<compile_context>
chip_gen: v7x
topology: tpu7x:2x2x1
jax: 0.10.0
libtpu: 0.0.40
codegen_flags: <defaults>
</compile_context>

<pallas_src>
import functools

import jax
import jax.numpy as jnp
from jax.experimental import pallas as pl
from jax.experimental.pallas import tpu as pltpu

# ----------------------------- small config -----------------------------
B = 2                     # batch size
OUT_CHANNELS = 32         # feature-map channels (stand-in for 1024)
FEAT_H = FEAT_W = 16      # feature-map spatial size
ROI_SIZE = 2              # roi_pool / avg_pool output size
HIDDEN = 32               # hidden_dim (stand-in for 512)
N_CLASSES = 5
PAD_CLASSES = 128         # lane-dense padded class dim (multiple of 128)
ROIS_PER_IMG = 4
N_ROIS = B * ROIS_PER_IMG
NEG_LARGE = -3.0e38       # mask value for ROI max-pool
PAD_BIAS = -1.0e30        # bias on padded class lanes (inert for softmax/argmax/CE)

VMEM_SPEC = pl.BlockSpec(memory_space=pltpu.MemorySpace.VMEM)
SMEM_SPEC = pl.BlockSpec(memory_space=pltpu.MemorySpace.SMEM)


# ----------------------------- fused Pallas kernel -----------------------------
def cls_module_kernel(bins_ref, gt_ref, feat_ref, wfc_ref, bfc_ref,
                      wcls_ref, bcls_ref,
                      scores_ref, classes_ref, loss_ref, pooled_sc):
    """ROI max-pool + avg -> fc + ReLU -> cls head -> argmax + cross-entropy."""
    # ---------- roi_pool (max per bin) followed by AvgPool2d(roi_size) ----------
    fmaps = [feat_ref[b] for b in range(B)]               # each (H, W, C) f32 in VMEM
    h_io = jax.lax.broadcasted_iota(jnp.int32, (FEAT_H, FEAT_W, 1), 0)
    w_io = jax.lax.broadcasted_iota(jnp.int32, (FEAT_H, FEAT_W, 1), 1)
    inv_bins = 1.0 / float(ROI_SIZE * ROI_SIZE)

    for r in range(N_ROIS):
        fmap = fmaps[r // ROIS_PER_IMG]                    # static batch index
        acc = jnp.zeros((1, OUT_CHANNELS), jnp.float32)
        for ph in range(ROI_SIZE):
            for pw in range(ROI_SIZE):
                base = ((r * ROI_SIZE + ph) * ROI_SIZE + pw) * 4
                hs = bins_ref[base + 0]
                he = bins_ref[base + 1]
                ws = bins_ref[base + 2]
                we = bins_ref[base + 3]
                mask = (h_io >= hs) & (h_io < he) & (w_io >= ws) & (w_io < we)
                masked = jnp.where(mask, fmap, NEG_LARGE)
                m1 = jnp.max(masked, axis=0)               # (W, C)
                bin_max = jnp.max(m1, axis=0, keepdims=True)   # (1, C)
                is_empty = jnp.logical_or(he <= hs, we <= ws)
                bin_val = jnp.where(is_empty, jnp.zeros_like(bin_max), bin_max)
                acc = acc + bin_val
        pooled_sc[pl.ds(r, 1), :] = acc * inv_bins

    pooled = pooled_sc[...]                                # (N_ROIS, C) f32

    # ---------- fc + ReLU (dropout == identity, eval mode) ----------
    h = jnp.dot(pooled.astype(jnp.bfloat16), wfc_ref[...],
                preferred_element_type=jnp.float32) + bfc_ref[...]
    h = jnp.maximum(h, 0.0)

    # ---------- cls head (lane-dense, padded to 128 classes) ----------
    scores = jnp.dot(h.astype(jnp.bfloat16), wcls_ref[...],
                     preferred_element_type=jnp.float32) + bcls_ref[...]
    scores_ref[...] = scores                               # (N_ROIS, PAD_CLASSES)

    # ---------- argmax (== argmax of softmax) ----------
    lane = jax.lax.broadcasted_iota(jnp.int32, scores.shape, 1)
    maxv = jnp.max(scores, axis=-1, keepdims=True)
    classes_ref[...] = jnp.min(
        jnp.where(scores == maxv, lane, PAD_CLASSES), axis=-1, keepdims=True)

    # ---------- cross-entropy (mean over ROIs) ----------
    onehot = lane == gt_ref[...]                           # (N_ROIS, PAD_CLASSES)
    picked = jnp.sum(jnp.where(onehot, scores, 0.0), axis=-1, keepdims=True)
    lse = maxv + jnp.log(jnp.sum(jnp.exp(scores - maxv), axis=-1, keepdims=True))
    loss_ref[0, 0] = jnp.sum(lse - picked) * (1.0 / N_ROIS)


# ----------------------------- plain-JAX glue -----------------------------
def roi_pool_bins(boxes_xyxy):
    """torchvision roi_pool bin bounds (spatial_scale=1.0) -> flat int32 array."""
    start_w = jnp.round(boxes_xyxy[:, 0]).astype(jnp.int32)
    start_h = jnp.round(boxes_xyxy[:, 1]).astype(jnp.int32)
    end_w = jnp.round(boxes_xyxy[:, 2]).astype(jnp.int32)
    end_h = jnp.round(boxes_xyxy[:, 3]).astype(jnp.int32)
    roi_w = jnp.maximum(end_w - start_w + 1, 1).astype(jnp.float32)
    roi_h = jnp.maximum(end_h - start_h + 1, 1).astype(jnp.float32)
    bin_w = roi_w / ROI_SIZE
    bin_h = roi_h / ROI_SIZE

    ph = jnp.arange(ROI_SIZE, dtype=jnp.float32)[None, :, None]   # (1,RS,1)
    pw = jnp.arange(ROI_SIZE, dtype=jnp.float32)[None, None, :]   # (1,1,RS)
    bh = bin_h[:, None, None]
    bw = bin_w[:, None, None]
    hs = jnp.clip(jnp.floor(ph * bh).astype(jnp.int32) + start_h[:, None, None], 0, FEAT_H)
    he = jnp.clip(jnp.ceil((ph + 1.0) * bh).astype(jnp.int32) + start_h[:, None, None], 0, FEAT_H)
    ws = jnp.clip(jnp.floor(pw * bw).astype(jnp.int32) + start_w[:, None, None], 0, FEAT_W)
    we = jnp.clip(jnp.ceil((pw + 1.0) * bw).astype(jnp.int32) + start_w[:, None, None], 0, FEAT_W)

    n = boxes_xyxy.shape[0]
    full = (n, ROI_SIZE, ROI_SIZE)
    bins = jnp.stack([jnp.broadcast_to(hs, full), jnp.broadcast_to(he, full),
                      jnp.broadcast_to(ws, full), jnp.broadcast_to(we, full)], axis=-1)
    return bins.reshape(-1).astype(jnp.int32)              # (N_ROIS*RS*RS*4,)


def init_params(key):
    ks = jax.random.split(key, 4)
    s = 0.05
    wfc = s * jax.random.normal(ks[0], (OUT_CHANNELS, HIDDEN), jnp.float32)
    bfc = s * jax.random.normal(ks[1], (1, HIDDEN), jnp.float32)
    wcls_real = s * jax.random.normal(ks[2], (HIDDEN, N_CLASSES), jnp.float32)
    bcls_real = s * jax.random.normal(ks[3], (1, N_CLASSES), jnp.float32)
    # pad the class dim to 128 lanes: zero weights + very negative bias -> inert
    wcls = jnp.zeros((HIDDEN, PAD_CLASSES), jnp.float32).at[:, :N_CLASSES].set(wcls_real)
    bcls = jnp.full((1, PAD_CLASSES), PAD_BIAS, jnp.float32).at[:, :N_CLASSES].set(bcls_real)
    return {
        "wfc": wfc.astype(jnp.bfloat16),
        "bfc": bfc,
        "wcls": wcls.astype(jnp.bfloat16),
        "bcls": bcls,
    }


@jax.jit
def classification_forward(feature_map_nchw, proposals, gt_classes, params):
    """Train-mode forward of ClassificationModule -> (cls_loss, classes_all, cls_scores)."""
    feat_nhwc = jnp.transpose(feature_map_nchw, (0, 2, 3, 1))   # channels on lanes
    boxes = proposals.reshape(-1, 4)                            # (N_ROIS, 4), per-image order
    bins = roi_pool_bins(boxes)
    gt = gt_classes.astype(jnp.int32).reshape(N_ROIS, 1)

    scores_pad, classes, loss = pl.pallas_call(
        cls_module_kernel,
        out_shape=(
            jax.ShapeDtypeStruct((N_ROIS, PAD_CLASSES), jnp.float32),
            jax.ShapeDtypeStruct((N_ROIS, 1), jnp.int32),
            jax.ShapeDtypeStruct((1, 1), jnp.float32),
        ),
        in_specs=[SMEM_SPEC] + [VMEM_SPEC] * 6,
        out_specs=(VMEM_SPEC, VMEM_SPEC, SMEM_SPEC),
        scratch_shapes=[pltpu.VMEM((N_ROIS, OUT_CHANNELS), jnp.float32)],
    )(bins, gt, feat_nhwc, params["wfc"], params["bfc"],
      params["wcls"], params["bcls"])

    cls_scores = scores_pad[:, :N_CLASSES]   # strip lane padding before any use
    cls_loss = loss[0, 0]
    classes_all = classes.reshape(-1)
    return cls_loss, classes_all, cls_scores


# ----------------------------- main -----------------------------
if __name__ == "__main__":
    root = jax.random.PRNGKey(0)
    k_feat, k_xy, k_wh, k_cls, k_par = jax.random.split(root, 5)

    feature_map = jax.random.normal(
        k_feat, (B, OUT_CHANNELS, FEAT_H, FEAT_W), jnp.float32)        # NCHW, like PyTorch
    xy = jax.random.uniform(k_xy, (B, ROIS_PER_IMG, 2), jnp.float32, 0.0, FEAT_W - 5.0)
    wh = jax.random.uniform(k_wh, (B, ROIS_PER_IMG, 2), jnp.float32, 2.0, 4.0)
    proposals = jnp.concatenate([xy, xy + wh], axis=-1)                # xyxy feature-map coords
    gt_classes = jax.random.randint(k_cls, (N_ROIS,), 0, N_CLASSES)
    params = init_params(k_par)

    cls_loss, classes_all, cls_scores = jax.block_until_ready(
        classification_forward(feature_map, proposals, gt_classes, params))

    assert cls_scores.shape == (N_ROIS, N_CLASSES)
    assert classes_all.shape == (N_ROIS,)
    assert bool(jnp.all((classes_all >= 0) & (classes_all < N_CLASSES)))
    assert bool(jnp.isfinite(cls_loss))
    print("KERNEL_OK")
</pallas_src>

<mosaic_0001>
module attributes {stable_mosaic.version = 11 : i64} {
  func.func @cls_module_kernel(%arg0: memref<128xi32, #tpu.memory_space<smem>>, %arg1: memref<8x1xi32, #tpu.memory_space<vmem>>, %arg2: memref<2x16x16x32xf32, #tpu.memory_space<vmem>>, %arg3: memref<32x32xbf16, #tpu.memory_space<vmem>>, %arg4: memref<1x32xf32, #tpu.memory_space<vmem>>, %arg5: memref<32x128xbf16, #tpu.memory_space<vmem>>, %arg6: memref<1x128xf32, #tpu.memory_space<vmem>>, %arg7: memref<8x128xf32, #tpu.memory_space<vmem>>, %arg8: memref<8x1xi32, #tpu.memory_space<vmem>>, %arg9: memref<1x1xf32, #tpu.memory_space<smem>>, %arg10: memref<8x32xf32, #tpu.memory_space<vmem>>) attributes {dimension_semantics = [], scalar_prefetch = 0 : i64, scratch_operands = 1 : i64, tpu.core_type = #tpu.core_type<tc>} {
    %c0 = arith.constant 0 : index
    %c0_0 = arith.constant 0 : index
    %c0_1 = arith.constant 0 : index
    %c0_2 = arith.constant 0 : index
    %0 = vector.load %arg2[%c0, %c0_0, %c0_1, %c0_2] : memref<2x16x16x32xf32, #tpu.memory_space<vmem>>, vector<1x16x16x32xf32>
    %1 = vector.shape_cast %0 : vector<1x16x16x32xf32> to vector<16x16x32xf32>
    %c1 = arith.constant 1 : index
    %c0_3 = arith.constant 0 : index
    %c0_4 = arith.constant 0 : index
    %c0_5 = arith.constant 0 : index
    %2 = vector.load %arg2[%c1, %c0_3, %c0_4, %c0_5] : memref<2x16x16x32xf32, #tpu.memory_space<vmem>>, vector<1x16x16x32xf32>
    %3 = vector.shape_cast %2 : vector<1x16x16x32xf32> to vector<16x16x32xf32>
    %4 = tpu.iota {dimensions = array<i32: 0>} : vector<16x16x1xi32>
    %5 = tpu.iota {dimensions = array<i32: 1>} : vector<16x16x1xi32>
    %cst = arith.constant 0.000000e+00 : f32
    %6 = vector.broadcast %cst : f32 to vector<1x32xf32>
    %c0_6 = arith.constant 0 : index
    %7 = memref.load %arg0[%c0_6] : memref<128xi32, #tpu.memory_space<smem>>
    %c1_7 = arith.constant 1 : index
    %8 = memref.load %arg0[%c1_7] : memref<128xi32, #tpu.memory_space<smem>>
    %c2 = arith.constant 2 : index
    %9 = memref.load %arg0[%c2] : memref<128xi32, #tpu.memory_space<smem>>
    %c3 = arith.constant 3 : index
    %10 = memref.load %arg0[%c3] : memref<128xi32, #tpu.memory_space<smem>>
    %11 = vector.broadcast %7 : i32 to vector<16x16x1xi32>
    %12 = arith.cmpi sge, %4, %11 : vector<16x16x1xi32>
    %13 = vector.broadcast %8 : i32 to vector<16x16x1xi32>
    %14 = arith.cmpi slt, %4, %13 : vector<16x16x1xi32>
    %15 = arith.andi %12, %14 : vector<16x16x1xi1>
    %16 = vector.broadcast %9 : i32 to vector<16x16x1xi32>
    %17 = arith.cmpi sge, %5, %16 : vector<16x16x1xi32>
    %18 = arith.andi %15, %17 : vector<16x16x1xi1>
    %19 = vector.broadcast %10 : i32 to vector<16x16x1xi32>
    %20 = arith.cmpi slt, %5, %19 : vector<16x16x1xi32>
    %21 = arith.andi %18, %20 : vector<16x16x1xi1>
    %cst_8 = arith.constant -3.000000e+38 : f32
    %22 = vector.shape_cast %21 : vector<16x16x1xi1> to vector<16x16x1xi1>
    %23 = vector.broadcast %22 : vector<16x16x1xi1> to vector<16x16x32xi1>
    %24 = vector.broadcast %cst_8 : f32 to vector<16x16x32xf32>
    %25 = arith.select %23, %1, %24 : vector<16x16x32xi1>, vector<16x16x32xf32>
    %cst_9 = arith.constant dense<0xFF800000> : vector<16x32xf32>
    %26 = vector.multi_reduction <maximumf>, %25, %cst_9 [0] : vector<16x16x32xf32> to vector<16x32xf32>
    %cst_10 = arith.constant dense<0xFF800000> : vector<32xf32>
    %27 = vector.multi_reduction <maximumf>, %26, %cst_10 [0] : vector<16x32xf32> to vector<32xf32>
    %28 = vector.shape_cast %27 : vector<32xf32> to vector<1x32xf32>
    %29 = arith.cmpi sle, %8, %7 : i32
    %30 = arith.cmpi sle, %10, %9 : i32
    %31 = arith.ori %29, %30 : i1
    %cst_11 = arith.constant 0.000000e+00 : f32
    %32 = vector.broadcast %cst_11 : f32 to vector<1x32xf32>
    %33 = arith.select %31, %32, %28 : vector<1x32xf32>
    %34 = arith.addf %6, %33 : vector<1x32xf32>
    %c4 = arith.constant 4 : index
    %35 = memref.load %arg0[%c4] : memref<128xi32, #tpu.memory_space<smem>>
    %c5 = arith.constant 5 : index
    %36 = memref.load %arg0[%c5] : memref<128xi32, #tpu.memory_space<smem>>
    %c6 = arith.constant 6 : index
    %37 = memref.load %arg0[%c6] : memref<128xi32, #tpu.memory_space<smem>>
    %c7 = arith.constant 7 : index
    %38 = memref.load %arg0[%c7] : memref<128xi32, #tpu.memory_space<smem>>
    %39 = vector.broadcast %35 : i32 to vector<16x16x1xi32>
    %40 = arith.cmpi sge, %4, %39 : vector<16x16x1xi32>
    %41 = vector.broadcast %36 : i32 to vector<16x16x1xi32>
    %42 = arith.cmpi slt, %4, %41 : vector<16x16x1xi32>
    %43 = arith.andi %40, %42 : vector<16x16x1xi1>
    %44 = vector.broadcast %37 : i32 to vector<16x16x1xi32>
    %45 = arith.cmpi sge, %5, %44 : vector<16x16x1xi32>
    %46 = arith.andi %43, %45 : vector<16x16x1xi1>
    %47 = vector.broadcast %38 : i32 to vector<16x16x1xi32>
    %48 = arith.cmpi slt, %5, %47 : vector<16x16x1xi32>
    %49 = arith.andi %46, %48 : vector<16x16x1xi1>
    %cst_12 = arith.constant -3.000000e+38 : f32
    %50 = vector.shape_cast %49 : vector<16x16x1xi1> to vector<16x16x1xi1>
    %51 = vector.broadcast %50 : vector<16x16x1xi1> to vector<16x16x32xi1>
    %52 = vector.broadcast %cst_12 : f32 to vector<16x16x32xf32>
    %53 = arith.select %51, %1, %52 : vector<16x16x32xi1>, vector<16x16x32xf32>
    %cst_13 = arith.constant dense<0xFF800000> : vector<16x32xf32>
    %54 = vector.multi_reduction <maximumf>, %53, %cst_13 [0] : vector<16x16x32xf32> to vector<16x32xf32>
    %cst_14 = arith.constant dense<0xFF800000> : vector<32xf32>
    %55 = vector.multi_reduction <maximumf>, %54, %cst_14 [0] : vector<16x32xf32> to vector<32xf32>
    %56 = vector.shape_cast %55 : vector<32xf32> to vector<1x32xf32>
    %57 = arith.cmpi sle, %36, %35 : i32
    %58 = arith.cmpi sle, %38, %37 : i32
    %59 = arith.ori %57, %58 : i1
    %cst_15 = arith.constant 0.000000e+00 : f32
    %60 = vector.broadcast %cst_15 : f32 to vector<1x32xf32>
    %61 = arith.select %59, %60, %56 : vector<1x32xf32>
    %62 = arith.addf %34, %61 : vector<1x32xf32>
    %c8 = arith.constant 8 : index
    %63 = memref.load %arg0[%c8] : memref<128xi32, #tpu.memory_space<smem>>
    %c9 = arith.constant 9 : index
    %64 = memref.load %arg0[%c9] : memref<128xi32, #tpu.memory_space<smem>>
    %c10 = arith.constant 10 : index
    %65 = memref.load %arg0[%c10] : memref<128xi32, #tpu.memory_space<smem>>
    %c11 = arith.constant 11 : index
    %66 = memref.load %arg0[%c11] : memref<128xi32, #tpu.memory_space<smem>>
    %67 = vector.broadcast %63 : i32 to vector<16x16x1xi32>
    %68 = arith.cmpi sge, %4, %67 : vector<16x16x1xi32>
    %69 = vector.broadcast %64 : i32 to vector<16x16x1xi32>
    %70 = arith.cmpi slt, %4, %69 : vector<16x16x1xi32>
    %71 = arith.andi %68, %70 : vector<16x16x1xi1>
    %72 = vector.broadcast %65 : i32 to vector<16x16x1xi32>
    %73 = arith.cmpi sge, %5, %72 : vector<16x16x1xi32>
    %74 = arith.andi %71, %73 : vector<16x16x1xi1>
    %75 = vector.broadcast %66 : i32 to vector<16x16x1xi32>
    %76 = arith.cmpi slt, %5, %75 : vector<16x16x1xi32>
    %77 = arith.andi %74, %76 : vector<16x16x1xi1>
    %cst_16 = arith.constant -3.000000e+38 : f32
    %78 = vector.shape_cast %77 : vector<16x16x1xi1> to vector<16x16x1xi1>
    %79 = vector.broadcast %78 : vector<16x16x1xi1> to vector<16x16x32xi1>
    %80 = vector.broadcast %cst_16 : f32 to vector<16x16x32xf32>
    %81 = arith.select %79, %1, %80 : vector<16x16x32xi1>, vector<16x16x32xf32>
    %cst_17 = arith.constant dense<0xFF800000> : vector<16x32xf32>
    %82 = vector.multi_reduction <maximumf>, %81, %cst_17 [0] : vector<16x16x32xf32> to vector<16x32xf32>
    %cst_18 = arith.constant dense<0xFF800000> : vector<32xf32>
    %83 = vector.multi_reduction <maximumf>, %82, %cst_18 [0] : vector<16x32xf32> to vector<32xf32>
    %84 = vector.shape_cast %83 : vector<32xf32> to vector<1x32xf32>
    %85 = arith.cmpi sle, %64, %63 : i32
    %86 = arith.cmpi sle, %66, %65 : i32
    %87 = arith.ori %85, %86 : i1
    %cst_19 = arith.constant 0.000000e+00 : f32
    %88 = vector.broadcast %cst_19 : f32 to vector<1x32xf32>
    %89 = arith.select %87, %88, %84 : vector<1x32xf32>
    %90 = arith.addf %62, %89 : vector<1x32xf32>
    %c12 = arith.constant 12 : index
    %91 = memref.load %arg0[%c12] : memref<128xi32, #tpu.memory_space<smem>>
    %c13 = arith.constant 13 : index
    %92 = memref.load %arg0[%c13] : memref<128xi32, #tpu.memory_space<smem>>
    %c14 = arith.constant 14 : index
    %93 = memref.load %arg0[%c14] : memref<128xi32, #tpu.memory_space<smem>>
    %c15 = arith.constant 15 : index
    %94 = memref.load %arg0[%c15] : memref<128xi32, #tpu.memory_space<smem>>
    %95 = vector.broadcast %91 : i32 to vector<16x16x1xi32>
    %96 = arith.cmpi sge, %4, %95 : vector<16x16x1xi32>
    %97 = vector.broadcast %92 : i32 to vector<16x16x1xi32>
    %98 = arith.cmpi slt, %4, %97 : vector<16x16x1xi32>
    %99 = arith.andi %96, %98 : vector<16x16x1xi1>
    %100 = vector.broadcast %93 : i32 to vector<16x16x1xi32>
    %101 = arith.cmpi sge, %5, %100 : vector<16x16x1xi32>
    %102 = arith.andi %99, %101 : vector<16x16x1xi1>
    %103 = vector.broadcast %94 : i32 to vector<16x16x1xi32>
    %104 = arith.cmpi slt, %5, %103 : vector<16x16x1xi32>
    %105 = arith.andi %102, %104 : vector<16x16x1xi1>
    %cst_20 = arith.constant -3.000000e+38 : f32
    %106 = vector.shape_cast %105 : vector<16x16x1xi1> to vector<16x16x1xi1>
    %107 = vector.broadcast %106 : vector<16x16x1xi1> to vector<16x16x32xi1>
    %108 = vector.broadcast %cst_20 : f32 to vector<16x16x32xf32>
    %109 = arith.select %107, %1, %108 : vector<16x16x32xi1>, vector<16x16x32xf32>
    %cst_21 = arith.constant dense<0xFF800000> : vector<16x32xf32>
    %110 = vector.multi_reduction <maximumf>, %109, %cst_21 [0] : vector<16x16x32xf32> to vector<16x32xf32>
    %cst_22 = arith.constant dense<0xFF800000> : vector<32xf32>
    %111 = vector.multi_reduction <maximumf>, %110, %cst_22 [0] : vector<16x32xf32> to vector<32xf32>
    %112 = vector.shape_cast %111 : vector<32xf32> to vector<1x32xf32>
    %113 = arith.cmpi sle, %92, %91 : i32
    %114 = arith.cmpi sle, %94, %93 : i32
    %115 = arith.ori %113, %114 : i1
    %cst_23 = arith.constant 0.000000e+00 : f32
    %116 = vector.broadcast %cst_23 : f32 to vector<1x32xf32>
    %117 = arith.select %115, %116, %112 : vector<1x32xf32>
    %118 = arith.addf %90, %117 : vector<1x32xf32>
    %cst_24 = arith.constant 2.500000e-01 : f32
    %119 = vector.broadcast %cst_24 : f32 to vector<1x32xf32>
    %120 = arith.mulf %118, %119 : vector<1x32xf32>
    %c0_25 = arith.constant 0 : index
    %c0_26 = arith.constant 0 : index
    %121 = vector.load %arg10[%c0_25, %c0_26] : memref<8x32xf32, #tpu.memory_space<vmem>>, vector<1x32xf32>
    tpu.vector_store %arg10[%c0_25, %c0_26], %120 {strides = array<i32>} : memref<8x32xf32, #tpu.memory_space<vmem>>, vector<1x32xf32>,
    %cst_27 = arith.constant 0.000000e+00 : f32
    %122 = vector.broadcast %cst_27 : f32 to vector<1x32xf32>
    %c16 = arith.constant 16 : index
    %123 = memref.load %arg0[%c16] : memref<128xi32, #tpu.memory_space<smem>>
    %c17 = arith.constant 17 : index
    %124 = memref.load %arg0[%c17] : memref<128xi32, #tpu.memory_space<smem>>
    %c18 = arith.constant 18 : index
    %125 = memref.load %arg0[%c18] : memref<128xi32, #tpu.memory_space<smem>>
    %c19 = arith.constant 19 : index
    %126 = memref.load %arg0[%c19] : memref<128xi32, #tpu.memory_space<smem>>
    %127 = vector.broadcast %123 : i32 to vector<16x16x1xi32>
    %128 = arith.cmpi sge, %4, %127 : vector<16x16x1xi32>
    %129 = vector.broadcast %124 : i32 to vector<16x16x1xi32>
    %130 = arith.cmpi slt, %4, %129 : vector<16x16x1xi32>
    %131 = arith.andi %128, %130 : vector<16x16x1xi1>
    %132 = vector.broadcast %125 : i32 to vector<16x16x1xi32>
    %133 = arith.cmpi sge, %5, %132 : vector<16x16x1xi32>
    %134 = arith.andi %131, %133 : vector<16x16x1xi1>
    %135 = vector.broadcast %126 : i32 to vector<16x16x1xi32>
    %136 = arith.cmpi slt, %5, %135 : vector<16x16x1xi32>
    %137 = arith.andi %134, %136 : vector<16x16x1xi1>
    %cst_28 = arith.constant -3.000000e+38 : f32
    %138 = vector.shape_cast %137 : vector<16x16x1xi1> to vector<16x16x1xi1>
    %139 = vector.broadcast %138 : vector<16x16x1xi1> to vector<16x16x32xi1>
    %140 = vector.broadcast %cst_28 : f32 to vector<16x16x32xf32>
    %141 = arith.select %139, %1, %140 : vector<16x16x32xi1>, vector<16x16x32xf32>
    %cst_29 = arith.constant dense<0xFF800000> : vector<16x32xf32>
    %142 = vector.multi_reduction <maximumf>, %141, %cst_29 [0] : vector<16x16x32xf32> to vector<16x32xf32>
    %cst_30 = arith.constant dense<0xFF800000> : vector<32xf32>
    %143 = vector.multi_reduction <maximumf>, %142, %cst_30 [0] : vector<16x32xf32> to vector<32xf32>
    %144 = vector.shape_cast %143 : vector<32xf32> to vector<1x32xf32>
    %145 = arith.cmpi sle, %124, %123 : i32
    %146 = arith.cmpi sle, %126, %125 : i32
    %147 = arith.ori %145, %146 : i1
    %cst_31 = arith.constant 0.000000e+00 : f32
    %148 = vector.broadcast %cst_31 : f32 to vector<1x32xf32>
    %149 = arith.select %147, %148, %144 : vector<1x32xf32>
    %150 = arith.addf %122, %149 : vector<1x32xf32>
    %c20 = arith.constant 20 : index
    %151 = memref.load %arg0[%c20] : memref<128xi32, #tpu.memory_space<smem>>
    %c21 = arith.constant 21 : index
    %152 = memref.load %arg0[%c21] : memref<128xi32, #tpu.memory_space<smem>>
    %c22 = arith.constant 22 : index
    %153 = memref.load %arg0[%c22] : memref<128xi32, #tpu.memory_space<smem>>
    %c23 = arith.constant 23 : index
    %154 = memref.load %arg0[%c23] : memref<128xi32, #tpu.memory_space<smem>>
    %155 = vector.broadcast %151 : i32 to vector<16x16x1xi32>
    %156 = arith.cmpi sge, %4, %155 : vector<16x16x1xi32>
    %157 = vector.broadcast %152 : i32 to vector<16x16x1xi32>
    %158 = arith.cmpi slt, %4, %157 : vector<16x16x1xi32>
    %159 = arith.andi %156, %158 : vector<16x16x1xi1>
    %160 = vector.broadcast %153 : i32 to vector<16x16x1xi32>
    %161 = arith.cmpi sge, %5, %160 : vector<16x16x1xi32>
    %162 = arith.andi %159, %161 : vector<16x16x1xi1>
    %163 = vector.broadcast %154 : i32 to vector<16x16x1xi32>
    %164 = arith.cmpi slt, %5, %163 : vector<16x16x1xi32>
    %165 = arith.andi %162, %164 : vector<16x16x1xi1>
    %cst_32 = arith.constant -3.000000e+38 : f32
    %166 = vector.shape_cast %165 : vector<16x16x1xi1> to vector<16x16x1xi1>
    %167 = vector.broadcast %166 : vector<16x16x1xi1> to vector<16x16x32xi1>
    %168 = vector.broadcast %cst_32 : f32 to vector<16x16x32xf32>
    %169 = arith.select %167, %1, %168 : vector<16x16x32xi1>, vector<16x16x32xf32>
    %cst_33 = arith.constant dense<0xFF800000> : vector<16x32xf32>
    %170 = vector.multi_reduction <maximumf>, %169, %cst_33 [0] : vector<16x16x32xf32> to vector<16x32xf32>
    %cst_34 = arith.constant dense<0xFF800000> : vector<32xf32>
    %171 = vector.multi_reduction <maximumf>, %170, %cst_34 [0] : vector<16x32xf32> to vector<32xf32>
    %172 = vector.shape_cast %171 : vector<32xf32> to vector<1x32xf32>
    %173 = arith.cmpi sle, %152, %151 : i32
    %174 = arith.cmpi sle, %154, %153 : i32
    %175 = arith.ori %173, %174 : i1
    %cst_35 = arith.constant 0.000000e+00 : f32
    %176 = vector.broadcast %cst_35 : f32 to vector<1x32xf32>
    %177 = arith.select %175, %176, %172 : vector<1x32xf32>
    %178 = arith.addf %150, %177 : vector<1x32xf32>
    %c24 = arith.constant 24 : index
    %179 = memref.load %arg0[%c24] : memref<128xi32, #tpu.memory_space<smem>>
    %c25 = arith.constant 25 : index
    %180 = memref.load %arg0[%c25] : memref<128xi32, #tpu.memory_space<smem>>
    %c26 = arith.constant 26 : index
    %181 = memref.load %arg0[%c26] : memref<128xi32, #tpu.memory_space<smem>>
    %c27 = arith.constant 27 : index
    %182 = memref.load %arg0[%c27] : memref<128xi32, #tpu.memory_space<smem>>
    %183 = vector.broadcast %179 : i32 to vector<16x16x1xi32>
    %184 = arith.cmpi sge, %4, %183 : vector<16x16x1xi32>
    %185 = vector.broadcast %180 : i32 to vector<16x16x1xi32>
    %186 = arith.cmpi slt, %4, %185 : vector<16x16x1xi32>
    %187 = arith.andi %184, %186 : vector<16x16x1xi1>
    %188 = vector.broadcast %181 : i32 to vector<16x16x1xi32>
    %189 = arith.cmpi sge, %5, %188 : vector<16x16x1xi32>
    %190 = arith.andi %187, %189 : vector<16x16x1xi1>
    %191 = vector.broadcast %182 : i32 to vector<16x16x1xi32>
    %192 = arith.cmpi slt, %5, %191 : vector<16x16x1xi32>
    %193 = arith.andi %190, %192 : vector<16x16x1xi1>
    %cst_36 = arith.constant -3.000000e+38 : f32
    %194 = vector.shape_cast %193 : vector<16x16x1xi1> to vector<16x16x1xi1>
    %195 = vector.broadcast %194 : vector<16x16x1xi1> to vector<16x16x32xi1>
    %196 = vector.broadcast %cst_36 : f32 to vector<16x16x32xf32>
    %197 = arith.select %195, %1, %196 : vector<16x16x32xi1>, vector<16x16x32xf32>
    %cst_37 = arith.constant dense<0xFF800000> : vector<16x32xf32>
    %198 = vector.multi_reduction <maximumf>, %197, %cst_37 [0] : vector<16x16x32xf32> to vector<16x32xf32>
    %cst_38 = arith.constant dense<0xFF800000> : vector<32xf32>
    %199 = vector.multi_reduction <maximumf>, %198, %cst_38 [0] : vector<16x32xf32> to vector<32xf32>
    %200 = vector.shape_cast %199 : vector<32xf32> to vector<1x32xf32>
    %201 = arith.cmpi sle, %180, %179 : i32
    %202 = arith.cmpi sle, %182, %181 : i32
    %203 = arith.ori %201, %202 : i1
    %cst_39 = arith.constant 0.000000e+00 : f32
    %204 = vector.broadcast %cst_39 : f32 to vector<1x32xf32>
    %205 = arith.select %203, %204, %200 : vector<1x32xf32>
    %206 = arith.addf %178, %205 : vector<1x32xf32>
    %c28 = arith.constant 28 : index
    %207 = memref.load %arg0[%c28] : memref<128xi32, #tpu.memory_space<smem>>
    %c29 = arith.constant 29 : index
    %208 = memref.load %arg0[%c29] : memref<128xi32, #tpu.memory_space<smem>>
    %c30 = arith.constant 30 : index
    %209 = memref.load %arg0[%c30] : memref<128xi32, #tpu.memory_space<smem>>
    %c31 = arith.constant 31 : index
    %210 = memref.load %arg0[%c31] : memref<128xi32, #tpu.memory_space<smem>>
    %211 = vector.broadcast %207 : i32 to vector<16x16x1xi32>
    %212 = arith.cmpi sge, %4, %211 : vector<16x16x1xi32>
    %213 = vector.broadcast %208 : i32 to vector<16x16x1xi32>
    %214 = arith.cmpi slt, %4, %213 : vector<16x16x1xi32>
    %215 = arith.andi %212, %214 : vector<16x16x1xi1>
    %216 = vector.broadcast %209 : i32 to vector<16x16x1xi32>
    %217 = arith.cmpi sge, %5, %216 : vector<16x16x1xi32>
    %218 = arith.andi %215, %217 : vector<16x16x1xi1>
    %219 = vector.broadcast %210 : i32 to vector<16x16x1xi32>
    %220 = arith.cmpi slt, %5, %219 : vector<16x16x1xi32>
    %221 = arith.andi %218, %220 : vector<16x16x1xi1>
    %cst_40 = arith.constant -3.000000e+38 : f32
    %222 = vector.shape_cast %221 : vector<16x16x1xi1> to vector<16x16x1xi1>
    %223 = vector.broadcast %222 : vector<16x16x1xi1> to vector<16x16x32xi1>
    %224 = vector.broadcast %cst_40 : f32 to vector<16x16x32xf32>
    %225 = arith.select %223, %1, %224 : vector<16x16x32xi1>, vector<16x16x32xf32>
    %cst_41 = arith.constant dense<0xFF800000> : vector<16x32xf32>
    %226 = vector.multi_reduction <maximumf>, %225, %cst_41 [0] : vector<16x16x32xf32> to vector<16x32xf32>
    %cst_42 = arith.constant dense<0xFF800000> : vector<32xf32>
    %227 = vector.multi_reduction <maximumf>, %226, %cst_42 [0] : vector<16x32xf32> to vector<32xf32>
    %228 = vector.shape_cast %227 : vector<32xf32> to vector<1x32xf32>
    %229 = arith.cmpi sle, %208, %207 : i32
    %230 = arith.cmpi sle, %210, %209 : i32
    %231 = arith.ori %229, %230 : i1
    %cst_43 = arith.constant 0.000000e+00 : f32
    %232 = vector.broadcast %cst_43 : f32 to vector<1x32xf32>
    %233 = arith.select %231, %232, %228 : vector<1x32xf32>
    %234 = arith.addf %206, %233 : vector<1x32xf32>
    %cst_44 = arith.constant 2.500000e-01 : f32
    %235 = vector.broadcast %cst_44 : f32 to vector<1x32xf32>
    %236 = arith.mulf %234, %235 : vector<1x32xf32>
    %c1_45 = arith.constant 1 : index
    %c0_46 = arith.constant 0 : index
    %237 = vector.load %arg10[%c1_45, %c0_46] : memref<8x32xf32, #tpu.memory_space<vmem>>, vector<1x32xf32>
    tpu.vector_store %arg10[%c1_45, %c0_46], %236 {strides = array<i32>} : memref<8x32xf32, #tpu.memory_space<vmem>>, vector<1x32xf32>,
    %cst_47 = arith.constant 0.000000e+00 : f32
    %238 = vector.broadcast %cst_47 : f32 to vector<1x32xf32>
    %c32 = arith.constant 32 : index
    %239 = memref.load %arg0[%c32] : memref<128xi32, #tpu.memory_space<smem>>
    %c33 = arith.constant 33 : index
    %240 = memref.load %arg0[%c33] : memref<128xi32, #tpu.memory_space<smem>>
    %c34 = arith.constant 34 : index
    %241 = memref.load %arg0[%c34] : memref<128xi32, #tpu.memory_space<smem>>
    %c35 = arith.constant 35 : index
    %242 = memref.load %arg0[%c35] : memref<128xi32, #tpu.memory_space<smem>>
    %243 = vector.broadcast %239 : i32 to vector<16x16x1xi32>
    %244 = arith.cmpi sge, %4, %243 : vector<16x16x1xi32>
    %245 = vector.broadcast %240 : i32 to vector<16x16x1xi32>
    %246 = arith.cmpi slt, %4, %245 : vector<16x16x1xi32>
    %247 = arith.andi %244, %246 : vector<16x16x1xi1>
    %248 = vector.broadcast %241 : i32 to vector<16x16x1xi32>
    %249 = arith.cmpi sge, %5, %248 : vector<16x16x1xi32>
    %250 = arith.andi %247, %249 : vector<16x16x1xi1>
    %251 = vector.broadcast %242 : i32 to vector<16x16x1xi32>
    %252 = arith.cmpi slt, %5, %251 : vector<16x16x1xi32>
    %253 = arith.andi %250, %252 : vector<16x16x1xi1>
    %cst_48 = arith.constant -3.000000e+38 : f32
    %254 = vector.shape_cast %253 : vector<16x16x1xi1> to vector<16x16x1xi1>
    %255 = vector.broadcast %254 : vector<16x16x1xi1> to vector<16x16x32xi1>
    %256 = vector.broadcast %cst_48 : f32 to vector<16x16x32xf32>
    %257 = arith.select %255, %1, %256 : vector<16x16x32xi1>, vector<16x16x32xf32>
    %cst_49 = arith.constant dense<0xFF800000> : vector<16x32xf32>
    %258 = vector.multi_reduction <maximumf>, %257, %cst_49 [0] : vector<16x16x32xf32> to vector<16x32xf32>
    %cst_50 = arith.constant dense<0xFF800000> : vector<32xf32>
    %259 = vector.multi_reduction <maximumf>, %258, %cst_50 [0] : vector<16x32xf32> to vector<32xf32>
    %260 = vector.shape_cast %259 : vector<32xf32> to vector<1x32xf32>
    %261 = arith.cmpi sle, %240, %239 : i32
    %262 = arith.cmpi sle, %242, %241 : i32
    %263 = arith.ori %261, %262 : i1
    %cst_51 = arith.constant 0.000000e+00 : f32
    %264 = vector.broadcast %cst_51 : f32 to vector<1x32xf32>
    %265 = arith.select %263, %264, %260 : vector<1x32xf32>
    %266 = arith.addf %238, %265 : vector<1x32xf32>
    %c36 = arith.constant 36 : index
    %267 = memref.load %arg0[%c36] : memref<128xi32, #tpu.memory_space<smem>>
    %c37 = arith.constant 37 : index
    %268 = memref.load %arg0[%c37] : memref<128xi32, #tpu.memory_space<smem>>
    %c38 = arith.constant 38 : index
    %269 = memref.load %arg0[%c38] : memref<128xi32, #tpu.memory_space<smem>>
    %c39 = arith.constant 39 : index
    %270 = memref.load %arg0[%c39] : memref<128xi32, #tpu.memory_space<smem>>
    %271 = vector.broadcast %267 : i32 to vector<16x16x1xi32>
    %272 = arith.cmpi sge, %4, %271 : vector<16x16x1xi32>
    %273 = vector.broadcast %268 : i32 to vector<16x16x1xi32>
    %274 = arith.cmpi slt, %4, %273 : vector<16x16x1xi32>
    %275 = arith.andi %272, %274 : vector<16x16x1xi1>
    %276 = vector.broadcast %269 : i32 to vector<16x16x1xi32>
    %277 = arith.cmpi sge, %5, %276 : vector<16x16x1xi32>
    %278 = arith.andi %275, %277 : vector<16x16x1xi1>
    %279 = vector.broadcast %270 : i32 to vector<16x16x1xi32>
    %280 = arith.cmpi slt, %5, %279 : vector<16x16x1xi32>
    %281 = arith.andi %278, %280 : vector<16x16x1xi1>
    %cst_52 = arith.constant -3.000000e+38 : f32
    %282 = vector.shape_cast %281 : vector<16x16x1xi1> to vector<16x16x1xi1>
    %283 = vector.broadcast %282 : vector<16x16x1xi1> to vector<16x16x32xi1>
    %284 = vector.broadcast %cst_52 : f32 to vector<16x16x32xf32>
    %285 = arith.select %283, %1, %284 : vector<16x16x32xi1>, vector<16x16x32xf32>
    %cst_53 = arith.constant dense<0xFF800000> : vector<16x32xf32>
    %286 = vector.multi_reduction <maximumf>, %285, %cst_53 [0] : vector<16x16x32xf32> to vector<16x32xf32>
    %cst_54 = arith.constant dense<0xFF800000> : vector<32xf32>
    %287 = vector.multi_reduction <maximumf>, %286, %cst_54 [0] : vector<16x32xf32> to vector<32xf32>
    %288 = vector.shape_cast %287 : vector<32xf32> to vector<1x32xf32>
    %289 = arith.cmpi sle, %268, %267 : i32
    %290 = arith.cmpi sle, %270, %269 : i32
    %291 = arith.ori %289, %290 : i1
    %cst_55 = arith.constant 0.000000e+00 : f32
    %292 = vector.broadcast %cst_55 : f32 to vector<1x32xf32>
    %293 = arith.select %291, %292, %288 : vector<1x32xf32>
    %294 = arith.addf %266, %293 : vector<1x32xf32>
    %c40 = arith.constant 40 : index
    %295 = memref.load %arg0[%c40] : memref<128xi32, #tpu.memory_space<smem>>
    %c41 = arith.constant 41 : index
    %296 = memref.load %arg0[%c41] : memref<128xi32, #tpu.memory_space<smem>>
    %c42 = arith.constant 42 : index
    %297 = memref.load %arg0[%c42] : memref<128xi32, #tpu.memory_space<smem>>
    %c43 = arith.constant 43 : index
    %298 = memref.load %arg0[%c43] : memref<128xi32, #tpu.memory_space<smem>>
    %299 = vector.broadcast %295 : i32 to vector<16x16x1xi32>
    %300 = arith.cmpi sge, %4, %299 : vector<16x16x1xi32>
    %301 = vector.broadcast %296 : i32 to vector<16x16x1xi32>
    %302 = arith.cmpi slt, %4, %301 : vector<16x16x1xi32>
    %303 = arith.andi %300, %302 : vector<16x16x1xi1>
    %304 = vector.broadcast %297 : i32 to vector<16x16x1xi32>
    %305 = arith.cmpi sge, %5, %304 : vector<16x16x1xi32>
    %306 = arith.andi %303, %305 : vector<16x16x1xi1>
    %307 = vector.broadcast %298 : i32 to vector<16x16x1xi32>
    %308 = arith.cmpi slt, %5, %307 : vector<16x16x1xi32>
    %309 = arith.andi %306, %308 : vector<16x16x1xi1>
    %cst_56 = arith.constant -3.000000e+38 : f32
    %310 = vector.shape_cast %309 : vector<16x16x1xi1> to vector<16x16x1xi1>
    %311 = vector.broadcast %310 : vector<16x16x1xi1> to vector<16x16x32xi1>
    %312 = vector.broadcast %cst_56 : f32 to vector<16x16x32xf32>
    %313 = arith.select %311, %1, %312 : vector<16x16x32xi1>, vector<16x16x32xf32>
    %cst_57 = arith.constant dense<0xFF800000> : vector<16x32xf32>
    %314 = vector.multi_reduction <maximumf>, %313, %cst_57 [0] : vector<16x16x32xf32> to vector<16x32xf32>
    %cst_58 = arith.constant dense<0xFF800000> : vector<32xf32>
    %315 = vector.multi_reduction <maximumf>, %314, %cst_58 [0] : vector<16x32xf32> to vector<32xf32>
    %316 = vector.shape_cast %315 : vector<32xf32> to vector<1x32xf32>
    %317 = arith.cmpi sle, %296, %295 : i32
    %318 = arith.cmpi sle, %298, %297 : i32
    %319 = arith.ori %317, %318 : i1
    %cst_59 = arith.constant 0.000000e+00 : f32
    %320 = vector.broadcast %cst_59 : f32 to vector<1x32xf32>
    %321 = arith.select %319, %320, %316 : vector<1x32xf32>
    %322 = arith.addf %294, %321 : vector<1x32xf32>
    %c44 = arith.constant 44 : index
    %323 = memref.load %arg0[%c44] : memref<128xi32, #tpu.memory_space<smem>>
    %c45 = arith.constant 45 : index
    %324 = memref.load %arg0[%c45] : memref<128xi32, #tpu.memory_space<smem>>
    %c46 = arith.constant 46 : index
    %325 = memref.load %arg0[%c46] : memref<128xi32, #tpu.memory_space<smem>>
    %c47 = arith.constant 47 : index
    %326 = memref.load %arg0[%c47] : memref<128xi32, #tpu.memory_space<smem>>
    %327 = vector.broadcast %323 : i32 to vector<16x16x1xi32>
    %328 = arith.cmpi sge, %4, %327 : vector<16x16x1xi32>
    %329 = vector.broadcast %324 : i32 to vector<16x16x1xi32>
    %330 = arith.cmpi slt, %4, %329 : vector<16x16x1xi32>
    %331 = arith.andi %328, %330 : vector<16x16x1xi1>
    %332 = vector.broadcast %325 : i32 to vector<16x16x1xi32>
    %333 = arith.cmpi sge, %5, %332 : vector<16x16x1xi32>
    %334 = arith.andi %331, %333 : vector<16x16x1xi1>
    %335 = vector.broadcast %326 : i32 to vector<16x16x1xi32>
    %336 = arith.cmpi slt, %5, %335 : vector<16x16x1xi32>
    %337 = arith.andi %334, %336 : vector<16x16x1xi1>
    %cst_60 = arith.constant -3.000000e+38 : f32
    %338 = vector.shape_cast %337 : vector<16x16x1xi1> to vector<16x16x1xi1>
    %339 = vector.broadcast %338 : vector<16x16x1xi1> to vector<16x16x32xi1>
    %340 = vector.broadcast %cst_60 : f32 to vector<16x16x32xf32>
    %341 = arith.select %339, %1, %340 : vector<16x16x32xi1>, vector<16x16x32xf32>
    %cst_61 = arith.constant dense<0xFF800000> : vector<16x32xf32>
    %342 = vector.multi_reduction <maximumf>, %341, %cst_61 [0] : vector<16x16x32xf32> to vector<16x32xf32>
    %cst_62 = arith.constant dense<0xFF800000> : vector<32xf32>
    %343 = vector.multi_reduction <maximumf>, %342, %cst_62 [0] : vector<16x32xf32> to vector<32xf32>
    %344 = vector.shape_cast %343 : vector<32xf32> to vector<1x32xf32>
    %345 = arith.cmpi sle, %324, %323 : i32
    %346 = arith.cmpi sle, %326, %325 : i32
    %347 = arith.ori %345, %346 : i1
    %cst_63 = arith.constant 0.000000e+00 : f32
    %348 = vector.broadcast %cst_63 : f32 to vector<1x32xf32>
    %349 = arith.select %347, %348, %344 : vector<1x32xf32>
    %350 = arith.addf %322, %349 : vector<1x32xf32>
    %cst_64 = arith.constant 2.500000e-01 : f32
    %351 = vector.broadcast %cst_64 : f32 to vector<1x32xf32>
    %352 = arith.mulf %350, %351 : vector<1x32xf32>
    %c2_65 = arith.constant 2 : index
    %c0_66 = arith.constant 0 : index
    %353 = vector.load %arg10[%c2_65, %c0_66] : memref<8x32xf32, #tpu.memory_space<vmem>>, vector<1x32xf32>
    tpu.vector_store %arg10[%c2_65, %c0_66], %352 {strides = array<i32>} : memref<8x32xf32, #tpu.memory_space<vmem>>, vector<1x32xf32>,
    %cst_67 = arith.constant 0.000000e+00 : f32
    %354 = vector.broadcast %cst_67 : f32 to vector<1x32xf32>
    %c48 = arith.constant 48 : index
    %355 = memref.load %arg0[%c48] : memref<128xi32, #tpu.memory_space<smem>>
    %c49 = arith.constant 49 : index
    %356 = memref.load %arg0[%c49] : memref<128xi32, #tpu.memory_space<smem>>
    %c50 = arith.constant 50 : index
    %357 = memref.load %arg0[%c50] : memref<128xi32, #tpu.memory_space<smem>>
    %c51 = arith.constant 51 : index
    %358 = memref.load %arg0[%c51] : memref<128xi32, #tpu.memory_space<smem>>
    %359 = vector.broadcast %355 : i32 to vector<16x16x1xi32>
    %360 = arith.cmpi sge, %4, %359 : vector<16x16x1xi32>
    %361 = vector.broadcast %356 : i32 to vector<16x16x1xi32>
    %362 = arith.cmpi slt, %4, %361 : vector<16x16x1xi32>
    %363 = arith.andi %360, %362 : vector<16x16x1xi1>
    %364 = vector.broadcast %357 : i32 to vector<16x16x1xi32>
    %365 = arith.cmpi sge, %5, %364 : vector<16x16x1xi32>
    %366 = arith.andi %363, %365 : vector<16x16x1xi1>
    %367 = vector.broadcast %358 : i32 to vector<16x16x1xi32>
    %368 = arith.cmpi slt, %5, %367 : vector<16x16x1xi32>
    %369 = arith.andi %366, %368 : vector<16x16x1xi1>
    %cst_68 = arith.constant -3.000000e+38 : f32
    %370 = vector.shape_cast %369 : vector<16x16x1xi1> to vector<16x16x1xi1>
    %371 = vector.broadcast %370 : vector<16x16x1xi1> to vector<16x16x32xi1>
    %372 = vector.broadcast %cst_68 : f32 to vector<16x16x32xf32>
    %373 = arith.select %371, %1, %372 : vector<16x16x32xi1>, vector<16x16x32xf32>
    %cst_69 = arith.constant dense<0xFF800000> : vector<16x32xf32>
    %374 = vector.multi_reduction <maximumf>, %373, %cst_69 [0] : vector<16x16x32xf32> to vector<16x32xf32>
    %cst_70 = arith.constant dense<0xFF800000> : vector<32xf32>
    %375 = vector.multi_reduction <maximumf>, %374, %cst_70 [0] : vector<16x32xf32> to vector<32xf32>
    %376 = vector.shape_cast %375 : vector<32xf32> to vector<1x32xf32>
    %377 = arith.cmpi sle, %356, %355 : i32
    %378 = arith.cmpi sle, %358, %357 : i32
    %379 = arith.ori %377, %378 : i1
    %cst_71 = arith.constant 0.000000e+00 : f32
    %380 = vector.broadcast %cst_71 : f32 to vector<1x32xf32>
    %381 = arith.select %379, %380, %376 : vector<1x32xf32>
    %382 = arith.addf %354, %381 : vector<1x32xf32>
    %c52 = arith.constant 52 : index
    %383 = memref.load %arg0[%c52] : memref<128xi32, #tpu.memory_space<smem>>
    %c53 = arith.constant 53 : index
    %384 = memref.load %arg0[%c53] : memref<128xi32, #tpu.memory_space<smem>>
    %c54 = arith.constant 54 : index
    %385 = memref.load %arg0[%c54] : memref<128xi32, #tpu.memory_space<smem>>
    %c55 = arith.constant 55 : index
    %386 = memref.load %arg0[%c55] : memref<128xi32, #tpu.memory_space<smem>>
    %387 = vector.broadcast %383 : i32 to vector<16x16x1xi32>
    %388 = arith.cmpi sge, %4, %387 : vector<16x16x1xi32>
    %389 = vector.broadcast %384 : i32 to vector<16x16x1xi32>
    %390 = arith.cmpi slt, %4, %389 : vector<16x16x1xi32>
    %391 = arith.andi %388, %390 : vector<16x16x1xi1>
    %392 = vector.broadcast %385 : i32 to vector<16x16x1xi32>
    %393 = arith.cmpi sge, %5, %392 : vector<16x16x1xi32>
    %394 = arith.andi %391, %393 : vector<16x16x1xi1>
    %395 = vector.broadcast %386 : i32 to vector<16x16x1xi32>
    %396 = arith.cmpi slt, %5, %395 : vector<16x16x1xi32>
    %397 = arith.andi %394, %396 : vector<16x16x1xi1>
    %cst_72 = arith.constant -3.000000e+38 : f32
    %398 = vector.shape_cast %397 : vector<16x16x1xi1> to vector<16x16x1xi1>
    %399 = vector.broadcast %398 : vector<16x16x1xi1> to vector<16x16x32xi1>
    %400 = vector.broadcast %cst_72 : f32 to vector<16x16x32xf32>
    %401 = arith.select %399, %1, %400 : vector<16x16x32xi1>, vector<16x16x32xf32>
    %cst_73 = arith.constant dense<0xFF800000> : vector<16x32xf32>
    %402 = vector.multi_reduction <maximumf>, %401, %cst_73 [0] : vector<16x16x32xf32> to vector<16x32xf32>
    %cst_74 = arith.constant dense<0xFF800000> : vector<32xf32>
    %403 = vector.multi_reduction <maximumf>, %402, %cst_74 [0] : vector<16x32xf32> to vector<32xf32>
    %404 = vector.shape_cast %403 : vector<32xf32> to vector<1x32xf32>
    %405 = arith.cmpi sle, %384, %383 : i32
    %406 = arith.cmpi sle, %386, %385 : i32
    %407 = arith.ori %405, %406 : i1
    %cst_75 = arith.constant 0.000000e+00 : f32
    %408 = vector.broadcast %cst_75 : f32 to vector<1x32xf32>
    %409 = arith.select %407, %408, %404 : vector<1x32xf32>
    %410 = arith.addf %382, %409 : vector<1x32xf32>
    %c56 = arith.constant 56 : index
    %411 = memref.load %arg0[%c56] : memref<128xi32, #tpu.memory_space<smem>>
    %c57 = arith.constant 57 : index
    %412 = memref.load %arg0[%c57] : memref<128xi32, #tpu.memory_space<smem>>
    %c58 = arith.constant 58 : index
    %413 = memref.load %arg0[%c58] : memref<128xi32, #tpu.memory_space<smem>>
    %c59 = arith.constant 59 : index
    %414 = memref.load %arg0[%c59] : memref<128xi32, #tpu.memory_space<smem>>
    %415 = vector.broadcast %411 : i32 to vector<16x16x1xi32>
    %416 = arith.cmpi sge, %4, %415 : vector<16x16x1xi32>
    %417 = vector.broadcast %412 : i32 to vector<16x16x1xi32>
    %418 = arith.cmpi slt, %4, %417 : vector<16x16x1xi32>
    %419 = arith.andi %416, %418 : vector<16x16x1xi1>
    %420 = vector.broadcast %413 : i32 to vector<16x16x1xi32>
    %421 = arith.cmpi sge, %5, %420 : vector<16x16x1xi32>
    %422 = arith.andi %419, %421 : vector<16x16x1xi1>
    %423 = vector.broadcast %414 : i32 to vector<16x16x1xi32>
    %424 = arith.cmpi slt, %5, %423 : vector<16x16x1xi32>
    %425 = arith.andi %422, %424 : vector<16x16x1xi1>
    %cst_76 = arith.constant -3.000000e+38 : f32
    %426 = vector.shape_cast %425 : vector<16x16x1xi1> to vector<16x16x1xi1>
    %427 = vector.broadcast %426 : vector<16x16x1xi1> to vector<16x16x32xi1>
    %428 = vector.broadcast %cst_76 : f32 to vector<16x16x32xf32>
    %429 = arith.select %427, %1, %428 : vector<16x16x32xi1>, vector<16x16x32xf32>
    %cst_77 = arith.constant dense<0xFF800000> : vector<16x32xf32>
    %430 = vector.multi_reduction <maximumf>, %429, %cst_77 [0] : vector<16x16x32xf32> to vector<16x32xf32>
    %cst_78 = arith.constant dense<0xFF800000> : vector<32xf32>
    %431 = vector.multi_reduction <maximumf>, %430, %cst_78 [0] : vector<16x32xf32> to vector<32xf32>
    %432 = vector.shape_cast %431 : vector<32xf32> to vector<1x32xf32>
    %433 = arith.cmpi sle, %412, %411 : i32
    %434 = arith.cmpi sle, %414, %413 : i32
    %435 = arith.ori %433, %434 : i1
    %cst_79 = arith.constant 0.000000e+00 : f32
    %436 = vector.broadcast %cst_79 : f32 to vector<1x32xf32>
    %437 = arith.select %435, %436, %432 : vector<1x32xf32>
    %438 = arith.addf %410, %437 : vector<1x32xf32>
    %c60 = arith.constant 60 : index
    %439 = memref.load %arg0[%c60] : memref<128xi32, #tpu.memory_space<smem>>
    %c61 = arith.constant 61 : index
    %440 = memref.load %arg0[%c61] : memref<128xi32, #tpu.memory_space<smem>>
    %c62 = arith.constant 62 : index
    %441 = memref.load %arg0[%c62] : memref<128xi32, #tpu.memory_space<smem>>
    %c63 = arith.constant 63 : index
    %442 = memref.load %arg0[%c63] : memref<128xi32, #tpu.memory_space<smem>>
    %443 = vector.broadcast %439 : i32 to vector<16x16x1xi32>
    %444 = arith.cmpi sge, %4, %443 : vector<16x16x1xi32>
    %445 = vector.broadcast %440 : i32 to vector<16x16x1xi32>
    %446 = arith.cmpi slt, %4, %445 : vector<16x16x1xi32>
    %447 = arith.andi %444, %446 : vector<16x16x1xi1>
    %448 = vector.broadcast %441 : i32 to vector<16x16x1xi32>
    %449 = arith.cmpi sge, %5, %448 : vector<16x16x1xi32>
    %450 = arith.andi %447, %449 : vector<16x16x1xi1>
    %451 = vector.broadcast %442 : i32 to vector<16x16x1xi32>
    %452 = arith.cmpi slt, %5, %451 : vector<16x16x1xi32>
    %453 = arith.andi %450, %452 : vector<16x16x1xi1>
    %cst_80 = arith.constant -3.000000e+38 : f32
    %454 = vector.shape_cast %453 : vector<16x16x1xi1> to vector<16x16x1xi1>
    %455 = vector.broadcast %454 : vector<16x16x1xi1> to vector<16x16x32xi1>
    %456 = vector.broadcast %cst_80 : f32 to vector<16x16x32xf32>
    %457 = arith.select %455, %1, %456 : vector<16x16x32xi1>, vector<16x16x32xf32>
    %cst_81 = arith.constant dense<0xFF800000> : vector<16x32xf32>
    %458 = vector.multi_reduction <maximumf>, %457, %cst_81 [0] : vector<16x16x32xf32> to vector<16x32xf32>
    %cst_82 = arith.constant dense<0xFF800000> : vector<32xf32>
    %459 = vector.multi_reduction <maximumf>, %458, %cst_82 [0] : vector<16x32xf32> to vector<32xf32>
    %460 = vector.shape_cast %459 : vector<32xf32> to vector<1x32xf32>
    %461 = arith.cmpi sle, %440, %439 : i32
    %462 = arith.cmpi sle, %442, %441 : i32
    %463 = arith.ori %461, %462 : i1
    %cst_83 = arith.constant 0.000000e+00 : f32
    %464 = vector.broadcast %cst_83 : f32 to vector<1x32xf32>
    %465 = arith.select %463, %464, %460 : vector<1x32xf32>
    %466 = arith.addf %438, %465 : vector<1x32xf32>
    %cst_84 = arith.constant 2.500000e-01 : f32
    %467 = vector.broadcast %cst_84 : f32 to vector<1x32xf32>
    %468 = arith.mulf %466, %467 : vector<1x32xf32>
    %c3_85 = arith.constant 3 : index
    %c0_86 = arith.constant 0 : index
    %469 = vector.load %arg10[%c3_85, %c0_86] : memref<8x32xf32, #tpu.memory_space<vmem>>, vector<1x32xf32>
    tpu.vector_store %arg10[%c3_85, %c0_86], %468 {strides = array<i32>} : memref<8x32xf32, #tpu.memory_space<vmem>>, vector<1x32xf32>,
    %cst_87 = arith.constant 0.000000e+00 : f32
    %470 = vector.broadcast %cst_87 : f32 to vector<1x32xf32>
    %c64 = arith.constant 64 : index
    %471 = memref.load %arg0[%c64] : memref<128xi32, #tpu.memory_space<smem>>
    %c65 = arith.constant 65 : index
    %472 = memref.load %arg0[%c65] : memref<128xi32, #tpu.memory_space<smem>>
    %c66 = arith.constant 66 : index
    %473 = memref.load %arg0[%c66] : memref<128xi32, #tpu.memory_space<smem>>
    %c67 = arith.constant 67 : index
    %474 = memref.load %arg0[%c67] : memref<128xi32, #tpu.memory_space<smem>>
    %475 = vector.broadcast %471 : i32 to vector<16x16x1xi32>
    %476 = arith.cmpi sge, %4, %475 : vector<16x16x1xi32>
    %477 = vector.broadcast %472 : i32 to vector<16x16x1xi32>
    %478 = arith.cmpi slt, %4, %477 : vector<16x16x1xi32>
    %479 = arith.andi %476, %478 : vector<16x16x1xi1>
    %480 = vector.broadcast %473 : i32 to vector<16x16x1xi32>
    %481 = arith.cmpi sge, %5, %480 : vector<16x16x1xi32>
    %482 = arith.andi %479, %481 : vector<16x16x1xi1>
    %483 = vector.broadcast %474 : i32 to vector<16x16x1xi32>
    %484 = arith.cmpi slt, %5, %483 : vector<16x16x1xi32>
    %485 = arith.andi %482, %484 : vector<16x16x1xi1>
    %cst_88 = arith.constant -3.000000e+38 : f32
    %486 = vector.shape_cast %485 : vector<16x16x1xi1> to vector<16x16x1xi1>
    %487 = vector.broadcast %486 : vector<16x16x1xi1> to vector<16x16x32xi1>
    %488 = vector.broadcast %cst_88 : f32 to vector<16x16x32xf32>
    %489 = arith.select %487, %3, %488 : vector<16x16x32xi1>, vector<16x16x32xf32>
    %cst_89 = arith.constant dense<0xFF800000> : vector<16x32xf32>
    %490 = vector.multi_reduction <maximumf>, %489, %cst_89 [0] : vector<16x16x32xf32> to vector<16x32xf32>
    %cst_90 = arith.constant dense<0xFF800000> : vector<32xf32>
    %491 = vector.multi_reduction <maximumf>, %490, %cst_90 [0] : vector<16x32xf32> to vector<32xf32>
    %492 = vector.shape_cast %491 : vector<32xf32> to vector<1x32xf32>
    %493 = arith.cmpi sle, %472, %471 : i32
    %494 = arith.cmpi sle, %474, %473 : i32
    %495 = arith.ori %493, %494 : i1
    %cst_91 = arith.constant 0.000000e+00 : f32
    %496 = vector.broadcast %cst_91 : f32 to vector<1x32xf32>
    %497 = arith.select %495, %496, %492 : vector<1x32xf32>
    %498 = arith.addf %470, %497 : vector<1x32xf32>
    %c68 = arith.constant 68 : index
    %499 = memref.load %arg0[%c68] : memref<128xi32, #tpu.memory_space<smem>>
    %c69 = arith.constant 69 : index
    %500 = memref.load %arg0[%c69] : memref<128xi32, #tpu.memory_space<smem>>
    %c70 = arith.constant 70 : index
    %501 = memref.load %arg0[%c70] : memref<128xi32, #tpu.memory_space<smem>>
    %c71 = arith.constant 71 : index
    %502 = memref.load %arg0[%c71] : memref<128xi32, #tpu.memory_space<smem>>
    %503 = vector.broadcast %499 : i32 to vector<16x16x1xi32>
    %504 = arith.cmpi sge, %4, %503 : vector<16x16x1xi32>
    %505 = vector.broadcast %500 : i32 to vector<16x16x1xi32>
    %506 = arith.cmpi slt, %4, %505 : vector<16x16x1xi32>
    %507 = arith.andi %504, %506 : vector<16x16x1xi1>
    %508 = vector.broadcast %501 : i32 to vector<16x16x1xi32>
    %509 = arith.cmpi sge, %5, %508 : vector<16x16x1xi32>
    %510 = arith.andi %507, %509 : vector<16x16x1xi1>
    %511 = vector.broadcast %502 : i32 to vector<16x16x1xi32>
    %512 = arith.cmpi slt, %5, %511 : vector<16x16x1xi32>
    %513 = arith.andi %510, %512 : vector<16x16x1xi1>
    %cst_92 = arith.constant -3.000000e+38 : f32
    %514 = vector.shape_cast %513 : vector<16x16x1xi1> to vector<16x16x1xi1>
    %515 = vector.broadcast %514 : vector<16x16x1xi1> to vector<16x16x32xi1>
    %516 = vector.broadcast %cst_92 : f32 to vector<16x16x32xf32>
    %517 = arith.select %515, %3, %516 : vector<16x16x32xi1>, vector<16x16x32xf32>
    %cst_93 = arith.constant dense<0xFF800000> : vector<16x32xf32>
    %518 = vector.multi_reduction <maximumf>, %517, %cst_93 [0] : vector<16x16x32xf32> to vector<16x32xf32>
    %cst_94 = arith.constant dense<0xFF800000> : vector<32xf32>
    %519 = vector.multi_reduction <maximumf>, %518, %cst_94 [0] : vector<16x32xf32> to vector<32xf32>
    %520 = vector.shape_cast %519 : vector<32xf32> to vector<1x32xf32>
    %521 = arith.cmpi sle, %500, %499 : i32
    %522 = arith.cmpi sle, %502, %501 : i32
    %523 = arith.ori %521, %522 : i1
    %cst_95 = arith.constant 0.000000e+00 : f32
    %524 = vector.broadcast %cst_95 : f32 to vector<1x32xf32>
    %525 = arith.select %523, %524, %520 : vector<1x32xf32>
    %526 = arith.addf %498, %525 : vector<1x32xf32>
    %c72 = arith.constant 72 : index
    %527 = memref.load %arg0[%c72] : memref<128xi32, #tpu.memory_space<smem>>
    %c73 = arith.constant 73 : index
    %528 = memref.load %arg0[%c73] : memref<128xi32, #tpu.memory_space<smem>>
    %c74 = arith.constant 74 : index
    %529 = memref.load %arg0[%c74] : memref<128xi32, #tpu.memory_space<smem>>
    %c75 = arith.constant 75 : index
    %530 = memref.load %arg0[%c75] : memref<128xi32, #tpu.memory_space<smem>>
    %531 = vector.broadcast %527 : i32 to vector<16x16x1xi32>
    %532 = arith.cmpi sge, %4, %531 : vector<16x16x1xi32>
    %533 = vector.broadcast %528 : i32 to vector<16x16x1xi32>
    %534 = arith.cmpi slt, %4, %533 : vector<16x16x1xi32>
    %535 = arith.andi %532, %534 : vector<16x16x1xi1>
    %536 = vector.broadcast %529 : i32 to vector<16x16x1xi32>
    %537 = arith.cmpi sge, %5, %536 : vector<16x16x1xi32>
    %538 = arith.andi %535, %537 : vector<16x16x1xi1>
    %539 = vector.broadcast %530 : i32 to vector<16x16x1xi32>
    %540 = arith.cmpi slt, %5, %539 : vector<16x16x1xi32>
    %541 = arith.andi %538, %540 : vector<16x16x1xi1>
    %cst_96 = arith.constant -3.000000e+38 : f32
    %542 = vector.shape_cast %541 : vector<16x16x1xi1> to vector<16x16x1xi1>
    %543 = vector.broadcast %542 : vector<16x16x1xi1> to vector<16x16x32xi1>
    %544 = vector.broadcast %cst_96 : f32 to vector<16x16x32xf32>
    %545 = arith.select %543, %3, %544 : vector<16x16x32xi1>, vector<16x16x32xf32>
    %cst_97 = arith.constant dense<0xFF800000> : vector<16x32xf32>
    %546 = vector.multi_reduction <maximumf>, %545, %cst_97 [0] : vector<16x16x32xf32> to vector<16x32xf32>
    %cst_98 = arith.constant dense<0xFF800000> : vector<32xf32>
    %547 = vector.multi_reduction <maximumf>, %546, %cst_98 [0] : vector<16x32xf32> to vector<32xf32>
    %548 = vector.shape_cast %547 : vector<32xf32> to vector<1x32xf32>
    %549 = arith.cmpi sle, %528, %527 : i32
    %550 = arith.cmpi sle, %530, %529 : i32
    %551 = arith.ori %549, %550 : i1
    %cst_99 = arith.constant 0.000000e+00 : f32
    %552 = vector.broadcast %cst_99 : f32 to vector<1x32xf32>
    %553 = arith.select %551, %552, %548 : vector<1x32xf32>
    %554 = arith.addf %526, %553 : vector<1x32xf32>
    %c76 = arith.constant 76 : index
    %555 = memref.load %arg0[%c76] : memref<128xi32, #tpu.memory_space<smem>>
    %c77 = arith.constant 77 : index
    %556 = memref.load %arg0[%c77] : memref<128xi32, #tpu.memory_space<smem>>
    %c78 = arith.constant 78 : index
    %557 = memref.load %arg0[%c78] : memref<128xi32, #tpu.memory_space<smem>>
    %c79 = arith.constant 79 : index
    %558 = memref.load %arg0[%c79] : memref<128xi32, #tpu.memory_space<smem>>
    %559 = vector.broadcast %555 : i32 to vector<16x16x1xi32>
    %560 = arith.cmpi sge, %4, %559 : vector<16x16x1xi32>
    %561 = vector.broadcast %556 : i32 to vector<16x16x1xi32>
    %562 = arith.cmpi slt, %4, %561 : vector<16x16x1xi32>
    %563 = arith.andi %560, %562 : vector<16x16x1xi1>
    %564 = vector.broadcast %557 : i32 to vector<16x16x1xi32>
    %565 = arith.cmpi sge, %5, %564 : vector<16x16x1xi32>
    %566 = arith.andi %563, %565 : vector<16x16x1xi1>
    %567 = vector.broadcast %558 : i32 to vector<16x16x1xi32>
    %568 = arith.cmpi slt, %5, %567 : vector<16x16x1xi32>
    %569 = arith.andi %566, %568 : vector<16x16x1xi1>
    %cst_100 = arith.constant -3.000000e+38 : f32
    %570 = vector.shape_cast %569 : vector<16x16x1xi1> to vector<16x16x1xi1>
    %571 = vector.broadcast %570 : vector<16x16x1xi1> to vector<16x16x32xi1>
    %572 = vector.broadcast %cst_100 : f32 to vector<16x16x32xf32>
    %573 = arith.select %571, %3, %572 : vector<16x16x32xi1>, vector<16x16x32xf32>
    %cst_101 = arith.constant dense<0xFF800000> : vector<16x32xf32>
    %574 = vector.multi_reduction <maximumf>, %573, %cst_101 [0] : vector<16x16x32xf32> to vector<16x32xf32>
    %cst_102 = arith.constant dense<0xFF800000> : vector<32xf32>
    %575 = vector.multi_reduction <maximumf>, %574, %cst_102 [0] : vector<16x32xf32> to vector<32xf32>
    %576 = vector.shape_cast %575 : vector<32xf32> to vector<1x32xf32>
    %577 = arith.cmpi sle, %556, %555 : i32
    %578 = arith.cmpi sle, %558, %557 : i32
    %579 = arith.ori %577, %578 : i1
    %cst_103 = arith.constant 0.000000e+00 : f32
    %580 = vector.broadcast %cst_103 : f32 to vector<1x32xf32>
    %581 = arith.select %579, %580, %576 : vector<1x32xf32>
    %582 = arith.addf %554, %581 : vector<1x32xf32>
    %cst_104 = arith.constant 2.500000e-01 : f32
    %583 = vector.broadcast %cst_104 : f32 to vector<1x32xf32>
    %584 = arith.mulf %582, %583 : vector<1x32xf32>
    %c4_105 = arith.constant 4 : index
    %c0_106 = arith.constant 0 : index
    %585 = vector.load %arg10[%c4_105, %c0_106] : memref<8x32xf32, #tpu.memory_space<vmem>>, vector<1x32xf32>
    tpu.vector_store %arg10[%c4_105, %c0_106], %584 {strides = array<i32>} : memref<8x32xf32, #tpu.memory_space<vmem>>, vector<1x32xf32>,
    %cst_107 = arith.constant 0.000000e+00 : f32
    %586 = vector.broadcast %cst_107 : f32 to vector<1x32xf32>
    %c80 = arith.constant 80 : index
    %587 = memref.load %arg0[%c80] : memref<128xi32, #tpu.memory_space<smem>>
    %c81 = arith.constant 81 : index
    %588 = memref.load %arg0[%c81] : memref<128xi32, #tpu.memory_space<smem>>
    %c82 = arith.constant 82 : index
    %589 = memref.load %arg0[%c82] : memref<128xi32, #tpu.memory_space<smem>>
    %c83 = arith.constant 83 : index
    %590 = memref.load %arg0[%c83] : memref<128xi32, #tpu.memory_space<smem>>
    %591 = vector.broadcast %587 : i32 to vector<16x16x1xi32>
    %592 = arith.cmpi sge, %4, %591 : vector<16x16x1xi32>
    %593 = vector.broadcast %588 : i32 to vector<16x16x1xi32>
    %594 = arith.cmpi slt, %4, %593 : vector<16x16x1xi32>
    %595 = arith.andi %592, %594 : vector<16x16x1xi1>
    %596 = vector.broadcast %589 : i32 to vector<16x16x1xi32>
    %597 = arith.cmpi sge, %5, %596 : vector<16x16x1xi32>
    %598 = arith.andi %595, %597 : vector<16x16x1xi1>
    %599 = vector.broadcast %590 : i32 to vector<16x16x1xi32>
    %600 = arith.cmpi slt, %5, %599 : vector<16x16x1xi32>
    %601 = arith.andi %598, %600 : vector<16x16x1xi1>
    %cst_108 = arith.constant -3.000000e+38 : f32
    %602 = vector.shape_cast %601 : vector<16x16x1xi1> to vector<16x16x1xi1>
    %603 = vector.broadcast %602 : vector<16x16x1xi1> to vector<16x16x32xi1>
    %604 = vector.broadcast %cst_108 : f32 to vector<16x16x32xf32>
    %605 = arith.select %603, %3, %604 : vector<16x16x32xi1>, vector<16x16x32xf32>
    %cst_109 = arith.constant dense<0xFF800000> : vector<16x32xf32>
    %606 = vector.multi_reduction <maximumf>, %605, %cst_109 [0] : vector<16x16x32xf32> to vector<16x32xf32>
    %cst_110 = arith.constant dense<0xFF800000> : vector<32xf32>
    %607 = vector.multi_reduction <maximumf>, %606, %cst_110 [0] : vector<16x32xf32> to vector<32xf32>
    %608 = vector.shape_cast %607 : vector<32xf32> to vector<1x32xf32>
    %609 = arith.cmpi sle, %588, %587 : i32
    %610 = arith.cmpi sle, %590, %589 : i32
    %611 = arith.ori %609, %610 : i1
    %cst_111 = arith.constant 0.000000e+00 : f32
    %612 = vector.broadcast %cst_111 : f32 to vector<1x32xf32>
    %613 = arith.select %611, %612, %608 : vector<1x32xf32>
    %614 = arith.addf %586, %613 : vector<1x32xf32>
    %c84 = arith.constant 84 : index
    %615 = memref.load %arg0[%c84] : memref<128xi32, #tpu.memory_space<smem>>
    %c85 = arith.constant 85 : index
    %616 = memref.load %arg0[%c85] : memref<128xi32, #tpu.memory_space<smem>>
    %c86 = arith.constant 86 : index
    %617 = memref.load %arg0[%c86] : memref<128xi32, #tpu.memory_space<smem>>
    %c87 = arith.constant 87 : index
    %618 = memref.load %arg0[%c87] : memref<128xi32, #tpu.memory_space<smem>>
    %619 = vector.broadcast %615 : i32 to vector<16x16x1xi32>
    %620 = arith.cmpi sge, %4, %619 : vector<16x16x1xi32>
    %621 = vector.broadcast %616 : i32 to vector<16x16x1xi32>
    %622 = arith.cmpi slt, %4, %621 : vector<16x16x1xi32>
    %623 = arith.andi %620, %622 : vector<16x16x1xi1>
    %624 = vector.broadcast %617 : i32 to vector<16x16x1xi32>
    %625 = arith.cmpi sge, %5, %624 : vector<16x16x1xi32>
    %626 = arith.andi %623, %625 : vector<16x16x1xi1>
    %627 = vector.broadcast %618 : i32 to vector<16x16x1xi32>
    %628 = arith.cmpi slt, %5, %627 : vector<16x16x1xi32>
    %629 = arith.andi %626, %628 : vector<16x16x1xi1>
    %cst_112 = arith.constant -3.000000e+38 : f32
    %630 = vector.shape_cast %629 : vector<16x16x1xi1> to vector<16x16x1xi1>
    %631 = vector.broadcast %630 : vector<16x16x1xi1> to vector<16x16x32xi1>
    %632 = vector.broadcast %cst_112 : f32 to vector<16x16x32xf32>
    %633 = arith.select %631, %3, %632 : vector<16x16x32xi1>, vector<16x16x32xf32>
    %cst_113 = arith.constant dense<0xFF800000> : vector<16x32xf32>
    %634 = vector.multi_reduction <maximumf>, %633, %cst_113 [0] : vector<16x16x32xf32> to vector<16x32xf32>
    %cst_114 = arith.constant dense<0xFF800000> : vector<32xf32>
    %635 = vector.multi_reduction <maximumf>, %634, %cst_114 [0] : vector<16x32xf32> to vector<32xf32>
    %636 = vector.shape_cast %635 : vector<32xf32> to vector<1x32xf32>
    %637 = arith.cmpi sle, %616, %615 : i32
    %638 = arith.cmpi sle, %618, %617 : i32
    %639 = arith.ori %637, %638 : i1
    %cst_115 = arith.constant 0.000000e+00 : f32
    %640 = vector.broadcast %cst_115 : f32 to vector<1x32xf32>
    %641 = arith.select %639, %640, %636 : vector<1x32xf32>
    %642 = arith.addf %614, %641 : vector<1x32xf32>
    %c88 = arith.constant 88 : index
    %643 = memref.load %arg0[%c88] : memref<128xi32, #tpu.memory_space<smem>>
    %c89 = arith.constant 89 : index
    %644 = memref.load %arg0[%c89] : memref<128xi32, #tpu.memory_space<smem>>
    %c90 = arith.constant 90 : index
    %645 = memref.load %arg0[%c90] : memref<128xi32, #tpu.memory_space<smem>>
    %c91 = arith.constant 91 : index
    %646 = memref.load %arg0[%c91] : memref<128xi32, #tpu.memory_space<smem>>
    %647 = vector.broadcast %643 : i32 to vector<16x16x1xi32>
    %648 = arith.cmpi sge, %4, %647 : vector<16x16x1xi32>
    %649 = vector.broadcast %644 : i32 to vector<16x16x1xi32>
    %650 = arith.cmpi slt, %4, %649 : vector<16x16x1xi32>
    %651 = arith.andi %648, %650 : vector<16x16x1xi1>
    %652 = vector.broadcast %645 : i32 to vector<16x16x1xi32>
    %653 = arith.cmpi sge, %5, %652 : vector<16x16x1xi32>
    %654 = arith.andi %651, %653 : vector<16x16x1xi1>
    %655 = vector.broadcast %646 : i32 to vector<16x16x1xi32>
    %656 = arith.cmpi slt, %5, %655 : vector<16x16x1xi32>
    %657 = arith.andi %654, %656 : vector<16x16x1xi1>
    %cst_116 = arith.constant -3.000000e+38 : f32
    %658 = vector.shape_cast %657 : vector<16x16x1xi1> to vector<16x16x1xi1>
    %659 = vector.broadcast %658 : vector<16x16x1xi1> to vector<16x16x32xi1>
    %660 = vector.broadcast %cst_116 : f32 to vector<16x16x32xf32>
    %661 = arith.select %659, %3, %660 : vector<16x16x32xi1>, vector<16x16x32xf32>
    %cst_117 = arith.constant dense<0xFF800000> : vector<16x32xf32>
    %662 = vector.multi_reduction <maximumf>, %661, %cst_117 [0] : vector<16x16x32xf32> to vector<16x32xf32>
    %cst_118 = arith.constant dense<0xFF800000> : vector<32xf32>
    %663 = vector.multi_reduction <maximumf>, %662, %cst_118 [0] : vector<16x32xf32> to vector<32xf32>
    %664 = vector.shape_cast %663 : vector<32xf32> to vector<1x32xf32>
    %665 = arith.cmpi sle, %644, %643 : i32
    %666 = arith.cmpi sle, %646, %645 : i32
    %667 = arith.ori %665, %666 : i1
    %cst_119 = arith.constant 0.000000e+00 : f32
    %668 = vector.broadcast %cst_119 : f32 to vector<1x32xf32>
    %669 = arith.select %667, %668, %664 : vector<1x32xf32>
    %670 = arith.addf %642, %669 : vector<1x32xf32>
    %c92 = arith.constant 92 : index
    %671 = memref.load %arg0[%c92] : memref<128xi32, #tpu.memory_space<smem>>
    %c93 = arith.constant 93 : index
    %672 = memref.load %arg0[%c93] : memref<128xi32, #tpu.memory_space<smem>>
    %c94 = arith.constant 94 : index
    %673 = memref.load %arg0[%c94] : memref<128xi32, #tpu.memory_space<smem>>
    %c95 = arith.constant 95 : index
    %674 = memref.load %arg0[%c95] : memref<128xi32, #tpu.memory_space<smem>>
    %675 = vector.broadcast %671 : i32 to vector<16x16x1xi32>
    %676 = arith.cmpi sge, %4, %675 : vector<16x16x1xi32>
    %677 = vector.broadcast %672 : i32 to vector<16x16x1xi32>
    %678 = arith.cmpi slt, %4, %677 : vector<16x16x1xi32>
    %679 = arith.andi %676, %678 : vector<16x16x1xi1>
    %680 = vector.broadcast %673 : i32 to vector<16x16x1xi32>
    %681 = arith.cmpi sge, %5, %680 : vector<16x16x1xi32>
    %682 = arith.andi %679, %681 : vector<16x16x1xi1>
    %683 = vector.broadcast %674 : i32 to vector<16x16x1xi32>
    %684 = arith.cmpi slt, %5, %683 : vector<16x16x1xi32>
    %685 = arith.andi %682, %684 : vector<16x16x1xi1>
    %cst_120 = arith.constant -3.000000e+38 : f32
    %686 = vector.shape_cast %685 : vector<16x16x1xi1> to vector<16x16x1xi1>
    %687 = vector.broadcast %686 : vector<16x16x1xi1> to vector<16x16x32xi1>
    %688 = vector.broadcast %cst_120 : f32 to vector<16x16x32xf32>
    %689 = arith.select %687, %3, %688 : vector<16x16x32xi1>, vector<16x16x32xf32>
    %cst_121 = arith.constant dense<0xFF800000> : vector<16x32xf32>
    %690 = vector.multi_reduction <maximumf>, %689, %cst_121 [0] : vector<16x16x32xf32> to vector<16x32xf32>
    %cst_122 = arith.constant dense<0xFF800000> : vector<32xf32>
    %691 = vector.multi_reduction <maximumf>, %690, %cst_122 [0] : vector<16x32xf32> to vector<32xf32>
    %692 = vector.shape_cast %691 : vector<32xf32> to vector<1x32xf32>
    %693 = arith.cmpi sle, %672, %671 : i32
    %694 = arith.cmpi sle, %674, %673 : i32
    %695 = arith.ori %693, %694 : i1
    %cst_123 = arith.constant 0.000000e+00 : f32
    %696 = vector.broadcast %cst_123 : f32 to vector<1x32xf32>
    %697 = arith.select %695, %696, %692 : vector<1x32xf32>
    %698 = arith.addf %670, %697 : vector<1x32xf32>
    %cst_124 = arith.constant 2.500000e-01 : f32
    %699 = vector.broadcast %cst_124 : f32 to vector<1x32xf32>
    %700 = arith.mulf %698, %699 : vector<1x32xf32>
    %c5_125 = arith.constant 5 : index
    %c0_126 = arith.constant 0 : index
    %701 = vector.load %arg10[%c5_125, %c0_126] : memref<8x32xf32, #tpu.memory_space<vmem>>, vector<1x32xf32>
    tpu.vector_store %arg10[%c5_125, %c0_126], %700 {strides = array<i32>} : memref<8x32xf32, #tpu.memory_space<vmem>>, vector<1x32xf32>,
    %cst_127 = arith.constant 0.000000e+00 : f32
    %702 = vector.broadcast %cst_127 : f32 to vector<1x32xf32>
    %c96 = arith.constant 96 : index
    %703 = memref.load %arg0[%c96] : memref<128xi32, #tpu.memory_space<smem>>
    %c97 = arith.constant 97 : index
    %704 = memref.load %arg0[%c97] : memref<128xi32, #tpu.memory_space<smem>>
    %c98 = arith.constant 98 : index
    %705 = memref.load %arg0[%c98] : memref<128xi32, #tpu.memory_space<smem>>
    %c99 = arith.constant 99 : index
    %706 = memref.load %arg0[%c99] : memref<128xi32, #tpu.memory_space<smem>>
    %707 = vector.broadcast %703 : i32 to vector<16x16x1xi32>
    %708 = arith.cmpi sge, %4, %707 : vector<16x16x1xi32>
    %709 = vector.broadcast %704 : i32 to vector<16x16x1xi32>
    %710 = arith.cmpi slt, %4, %709 : vector<16x16x1xi32>
    %711 = arith.andi %708, %710 : vector<16x16x1xi1>
    %712 = vector.broadcast %705 : i32 to vector<16x16x1xi32>
    %713 = arith.cmpi sge, %5, %712 : vector<16x16x1xi32>
    %714 = arith.andi %711, %713 : vector<16x16x1xi1>
    %715 = vector.broadcast %706 : i32 to vector<16x16x1xi32>
    %716 = arith.cmpi slt, %5, %715 : vector<16x16x1xi32>
    %717 = arith.andi %714, %716 : vector<16x16x1xi1>
    %cst_128 = arith.constant -3.000000e+38 : f32
    %718 = vector.shape_cast %717 : vector<16x16x1xi1> to vector<16x16x1xi1>
    %719 = vector.broadcast %718 : vector<16x16x1xi1> to vector<16x16x32xi1>
    %720 = vector.broadcast %cst_128 : f32 to vector<16x16x32xf32>
    %721 = arith.select %719, %3, %720 : vector<16x16x32xi1>, vector<16x16x32xf32>
    %cst_129 = arith.constant dense<0xFF800000> : vector<16x32xf32>
    %722 = vector.multi_reduction <maximumf>, %721, %cst_129 [0] : vector<16x16x32xf32> to vector<16x32xf32>
    %cst_130 = arith.constant dense<0xFF800000> : vector<32xf32>
    %723 = vector.multi_reduction <maximumf>, %722, %cst_130 [0] : vector<16x32xf32> to vector<32xf32>
    %724 = vector.shape_cast %723 : vector<32xf32> to vector<1x32xf32>
    %725 = arith.cmpi sle, %704, %703 : i32
    %726 = arith.cmpi sle, %706, %705 : i32
    %727 = arith.ori %725, %726 : i1
    %cst_131 = arith.constant 0.000000e+00 : f32
    %728 = vector.broadcast %cst_131 : f32 to vector<1x32xf32>
    %729 = arith.select %727, %728, %724 : vector<1x32xf32>
    %730 = arith.addf %702, %729 : vector<1x32xf32>
    %c100 = arith.constant 100 : index
    %731 = memref.load %arg0[%c100] : memref<128xi32, #tpu.memory_space<smem>>
    %c101 = arith.constant 101 : index
    %732 = memref.load %arg0[%c101] : memref<128xi32, #tpu.memory_space<smem>>
    %c102 = arith.constant 102 : index
    %733 = memref.load %arg0[%c102] : memref<128xi32, #tpu.memory_space<smem>>
    %c103 = arith.constant 103 : index
    %734 = memref.load %arg0[%c103] : memref<128xi32, #tpu.memory_space<smem>>
    %735 = vector.broadcast %731 : i32 to vector<16x16x1xi32>
    %736 = arith.cmpi sge, %4, %735 : vector<16x16x1xi32>
    %737 = vector.broadcast %732 : i32 to vector<16x16x1xi32>
    %738 = arith.cmpi slt, %4, %737 : vector<16x16x1xi32>
    %739 = arith.andi %736, %738 : vector<16x16x1xi1>
    %740 = vector.broadcast %733 : i32 to vector<16x16x1xi32>
    %741 = arith.cmpi sge, %5, %740 : vector<16x16x1xi32>
    %742 = arith.andi %739, %741 : vector<16x16x1xi1>
    %743 = vector.broadcast %734 : i32 to vector<16x16x1xi32>
    %744 = arith.cmpi slt, %5, %743 : vector<16x16x1xi32>
    %745 = arith.andi %742, %744 : vector<16x16x1xi1>
    %cst_132 = arith.constant -3.000000e+38 : f32
    %746 = vector.shape_cast %745 : vector<16x16x1xi1> to vector<16x16x1xi1>
    %747 = vector.broadcast %746 : vector<16x16x1xi1> to vector<16x16x32xi1>
    %748 = vector.broadcast %cst_132 : f32 to vector<16x16x32xf32>
    %749 = arith.select %747, %3, %748 : vector<16x16x32xi1>, vector<16x16x32xf32>
    %cst_133 = arith.constant dense<0xFF800000> : vector<16x32xf32>
    %750 = vector.multi_reduction <maximumf>, %749, %cst_133 [0] : vector<16x16x32xf32> to vector<16x32xf32>
    %cst_134 = arith.constant dense<0xFF800000> : vector<32xf32>
    %751 = vector.multi_reduction <maximumf>, %750, %cst_134 [0] : vector<16x32xf32> to vector<32xf32>
    %752 = vector.shape_cast %751 : vector<32xf32> to vector<1x32xf32>
    %753 = arith.cmpi sle, %732, %731 : i32
    %754 = arith.cmpi sle, %734, %733 : i32
    %755 = arith.ori %753, %754 : i1
    %cst_135 = arith.constant 0.000000e+00 : f32
    %756 = vector.broadcast %cst_135 : f32 to vector<1x32xf32>
    %757 = arith.select %755, %756, %752 : vector<1x32xf32>
    %758 = arith.addf %730, %757 : vector<1x32xf32>
    %c104 = arith.constant 104 : index
    %759 = memref.load %arg0[%c104] : memref<128xi32, #tpu.memory_space<smem>>
    %c105 = arith.constant 105 : index
    %760 = memref.load %arg0[%c105] : memref<128xi32, #tpu.memory_space<smem>>
    %c106 = arith.constant 106 : index
    %761 = memref.load %arg0[%c106] : memref<128xi32, #tpu.memory_space<smem>>
    %c107 = arith.constant 107 : index
    %762 = memref.load %arg0[%c107] : memref<128xi32, #tpu.memory_space<smem>>
    %763 = vector.broadcast %759 : i32 to vector<16x16x1xi32>
    %764 = arith.cmpi sge, %4, %763 : vector<16x16x1xi32>
    %765 = vector.broadcast %760 : i32 to vector<16x16x1xi32>
    %766 = arith.cmpi slt, %4, %765 : vector<16x16x1xi32>
    %767 = arith.andi %764, %766 : vector<16x16x1xi1>
    %768 = vector.broadcast %761 : i32 to vector<16x16x1xi32>
    %769 = arith.cmpi sge, %5, %768 : vector<16x16x1xi32>
    %770 = arith.andi %767, %769 : vector<16x16x1xi1>
    %771 = vector.broadcast %762 : i32 to vector<16x16x1xi32>
    %772 = arith.cmpi slt, %5, %771 : vector<16x16x1xi32>
    %773 = arith.andi %770, %772 : vector<16x16x1xi1>
    %cst_136 = arith.constant -3.000000e+38 : f32
    %774 = vector.shape_cast %773 : vector<16x16x1xi1> to vector<16x16x1xi1>
    %775 = vector.broadcast %774 : vector<16x16x1xi1> to vector<16x16x32xi1>
    %776 = vector.broadcast %cst_136 : f32 to vector<16x16x32xf32>
    %777 = arith.select %775, %3, %776 : vector<16x16x32xi1>, vector<16x16x32xf32>
    %cst_137 = arith.constant dense<0xFF800000> : vector<16x32xf32>
    %778 = vector.multi_reduction <maximumf>, %777, %cst_137 [0] : vector<16x16x32xf32> to vector<16x32xf32>
    %cst_138 = arith.constant dense<0xFF800000> : vector<32xf32>
    %779 = vector.multi_reduction <maximumf>, %778, %cst_138 [0] : vector<16x32xf32> to vector<32xf32>
    %780 = vector.shape_cast %779 : vector<32xf32> to vector<1x32xf32>
    %781 = arith.cmpi sle, %760, %759 : i32
    %782 = arith.cmpi sle, %762, %761 : i32
    %783 = arith.ori %781, %782 : i1
    %cst_139 = arith.constant 0.000000e+00 : f32
    %784 = vector.broadcast %cst_139 : f32 to vector<1x32xf32>
    %785 = arith.select %783, %784, %780 : vector<1x32xf32>
    %786 = arith.addf %758, %785 : vector<1x32xf32>
    %c108 = arith.constant 108 : index
    %787 = memref.load %arg0[%c108] : memref<128xi32, #tpu.memory_space<smem>>
    %c109 = arith.constant 109 : index
    %788 = memref.load %arg0[%c109] : memref<128xi32, #tpu.memory_space<smem>>
    %c110 = arith.constant 110 : index
    %789 = memref.load %arg0[%c110] : memref<128xi32, #tpu.memory_space<smem>>
    %c111 = arith.constant 111 : index
    %790 = memref.load %arg0[%c111] : memref<128xi32, #tpu.memory_space<smem>>
    %791 = vector.broadcast %787 : i32 to vector<16x16x1xi32>
    %792 = arith.cmpi sge, %4, %791 : vector<16x16x1xi32>
    %793 = vector.broadcast %788 : i32 to vector<16x16x1xi32>
    %794 = arith.cmpi slt, %4, %793 : vector<16x16x1xi32>
    %795 = arith.andi %792, %794 : vector<16x16x1xi1>
    %796 = vector.broadcast %789 : i32 to vector<16x16x1xi32>
    %797 = arith.cmpi sge, %5, %796 : vector<16x16x1xi32>
    %798 = arith.andi %795, %797 : vector<16x16x1xi1>
    %799 = vector.broadcast %790 : i32 to vector<16x16x1xi32>
    %800 = arith.cmpi slt, %5, %799 : vector<16x16x1xi32>
    %801 = arith.andi %798, %800 : vector<16x16x1xi1>
    %cst_140 = arith.constant -3.000000e+38 : f32
    %802 = vector.shape_cast %801 : vector<16x16x1xi1> to vector<16x16x1xi1>
    %803 = vector.broadcast %802 : vector<16x16x1xi1> to vector<16x16x32xi1>
    %804 = vector.broadcast %cst_140 : f32 to vector<16x16x32xf32>
    %805 = arith.select %803, %3, %804 : vector<16x16x32xi1>, vector<16x16x32xf32>
    %cst_141 = arith.constant dense<0xFF800000> : vector<16x32xf32>
    %806 = vector.multi_reduction <maximumf>, %805, %cst_141 [0] : vector<16x16x32xf32> to vector<16x32xf32>
    %cst_142 = arith.constant dense<0xFF800000> : vector<32xf32>
    %807 = vector.multi_reduction <maximumf>, %806, %cst_142 [0] : vector<16x32xf32> to vector<32xf32>
    %808 = vector.shape_cast %807 : vector<32xf32> to vector<1x32xf32>
    %809 = arith.cmpi sle, %788, %787 : i32
    %810 = arith.cmpi sle, %790, %789 : i32
    %811 = arith.ori %809, %810 : i1
    %cst_143 = arith.constant 0.000000e+00 : f32
    %812 = vector.broadcast %cst_143 : f32 to vector<1x32xf32>
    %813 = arith.select %811, %812, %808 : vector<1x32xf32>
    %814 = arith.addf %786, %813 : vector<1x32xf32>
    %cst_144 = arith.constant 2.500000e-01 : f32
    %815 = vector.broadcast %cst_144 : f32 to vector<1x32xf32>
    %816 = arith.mulf %814, %815 : vector<1x32xf32>
    %c6_145 = arith.constant 6 : index
    %c0_146 = arith.constant 0 : index
    %817 = vector.load %arg10[%c6_145, %c0_146] : memref<8x32xf32, #tpu.memory_space<vmem>>, vector<1x32xf32>
    tpu.vector_store %arg10[%c6_145, %c0_146], %816 {strides = array<i32>} : memref<8x32xf32, #tpu.memory_space<vmem>>, vector<1x32xf32>,
    %cst_147 = arith.constant 0.000000e+00 : f32
    %818 = vector.broadcast %cst_147 : f32 to vector<1x32xf32>
    %c112 = arith.constant 112 : index
    %819 = memref.load %arg0[%c112] : memref<128xi32, #tpu.memory_space<smem>>
    %c113 = arith.constant 113 : index
    %820 = memref.load %arg0[%c113] : memref<128xi32, #tpu.memory_space<smem>>
    %c114 = arith.constant 114 : index
    %821 = memref.load %arg0[%c114] : memref<128xi32, #tpu.memory_space<smem>>
    %c115 = arith.constant 115 : index
    %822 = memref.load %arg0[%c115] : memref<128xi32, #tpu.memory_space<smem>>
    %823 = vector.broadcast %819 : i32 to vector<16x16x1xi32>
    %824 = arith.cmpi sge, %4, %823 : vector<16x16x1xi32>
    %825 = vector.broadcast %820 : i32 to vector<16x16x1xi32>
    %826 = arith.cmpi slt, %4, %825 : vector<16x16x1xi32>
    %827 = arith.andi %824, %826 : vector<16x16x1xi1>
    %828 = vector.broadcast %821 : i32 to vector<16x16x1xi32>
    %829 = arith.cmpi sge, %5, %828 : vector<16x16x1xi32>
    %830 = arith.andi %827, %829 : vector<16x16x1xi1>
    %831 = vector.broadcast %822 : i32 to vector<16x16x1xi32>
    %832 = arith.cmpi slt, %5, %831 : vector<16x16x1xi32>
    %833 = arith.andi %830, %832 : vector<16x16x1xi1>
    %cst_148 = arith.constant -3.000000e+38 : f32
    %834 = vector.shape_cast %833 : vector<16x16x1xi1> to vector<16x16x1xi1>
    %835 = vector.broadcast %834 : vector<16x16x1xi1> to vector<16x16x32xi1>
    %836 = vector.broadcast %cst_148 : f32 to vector<16x16x32xf32>
    %837 = arith.select %835, %3, %836 : vector<16x16x32xi1>, vector<16x16x32xf32>
    %cst_149 = arith.constant dense<0xFF800000> : vector<16x32xf32>
    %838 = vector.multi_reduction <maximumf>, %837, %cst_149 [0] : vector<16x16x32xf32> to vector<16x32xf32>
    %cst_150 = arith.constant dense<0xFF800000> : vector<32xf32>
    %839 = vector.multi_reduction <maximumf>, %838, %cst_150 [0] : vector<16x32xf32> to vector<32xf32>
    %840 = vector.shape_cast %839 : vector<32xf32> to vector<1x32xf32>
    %841 = arith.cmpi sle, %820, %819 : i32
    %842 = arith.cmpi sle, %822, %821 : i32
    %843 = arith.ori %841, %842 : i1
    %cst_151 = arith.constant 0.000000e+00 : f32
    %844 = vector.broadcast %cst_151 : f32 to vector<1x32xf32>
    %845 = arith.select %843, %844, %840 : vector<1x32xf32>
    %846 = arith.addf %818, %845 : vector<1x32xf32>
    %c116 = arith.constant 116 : index
    %847 = memref.load %arg0[%c116] : memref<128xi32, #tpu.memory_space<smem>>
    %c117 = arith.constant 117 : index
    %848 = memref.load %arg0[%c117] : memref<128xi32, #tpu.memory_space<smem>>
    %c118 = arith.constant 118 : index
    %849 = memref.load %arg0[%c118] : memref<128xi32, #tpu.memory_space<smem>>
    %c119 = arith.constant 119 : index
    %850 = memref.load %arg0[%c119] : memref<128xi32, #tpu.memory_space<smem>>
    %851 = vector.broadcast %847 : i32 to vector<16x16x1xi32>
    %852 = arith.cmpi sge, %4, %851 : vector<16x16x1xi32>
    %853 = vector.broadcast %848 : i32 to vector<16x16x1xi32>
    %854 = arith.cmpi slt, %4, %853 : vector<16x16x1xi32>
    %855 = arith.andi %852, %854 : vector<16x16x1xi1>
    %856 = vector.broadcast %849 : i32 to vector<16x16x1xi32>
    %857 = arith.cmpi sge, %5, %856 : vector<16x16x1xi32>
    %858 = arith.andi %855, %857 : vector<16x16x1xi1>
    %859 = vector.broadcast %850 : i32 to vector<16x16x1xi32>
    %860 = arith.cmpi slt, %5, %859 : vector<16x16x1xi32>
    %861 = arith.andi %858, %860 : vector<16x16x1xi1>
    %cst_152 = arith.constant -3.000000e+38 : f32
    %862 = vector.shape_cast %861 : vector<16x16x1xi1> to vector<16x16x1xi1>
    %863 = vector.broadcast %862 : vector<16x16x1xi1> to vector<16x16x32xi1>
    %864 = vector.broadcast %cst_152 : f32 to vector<16x16x32xf32>
    %865 = arith.select %863, %3, %864 : vector<16x16x32xi1>, vector<16x16x32xf32>
    %cst_153 = arith.constant dense<0xFF800000> : vector<16x32xf32>
    %866 = vector.multi_reduction <maximumf>, %865, %cst_153 [0] : vector<16x16x32xf32> to vector<16x32xf32>
    %cst_154 = arith.constant dense<0xFF800000> : vector<32xf32>
    %867 = vector.multi_reduction <maximumf>, %866, %cst_154 [0] : vector<16x32xf32> to vector<32xf32>
    %868 = vector.shape_cast %867 : vector<32xf32> to vector<1x32xf32>
    %869 = arith.cmpi sle, %848, %847 : i32
    %870 = arith.cmpi sle, %850, %849 : i32
    %871 = arith.ori %869, %870 : i1
    %cst_155 = arith.constant 0.000000e+00 : f32
    %872 = vector.broadcast %cst_155 : f32 to vector<1x32xf32>
    %873 = arith.select %871, %872, %868 : vector<1x32xf32>
    %874 = arith.addf %846, %873 : vector<1x32xf32>
    %c120 = arith.constant 120 : index
    %875 = memref.load %arg0[%c120] : memref<128xi32, #tpu.memory_space<smem>>
    %c121 = arith.constant 121 : index
    %876 = memref.load %arg0[%c121] : memref<128xi32, #tpu.memory_space<smem>>
    %c122 = arith.constant 122 : index
    %877 = memref.load %arg0[%c122] : memref<128xi32, #tpu.memory_space<smem>>
    %c123 = arith.constant 123 : index
    %878 = memref.load %arg0[%c123] : memref<128xi32, #tpu.memory_space<smem>>
    %879 = vector.broadcast %875 : i32 to vector<16x16x1xi32>
    %880 = arith.cmpi sge, %4, %879 : vector<16x16x1xi32>
    %881 = vector.broadcast %876 : i32 to vector<16x16x1xi32>
    %882 = arith.cmpi slt, %4, %881 : vector<16x16x1xi32>
    %883 = arith.andi %880, %882 : vector<16x16x1xi1>
    %884 = vector.broadcast %877 : i32 to vector<16x16x1xi32>
    %885 = arith.cmpi sge, %5, %884 : vector<16x16x1xi32>
    %886 = arith.andi %883, %885 : vector<16x16x1xi1>
    %887 = vector.broadcast %878 : i32 to vector<16x16x1xi32>
    %888 = arith.cmpi slt, %5, %887 : vector<16x16x1xi32>
    %889 = arith.andi %886, %888 : vector<16x16x1xi1>
    %cst_156 = arith.constant -3.000000e+38 : f32
    %890 = vector.shape_cast %889 : vector<16x16x1xi1> to vector<16x16x1xi1>
    %891 = vector.broadcast %890 : vector<16x16x1xi1> to vector<16x16x32xi1>
    %892 = vector.broadcast %cst_156 : f32 to vector<16x16x32xf32>
    %893 = arith.select %891, %3, %892 : vector<16x16x32xi1>, vector<16x16x32xf32>
    %cst_157 = arith.constant dense<0xFF800000> : vector<16x32xf32>
    %894 = vector.multi_reduction <maximumf>, %893, %cst_157 [0] : vector<16x16x32xf32> to vector<16x32xf32>
    %cst_158 = arith.constant dense<0xFF800000> : vector<32xf32>
    %895 = vector.multi_reduction <maximumf>, %894, %cst_158 [0] : vector<16x32xf32> to vector<32xf32>
    %896 = vector.shape_cast %895 : vector<32xf32> to vector<1x32xf32>
    %897 = arith.cmpi sle, %876, %875 : i32
    %898 = arith.cmpi sle, %878, %877 : i32
    %899 = arith.ori %897, %898 : i1
    %cst_159 = arith.constant 0.000000e+00 : f32
    %900 = vector.broadcast %cst_159 : f32 to vector<1x32xf32>
    %901 = arith.select %899, %900, %896 : vector<1x32xf32>
    %902 = arith.addf %874, %901 : vector<1x32xf32>
    %c124 = arith.constant 124 : index
    %903 = memref.load %arg0[%c124] : memref<128xi32, #tpu.memory_space<smem>>
    %c125 = arith.constant 125 : index
    %904 = memref.load %arg0[%c125] : memref<128xi32, #tpu.memory_space<smem>>
    %c126 = arith.constant 126 : index
    %905 = memref.load %arg0[%c126] : memref<128xi32, #tpu.memory_space<smem>>
    %c127 = arith.constant 127 : index
    %906 = memref.load %arg0[%c127] : memref<128xi32, #tpu.memory_space<smem>>
    %907 = vector.broadcast %903 : i32 to vector<16x16x1xi32>
    %908 = arith.cmpi sge, %4, %907 : vector<16x16x1xi32>
    %909 = vector.broadcast %904 : i32 to vector<16x16x1xi32>
    %910 = arith.cmpi slt, %4, %909 : vector<16x16x1xi32>
    %911 = arith.andi %908, %910 : vector<16x16x1xi1>
    %912 = vector.broadcast %905 : i32 to vector<16x16x1xi32>
    %913 = arith.cmpi sge, %5, %912 : vector<16x16x1xi32>
    %914 = arith.andi %911, %913 : vector<16x16x1xi1>
    %915 = vector.broadcast %906 : i32 to vector<16x16x1xi32>
    %916 = arith.cmpi slt, %5, %915 : vector<16x16x1xi32>
    %917 = arith.andi %914, %916 : vector<16x16x1xi1>
    %cst_160 = arith.constant -3.000000e+38 : f32
    %918 = vector.shape_cast %917 : vector<16x16x1xi1> to vector<16x16x1xi1>
    %919 = vector.broadcast %918 : vector<16x16x1xi1> to vector<16x16x32xi1>
    %920 = vector.broadcast %cst_160 : f32 to vector<16x16x32xf32>
    %921 = arith.select %919, %3, %920 : vector<16x16x32xi1>, vector<16x16x32xf32>
    %cst_161 = arith.constant dense<0xFF800000> : vector<16x32xf32>
    %922 = vector.multi_reduction <maximumf>, %921, %cst_161 [0] : vector<16x16x32xf32> to vector<16x32xf32>
    %cst_162 = arith.constant dense<0xFF800000> : vector<32xf32>
    %923 = vector.multi_reduction <maximumf>, %922, %cst_162 [0] : vector<16x32xf32> to vector<32xf32>
    %924 = vector.shape_cast %923 : vector<32xf32> to vector<1x32xf32>
    %925 = arith.cmpi sle, %904, %903 : i32
    %926 = arith.cmpi sle, %906, %905 : i32
    %927 = arith.ori %925, %926 : i1
    %cst_163 = arith.constant 0.000000e+00 : f32
    %928 = vector.broadcast %cst_163 : f32 to vector<1x32xf32>
    %929 = arith.select %927, %928, %924 : vector<1x32xf32>
    %930 = arith.addf %902, %929 : vector<1x32xf32>
    %cst_164 = arith.constant 2.500000e-01 : f32
    %931 = vector.broadcast %cst_164 : f32 to vector<1x32xf32>
    %932 = arith.mulf %930, %931 : vector<1x32xf32>
    %c7_165 = arith.constant 7 : index
    %c0_166 = arith.constant 0 : index
    %933 = vector.load %arg10[%c7_165, %c0_166] : memref<8x32xf32, #tpu.memory_space<vmem>>, vector<1x32xf32>
    tpu.vector_store %arg10[%c7_165, %c0_166], %932 {strides = array<i32>} : memref<8x32xf32, #tpu.memory_space<vmem>>, vector<1x32xf32>,
    %c0_167 = arith.constant 0 : index
    %c0_168 = arith.constant 0 : index
    %934 = vector.load %arg10[%c0_167, %c0_168] : memref<8x32xf32, #tpu.memory_space<vmem>>, vector<8x32xf32>
    %935 = arith.truncf %934 : vector<8x32xf32> to vector<8x32xbf16>
    %c0_169 = arith.constant 0 : index
    %c0_170 = arith.constant 0 : index
    %936 = vector.load %arg3[%c0_169, %c0_170] : memref<32x32xbf16, #tpu.memory_space<vmem>>, vector<32x32xbf16>
    %cst_171 = arith.constant dense<0.000000e+00> : vector<8x32xf32>
    %937 = tpu.matmul %935, %936, %cst_171 {dimension_numbers = #tpu.dot_dimension_numbers<[1], [0], [0], [1], [0, 0, 1, 1], [], []>} : vector<8x32xbf16>, vector<32x32xbf16>, vector<8x32xf32> -> vector<8x32xf32>
    %c0_172 = arith.constant 0 : index
    %c0_173 = arith.constant 0 : index
    %938 = vector.load %arg4[%c0_172, %c0_173] : memref<1x32xf32, #tpu.memory_space<vmem>>, vector<1x32xf32>
    %939 = vector.broadcast %938 : vector<1x32xf32> to vector<8x32xf32>
    %940 = arith.addf %937, %939 : vector<8x32xf32>
    %cst_174 = arith.constant 0.000000e+00 : f32
    %941 = vector.broadcast %cst_174 : f32 to vector<8x32xf32>
    %942 = arith.maximumf %940, %941 : vector<8x32xf32>
    %943 = arith.truncf %942 : vector<8x32xf32> to vector<8x32xbf16>
    %c0_175 = arith.constant 0 : index
    %c0_176 = arith.constant 0 : index
    %944 = vector.load %arg5[%c0_175, %c0_176] : memref<32x128xbf16, #tpu.memory_space<vmem>>, vector<32x128xbf16>
    %cst_177 = arith.constant dense<0.000000e+00> : vector<8x128xf32>
    %945 = tpu.matmul %943, %944, %cst_177 {dimension_numbers = #tpu.dot_dimension_numbers<[1], [0], [0], [1], [0, 0, 1, 1], [], []>} : vector<8x32xbf16>, vector<32x128xbf16>, vector<8x128xf32> -> vector<8x128xf32>
    %c0_178 = arith.constant 0 : index
    %c0_179 = arith.constant 0 : index
    %946 = vector.load %arg6[%c0_178, %c0_179] : memref<1x128xf32, #tpu.memory_space<vmem>>, vector<1x128xf32>
    %947 = vector.broadcast %946 : vector<1x128xf32> to vector<8x128xf32>
    %948 = arith.addf %945, %947 : vector<8x128xf32>
    %c0_180 = arith.constant 0 : index
    %c0_181 = arith.constant 0 : index
    %949 = vector.load %arg7[%c0_180, %c0_181] : memref<8x128xf32, #tpu.memory_space<vmem>>, vector<8x128xf32>
    tpu.vector_store %arg7[%c0_180, %c0_181], %948 {strides = array<i32>} : memref<8x128xf32, #tpu.memory_space<vmem>>, vector<8x128xf32>,
    %950 = tpu.iota {dimensions = array<i32: 1>} : vector<8x128xi32>
    %cst_182 = arith.constant dense<0xFF800000> : vector<8xf32>
    %951 = vector.multi_reduction <maximumf>, %948, %cst_182 [1] : vector<8x128xf32> to vector<8xf32>
    %952 = vector.shape_cast %951 : vector<8xf32> to vector<8x1xf32>
    %953 = vector.broadcast %952 : vector<8x1xf32> to vector<8x128xf32>
    %954 = arith.cmpf oeq, %948, %953 : vector<8x128xf32>
    %c128_i32 = arith.constant 128 : i32
    %955 = vector.broadcast %c128_i32 : i32 to vector<8x128xi32>
    %956 = arith.select %954, %950, %955 : vector<8x128xi1>, vector<8x128xi32>
    %cst_183 = arith.constant dense<2147483647> : vector<8xi32>
    %957 = vector.multi_reduction <minsi>, %956, %cst_183 [1] : vector<8x128xi32> to vector<8xi32>
    %958 = vector.shape_cast %957 : vector<8xi32> to vector<8x1xi32>
    %c0_184 = arith.constant 0 : index
    %c0_185 = arith.constant 0 : index
    %959 = vector.load %arg8[%c0_184, %c0_185] : memref<8x1xi32, #tpu.memory_space<vmem>>, vector<8x1xi32>
    tpu.vector_store %arg8[%c0_184, %c0_185], %958 {strides = array<i32>} : memref<8x1xi32, #tpu.memory_space<vmem>>, vector<8x1xi32>,
    %c0_186 = arith.constant 0 : index
    %c0_187 = arith.constant 0 : index
    %960 = vector.load %arg1[%c0_186, %c0_187] : memref<8x1xi32, #tpu.memory_space<vmem>>, vector<8x1xi32>
    %961 = vector.broadcast %960 : vector<8x1xi32> to vector<8x128xi32>
    %962 = arith.cmpi eq, %950, %961 : vector<8x128xi32>
    %cst_188 = arith.constant 0.000000e+00 : f32
    %963 = vector.broadcast %cst_188 : f32 to vector<8x128xf32>
    %964 = arith.select %962, %948, %963 : vector<8x128xi1>, vector<8x128xf32>
    %cst_189 = arith.constant dense<0.000000e+00> : vector<8xf32>
    %965 = vector.multi_reduction <add>, %964, %cst_189 [1] : vector<8x128xf32> to vector<8xf32>
    %966 = vector.shape_cast %965 : vector<8xf32> to vector<8x1xf32>
    %967 = vector.broadcast %952 : vector<8x1xf32> to vector<8x128xf32>
    %968 = arith.subf %948, %967 : vector<8x128xf32>
    %969 = math.exp %968 : vector<8x128xf32>
    %cst_190 = arith.constant dense<0.000000e+00> : vector<8xf32>
    %970 = vector.multi_reduction <add>, %969, %cst_190 [1] : vector<8x128xf32> to vector<8xf32>
    %971 = vector.shape_cast %970 : vector<8xf32> to vector<8x1xf32>
    %972 = math.log %971 : vector<8x1xf32>
    %973 = arith.addf %952, %972 : vector<8x1xf32>
    %974 = arith.subf %973, %966 : vector<8x1xf32>
    %975 = vector.shape_cast %974 : vector<8x1xf32> to vector<1x8x1xf32>
    %cst_191 = arith.constant dense<0.000000e+00> : vector<1xf32>
    %976 = vector.multi_reduction <add>, %975, %cst_191 [1, 2] : vector<1x8x1xf32> to vector<1xf32>
    %977 = vector.shape_cast %976 : vector<1xf32> to vector<1x1x1xf32>
    %978 = vector.extract %977[0, 0, 0] : f32 from vector<1x1x1xf32>
    %cst_192 = arith.constant 1.250000e-01 : f32
    %979 = arith.mulf %978, %cst_192 : f32
    %c0_193 = arith.constant 0 : index
    %c0_194 = arith.constant 0 : index
    %980 = memref.load %arg9[%c0_193, %c0_194] : memref<1x1xf32, #tpu.memory_space<smem>>
    memref.store %979, %arg9[%c0_193, %c0_194] : memref<1x1xf32, #tpu.memory_space<smem>>
    return
  }
}

</mosaic_0001>

<llo_original>
// kernel: classification_forward.1
$region0: #{classification_forward.1}
  #allocation0 [shape = 'u32[]', space=smem, size = 0x4, offset = 0x4, fixed_abs, tag = 'smem constant byte address 0x4 - core index']
  #allocation1 [shape = 'u32[144,128]{1,0:T(1,128)}', space=vmem, size = 0x12000, scoped, tag = 'internal scratch']
  #allocation2 [shape = 'f32[8,32]{1,0:T(8,128)}', space=vmem, size = 0x1000, scoped, tag = 'scratch operand']
  %s0 = inlined_call_operand.vmem [shape: s32[128], index: 0, kind: input, shape index: {}]
  %s1 = inlined_call_operand.vmem [shape: s32[8,1], index: 1, kind: input, shape index: {}]
  %s2 = inlined_call_operand.vmem [shape: f32[2,16,16,32], index: 2, kind: input, shape index: {}]
  %s3 = inlined_call_operand.vmem [shape: bf16[32,32], index: 3, kind: input, shape index: {}]
  %s4 = inlined_call_operand.vmem [shape: f32[1,32], index: 4, kind: input, shape index: {}]
  %s5 = inlined_call_operand.vmem [shape: bf16[32,128], index: 5, kind: input, shape index: {}]
  %s6 = inlined_call_operand.vmem [shape: f32[1,128], index: 6, kind: input, shape index: {}]
  %s7 = inlined_call_operand.hbm [shape: f32[8,128], index: 7, kind: output, shape index: {0}]
  %s8 = inlined_call_operand.vmem [shape: s32[8,1], index: 8, kind: output, shape index: {1}]
  %s9 = inlined_call_operand.hbm [shape: f32[1,1], index: 9, kind: output, shape index: {2}]
  %10 = xla_tuple %s7, %s8, %s9
  %s11 = sld [smem:[#allocation0]]
  $region58: #{classification_forward.1} parent=0
    _
  %s13 = ssub.s32 1, %s11
  %s14 = scalar_select 0, %s13, %s11
  $region1: #{classification_forward.1} parent=0
    #allocation3 [shape = 'u8[512]{0}', space=smem, size = 0x200, scoped, tag = 'input window, operand 0, single buffered']
    #allocation4 [shape = 's32[1]{0}', space=sflag, size = 0x4, scoped, tag = 'scoped memory for classification_forward.1']
    #allocation5 [shape = 's32[1]{0}', space=sflag, size = 0x4, scoped, tag = 'scoped memory for classification_forward.1']
    #allocation6 [shape = 's32[1]{0}', space=sflag, size = 0x4, scoped, tag = 'scoped memory for classification_forward.1']
    #allocation7 [shape = 'u8[4096]{0}', space=vmem, size = 0x1000, scoped, tag = 'output window, operand 0, single buffered']
    #allocation8 [shape = 'u8[512]{0}', space=smem, size = 0x200, scoped, tag = 'output window, operand 2, single buffered']
    %15 = vsyncpa [#allocation6], 0
    %16 = vsyncpa [#allocation4], 0
    %17 = vsyncpa [#allocation5], 0
    // Predicated region
    $region2: #{classification_forward.1} parent=1 // pred_check
      _
    $region3: #{classification_forward.1} parent=1 // pred_check_branch
      %19 = sbr.rel (0) target = $region5
    $region4: #{classification_forward.1} parent=1 // pred_region
      %s21 = ssub.s32 16, 16
      %22 = vsyncadd [#allocation6], %s21
      %s24 = sshll.u32 %s0, 4
      %s25 = int_to_ptr.vmem [resolvable:$true] %s24
      %27 = dma.vmem_to_smem %s25, 16, [#allocation3], [#allocation6]
    $region5: #{classification_forward.1} parent=1 // pred_fallthru
      _
    // Predicated region
    $region6: #{classification_forward.1} parent=1 // pred_check
      _
    $region7: #{classification_forward.1} parent=1 // pred_check_branch
      %29 = sbr.rel (0) target = $region9
    $region8: #{classification_forward.1} parent=1 // pred_region
      _
    $region9: #{classification_forward.1} parent=1 // pred_fallthru
      _
    // Predicated region
    $region10: #{classification_forward.1} parent=1 // pred_check
      _
    $region11: #{classification_forward.1} parent=1 // pred_check_branch
      %31 = sbr.rel (0) target = $region13
    $region12: #{classification_forward.1} parent=1 // pred_region
      _
    $region13: #{classification_forward.1} parent=1 // pred_fallthru
      _
    // Predicated region
    $region14: #{classification_forward.1} parent=1 // pred_check
      _
    $region15: #{classification_forward.1} parent=1 // pred_check_branch
      %33 = sbr.rel (0) target = $region17
    $region16: #{classification_forward.1} parent=1 // pred_region
      _
    $region17: #{classification_forward.1} parent=1 // pred_fallthru
      _
    // Predicated region
    $region18: #{classification_forward.1} parent=1 // pred_check
      _
    $region19: #{classification_forward.1} parent=1 // pred_check_branch
      %35 = sbr.rel (0) target = $region21
    $region20: #{classification_forward.1} parent=1 // pred_region
      _
    $region21: #{classification_forward.1} parent=1 // pred_fallthru
      _
    // Predicated region
    $region22: #{classification_forward.1} parent=1 // pred_check
      _
    $region23: #{classification_forward.1} parent=1 // pred_check_branch
      %37 = sbr.rel (0) target = $region25
    $region24: #{classification_forward.1} parent=1 // pred_region
      _
    $region25: #{classification_forward.1} parent=1 // pred_fallthru
      _
    // Predicated region
    $region26: #{classification_forward.1} parent=1 // pred_check
      _
    $region27: #{classification_forward.1} parent=1 // pred_check_branch
      %39 = sbr.rel (0) target = $region29
    $region28: #{classification_forward.1} parent=1 // pred_region
      _
    $region29: #{classification_forward.1} parent=1 // pred_fallthru
      _
    // Predicated region
    $region30: #{classification_forward.1} parent=1 // pred_check
      _
    $region31: #{classification_forward.1} parent=1 // pred_check_branch
      %41 = sbr.rel (0) target = $region33
    $region32: #{classification_forward.1} parent=1 // pred_region
      %42 = dma.done [#allocation6], 16
    $region33: #{classification_forward.1} parent=1 // pred_fallthru
      _
    %43 = sfence
    %v45 = vld [vmem:[%s2] sm:$0xff]
    %v46 = vld [vmem:[%s2 + $0x8] sm:$0xff]
    %v47 = vld [vmem:[%s2 + $0x10] sm:$0xff]
    %v48 = vld [vmem:[%s2 + $0x18] sm:$0xff]
    %v49 = vld [vmem:[%s2 + $0x20] sm:$0xff]
    %v50 = vld [vmem:[%s2 + $0x28] sm:$0xff]
    %v51 = vld [vmem:[%s2 + $0x30] sm:$0xff]
    %v52 = vld [vmem:[%s2 + $0x38] sm:$0xff]
    %v53 = vld [vmem:[%s2 + $0x40] sm:$0xff]
    %v54 = vld [vmem:[%s2 + $0x48] sm:$0xff]
    %v55 = vld [vmem:[%s2 + $0x50] sm:$0xff]
    %v56 = vld [vmem:[%s2 + $0x58] sm:$0xff]
    %v57 = vld [vmem:[%s2 + $0x60] sm:$0xff]
    %v58 = vld [vmem:[%s2 + $0x68] sm:$0xff]
    %v59 = vld [vmem:[%s2 + $0x70] sm:$0xff]
    %v60 = vld [vmem:[%s2 + $0x78] sm:$0xff]
    %v61 = vld [vmem:[%s2 + $0x80] sm:$0xff]
    %v62 = vld [vmem:[%s2 + $0x88] sm:$0xff]
    %v63 = vld [vmem:[%s2 + $0x90] sm:$0xff]
    %v64 = vld [vmem:[%s2 + $0x98] sm:$0xff]
    %v65 = vld [vmem:[%s2 + $0xa0] sm:$0xff]
    %v66 = vld [vmem:[%s2 + $0xa8] sm:$0xff]
    %v67 = vld [vmem:[%s2 + $0xb0] sm:$0xff]
    %v68 = vld [vmem:[%s2 + $0xb8] sm:$0xff]
    %v69 = vld [vmem:[%s2 + $0xc0] sm:$0xff]
    %v70 = vld [vmem:[%s2 + $0xc8] sm:$0xff]
    %v71 = vld [vmem:[%s2 + $0xd0] sm:$0xff]
    %v72 = vld [vmem:[%s2 + $0xd8] sm:$0xff]
    %v73 = vld [vmem:[%s2 + $0xe0] sm:$0xff]
    %v74 = vld [vmem:[%s2 + $0xe8] sm:$0xff]
    %v75 = vld [vmem:[%s2 + $0xf0] sm:$0xff]
    %v76 = vld [vmem:[%s2 + $0xf8] sm:$0xff]
    %s77 = scalar_lea.vmem %s2, 256
    %v78 = vld [vmem:[%s77] sm:$0xff]
    %v79 = vld [vmem:[%s77 + $0x8] sm:$0xff]
    %v80 = vld [vmem:[%s77 + $0x10] sm:$0xff]
    %v81 = vld [vmem:[%s77 + $0x18] sm:$0xff]
    %v82 = vld [vmem:[%s77 + $0x20] sm:$0xff]
    %v83 = vld [vmem:[%s77 + $0x28] sm:$0xff]
    %v84 = vld [vmem:[%s77 + $0x30] sm:$0xff]
    %v85 = vld [vmem:[%s77 + $0x38] sm:$0xff]
    %v86 = vld [vmem:[%s77 + $0x40] sm:$0xff]
    %v87 = vld [vmem:[%s77 + $0x48] sm:$0xff]
    %v88 = vld [vmem:[%s77 + $0x50] sm:$0xff]
    %v89 = vld [vmem:[%s77 + $0x58] sm:$0xff]
    %v90 = vld [vmem:[%s77 + $0x60] sm:$0xff]
    %v91 = vld [vmem:[%s77 + $0x68] sm:$0xff]
    %v92 = vld [vmem:[%s77 + $0x70] sm:$0xff]
    %v93 = vld [vmem:[%s77 + $0x78] sm:$0xff]
    %v94 = vld [vmem:[%s77 + $0x80] sm:$0xff]
    %v95 = vld [vmem:[%s77 + $0x88] sm:$0xff]
    %v96 = vld [vmem:[%s77 + $0x90] sm:$0xff]
    %v97 = vld [vmem:[%s77 + $0x98] sm:$0xff]
    %v98 = vld [vmem:[%s77 + $0xa0] sm:$0xff]
    %v99 = vld [vmem:[%s77 + $0xa8] sm:$0xff]
    %v100 = vld [vmem:[%s77 + $0xb0] sm:$0xff]
    %v101 = vld [vmem:[%s77 + $0xb8] sm:$0xff]
    %v102 = vld [vmem:[%s77 + $0xc0] sm:$0xff]
    %v103 = vld [vmem:[%s77 + $0xc8] sm:$0xff]
    %v104 = vld [vmem:[%s77 + $0xd0] sm:$0xff]
    %v105 = vld [vmem:[%s77 + $0xd8] sm:$0xff]
    %v106 = vld [vmem:[%s77 + $0xe0] sm:$0xff]
    %v107 = vld [vmem:[%s77 + $0xe8] sm:$0xff]
    %v108 = vld [vmem:[%s77 + $0xf0] sm:$0xff]
    %v109 = vld [vmem:[%s77 + $0xf8] sm:$0xff]
    %v110 = vlaneseq
    %v111 = vshrl.u32 %v110, 7
    %v112 = vadd.s32 %v111, 8
    %s113 = sld [smem:[#allocation3]]
    %s114 = sld [smem:[#allocation3 + $0x1]]
    %s115 = sld [smem:[#allocation3 + $0x2]]
    %s116 = sld [smem:[#allocation3 + $0x3]]
    %v117 = vstv %s113
    %vm118 = vcmp.le.s32.totalorder %v117, 0
    %vm119 = vcmp.le.s32.totalorder %v117, 1
    %vm120 = vcmp.le.s32.totalorder %v117, 2
    %vm121 = vcmp.le.s32.totalorder %v117, 3
    %vm122 = vcmp.le.s32.totalorder %v117, 4
    %vm123 = vcmp.le.s32.totalorder %v117, 5
    %vm124 = vcmp.le.s32.totalorder %v117, 6
    %vm125 = vcmp.le.s32.totalorder %v117, 7
    %vm126 = vcmp.le.s32.totalorder %v117, 8
    %vm127 = vcmp.le.s32.totalorder %v117, 9
    %vm128 = vcmp.le.s32.totalorder %v117, 10
    %vm129 = vcmp.le.s32.totalorder %v117, 11
    %vm130 = vcmp.le.s32.totalorder %v117, 12
    %vm131 = vcmp.le.s32.totalorder %v117, 13
    %vm132 = vcmp.le.s32.totalorder %v117, 14
    %vm133 = vcmp.le.s32.totalorder %v117, 15
    %v134 = vstv %s114
    %vm135 = vcmp.gt.s32.totalorder %v134, 0
    %vm136 = vcmp.gt.s32.totalorder %v134, 1
    %vm137 = vcmp.gt.s32.totalorder %v134, 2
    %vm138 = vcmp.gt.s32.totalorder %v134, 3
    %vm139 = vcmp.gt.s32.totalorder %v134, 4
    %vm140 = vcmp.gt.s32.totalorder %v134, 5
    %vm141 = vcmp.gt.s32.totalorder %v134, 6
    %vm142 = vcmp.gt.s32.totalorder %v134, 7
    %vm143 = vcmp.gt.s32.totalorder %v134, 8
    %vm144 = vcmp.gt.s32.totalorder %v134, 9
    %vm145 = vcmp.gt.s32.totalorder %v134, 10
    %vm146 = vcmp.gt.s32.totalorder %v134, 11
    %vm147 = vcmp.gt.s32.totalorder %v134, 12
    %vm148 = vcmp.gt.s32.totalorder %v134, 13
    %vm149 = vcmp.gt.s32.totalorder %v134, 14
    %vm150 = vcmp.gt.s32.totalorder %v134, 15
    %vm151 = vmand %vm118, %vm135
    %vm152 = vmand %vm119, %vm136
    %vm153 = vmand %vm120, %vm137
    %vm154 = vmand %vm121, %vm138
    %vm155 = vmand %vm122, %vm139
    %vm156 = vmand %vm123, %vm140
    %vm157 = vmand %vm124, %vm141
    %vm158 = vmand %vm125, %vm142
    %vm159 = vmand %vm126, %vm143
    %vm160 = vmand %vm127, %vm144
    %vm161 = vmand %vm128, %vm145
    %vm162 = vmand %vm129, %vm146
    %vm163 = vmand %vm130, %vm147
    %vm164 = vmand %vm131, %vm148
    %vm165 = vmand %vm132, %vm149
    %vm166 = vmand %vm133, %vm150
    %v167 = vstv %s115
    %vm168 = vcmp.ge.s32.totalorder %v111, %v167
    %vm169 = vcmp.ge.s32.totalorder %v112, %v167
    %vm170 = vmand %vm151, %vm168
    %vm171 = vmand %vm151, %vm169
    %vm172 = vmand %vm152, %vm168
    %vm173 = vmand %vm152, %vm169
    %vm174 = vmand %vm153, %vm168
    %vm175 = vmand %vm153, %vm169
    %vm176 = vmand %vm154, %vm168
    %vm177 = vmand %vm154, %vm169
    %vm178 = vmand %vm155, %vm168
    %vm179 = vmand %vm155, %vm169
    %vm180 = vmand %vm156, %vm168
    %vm181 = vmand %vm156, %vm169
    %vm182 = vmand %vm157, %vm168
    %vm183 = vmand %vm157, %vm169
    %vm184 = vmand %vm158, %vm168
    %vm185 = vmand %vm158, %vm169
    %vm186 = vmand %vm159, %vm168
    %vm187 = vmand %vm159, %vm169
    %vm188 = vmand %vm160, %vm168
    %vm189 = vmand %vm160, %vm169
    %vm190 = vmand %vm161, %vm168
    %vm191 = vmand %vm161, %vm169
    %vm192 = vmand %vm162, %vm168
    %vm193 = vmand %vm162, %vm169
    %vm194 = vmand %vm163, %vm168
    %vm195 = vmand %vm163, %vm169
    %vm196 = vmand %vm164, %vm168
    %vm197 = vmand %vm164, %vm169
    %vm198 = vmand %vm165, %vm168
    %vm199 = vmand %vm165, %vm169
    %vm200 = vmand %vm166, %vm168
    %vm201 = vmand %vm166, %vm169
    %v202 = vstv %s116
    %vm203 = vcmp.lt.s32.totalorder %v111, %v202
    %vm204 = vcmp.lt.s32.totalorder %v112, %v202
    %vm205 = vmand %vm170, %vm203
    %vm206 = vmand %vm171, %vm204
    %vm207 = vmand %vm172, %vm203
    %vm208 = vmand %vm173, %vm204
    %vm209 = vmand %vm174, %vm203
    %vm210 = vmand %vm175, %vm204
    %vm211 = vmand %vm176, %vm203
    %vm212 = vmand %vm177, %vm204
    %vm213 = vmand %vm178, %vm203
    %vm214 = vmand %vm179, %vm204
    %vm215 = vmand %vm180, %vm203
    %vm216 = vmand %vm181, %vm204
    %vm217 = vmand %vm182, %vm203
    %vm218 = vmand %vm183, %vm204
    %vm219 = vmand %vm184, %vm203
    %vm220 = vmand %vm185, %vm204
    %vm221 = vmand %vm186, %vm203
    %vm222 = vmand %vm187, %vm204
    %vm223 = vmand %vm188, %vm203
    %vm224 = vmand %vm189, %vm204
    %vm225 = vmand %vm190, %vm203
    %vm226 = vmand %vm191, %vm204
    %vm227 = vmand %vm192, %vm203
    %vm228 = vmand %vm193, %vm204
    %vm229 = vmand %vm194, %vm203
    %vm230 = vmand %vm195, %vm204
    %vm231 = vmand %vm196, %vm203
    %vm232 = vmand %vm197, %vm204
    %vm233 = vmand %vm198, %vm203
    %vm234 = vmand %vm199, %vm204
    %vm235 = vmand %vm200, %vm203
    %vm236 = vmand %vm201, %vm204
    %v237 = vsel %vm205, 1, 0
    %v238 = vsel %vm206, 1, 0
    %v239 = vsel %vm207, 1, 0
    %v240 = vsel %vm208, 1, 0
    %v241 = vsel %vm209, 1, 0
    %v242 = vsel %vm210, 1, 0
    %v243 = vsel %vm211, 1, 0
    %v244 = vsel %vm212, 1, 0
    %v245 = vsel %vm213, 1, 0
    %v246 = vsel %vm214, 1, 0
    %v247 = vsel %vm215, 1, 0
    %v248 = vsel %vm216, 1, 0
    %v249 = vsel %vm217, 1, 0
    %v250 = vsel %vm218, 1, 0
    %v251 = vsel %vm219, 1, 0
    %v252 = vsel %vm220, 1, 0
    %v253 = vsel %vm221, 1, 0
    %v254 = vsel %vm222, 1, 0
    %v255 = vsel %vm223, 1, 0
    %v256 = vsel %vm224, 1, 0
    %v257 = vsel %vm225, 1, 0
    %v258 = vsel %vm226, 1, 0
    %v259 = vsel %vm227, 1, 0
    %v260 = vsel %vm228, 1, 0
    %v261 = vsel %vm229, 1, 0
    %v262 = vsel %vm230, 1, 0
    %v263 = vsel %vm231, 1, 0
    %v264 = vsel %vm232, 1, 0
    %v265 = vsel %vm233, 1, 0
    %v266 = vsel %vm234, 1, 0
    %v267 = vsel %vm235, 1, 0
    %v268 = vsel %vm236, 1, 0
    %vm269 = vcmp.eq.s32.totalorder %v237, 1
    %vm270 = vcmp.eq.s32.totalorder %v238, 1
    %vm271 = vcmp.eq.s32.totalorder %v239, 1
    %vm272 = vcmp.eq.s32.totalorder %v240, 1
    %vm273 = vcmp.eq.s32.totalorder %v241, 1
    %vm274 = vcmp.eq.s32.totalorder %v242, 1
    %vm275 = vcmp.eq.s32.totalorder %v243, 1
    %vm276 = vcmp.eq.s32.totalorder %v244, 1
    %vm277 = vcmp.eq.s32.totalorder %v245, 1
    %vm278 = vcmp.eq.s32.totalorder %v246, 1
    %vm279 = vcmp.eq.s32.totalorder %v247, 1
    %vm280 = vcmp.eq.s32.totalorder %v248, 1
    %vm281 = vcmp.eq.s32.totalorder %v249, 1
    %vm282 = vcmp.eq.s32.totalorder %v250, 1
    %vm283 = vcmp.eq.s32.totalorder %v251, 1
    %vm284 = vcmp.eq.s32.totalorder %v252, 1
    %vm285 = vcmp.eq.s32.totalorder %v253, 1
    %vm286 = vcmp.eq.s32.totalorder %v254, 1
    %vm287 = vcmp.eq.s32.totalorder %v255, 1
    %vm288 = vcmp.eq.s32.totalorder %v256, 1
    %vm289 = vcmp.eq.s32.totalorder %v257, 1
    %vm290 = vcmp.eq.s32.totalorder %v258, 1
    %vm291 = vcmp.eq.s32.totalorder %v259, 1
    %vm292 = vcmp.eq.s32.totalorder %v260, 1
    %vm293 = vcmp.eq.s32.totalorder %v261, 1
    %vm294 = vcmp.eq.s32.totalorder %v262, 1
    %vm295 = vcmp.eq.s32.totalorder %v263, 1
    %vm296 = vcmp.eq.s32.totalorder %v264, 1
    %vm297 = vcmp.eq.s32.totalorder %v265, 1
    %vm298 = vcmp.eq.s32.totalorder %v266, 1
    %vm299 = vcmp.eq.s32.totalorder %v267, 1
    %vm300 = vcmp.eq.s32.totalorder %v268, 1
    %v301 = vsel %vm269, %v45, -3e+38
    %v302 = vsel %vm270, %v46, -3e+38
    %v303 = vsel %vm271, %v47, -3e+38
    %v304 = vsel %vm272, %v48, -3e+38
    %v305 = vsel %vm273, %v49, -3e+38
    %v306 = vsel %vm274, %v50, -3e+38
    %v307 = vsel %vm275, %v51, -3e+38
    %v308 = vsel %vm276, %v52, -3e+38
    %v309 = vsel %vm277, %v53, -3e+38
    %v310 = vsel %vm278, %v54, -3e+38
    %v311 = vsel %vm279, %v55, -3e+38
    %v312 = vsel %vm280, %v56, -3e+38
    %v313 = vsel %vm281, %v57, -3e+38
    %v314 = vsel %vm282, %v58, -3e+38
    %v315 = vsel %vm283, %v59, -3e+38
    %v316 = vsel %vm284, %v60, -3e+38
    %v317 = vsel %vm285, %v61, -3e+38
    %v318 = vsel %vm286, %v62, -3e+38
    %v319 = vsel %vm287, %v63, -3e+38
    %v320 = vsel %vm288, %v64, -3e+38
    %v321 = vsel %vm289, %v65, -3e+38
    %v322 = vsel %vm290, %v66, -3e+38
    %v323 = vsel %vm291, %v67, -3e+38
    %v324 = vsel %vm292, %v68, -3e+38
    %v325 = vsel %vm293, %v69, -3e+38
    %v326 = vsel %vm294, %v70, -3e+38
    %v327 = vsel %vm295, %v71, -3e+38
    %v328 = vsel %vm296, %v72, -3e+38
    %v329 = vsel %vm297, %v73, -3e+38
    %v330 = vsel %vm298, %v74, -3e+38
    %v331 = vsel %vm299, %v75, -3e+38
    %v332 = vsel %vm300, %v76, -3e+38
    %vm333 = vcmask 261120
    %v334 = vsel %vm333, %v301, -inf
    %v335 = vsel %vm333, %v303, -inf
    %v336 = vsel %vm333, %v305, -inf
    %v337 = vmax.f32 %v334, %v336
    %v338 = vsel %vm333, %v307, -inf
    %v339 = vmax.f32 %v335, %v338
    %v340 = vsel %vm333, %v309, -inf
    %v341 = vmax.f32 %v337, %v340
    %v342 = vsel %vm333, %v311, -inf
    %v343 = vmax.f32 %v339, %v342
    %v344 = vsel %vm333, %v313, -inf
    %v345 = vmax.f32 %v341, %v344
    %v346 = vsel %vm333, %v315, -inf
    %v347 = vmax.f32 %v343, %v346
    %v348 = vsel %vm333, %v317, -inf
    %v349 = vmax.f32 %v345, %v348
    %v350 = vsel %vm333, %v319, -inf
    %v351 = vmax.f32 %v347, %v350
    %v352 = vsel %vm333, %v321, -inf
    %v353 = vmax.f32 %v349, %v352
    %v354 = vsel %vm333, %v323, -inf
    %v355 = vmax.f32 %v351, %v354
    %v356 = vsel %vm333, %v325, -inf
    %v357 = vmax.f32 %v353, %v356
    %v358 = vsel %vm333, %v327, -inf
    %v359 = vmax.f32 %v355, %v358
    %v360 = vsel %vm333, %v329, -inf
    %v361 = vmax.f32 %v357, %v360
    %v362 = vsel %vm333, %v331, -inf
    %v363 = vmax.f32 %v359, %v362
    %v364 = vmax.f32 %v361, %v363
    %v365 = vsel %vm333, %v302, -inf
    %v366 = vsel %vm333, %v304, -inf
    %v367 = vsel %vm333, %v306, -inf
    %v368 = vmax.f32 %v365, %v367
    %v369 = vsel %vm333, %v308, -inf
    %v370 = vmax.f32 %v366, %v369
    %v371 = vsel %vm333, %v310, -inf
    %v372 = vmax.f32 %v368, %v371
    %v373 = vsel %vm333, %v312, -inf
    %v374 = vmax.f32 %v370, %v373
    %v375 = vsel %vm333, %v314, -inf
    %v376 = vmax.f32 %v372, %v375
    %v377 = vsel %vm333, %v316, -inf
    %v378 = vmax.f32 %v374, %v377
    %v379 = vsel %vm333, %v318, -inf
    %v380 = vmax.f32 %v376, %v379
    %v381 = vsel %vm333, %v320, -inf
    %v382 = vmax.f32 %v378, %v381
    %v383 = vsel %vm333, %v322, -inf
    %v384 = vmax.f32 %v380, %v383
    %v385 = vsel %vm333, %v324, -inf
    %v386 = vmax.f32 %v382, %v385
    %v387 = vsel %vm333, %v326, -inf
    %v388 = vmax.f32 %v384, %v387
    %v389 = vsel %vm333, %v328, -inf
    %v390 = vmax.f32 %v386, %v389
    %v391 = vsel %vm333, %v330, -inf
    %v392 = vmax.f32 %v388, %v391
    %v393 = vsel %vm333, %v332, -inf
    %v394 = vmax.f32 %v390, %v393
    %v395 = vmax.f32 %v392, %v394
    %v396 = vsel %vm333, %v364, -inf
    %v397 = vsel %vm333, %v395, -inf
    %v398 = vmax.f32 %v396, %v397
    %v399 = vrot.slane %v398, 4
    %v400 = vmax.f32 %v398, %v399
    %v401 = vrot.slane %v400, 2
    %v402 = vmax.f32 %v400, %v401
    %v403 = vrot.slane %v402, 1
    %v404 = vmax.f32 %v402, %v403
    %p405 = scmp.le.s32.totalorder %s114, %s113
    %p406 = scmp.le.s32.totalorder %s116, %s115
    %p407 = por %p405, %p406
    %s408 = scalar_select %p407, 1, 0
    %v409 = vstv %s408
    %vm410 = vcmp.eq.s32.totalorder %v409, 1
    %v411 = vsel %vm410, 0.0, %v404
    %v412 = vadd.f32 %v411, 0.0
    %s413 = sld [smem:[#allocation3 + $0x4]]
    %s414 = sld [smem:[#allocation3 + $0x5]]
    %s415 = sld [smem:[#allocation3 + $0x6]]
    %s416 = sld [smem:[#allocation3 + $0x7]]
    %v417 = vstv %s413
    %vm418 = vcmp.le.s32.totalorder %v417, 0
    %vm419 = vcmp.le.s32.totalorder %v417, 1
    %vm420 = vcmp.le.s32.totalorder %v417, 2
    %vm421 = vcmp.le.s32.totalorder %v417, 3
    %vm422 = vcmp.le.s32.totalorder %v417, 4
    %vm423 = vcmp.le.s32.totalorder %v417, 5
    %vm424 = vcmp.le.s32.totalorder %v417, 6
    %vm425 = vcmp.le.s32.totalorder %v417, 7
    %vm426 = vcmp.le.s32.totalorder %v417, 8
    %vm427 = vcmp.le.s32.totalorder %v417, 9
    %vm428 = vcmp.le.s32.totalorder %v417, 10
    %vm429 = vcmp.le.s32.totalorder %v417, 11
    %vm430 = vcmp.le.s32.totalorder %v417, 12
    %vm431 = vcmp.le.s32.totalorder %v417, 13
    %vm432 = vcmp.le.s32.totalorder %v417, 14
    %vm433 = vcmp.le.s32.totalorder %v417, 15
    %v434 = vstv %s414
    %vm435 = vcmp.gt.s32.totalorder %v434, 0
    %vm436 = vcmp.gt.s32.totalorder %v434, 1
    %vm437 = vcmp.gt.s32.totalorder %v434, 2
    %vm438 = vcmp.gt.s32.totalorder %v434, 3
    %vm439 = vcmp.gt.s32.totalorder %v434, 4
    %vm440 = vcmp.gt.s32.totalorder %v434, 5
    %vm441 = vcmp.gt.s32.totalorder %v434, 6
    %vm442 = vcmp.gt.s32.totalorder %v434, 7
    %vm443 = vcmp.gt.s32.totalorder %v434, 8
    %vm444 = vcmp.gt.s32.totalorder %v434, 9
    %vm445 = vcmp.gt.s32.totalorder %v434, 10
    %vm446 = vcmp.gt.s32.totalorder %v434, 11
    %vm447 = vcmp.gt.s32.totalorder %v434, 12
    %vm448 = vcmp.gt.s32.totalorder %v434, 13
    %vm449 = vcmp.gt.s32.totalorder %v434, 14
    %vm450 = vcmp.gt.s32.totalorder %v434, 15
    %vm451 = vmand %vm418, %vm435
    %vm452 = vmand %vm419, %vm436
    %vm453 = vmand %vm420, %vm437
    %vm454 = vmand %vm421, %vm438
    %vm455 = vmand %vm422, %vm439
    %vm456 = vmand %vm423, %vm440
    %vm457 = vmand %vm424, %vm441
    %vm458 = vmand %vm425, %vm442
    %vm459 = vmand %vm426, %vm443
    %vm460 = vmand %vm427, %vm444
    %vm461 = vmand %vm428, %vm445
    %vm462 = vmand %vm429, %vm446
    %vm463 = vmand %vm430, %vm447
    %vm464 = vmand %vm431, %vm448
    %vm465 = vmand %vm432, %vm449
    %vm466 = vmand %vm433, %vm450
    %v467 = vstv %s415
    %vm468 = vcmp.ge.s32.totalorder %v111, %v467
    %vm469 = vcmp.ge.s32.totalorder %v112, %v467
    %vm470 = vmand %vm451, %vm468
    %vm471 = vmand %vm451, %vm469
    %vm472 = vmand %vm452, %vm468
    %vm473 = vmand %vm452, %vm469
    %vm474 = vmand %vm453, %vm468
    %vm475 = vmand %vm453, %vm469
    %vm476 = vmand %vm454, %vm468
    %vm477 = vmand %vm454, %vm469
    %vm478 = vmand %vm455, %vm468
    %vm479 = vmand %vm455, %vm469
    %vm480 = vmand %vm456, %vm468
    %vm481 = vmand %vm456, %vm469
    %vm482 = vmand %vm457, %vm468
    %vm483 = vmand %vm457, %vm469
    %vm484 = vmand %vm458, %vm468
    %vm485 = vmand %vm458, %vm469
    %vm486 = vmand %vm459, %vm468
    %vm487 = vmand %vm459, %vm469
    %vm488 = vmand %vm460, %vm468
    %vm489 = vmand %vm460, %vm469
    %vm490 = vmand %vm461, %vm468
    %vm491 = vmand %vm461, %vm469
    %vm492 = vmand %vm462, %vm468
    %vm493 = vmand %vm462, %vm469
    %vm494 = vmand %vm463, %vm468
    %vm495 = vmand %vm463, %vm469
    %vm496 = vmand %vm464, %vm468
    %vm497 = vmand %vm464, %vm469
    %vm498 = vmand %vm465, %vm468
    %vm499 = vmand %vm465, %vm469
    %vm500 = vmand %vm466, %vm468
    %vm501 = vmand %vm466, %vm469
    %v502 = vstv %s416
    %vm503 = vcmp.lt.s32.totalorder %v111, %v502
    %vm504 = vcmp.lt.s32.totalorder %v112, %v502
    %vm505 = vmand %vm470, %vm503
    %vm506 = vmand %vm471, %vm504
    %vm507 = vmand %vm472, %vm503
    %vm508 = vmand %vm473, %vm504
    %vm509 = vmand %vm474, %vm503
    %vm510 = vmand %vm475, %vm504
    %vm511 = vmand %vm476, %vm503
    %vm512 = vmand %vm477, %vm504
    %vm513 = vmand %vm478, %vm503
    %vm514 = vmand %vm479, %vm504
    %vm515 = vmand %vm480, %vm503
    %vm516 = vmand %vm481, %vm504
    %vm517 = vmand %vm482, %vm503
    %vm518 = vmand %vm483, %vm504
    %vm519 = vmand %vm484, %vm503
    %vm520 = vmand %vm485, %vm504
    %vm521 = vmand %vm486, %vm503
    %vm522 = vmand %vm487, %vm504
    %vm523 = vmand %vm488, %vm503
    %vm524 = vmand %vm489, %vm504
    %vm525 = vmand %vm490, %vm503
    %vm526 = vmand %vm491, %vm504
    %vm527 = vmand %vm492, %vm503
    %vm528 = vmand %vm493, %vm504
    %vm529 = vmand %vm494, %vm503
    %vm530 = vmand %vm495, %vm504
    %vm531 = vmand %vm496, %vm503
    %vm532 = vmand %vm497, %vm504
    %vm533 = vmand %vm498, %vm503
    %vm534 = vmand %vm499, %vm504
    %vm535 = vmand %vm500, %vm503
    %vm536 = vmand %vm501, %vm504
    %v537 = vsel %vm505, 1, 0
    %v538 = vsel %vm506, 1, 0
    %v539 = vsel %vm507, 1, 0
    %v540 = vsel %vm508, 1, 0
    %v541 = vsel %vm509, 1, 0
    %v542 = vsel %vm510, 1, 0
    %v543 = vsel %vm511, 1, 0
    %v544 = vsel %vm512, 1, 0
    %v545 = vsel %vm513, 1, 0
    %v546 = vsel %vm514, 1, 0
    %v547 = vsel %vm515, 1, 0
    %v548 = vsel %vm516, 1, 0
    %v549 = vsel %vm517, 1, 0
    %v550 = vsel %vm518, 1, 0
    %v551 = vsel %vm519, 1, 0
    %v552 = vsel %vm520, 1, 0
    %v553 = vsel %vm521, 1, 0
    %v554 = vsel %vm522, 1, 0
    %v555 = vsel %vm523, 1, 0
    %v556 = vsel %vm524, 1, 0
    %v557 = vsel %vm525, 1, 0
    %v558 = vsel %vm526, 1, 0
    %v559 = vsel %vm527, 1, 0
    %v560 = vsel %vm528, 1, 0
    %v561 = vsel %vm529, 1, 0
    %v562 = vsel %vm530, 1, 0
    %v563 = vsel %vm531, 1, 0
    %v564 = vsel %vm532, 1, 0
    %v565 = vsel %vm533, 1, 0
    %v566 = vsel %vm534, 1, 0
    %v567 = vsel %vm535, 1, 0
    %v568 = vsel %vm536, 1, 0
    %vm569 = vcmp.eq.s32.totalorder %v537, 1
    %vm570 = vcmp.eq.s32.totalorder %v538, 1
    %vm571 = vcmp.eq.s32.totalorder %v539, 1
    %vm572 = vcmp.eq.s32.totalorder %v540, 1
    %vm573 = vcmp.eq.s32.totalorder %v541, 1
    %vm574 = vcmp.eq.s32.totalorder %v542, 1
    %vm575 = vcmp.eq.s32.totalorder %v543, 1
    %vm576 = vcmp.eq.s32.totalorder %v544, 1
    %vm577 = vcmp.eq.s32.totalorder %v545, 1
    %vm578 = vcmp.eq.s32.totalorder %v546, 1
    %vm579 = vcmp.eq.s32.totalorder %v547, 1
    %vm580 = vcmp.eq.s32.totalorder %v548, 1
    %vm581 = vcmp.eq.s32.totalorder %v549, 1
    %vm582 = vcmp.eq.s32.totalorder %v550, 1
    %vm583 = vcmp.eq.s32.totalorder %v551, 1
    %vm584 = vcmp.eq.s32.totalorder %v552, 1
    %vm585 = vcmp.eq.s32.totalorder %v553, 1
    %vm586 = vcmp.eq.s32.totalorder %v554, 1
    %vm587 = vcmp.eq.s32.totalorder %v555, 1
    %vm588 = vcmp.eq.s32.totalorder %v556, 1
    %vm589 = vcmp.eq.s32.totalorder %v557, 1
    %vm590 = vcmp.eq.s32.totalorder %v558, 1
    %vm591 = vcmp.eq.s32.totalorder %v559, 1
    %vm592 = vcmp.eq.s32.totalorder %v560, 1
    %vm593 = vcmp.eq.s32.totalorder %v561, 1
    %vm594 = vcmp.eq.s32.totalorder %v562, 1
    %vm595 = vcmp.eq.s32.totalorder %v563, 1
    %vm596 = vcmp.eq.s32.totalorder %v564, 1
    %vm597 = vcmp.eq.s32.totalorder %v565, 1
    %vm598 = vcmp.eq.s32.totalorder %v566, 1
    %vm599 = vcmp.eq.s32.totalorder %v567, 1
    %vm600 = vcmp.eq.s32.totalorder %v568, 1
    %v601 = vsel %vm569, %v45, -3e+38
    %v602 = vsel %vm570, %v46, -3e+38
    %v603 = vsel %vm571, %v47, -3e+38
    %v604 = vsel %vm572, %v48, -3e+38
    %v605 = vsel %vm573, %v49, -3e+38
    %v606 = vsel %vm574, %v50, -3e+38
    %v607 = vsel %vm575, %v51, -3e+38
    %v608 = vsel %vm576, %v52, -3e+38
    %v609 = vsel %vm577, %v53, -3e+38
    %v610 = vsel %vm578, %v54, -3e+38
    %v611 = vsel %vm579, %v55, -3e+38
    %v612 = vsel %vm580, %v56, -3e+38
    %v613 = vsel %vm581, %v57, -3e+38
    %v614 = vsel %vm582, %v58, -3e+38
    %v615 = vsel %vm583, %v59, -3e+38
    %v616 = vsel %vm584, %v60, -3e+38
    %v617 = vsel %vm585, %v61, -3e+38
    %v618 = vsel %vm586, %v62, -3e+38
    %v619 = vsel %vm587, %v63, -3e+38
    %v620 = vsel %vm588, %v64, -3e+38
    %v621 = vsel %vm589, %v65, -3e+38
    %v622 = vsel %vm590, %v66, -3e+38
    %v623 = vsel %vm591, %v67, -3e+38
    %v624 = vsel %vm592, %v68, -3e+38
    %v625 = vsel %vm593, %v69, -3e+38
    %v626 = vsel %vm594, %v70, -3e+38
    %v627 = vsel %vm595, %v71, -3e+38
    %v628 = vsel %vm596, %v72, -3e+38
    %v629 = vsel %vm597, %v73, -3e+38
    %v630 = vsel %vm598, %v74, -3e+38
    %v631 = vsel %vm599, %v75, -3e+38
    %v632 = vsel %vm600, %v76, -3e+38
    %v633 = vsel %vm333, %v601, -inf
    %v634 = vsel %vm333, %v603, -inf
    %v635 = vsel %vm333, %v605, -inf
    %v636 = vmax.f32 %v633, %v635
    %v637 = vsel %vm333, %v607, -inf
    %v638 = vmax.f32 %v634, %v637
    %v639 = vsel %vm333, %v609, -inf
    %v640 = vmax.f32 %v636, %v639
    %v641 = vsel %vm333, %v611, -inf
    %v642 = vmax.f32 %v638, %v641
    %v643 = vsel %vm333, %v613, -inf
    %v644 = vmax.f32 %v640, %v643
    %v645 = vsel %vm333, %v615, -inf
    %v646 = vmax.f32 %v642, %v645
    %v647 = vsel %vm333, %v617, -inf
    %v648 = vmax.f32 %v644, %v647
    %v649 = vsel %vm333, %v619, -inf
    %v650 = vmax.f32 %v646, %v649
    %v651 = vsel %vm333, %v621, -inf
    %v652 = vmax.f32 %v648, %v651
    %v653 = vsel %vm333, %v623, -inf
    %v654 = vmax.f32 %v650, %v653
    %v655 = vsel %vm333, %v625, -inf
    %v656 = vmax.f32 %v652, %v655
    %v657 = vsel %vm333, %v627, -inf
    %v658 = vmax.f32 %v654, %v657
    %v659 = vsel %vm333, %v629, -inf
    %v660 = vmax.f32 %v656, %v659
    %v661 = vsel %vm333, %v631, -inf
    %v662 = vmax.f32 %v658, %v661
    %v663 = vmax.f32 %v660, %v662
    %v664 = vsel %vm333, %v602, -inf
    %v665 = vsel %vm333, %v604, -inf
    %v666 = vsel %vm333, %v606, -inf
    %v667 = vmax.f32 %v664, %v666
    %v668 = vsel %vm333, %v608, -inf
    %v669 = vmax.f32 %v665, %v668
    %v670 = vsel %vm333, %v610, -inf
    %v671 = vmax.f32 %v667, %v670
    %v672 = vsel %vm333, %v612, -inf
    %v673 = vmax.f32 %v669, %v672
    %v674 = vsel %vm333, %v614, -inf
    %v675 = vmax.f32 %v671, %v674
    %v676 = vsel %vm333, %v616, -inf
    %v677 = vmax.f32 %v673, %v676
    %v678 = vsel %vm333, %v618, -inf
    %v679 = vmax.f32 %v675, %v678
    %v680 = vsel %vm333, %v620, -inf
    %v681 = vmax.f32 %v677, %v680
    %v682 = vsel %vm333, %v622, -inf
    %v683 = vmax.f32 %v679, %v682
    %v684 = vsel %vm333, %v624, -inf
    %v685 = vmax.f32 %v681, %v684
    %v686 = vsel %vm333, %v626, -inf
    %v687 = vmax.f32 %v683, %v686
    %v688 = vsel %vm333, %v628, -inf
    %v689 = vmax.f32 %v685, %v688
    %v690 = vsel %vm333, %v630, -inf
    %v691 = vmax.f32 %v687, %v690
    %v692 = vsel %vm333, %v632, -inf
    %v693 = vmax.f32 %v689, %v692
    %v694 = vmax.f32 %v691, %v693
    %v695 = vsel %vm333, %v663, -inf
    %v696 = vsel %vm333, %v694, -inf
    %v697 = vmax.f32 %v695, %v696
    %v698 = vrot.slane %v697, 4
    %v699 = vmax.f32 %v697, %v698
    %v700 = vrot.slane %v699, 2
    %v701 = vmax.f32 %v699, %v700
    %v702 = vrot.slane %v701, 1
    %v703 = vmax.f32 %v701, %v702
    %p704 = scmp.le.s32.totalorder %s414, %s413
    %p705 = scmp.le.s32.totalorder %s416, %s415
    %p706 = por %p704, %p705
    %s707 = scalar_select %p706, 1, 0
    %v708 = vstv %s707
    %vm709 = vcmp.eq.s32.totalorder %v708, 1
    %v710 = vsel %vm709, 0.0, %v703
    %v711 = vadd.f32 %v412, %v710
    %s712 = sld [smem:[#allocation3 + $0x8]]
    %s713 = sld [smem:[#allocation3 + $0x9]]
    %s714 = sld [smem:[#allocation3 + $0xa]]
    %s715 = sld [smem:[#allocation3 + $0xb]]
    %v716 = vstv %s712
    %vm717 = vcmp.le.s32.totalorder %v716, 0
    %vm718 = vcmp.le.s32.totalorder %v716, 1
    %vm719 = vcmp.le.s32.totalorder %v716, 2
    %vm720 = vcmp.le.s32.totalorder %v716, 3
    %vm721 = vcmp.le.s32.totalorder %v716, 4
    %vm722 = vcmp.le.s32.totalorder %v716, 5
    %vm723 = vcmp.le.s32.totalorder %v716, 6
    %vm724 = vcmp.le.s32.totalorder %v716, 7
    %vm725 = vcmp.le.s32.totalorder %v716, 8
    %vm726 = vcmp.le.s32.totalorder %v716, 9
    %vm727 = vcmp.le.s32.totalorder %v716, 10
    %vm728 = vcmp.le.s32.totalorder %v716, 11
    %vm729 = vcmp.le.s32.totalorder %v716, 12
    %vm730 = vcmp.le.s32.totalorder %v716, 13
    %vm731 = vcmp.le.s32.totalorder %v716, 14
    %vm732 = vcmp.le.s32.totalorder %v716, 15
    %v733 = vstv %s713
    %vm734 = vcmp.gt.s32.totalorder %v733, 0
    %vm735 = vcmp.gt.s32.totalorder %v733, 1
    %vm736 = vcmp.gt.s32.totalorder %v733, 2
    %vm737 = vcmp.gt.s32.totalorder %v733, 3
    %vm738 = vcmp.gt.s32.totalorder %v733, 4
    %vm739 = vcmp.gt.s32.totalorder %v733, 5
    %vm740 = vcmp.gt.s32.totalorder %v733, 6
    %vm741 = vcmp.gt.s32.totalorder %v733, 7
    %vm742 = vcmp.gt.s32.totalorder %v733, 8
    %vm743 = vcmp.gt.s32.totalorder %v733, 9
    %vm744 = vcmp.gt.s32.totalorder %v733, 10
    %vm745 = vcmp.gt.s32.totalorder %v733, 11
    %vm746 = vcmp.gt.s32.totalorder %v733, 12
    %vm747 = vcmp.gt.s32.totalorder %v733, 13
    %vm748 = vcmp.gt.s32.totalorder %v733, 14
    %vm749 = vcmp.gt.s32.totalorder %v733, 15
    %vm750 = vmand %vm717, %vm734
    %vm751 = vmand %vm718, %vm735
    %vm752 = vmand %vm719, %vm736
    %vm753 = vmand %vm720, %vm737
    %vm754 = vmand %vm721, %vm738
    %vm755 = vmand %vm722, %vm739
    %vm756 = vmand %vm723, %vm740
    %vm757 = vmand %vm724, %vm741
    %vm758 = vmand %vm725, %vm742
    %vm759 = vmand %vm726, %vm743
    %vm760 = vmand %vm727, %vm744
    %vm761 = vmand %vm728, %vm745
    %vm762 = vmand %vm729, %vm746
    %vm763 = vmand %vm730, %vm747
    %vm764 = vmand %vm731, %vm748
    %vm765 = vmand %vm732, %vm749
    %v766 = vstv %s714
    %vm767 = vcmp.ge.s32.totalorder %v111, %v766
    %vm768 = vcmp.ge.s32.totalorder %v112, %v766
    %vm769 = vmand %vm750, %vm767
    %vm770 = vmand %vm750, %vm768
    %vm771 = vmand %vm751, %vm767
    %vm772 = vmand %vm751, %vm768
    %vm773 = vmand %vm752, %vm767
    %vm774 = vmand %vm752, %vm768
    %vm775 = vmand %vm753, %vm767
    %vm776 = vmand %vm753, %vm768
    %vm777 = vmand %vm754, %vm767
    %vm778 = vmand %vm754, %vm768
    %vm779 = vmand %vm755, %vm767
    %vm780 = vmand %vm755, %vm768
    %vm781 = vmand %vm756, %vm767
    %vm782 = vmand %vm756, %vm768
    %vm783 = vmand %vm757, %vm767
    %vm784 = vmand %vm757, %vm768
    %vm785 = vmand %vm758, %vm767
    %vm786 = vmand %vm758, %vm768
    %vm787 = vmand %vm759, %vm767
    %vm788 = vmand %vm759, %vm768
    %vm789 = vmand %vm760, %vm767
    %vm790 = vmand %vm760, %vm768
    %vm791 = vmand %vm761, %vm767
    %vm792 = vmand %vm761, %vm768
    %vm793 = vmand %vm762, %vm767
    %vm794 = vmand %vm762, %vm768
    %vm795 = vmand %vm763, %vm767
    %vm796 = vmand %vm763, %vm768
    %vm797 = vmand %vm764, %vm767
    %vm798 = vmand %vm764, %vm768
    %vm799 = vmand %vm765, %vm767
    %vm800 = vmand %vm765, %vm768
    %v801 = vstv %s715
    %vm802 = vcmp.lt.s32.totalorder %v111, %v801
    %vm803 = vcmp.lt.s32.totalorder %v112, %v801
    %vm804 = vmand %vm769, %vm802
    %vm805 = vmand %vm770, %vm803
    %vm806 = vmand %vm771, %vm802
    %vm807 = vmand %vm772, %vm803
    %vm808 = vmand %vm773, %vm802
    %vm809 = vmand %vm774, %vm803
    %vm810 = vmand %vm775, %vm802
    %vm811 = vmand %vm776, %vm803
    %vm812 = vmand %vm777, %vm802
    %vm813 = vmand %vm778, %vm803
    %vm814 = vmand %vm779, %vm802
    %vm815 = vmand %vm780, %vm803
    %vm816 = vmand %vm781, %vm802
    %vm817 = vmand %vm782, %vm803
    %vm818 = vmand %vm783, %vm802
    %vm819 = vmand %vm784, %vm803
    %vm820 = vmand %vm785, %vm802
    %vm821 = vmand %vm786, %vm803
    %vm822 = vmand %vm787, %vm802
    %vm823 = vmand %vm788, %vm803
    %vm824 = vmand %vm789, %vm802
    %vm825 = vmand %vm790, %vm803
    %vm826 = vmand %vm791, %vm802
    %vm827 = vmand %vm792, %vm803
    %vm828 = vmand %vm793, %vm802
    %vm829 = vmand %vm794, %vm803
    %vm830 = vmand %vm795, %vm802
    %vm831 = vmand %vm796, %vm803
    %vm832 = vmand %vm797, %vm802
    %vm833 = vmand %vm798, %vm803
    %vm834 = vmand %vm799, %vm802
    %vm835 = vmand %vm800, %vm803
    %v836 = vsel %vm804, 1, 0
    %v837 = vsel %vm805, 1, 0
    %v838 = vsel %vm806, 1, 0
    %v839 = vsel %vm807, 1, 0
    %v840 = vsel %vm808, 1, 0
    %v841 = vsel %vm809, 1, 0
    %v842 = vsel %vm810, 1, 0
    %v843 = vsel %vm811, 1, 0
    %v844 = vsel %vm812, 1, 0
    %v845 = vsel %vm813, 1, 0
    %v846 = vsel %vm814, 1, 0
    %v847 = vsel %vm815, 1, 0
    %v848 = vsel %vm816, 1, 0
    %v849 = vsel %vm817, 1, 0
    %v850 = vsel %vm818, 1, 0
    %v851 = vsel %vm819, 1, 0
    %v852 = vsel %vm820, 1, 0
    %v853 = vsel %vm821, 1, 0
    %v854 = vsel %vm822, 1, 0
    %v855 = vsel %vm823, 1, 0
    %v856 = vsel %vm824, 1, 0
    %v857 = vsel %vm825, 1, 0
    %v858 = vsel %vm826, 1, 0
    %v859 = vsel %vm827, 1, 0
    %v860 = vsel %vm828, 1, 0
    %v861 = vsel %vm829, 1, 0
    %v862 = vsel %vm830, 1, 0
    %v863 = vsel %vm831, 1, 0
    %v864 = vsel %vm832, 1, 0
    %v865 = vsel %vm833, 1, 0
    %v866 = vsel %vm834, 1, 0
    %v867 = vsel %vm835, 1, 0
    %vm868 = vcmp.eq.s32.totalorder %v836, 1
    %vm869 = vcmp.eq.s32.totalorder %v837, 1
    %vm870 = vcmp.eq.s32.totalorder %v838, 1
    %vm871 = vcmp.eq.s32.totalorder %v839, 1
    %vm872 = vcmp.eq.s32.totalorder %v840, 1
    %vm873 = vcmp.eq.s32.totalorder %v841, 1
    %vm874 = vcmp.eq.s32.totalorder %v842, 1
    %vm875 = vcmp.eq.s32.totalorder %v843, 1
    %vm876 = vcmp.eq.s32.totalorder %v844, 1
    %vm877 = vcmp.eq.s32.totalorder %v845, 1
    %vm878 = vcmp.eq.s32.totalorder %v846, 1
    %vm879 = vcmp.eq.s32.totalorder %v847, 1
    %vm880 = vcmp.eq.s32.totalorder %v848, 1
    %vm881 = vcmp.eq.s32.totalorder %v849, 1
    %vm882 = vcmp.eq.s32.totalorder %v850, 1
    %vm883 = vcmp.eq.s32.totalorder %v851, 1
    %vm884 = vcmp.eq.s32.totalorder %v852, 1
    %vm885 = vcmp.eq.s32.totalorder %v853, 1
    %vm886 = vcmp.eq.s32.totalorder %v854, 1
    %vm887 = vcmp.eq.s32.totalorder %v855, 1
    %vm888 = vcmp.eq.s32.totalorder %v856, 1
    %vm889 = vcmp.eq.s32.totalorder %v857, 1
    %vm890 = vcmp.eq.s32.totalorder %v858, 1
    %vm891 = vcmp.eq.s32.totalorder %v859, 1
    %vm892 = vcmp.eq.s32.totalorder %v860, 1
    %vm893 = vcmp.eq.s32.totalorder %v861, 1
    %vm894 = vcmp.eq.s32.totalorder %v862, 1
    %vm895 = vcmp.eq.s32.totalorder %v863, 1
    %vm896 = vcmp.eq.s32.totalorder %v864, 1
    %vm897 = vcmp.eq.s32.totalorder %v865, 1
    %vm898 = vcmp.eq.s32.totalorder %v866, 1
    %vm899 = vcmp.eq.s32.totalorder %v867, 1
    %v900 = vsel %vm868, %v45, -3e+38
    %v901 = vsel %vm869, %v46, -3e+38
    %v902 = vsel %vm870, %v47, -3e+38
    %v903 = vsel %vm871, %v48, -3e+38
    %v904 = vsel %vm872, %v49, -3e+38
    %v905 = vsel %vm873, %v50, -3e+38
    %v906 = vsel %vm874, %v51, -3e+38
    %v907 = vsel %vm875, %v52, -3e+38
    %v908 = vsel %vm876, %v53, -3e+38
    %v909 = vsel %vm877, %v54, -3e+38
    %v910 = vsel %vm878, %v55, -3e+38
    %v911 = vsel %vm879, %v56, -3e+38
    %v912 = vsel %vm880, %v57, -3e+38
    %v913 = vsel %vm881, %v58, -3e+38
    %v914 = vsel %vm882, %v59, -3e+38
    %v915 = vsel %vm883, %v60, -3e+38
    %v916 = vsel %vm884, %v61, -3e+38
    %v917 = vsel %vm885, %v62, -3e+38
    %v918 = vsel %vm886, %v63, -3e+38
    %v919 = vsel %vm887, %v64, -3e+38
    %v920 = vsel %vm888, %v65, -3e+38
    %v921 = vsel %vm889, %v66, -3e+38
    %v922 = vsel %vm890, %v67, -3e+38
    %v923 = vsel %vm891, %v68, -3e+38
    %v924 = vsel %vm892, %v69, -3e+38
    %v925 = vsel %vm893, %v70, -3e+38
    %v926 = vsel %vm894, %v71, -3e+38
    %v927 = vsel %vm895, %v72, -3e+38
    %v928 = vsel %vm896, %v73, -3e+38
    %v929 = vsel %vm897, %v74, -3e+38
    %v930 = vsel %vm898, %v75, -3e+38
    %v931 = vsel %vm899, %v76, -3e+38
    %v932 = vsel %vm333, %v900, -inf
    %v933 = vsel %vm333, %v902, -inf
    %v934 = vsel %vm333, %v904, -inf
    %v935 = vmax.f32 %v932, %v934
    %v936 = vsel %vm333, %v906, -inf
    %v937 = vmax.f32 %v933, %v936
    %v938 = vsel %vm333, %v908, -inf
    %v939 = vmax.f32 %v935, %v938
    %v940 = vsel %vm333, %v910, -inf
    %v941 = vmax.f32 %v937, %v940
    %v942 = vsel %vm333, %v912, -inf
    %v943 = vmax.f32 %v939, %v942
    %v944 = vsel %vm333, %v914, -inf
    %v945 = vmax.f32 %v941, %v944
    %v946 = vsel %vm333, %v916, -inf
    %v947 = vmax.f32 %v943, %v946
    %v948 = vsel %vm333, %v918, -inf
    %v949 = vmax.f32 %v945, %v948
    %v950 = vsel %vm333, %v920, -inf
    %v951 = vmax.f32 %v947, %v950
    %v952 = vsel %vm333, %v922, -inf
    %v953 = vmax.f32 %v949, %v952
    %v954 = vsel %vm333, %v924, -inf
    %v955 = vmax.f32 %v951, %v954
    %v956 = vsel %vm333, %v926, -inf
    %v957 = vmax.f32 %v953, %v956
    %v958 = vsel %vm333, %v928, -inf
    %v959 = vmax.f32 %v955, %v958
    %v960 = vsel %vm333, %v930, -inf
    %v961 = vmax.f32 %v957, %v960
    %v962 = vmax.f32 %v959, %v961
    %v963 = vsel %vm333, %v901, -inf
    %v964 = vsel %vm333, %v903, -inf
    %v965 = vsel %vm333, %v905, -inf
    %v966 = vmax.f32 %v963, %v965
    %v967 = vsel %vm333, %v907, -inf
    %v968 = vmax.f32 %v964, %v967
    %v969 = vsel %vm333, %v909, -inf
    %v970 = vmax.f32 %v966, %v969
    %v971 = vsel %vm333, %v911, -inf
    %v972 = vmax.f32 %v968, %v971
    %v973 = vsel %vm333, %v913, -inf
    %v974 = vmax.f32 %v970, %v973
    %v975 = vsel %vm333, %v915, -inf
    %v976 = vmax.f32 %v972, %v975
    %v977 = vsel %vm333, %v917, -inf
    %v978 = vmax.f32 %v974, %v977
    %v979 = vsel %vm333, %v919, -inf
    %v980 = vmax.f32 %v976, %v979
    %v981 = vsel %vm333, %v921, -inf
    %v982 = vmax.f32 %v978, %v981
    %v983 = vsel %vm333, %v923, -inf
    %v984 = vmax.f32 %v980, %v983
    %v985 = vsel %vm333, %v925, -inf
    %v986 = vmax.f32 %v982, %v985
    %v987 = vsel %vm333, %v927, -inf
    %v988 = vmax.f32 %v984, %v987
    %v989 = vsel %vm333, %v929, -inf
    %v990 = vmax.f32 %v986, %v989
    %v991 = vsel %vm333, %v931, -inf
    %v992 = vmax.f32 %v988, %v991
    %v993 = vmax.f32 %v990, %v992
    %v994 = vsel %vm333, %v962, -inf
    %v995 = vsel %vm333, %v993, -inf
    %v996 = vmax.f32 %v994, %v995
    %v997 = vrot.slane %v996, 4
    %v998 = vmax.f32 %v996, %v997
    %v999 = vrot.slane %v998, 2
    %v1000 = vmax.f32 %v998, %v999
    %v1001 = vrot.slane %v1000, 1
    %v1002 = vmax.f32 %v1000, %v1001
    %p1003 = scmp.le.s32.totalorder %s713, %s712
    %p1004 = scmp.le.s32.totalorder %s715, %s714
    %p1005 = por %p1003, %p1004
    %s1006 = scalar_select %p1005, 1, 0
    %v1007 = vstv %s1006
    %vm1008 = vcmp.eq.s32.totalorder %v1007, 1
    %v1009 = vsel %vm1008, 0.0, %v1002
    %v1010 = vadd.f32 %v711, %v1009
    %s1011 = sld [smem:[#allocation3 + $0xc]]
    %s1012 = sld [smem:[#allocation3 + $0xd]]
    %s1013 = sld [smem:[#allocation3 + $0xe]]
    %s1014 = sld [smem:[#allocation3 + $0xf]]
    %v1015 = vstv %s1011
    %vm1016 = vcmp.le.s32.totalorder %v1015, 0
    %vm1017 = vcmp.le.s32.totalorder %v1015, 1
    %vm1018 = vcmp.le.s32.totalorder %v1015, 2
    %vm1019 = vcmp.le.s32.totalorder %v1015, 3
    %vm1020 = vcmp.le.s32.totalorder %v1015, 4
    %vm1021 = vcmp.le.s32.totalorder %v1015, 5
    %vm1022 = vcmp.le.s32.totalorder %v1015, 6
    %vm1023 = vcmp.le.s32.totalorder %v1015, 7
    %vm1024 = vcmp.le.s32.totalorder %v1015, 8
    %vm1025 = vcmp.le.s32.totalorder %v1015, 9
    %vm1026 = vcmp.le.s32.totalorder %v1015, 10
    %vm1027 = vcmp.le.s32.totalorder %v1015, 11
    %vm1028 = vcmp.le.s32.totalorder %v1015, 12
    %vm1029 = vcmp.le.s32.totalorder %v1015, 13
    %vm1030 = vcmp.le.s32.totalorder %v1015, 14
    %vm1031 = vcmp.le.s32.totalorder %v1015, 15
    %v1032 = vstv %s1012
    %vm1033 = vcmp.gt.s32.totalorder %v1032, 0
    %vm1034 = vcmp.gt.s32.totalorder %v1032, 1
    %vm1035 = vcmp.gt.s32.totalorder %v1032, 2
    %vm1036 = vcmp.gt.s32.totalorder %v1032, 3
    %vm1037 = vcmp.gt.s32.totalorder %v1032, 4
    %vm1038 = vcmp.gt.s32.totalorder %v1032, 5
    %vm1039 = vcmp.gt.s32.totalorder %v1032, 6
    %vm1040 = vcmp.gt.s32.totalorder %v1032, 7
    %vm1041 = vcmp.gt.s32.totalorder %v1032, 8
    %vm1042 = vcmp.gt.s32.totalorder %v1032, 9
    %vm1043 = vcmp.gt.s32.totalorder %v1032, 10
    %vm1044 = vcmp.gt.s32.totalorder %v1032, 11
    %vm1045 = vcmp.gt.s32.totalorder %v1032, 12
    %vm1046 = vcmp.gt.s32.totalorder %v1032, 13
    %vm1047 = vcmp.gt.s32.totalorder %v1032, 14
    %vm1048 = vcmp.gt.s32.totalorder %v1032, 15
    %vm1049 = vmand %vm1016, %vm1033
    %vm1050 = vmand %vm1017, %vm1034
    %vm1051 = vmand %vm1018, %vm1035
    %vm1052 = vmand %vm1019, %vm1036
    %vm1053 = vmand %vm1020, %vm1037
    %vm1054 = vmand %vm1021, %vm1038
    %vm1055 = vmand %vm1022, %vm1039
    %vm1056 = vmand %vm1023, %vm1040
    %vm1057 = vmand %vm1024, %vm1041
    %vm1058 = vmand %vm1025, %vm1042
    %vm1059 = vmand %vm1026, %vm1043
    %vm1060 = vmand %vm1027, %vm1044
    %vm1061 = vmand %vm1028, %vm1045
    %vm1062 = vmand %vm1029, %vm1046
    %vm1063 = vmand %vm1030, %vm1047
    %vm1064 = vmand %vm1031, %vm1048
    %v1065 = vstv %s1013
    %vm1066 = vcmp.ge.s32.totalorder %v111, %v1065
    %vm1067 = vcmp.ge.s32.totalorder %v112, %v1065
    %vm1068 = vmand %vm1049, %vm1066
    %vm1069 = vmand %vm1049, %vm1067
    %vm1070 = vmand %vm1050, %vm1066
    %vm1071 = vmand %vm1050, %vm1067
    %vm1072 = vmand %vm1051, %vm1066
    %vm1073 = vmand %vm1051, %vm1067
    %vm1074 = vmand %vm1052, %vm1066
    %vm1075 = vmand %vm1052, %vm1067
    %vm1076 = vmand %vm1053, %vm1066
    %vm1077 = vmand %vm1053, %vm1067
    %vm1078 = vmand %vm1054, %vm1066
    %vm1079 = vmand %vm1054, %vm1067
    %vm1080 = vmand %vm1055, %vm1066
    %vm1081 = vmand %vm1055, %vm1067
    %vm1082 = vmand %vm1056, %vm1066
    %vm1083 = vmand %vm1056, %vm1067
    %vm1084 = vmand %vm1057, %vm1066
    %vm1085 = vmand %vm1057, %vm1067
    %vm1086 = vmand %vm1058, %vm1066
    %vm1087 = vmand %vm1058, %vm1067
    %vm1088 = vmand %vm1059, %vm1066
    %vm1089 = vmand %vm1059, %vm1067
    %vm1090 = vmand %vm1060, %vm1066
    %vm1091 = vmand %vm1060, %vm1067
    %vm1092 = vmand %vm1061, %vm1066
    %vm1093 = vmand %vm1061, %vm1067
    %vm1094 = vmand %vm1062, %vm1066
    %vm1095 = vmand %vm1062, %vm1067
    %vm1096 = vmand %vm1063, %vm1066
    %vm1097 = vmand %vm1063, %vm1067
    %vm1098 = vmand %vm1064, %vm1066
    %vm1099 = vmand %vm1064, %vm1067
    %v1100 = vstv %s1014
    %vm1101 = vcmp.lt.s32.totalorder %v111, %v1100
    %vm1102 = vcmp.lt.s32.totalorder %v112, %v1100
    %vm1103 = vmand %vm1068, %vm1101
    %vm1104 = vmand %vm1069, %vm1102
    %vm1105 = vmand %vm1070, %vm1101
    %vm1106 = vmand %vm1071, %vm1102
    %vm1107 = vmand %vm1072, %vm1101
    %vm1108 = vmand %vm1073, %vm1102
    %vm1109 = vmand %vm1074, %vm1101
    %vm1110 = vmand %vm1075, %vm1102
    %vm1111 = vmand %vm1076, %vm1101
    %vm1112 = vmand %vm1077, %vm1102
    %vm1113 = vmand %vm1078, %vm1101
    %vm1114 = vmand %vm1079, %vm1102
    %vm1115 = vmand %vm1080, %vm1101
    %vm1116 = vmand %vm1081, %vm1102
    %vm1117 = vmand %vm1082, %vm1101
    %vm1118 = vmand %vm1083, %vm1102
    %vm1119 = vmand %vm1084, %vm1101
    %vm1120 = vmand %vm1085, %vm1102
    %vm1121 = vmand %vm1086, %vm1101
    %vm1122 = vmand %vm1087, %vm1102
    %vm1123 = vmand %vm1088, %vm1101
    %vm1124 = vmand %vm1089, %vm1102
    %vm1125 = vmand %vm1090, %vm1101
    %vm1126 = vmand %vm1091, %vm1102
    %vm1127 = vmand %vm1092, %vm1101
    %vm1128 = vmand %vm1093, %vm1102
    %vm1129 = vmand %vm1094, %vm1101
    %vm1130 = vmand %vm1095, %vm1102
    %vm1131 = vmand %vm1096, %vm1101
    %vm1132 = vmand %vm1097, %vm1102
    %vm1133 = vmand %vm1098, %vm1101
    %vm1134 = vmand %vm1099, %vm1102
    %v1135 = vsel %vm1103, 1, 0
    %v1136 = vsel %vm1104, 1, 0
    %v1137 = vsel %vm1105, 1, 0
    %v1138 = vsel %vm1106, 1, 0
    %v1139 = vsel %vm1107, 1, 0
    %v1140 = vsel %vm1108, 1, 0
    %v1141 = vsel %vm1109, 1, 0
    %v1142 = vsel %vm1110, 1, 0
    %v1143 = vsel %vm1111, 1, 0
    %v1144 = vsel %vm1112, 1, 0
    %v1145 = vsel %vm1113, 1, 0
    %v1146 = vsel %vm1114, 1, 0
    %v1147 = vsel %vm1115, 1, 0
    %v1148 = vsel %vm1116, 1, 0
    %v1149 = vsel %vm1117, 1, 0
    %v1150 = vsel %vm1118, 1, 0
    %v1151 = vsel %vm1119, 1, 0
    %v1152 = vsel %vm1120, 1, 0
    %v1153 = vsel %vm1121, 1, 0
    %v1154 = vsel %vm1122, 1, 0
    %v1155 = vsel %vm1123, 1, 0
    %v1156 = vsel %vm1124, 1, 0
    %v1157 = vsel %vm1125, 1, 0
    %v1158 = vsel %vm1126, 1, 0
    %v1159 = vsel %vm1127, 1, 0
    %v1160 = vsel %vm1128, 1, 0
    %v1161 = vsel %vm1129, 1, 0
    %v1162 = vsel %vm1130, 1, 0
    %v1163 = vsel %vm1131, 1, 0
    %v1164 = vsel %vm1132, 1, 0
    %v1165 = vsel %vm1133, 1, 0
    %v1166 = vsel %vm1134, 1, 0
    %vm1167 = vcmp.eq.s32.totalorder %v1135, 1
    %vm1168 = vcmp.eq.s32.totalorder %v1136, 1
    %vm1169 = vcmp.eq.s32.totalorder %v1137, 1
    %vm1170 = vcmp.eq.s32.totalorder %v1138, 1
    %vm1171 = vcmp.eq.s32.totalorder %v1139, 1
    %vm1172 = vcmp.eq.s32.totalorder %v1140, 1
    %vm1173 = vcmp.eq.s32.totalorder %v1141, 1
    %vm1174 = vcmp.eq.s32.totalorder %v1142, 1
    %vm1175 = vcmp.eq.s32.totalorder %v1143, 1
    %vm1176 = vcmp.eq.s32.totalorder %v1144, 1
    %vm1177 = vcmp.eq.s32.totalorder %v1145, 1
    %vm1178 = vcmp.eq.s32.totalorder %v1146, 1
    %vm1179 = vcmp.eq.s32.totalorder %v1147, 1
    %vm1180 = vcmp.eq.s32.totalorder %v1148, 1
    %vm1181 = vcmp.eq.s32.totalorder %v1149, 1
    %vm1182 = vcmp.eq.s32.totalorder %v1150, 1
    %vm1183 = vcmp.eq.s32.totalorder %v1151, 1
    %vm1184 = vcmp.eq.s32.totalorder %v1152, 1
    %vm1185 = vcmp.eq.s32.totalorder %v1153, 1
    %vm1186 = vcmp.eq.s32.totalorder %v1154, 1
    %vm1187 = vcmp.eq.s32.totalorder %v1155, 1
    %vm1188 = vcmp.eq.s32.totalorder %v1156, 1
    %vm1189 = vcmp.eq.s32.totalorder %v1157, 1
    %vm1190 = vcmp.eq.s32.totalorder %v1158, 1
    %vm1191 = vcmp.eq.s32.totalorder %v1159, 1
    %vm1192 = vcmp.eq.s32.totalorder %v1160, 1
    %vm1193 = vcmp.eq.s32.totalorder %v1161, 1
    %vm1194 = vcmp.eq.s32.totalorder %v1162, 1
    %vm1195 = vcmp.eq.s32.totalorder %v1163, 1
    %vm1196 = vcmp.eq.s32.totalorder %v1164, 1
    %vm1197 = vcmp.eq.s32.totalorder %v1165, 1
    %vm1198 = vcmp.eq.s32.totalorder %v1166, 1
    %v1199 = vsel %vm1167, %v45, -3e+38
    %v1200 = vsel %vm1168, %v46, -3e+38
    %v1201 = vsel %vm1169, %v47, -3e+38
    %v1202 = vsel %vm1170, %v48, -3e+38
    %v1203 = vsel %vm1171, %v49, -3e+38
    %v1204 = vsel %vm1172, %v50, -3e+38
    %v1205 = vsel %vm1173, %v51, -3e+38
    %v1206 = vsel %vm1174, %v52, -3e+38
    %v1207 = vsel %vm1175, %v53, -3e+38
    %v1208 = vsel %vm1176, %v54, -3e+38
    %v1209 = vsel %vm1177, %v55, -3e+38
    %v1210 = vsel %vm1178, %v56, -3e+38
    %v1211 = vsel %vm1179, %v57, -3e+38
    %v1212 = vsel %vm1180, %v58, -3e+38
    %v1213 = vsel %vm1181, %v59, -3e+38
    %v1214 = vsel %vm1182, %v60, -3e+38
    %v1215 = vsel %vm1183, %v61, -3e+38
    %v1216 = vsel %vm1184, %v62, -3e+38
    %v1217 = vsel %vm1185, %v63, -3e+38
    %v1218 = vsel %vm1186, %v64, -3e+38
    %v1219 = vsel %vm1187, %v65, -3e+38
    %v1220 = vsel %vm1188, %v66, -3e+38
    %v1221 = vsel %vm1189, %v67, -3e+38
    %v1222 = vsel %vm1190, %v68, -3e+38
    %v1223 = vsel %vm1191, %v69, -3e+38
    %v1224 = vsel %vm1192, %v70, -3e+38
    %v1225 = vsel %vm1193, %v71, -3e+38
    %v1226 = vsel %vm1194, %v72, -3e+38
    %v1227 = vsel %vm1195, %v73, -3e+38
    %v1228 = vsel %vm1196, %v74, -3e+38
    %v1229 = vsel %vm1197, %v75, -3e+38
    %v1230 = vsel %vm1198, %v76, -3e+38
    %v1231 = vsel %vm333, %v1199, -inf
    %v1232 = vsel %vm333, %v1201, -inf
    %v1233 = vsel %vm333, %v1203, -inf
    %v1234 = vmax.f32 %v1231, %v1233
    %v1235 = vsel %vm333, %v1205, -inf
    %v1236 = vmax.f32 %v1232, %v1235
    %v1237 = vsel %vm333, %v1207, -inf
    %v1238 = vmax.f32 %v1234, %v1237
    %v1239 = vsel %vm333, %v1209, -inf
    %v1240 = vmax.f32 %v1236, %v1239
    %v1241 = vsel %vm333, %v1211, -inf
    %v1242 = vmax.f32 %v1238, %v1241
    %v1243 = vsel %vm333, %v1213, -inf
    %v1244 = vmax.f32 %v1240, %v1243
    %v1245 = vsel %vm333, %v1215, -inf
    %v1246 = vmax.f32 %v1242, %v1245
    %v1247 = vsel %vm333, %v1217, -inf
    %v1248 = vmax.f32 %v1244, %v1247
    %v1249 = vsel %vm333, %v1219, -inf
    %v1250 = vmax.f32 %v1246, %v1249
    %v1251 = vsel %vm333, %v1221, -inf
    %v1252 = vmax.f32 %v1248, %v1251
    %v1253 = vsel %vm333, %v1223, -inf
    %v1254 = vmax.f32 %v1250, %v1253
    %v1255 = vsel %vm333, %v1225, -inf
    %v1256 = vmax.f32 %v1252, %v1255
    %v1257 = vsel %vm333, %v1227, -inf
    %v1258 = vmax.f32 %v1254, %v1257
    %v1259 = vsel %vm333, %v1229, -inf
    %v1260 = vmax.f32 %v1256, %v1259
    %v1261 = vmax.f32 %v1258, %v1260
    %v1262 = vsel %vm333, %v1200, -inf
    %v1263 = vsel %vm333, %v1202, -inf
    %v1264 = vsel %vm333, %v1204, -inf
    %v1265 = vmax.f32 %v1262, %v1264
    %v1266 = vsel %vm333, %v1206, -inf
    %v1267 = vmax.f32 %v1263, %v1266
    %v1268 = vsel %vm333, %v1208, -inf
    %v1269 = vmax.f32 %v1265, %v1268
    %v1270 = vsel %vm333, %v1210, -inf
    %v1271 = vmax.f32 %v1267, %v1270
    %v1272 = vsel %vm333, %v1212, -inf
    %v1273 = vmax.f32 %v1269, %v1272
    %v1274 = vsel %vm333, %v1214, -inf
    %v1275 = vmax.f32 %v1271, %v1274
    %v1276 = vsel %vm333, %v1216, -inf
    %v1277 = vmax.f32 %v1273, %v1276
    %v1278 = vsel %vm333, %v1218, -inf
    %v1279 = vmax.f32 %v1275, %v1278
    %v1280 = vsel %vm333, %v1220, -inf
    %v1281 = vmax.f32 %v1277, %v1280
    %v1282 = vsel %vm333, %v1222, -inf
    %v1283 = vmax.f32 %v1279, %v1282
    %v1284 = vsel %vm333, %v1224, -inf
    %v1285 = vmax.f32 %v1281, %v1284
    %v1286 = vsel %vm333, %v1226, -inf
    %v1287 = vmax.f32 %v1283, %v1286
    %v1288 = vsel %vm333, %v1228, -inf
    %v1289 = vmax.f32 %v1285, %v1288
    %v1290 = vsel %vm333, %v1230, -inf
    %v1291 = vmax.f32 %v1287, %v1290
    %v1292 = vmax.f32 %v1289, %v1291
    %v1293 = vsel %vm333, %v1261, -inf
    %v1294 = vsel %vm333, %v1292, -inf
    %v1295 = vmax.f32 %v1293, %v1294
    %v1296 = vrot.slane %v1295, 4
    %v1297 = vmax.f32 %v1295, %v1296
    %v1298 = vrot.slane %v1297, 2
    %v1299 = vmax.f32 %v1297, %v1298
    %v1300 = vrot.slane %v1299, 1
    %v1301 = vmax.f32 %v1299, %v1300
    %p1302 = scmp.le.s32.totalorder %s1012, %s1011
    %p1303 = scmp.le.s32.totalorder %s1014, %s1013
    %p1304 = por %p1302, %p1303
    %s1305 = scalar_select %p1304, 1, 0
    %v1306 = vstv %s1305
    %vm1307 = vcmp.eq.s32.totalorder %v1306, 1
    %v1308 = vsel %vm1307, 0.0, %v1301
    %v1309 = vadd.f32 %v1010, %v1308
    %v1310 = vmul.f32 %v1309, 0.25
    %vm1311 = vcmask 253952
    %1312 = vst.msk [vmem:[#allocation2] sm:$0x1] %vm1311, %v1310
    %s1313 = sld [smem:[#allocation3 + $0x10]]
    %s1314 = sld [smem:[#allocation3 + $0x11]]
    %s1315 = sld [smem:[#allocation3 + $0x12]]
    %s1316 = sld [smem:[#allocation3 + $0x13]]
    %v1317 = vstv %s1313
    %vm1318 = vcmp.le.s32.totalorder %v1317, 0
    %vm1319 = vcmp.le.s32.totalorder %v1317, 1
    %vm1320 = vcmp.le.s32.totalorder %v1317, 2
    %vm1321 = vcmp.le.s32.totalorder %v1317, 3
    %vm1322 = vcmp.le.s32.totalorder %v1317, 4
    %vm1323 = vcmp.le.s32.totalorder %v1317, 5
    %vm1324 = vcmp.le.s32.totalorder %v1317, 6
    %vm1325 = vcmp.le.s32.totalorder %v1317, 7
    %vm1326 = vcmp.le.s32.totalorder %v1317, 8
    %vm1327 = vcmp.le.s32.totalorder %v1317, 9
    %vm1328 = vcmp.le.s32.totalorder %v1317, 10
    %vm1329 = vcmp.le.s32.totalorder %v1317, 11
    %vm1330 = vcmp.le.s32.totalorder %v1317, 12
    %vm1331 = vcmp.le.s32.totalorder %v1317, 13
    %vm1332 = vcmp.le.s32.totalorder %v1317, 14
    %vm1333 = vcmp.le.s32.totalorder %v1317, 15
    %v1334 = vstv %s1314
    %vm1335 = vcmp.gt.s32.totalorder %v1334, 0
    %vm1336 = vcmp.gt.s32.totalorder %v1334, 1
    %vm1337 = vcmp.gt.s32.totalorder %v1334, 2
    %vm1338 = vcmp.gt.s32.totalorder %v1334, 3
    %vm1339 = vcmp.gt.s32.totalorder %v1334, 4
    %vm1340 = vcmp.gt.s32.totalorder %v1334, 5
    %vm1341 = vcmp.gt.s32.totalorder %v1334, 6
    %vm1342 = vcmp.gt.s32.totalorder %v1334, 7
    %vm1343 = vcmp.gt.s32.totalorder %v1334, 8
    %vm1344 = vcmp.gt.s32.totalorder %v1334, 9
    %vm1345 = vcmp.gt.s32.totalorder %v1334, 10
    %vm1346 = vcmp.gt.s32.totalorder %v1334, 11
    %vm1347 = vcmp.gt.s32.totalorder %v1334, 12
    %vm1348 = vcmp.gt.s32.totalorder %v1334, 13
    %vm1349 = vcmp.gt.s32.totalorder %v1334, 14
    %vm1350 = vcmp.gt.s32.totalorder %v1334, 15
    %vm1351 = vmand %vm1318, %vm1335
    %vm1352 = vmand %vm1319, %vm1336
    %vm1353 = vmand %vm1320, %vm1337
    %vm1354 = vmand %vm1321, %vm1338
    %vm1355 = vmand %vm1322, %vm1339
    %vm1356 = vmand %vm1323, %vm1340
    %vm1357 = vmand %vm1324, %vm1341
    %vm1358 = vmand %vm1325, %vm1342
    %vm1359 = vmand %vm1326, %vm1343
    %vm1360 = vmand %vm1327, %vm1344
    %vm1361 = vmand %vm1328, %vm1345
    %vm1362 = vmand %vm1329, %vm1346
    %vm1363 = vmand %vm1330, %vm1347
    %vm1364 = vmand %vm1331, %vm1348
    %vm1365 = vmand %vm1332, %vm1349
    %vm1366 = vmand %vm1333, %vm1350
    %v1367 = vstv %s1315
    %vm1368 = vcmp.ge.s32.totalorder %v111, %v1367
    %vm1369 = vcmp.ge.s32.totalorder %v112, %v1367
    %vm1370 = vmand %vm1351, %vm1368
    %vm1371 = vmand %vm1351, %vm1369
    %vm1372 = vmand %vm1352, %vm1368
    %vm1373 = vmand %vm1352, %vm1369
    %vm1374 = vmand %vm1353, %vm1368
    %vm1375 = vmand %vm1353, %vm1369
    %vm1376 = vmand %vm1354, %vm1368
    %vm1377 = vmand %vm1354, %vm1369
    %vm1378 = vmand %vm1355, %vm1368
    %vm1379 = vmand %vm1355, %vm1369
    %vm1380 = vmand %vm1356, %vm1368
    %vm1381 = vmand %vm1356, %vm1369
    %vm1382 = vmand %vm1357, %vm1368
    %vm1383 = vmand %vm1357, %vm1369
    %vm1384 = vmand %vm1358, %vm1368
    %vm1385 = vmand %vm1358, %vm1369
    %vm1386 = vmand %vm1359, %vm1368
    %vm1387 = vmand %vm1359, %vm1369
    %vm1388 = vmand %vm1360, %vm1368
    %vm1389 = vmand %vm1360, %vm1369
    %vm1390 = vmand %vm1361, %vm1368
    %vm1391 = vmand %vm1361, %vm1369
    %vm1392 = vmand %vm1362, %vm1368
    %vm1393 = vmand %vm1362, %vm1369
    %vm1394 = vmand %vm1363, %vm1368
    %vm1395 = vmand %vm1363, %vm1369
    %vm1396 = vmand %vm1364, %vm1368
    %vm1397 = vmand %vm1364, %vm1369
    %vm1398 = vmand %vm1365, %vm1368
    %vm1399 = vmand %vm1365, %vm1369
    %vm1400 = vmand %vm1366, %vm1368
    %vm1401 = vmand %vm1366, %vm1369
    %v1402 = vstv %s1316
    %vm1403 = vcmp.lt.s32.totalorder %v111, %v1402
    %vm1404 = vcmp.lt.s32.totalorder %v112, %v1402
    %vm1405 = vmand %vm1370, %vm1403
    %vm1406 = vmand %vm1371, %vm1404
    %vm1407 = vmand %vm1372, %vm1403
    %vm1408 = vmand %vm1373, %vm1404
    %vm1409 = vmand %vm1374, %vm1403
    %vm1410 = vmand %vm1375, %vm1404
    %vm1411 = vmand %vm1376, %vm1403
    %vm1412 = vmand %vm1377, %vm1404
    %vm1413 = vmand %vm1378, %vm1403
    %vm1414 = vmand %vm1379, %vm1404
    %vm1415 = vmand %vm1380, %vm1403
    %vm1416 = vmand %vm1381, %vm1404
    %vm1417 = vmand %vm1382, %vm1403
    %vm1418 = vmand %vm1383, %vm1404
    %vm1419 = vmand %vm1384, %vm1403
    %vm1420 = vmand %vm1385, %vm1404
    %vm1421 = vmand %vm1386, %vm1403
    %vm1422 = vmand %vm1387, %vm1404
    %vm1423 = vmand %vm1388, %vm1403
    %vm1424 = vmand %vm1389, %vm1404
    %vm1425 = vmand %vm1390, %vm1403
    %vm1426 = vmand %vm1391, %vm1404
    %vm1427 = vmand %vm1392, %vm1403
    %vm1428 = vmand %vm1393, %vm1404
    %vm1429 = vmand %vm1394, %vm1403
    %vm1430 = vmand %vm1395, %vm1404
    %vm1431 = vmand %vm1396, %vm1403
    %vm1432 = vmand %vm1397, %vm1404
    %vm1433 = vmand %vm1398, %vm1403
    %vm1434 = vmand %vm1399, %vm1404
    %vm1435 = vmand %vm1400, %vm1403
    %vm1436 = vmand %vm1401, %vm1404
    %v1437 = vsel %vm1405, 1, 0
    %v1438 = vsel %vm1406, 1, 0
    %v1439 = vsel %vm1407, 1, 0
    %v1440 = vsel %vm1408, 1, 0
    %v1441 = vsel %vm1409, 1, 0
    %v1442 = vsel %vm1410, 1, 0
    %v1443 = vsel %vm1411, 1, 0
    %v1444 = vsel %vm1412, 1, 0
    %v1445 = vsel %vm1413, 1, 0
    %v1446 = vsel %vm1414, 1, 0
    %v1447 = vsel %vm1415, 1, 0
    %v1448 = vsel %vm1416, 1, 0
    %v1449 = vsel %vm1417, 1, 0
    %v1450 = vsel %vm1418, 1, 0
    %v1451 = vsel %vm1419, 1, 0
    %v1452 = vsel %vm1420, 1, 0
    %v1453 = vsel %vm1421, 1, 0
    %v1454 = vsel %vm1422, 1, 0
    %v1455 = vsel %vm1423, 1, 0
    %v1456 = vsel %vm1424, 1, 0
    %v1457 = vsel %vm1425, 1, 0
    %v1458 = vsel %vm1426, 1, 0
    %v1459 = vsel %vm1427, 1, 0
    %v1460 = vsel %vm1428, 1, 0
    %v1461 = vsel %vm1429, 1, 0
    %v1462 = vsel %vm1430, 1, 0
    %v1463 = vsel %vm1431, 1, 0
    %v1464 = vsel %vm1432, 1, 0
    %v1465 = vsel %vm1433, 1, 0
    %v1466 = vsel %vm1434, 1, 0
    %v1467 = vsel %vm1435, 1, 0
    %v1468 = vsel %vm1436, 1, 0
    %vm1469 = vcmp.eq.s32.totalorder %v1437, 1
    %vm1470 = vcmp.eq.s32.totalorder %v1438, 1
    %vm1471 = vcmp.eq.s32.totalorder %v1439, 1
    %vm1472 = vcmp.eq.s32.totalorder %v1440, 1
    %vm1473 = vcmp.eq.s32.totalorder %v1441, 1
    %vm1474 = vcmp.eq.s32.totalorder %v1442, 1
    %vm1475 = vcmp.eq.s32.totalorder %v1443, 1
    %vm1476 = vcmp.eq.s32.totalorder %v1444, 1
    %vm1477 = vcmp.eq.s32.totalorder %v1445, 1
    %vm1478 = vcmp.eq.s32.totalorder %v1446, 1
    %vm1479 = vcmp.eq.s32.totalorder %v1447, 1
    %vm1480 = vcmp.eq.s32.totalorder %v1448, 1
    %vm1481 = vcmp.eq.s32.totalorder %v1449, 1
    %vm1482 = vcmp.eq.s32.totalorder %v1450, 1
    %vm1483 = vcmp.eq.s32.totalorder %v1451, 1
    %vm1484 = vcmp.eq.s32.totalorder %v1452, 1
    %vm1485 = vcmp.eq.s32.totalorder %v1453, 1
    %vm1486 = vcmp.eq.s32.totalorder %v1454, 1
    %vm1487 = vcmp.eq.s32.totalorder %v1455, 1
    %vm1488 = vcmp.eq.s32.totalorder %v1456, 1
    %vm1489 = vcmp.eq.s32.totalorder %v1457, 1
    %vm1490 = vcmp.eq.s32.totalorder %v1458, 1
    %vm1491 = vcmp.eq.s32.totalorder %v1459, 1
    %vm1492 = vcmp.eq.s32.totalorder %v1460, 1
    %vm1493 = vcmp.eq.s32.totalorder %v1461, 1
    %vm1494 = vcmp.eq.s32.totalorder %v1462, 1
    %vm1495 = vcmp.eq.s32.totalorder %v1463, 1
    %vm1496 = vcmp.eq.s32.totalorder %v1464, 1
    %vm1497 = vcmp.eq.s32.totalorder %v1465, 1
    %vm1498 = vcmp.eq.s32.totalorder %v1466, 1
    %vm1499 = vcmp.eq.s32.totalorder %v1467, 1
    %vm1500 = vcmp.eq.s32.totalorder %v1468, 1
    %v1501 = vsel %vm1469, %v45, -3e+38
    %v1502 = vsel %vm1470, %v46, -3e+38
    %v1503 = vsel %vm1471, %v47, -3e+38
    %v1504 = vsel %vm1472, %v48, -3e+38
    %v1505 = vsel %vm1473, %v49, -3e+38
    %v1506 = vsel %vm1474, %v50, -3e+38
    %v1507 = vsel %vm1475, %v51, -3e+38
    %v1508 = vsel %vm1476, %v52, -3e+38
    %v1509 = vsel %vm1477, %v53, -3e+38
    %v1510 = vsel %vm1478, %v54, -3e+38
    %v1511 = vsel %vm1479, %v55, -3e+38
    %v1512 = vsel %vm1480, %v56, -3e+38
    %v1513 = vsel %vm1481, %v57, -3e+38
    %v1514 = vsel %vm1482, %v58, -3e+38
    %v1515 = vsel %vm1483, %v59, -3e+38
    %v1516 = vsel %vm1484, %v60, -3e+38
    %v1517 = vsel %vm1485, %v61, -3e+38
    %v1518 = vsel %vm1486, %v62, -3e+38
    %v1519 = vsel %vm1487, %v63, -3e+38
    %v1520 = vsel %vm1488, %v64, -3e+38
    %v1521 = vsel %vm1489, %v65, -3e+38
    %v1522 = vsel %vm1490, %v66, -3e+38
    %v1523 = vsel %vm1491, %v67, -3e+38
    %v1524 = vsel %vm1492, %v68, -3e+38
    %v1525 = vsel %vm1493, %v69, -3e+38
    %v1526 = vsel %vm1494, %v70, -3e+38
    %v1527 = vsel %vm1495, %v71, -3e+38
    %v1528 = vsel %vm1496, %v72, -3e+38
    %v1529 = vsel %vm1497, %v73, -3e+38
    %v1530 = vsel %vm1498, %v74, -3e+38
    %v1531 = vsel %vm1499, %v75, -3e+38
    %v1532 = vsel %vm1500, %v76, -3e+38
    %v1533 = vsel %vm333, %v1501, -inf
    %v1534 = vsel %vm333, %v1503, -inf
    %v1535 = vsel %vm333, %v1505, -inf
    %v1536 = vmax.f32 %v1533, %v1535
    %v1537 = vsel %vm333, %v1507, -inf
    %v1538 = vmax.f32 %v1534, %v1537
    %v1539 = vsel %vm333, %v1509, -inf
    %v1540 = vmax.f32 %v1536, %v1539
    %v1541 = vsel %vm333, %v1511, -inf
    %v1542 = vmax.f32 %v1538, %v1541
    %v1543 = vsel %vm333, %v1513, -inf
    %v1544 = vmax.f32 %v1540, %v1543
    %v1545 = vsel %vm333, %v1515, -inf
    %v1546 = vmax.f32 %v1542, %v1545
    %v1547 = vsel %vm333, %v1517, -inf
    %v1548 = vmax.f32 %v1544, %v1547
    %v1549 = vsel %vm333, %v1519, -inf
    %v1550 = vmax.f32 %v1546, %v1549
    %v1551 = vsel %vm333, %v1521, -inf
    %v1552 = vmax.f32 %v1548, %v1551
    %v1553 = vsel %vm333, %v1523, -inf
    %v1554 = vmax.f32 %v1550, %v1553
    %v1555 = vsel %vm333, %v1525, -inf
    %v1556 = vmax.f32 %v1552, %v1555
    %v1557 = vsel %vm333, %v1527, -inf
    %v1558 = vmax.f32 %v1554, %v1557
    %v1559 = vsel %vm333, %v1529, -inf
    %v1560 = vmax.f32 %v1556, %v1559
    %v1561 = vsel %vm333, %v1531, -inf
    %v1562 = vmax.f32 %v1558, %v1561
    %v1563 = vmax.f32 %v1560, %v1562
    %v1564 = vsel %vm333, %v1502, -inf
    %v1565 = vsel %vm333, %v1504, -inf
    %v1566 = vsel %vm333, %v1506, -inf
    %v1567 = vmax.f32 %v1564, %v1566
    %v1568 = vsel %vm333, %v1508, -inf
    %v1569 = vmax.f32 %v1565, %v1568
    %v1570 = vsel %vm333, %v1510, -inf
    %v1571 = vmax.f32 %v1567, %v1570
    %v1572 = vsel %vm333, %v1512, -inf
    %v1573 = vmax.f32 %v1569, %v1572
    %v1574 = vsel %vm333, %v1514, -inf
    %v1575 = vmax.f32 %v1571, %v1574
    %v1576 = vsel %vm333, %v1516, -inf
    %v1577 = vmax.f32 %v1573, %v1576
    %v1578 = vsel %vm333, %v1518, -inf
    %v1579 = vmax.f32 %v1575, %v1578
    %v1580 = vsel %vm333, %v1520, -inf
    %v1581 = vmax.f32 %v1577, %v1580
    %v1582 = vsel %vm333, %v1522, -inf
    %v1583 = vmax.f32 %v1579, %v1582
    %v1584 = vsel %vm333, %v1524, -inf
    %v1585 = vmax.f32 %v1581, %v1584
    %v1586 = vsel %vm333, %v1526, -inf
    %v1587 = vmax.f32 %v1583, %v1586
    %v1588 = vsel %vm333, %v1528, -inf
    %v1589 = vmax.f32 %v1585, %v1588
    %v1590 = vsel %vm333, %v1530, -inf
    %v1591 = vmax.f32 %v1587, %v1590
    %v1592 = vsel %vm333, %v1532, -inf
    %v1593 = vmax.f32 %v1589, %v1592
    %v1594 = vmax.f32 %v1591, %v1593
    %v1595 = vsel %vm333, %v1563, -inf
    %v1596 = vsel %vm333, %v1594, -inf
    %v1597 = vmax.f32 %v1595, %v1596
    %v1598 = vrot.slane %v1597, 4
    %v1599 = vmax.f32 %v1597, %v1598
    %v1600 = vrot.slane %v1599, 2
    %v1601 = vmax.f32 %v1599, %v1600
    %v1602 = vrot.slane %v1601, 1
    %v1603 = vmax.f32 %v1601, %v1602
    %p1604 = scmp.le.s32.totalorder %s1314, %s1313
    %p1605 = scmp.le.s32.totalorder %s1316, %s1315
    %p1606 = por %p1604, %p1605
    %s1607 = scalar_select %p1606, 1, 0
    %v1608 = vstv %s1607
    %vm1609 = vcmp.eq.s32.totalorder %v1608, 1
    %v1610 = vsel %vm1609, 0.0, %v1603
    %v1611 = vadd.f32 %v1610, 0.0
    %s1612 = sld [smem:[#allocation3 + $0x14]]
    %s1613 = sld [smem:[#allocation3 + $0x15]]
    %s1614 = sld [smem:[#allocation3 + $0x16]]
    %s1615 = sld [smem:[#allocation3 + $0x17]]
    %v1616 = vstv %s1612
    %vm1617 = vcmp.le.s32.totalorder %v1616, 0
    %vm1618 = vcmp.le.s32.totalorder %v1616, 1
    %vm1619 = vcmp.le.s32.totalorder %v1616, 2
    %vm1620 = vcmp.le.s32.totalorder %v1616, 3
    %vm1621 = vcmp.le.s32.totalorder %v1616, 4
    %vm1622 = vcmp.le.s32.totalorder %v1616, 5
    %vm1623 = vcmp.le.s32.totalorder %v1616, 6
    %vm1624 = vcmp.le.s32.totalorder %v1616, 7
    %vm1625 = vcmp.le.s32.totalorder %v1616, 8
    %vm1626 = vcmp.le.s32.totalorder %v1616, 9
    %vm1627 = vcmp.le.s32.totalorder %v1616, 10
    %vm1628 = vcmp.le.s32.totalorder %v1616, 11
    %vm1629 = vcmp.le.s32.totalorder %v1616, 12
    %vm1630 = vcmp.le.s32.totalorder %v1616, 13
    %vm1631 = vcmp.le.s32.totalorder %v1616, 14
    %vm1632 = vcmp.le.s32.totalorder %v1616, 15
    %v1633 = vstv %s1613
    %vm1634 = vcmp.gt.s32.totalorder %v1633, 0
    %vm1635 = vcmp.gt.s32.totalorder %v1633, 1
    %vm1636 = vcmp.gt.s32.totalorder %v1633, 2
    %vm1637 = vcmp.gt.s32.totalorder %v1633, 3
    %vm1638 = vcmp.gt.s32.totalorder %v1633, 4
    %vm1639 = vcmp.gt.s32.totalorder %v1633, 5
    %vm1640 = vcmp.gt.s32.totalorder %v1633, 6
    %vm1641 = vcmp.gt.s32.totalorder %v1633, 7
    %vm1642 = vcmp.gt.s32.totalorder %v1633, 8
    %vm1643 = vcmp.gt.s32.totalorder %v1633, 9
    %vm1644 = vcmp.gt.s32.totalorder %v1633, 10
    %vm1645 = vcmp.gt.s32.totalorder %v1633, 11
    %vm1646 = vcmp.gt.s32.totalorder %v1633, 12
    %vm1647 = vcmp.gt.s32.totalorder %v1633, 13
    %vm1648 = vcmp.gt.s32.totalorder %v1633, 14
    %vm1649 = vcmp.gt.s32.totalorder %v1633, 15
    %vm1650 = vmand %vm1617, %vm1634
    %vm1651 = vmand %vm1618, %vm1635
    %vm1652 = vmand %vm1619, %vm1636
    %vm1653 = vmand %vm1620, %vm1637
    %vm1654 = vmand %vm1621, %vm1638
    %vm1655 = vmand %vm1622, %vm1639
    %vm1656 = vmand %vm1623, %vm1640
    %vm1657 = vmand %vm1624, %vm1641
    %vm1658 = vmand %vm1625, %vm1642
    %vm1659 = vmand %vm1626, %vm1643
    %vm1660 = vmand %vm1627, %vm1644
    %vm1661 = vmand %vm1628, %vm1645
    %vm1662 = vmand %vm1629, %vm1646
    %vm1663 = vmand %vm1630, %vm1647
    %vm1664 = vmand %vm1631, %vm1648
    %vm1665 = vmand %vm1632, %vm1649
    %v1666 = vstv %s1614
    %vm1667 = vcmp.ge.s32.totalorder %v111, %v1666
    %vm1668 = vcmp.ge.s32.totalorder %v112, %v1666
    %vm1669 = vmand %vm1650, %vm1667
    %vm1670 = vmand %vm1650, %vm1668
    %vm1671 = vmand %vm1651, %vm1667
    %vm1672 = vmand %vm1651, %vm1668
    %vm1673 = vmand %vm1652, %vm1667
    %vm1674 = vmand %vm1652, %vm1668
    %vm1675 = vmand %vm1653, %vm1667
    %vm1676 = vmand %vm1653, %vm1668
    %vm1677 = vmand %vm1654, %vm1667
    %vm1678 = vmand %vm1654, %vm1668
    %vm1679 = vmand %vm1655, %vm1667
    %vm1680 = vmand %vm1655, %vm1668
    %vm1681 = vmand %vm1656, %vm1667
    %vm1682 = vmand %vm1656, %vm1668
    %vm1683 = vmand %vm1657, %vm1667
    %vm1684 = vmand %vm1657, %vm1668
    %vm1685 = vmand %vm1658, %vm1667
    %vm1686 = vmand %vm1658, %vm1668
    %vm1687 = vmand %vm1659, %vm1667
    %vm1688 = vmand %vm1659, %vm1668
    %vm1689 = vmand %vm1660, %vm1667
    %vm1690 = vmand %vm1660, %vm1668
    %vm1691 = vmand %vm1661, %vm1667
    %vm1692 = vmand %vm1661, %vm1668
    %vm1693 = vmand %vm1662, %vm1667
    %vm1694 = vmand %vm1662, %vm1668
    %vm1695 = vmand %vm1663, %vm1667
    %vm1696 = vmand %vm1663, %vm1668
    %vm1697 = vmand %vm1664, %vm1667
    %vm1698 = vmand %vm1664, %vm1668
    %vm1699 = vmand %vm1665, %vm1667
    %vm1700 = vmand %vm1665, %vm1668
    %v1701 = vstv %s1615
    %vm1702 = vcmp.lt.s32.totalorder %v111, %v1701
    %vm1703 = vcmp.lt.s32.totalorder %v112, %v1701
    %vm1704 = vmand %vm1669, %vm1702
    %vm1705 = vmand %vm1670, %vm1703
    %vm1706 = vmand %vm1671, %vm1702
    %vm1707 = vmand %vm1672, %vm1703
    %vm1708 = vmand %vm1673, %vm1702
    %vm1709 = vmand %vm1674, %vm1703
    %vm1710 = vmand %vm1675, %vm1702
    %vm1711 = vmand %vm1676, %vm1703
    %vm1712 = vmand %vm1677, %vm1702
    %vm1713 = vmand %vm1678, %vm1703
    %vm1714 = vmand %vm1679, %vm1702
    %vm1715 = vmand %vm1680, %vm1703
    %vm1716 = vmand %vm1681, %vm1702
    %vm1717 = vmand %vm1682, %vm1703
    %vm1718 = vmand %vm1683, %vm1702
    %vm1719 = vmand %vm1684, %vm1703
    %vm1720 = vmand %vm1685, %vm1702
    %vm1721 = vmand %vm1686, %vm1703
    %vm1722 = vmand %vm1687, %vm1702
    %vm1723 = vmand %vm1688, %vm1703
    %vm1724 = vmand %vm1689, %vm1702
    %vm1725 = vmand %vm1690, %vm1703
    %vm1726 = vmand %vm1691, %vm1702
    %vm1727 = vmand %vm1692, %vm1703
    %vm1728 = vmand %vm1693, %vm1702
    %vm1729 = vmand %vm1694, %vm1703
    %vm1730 = vmand %vm1695, %vm1702
    %vm1731 = vmand %vm1696, %vm1703
    %vm1732 = vmand %vm1697, %vm1702
    %vm1733 = vmand %vm1698, %vm1703
    %vm1734 = vmand %vm1699, %vm1702
    %vm1735 = vmand %vm1700, %vm1703
    %v1736 = vsel %vm1704, 1, 0
    %v1737 = vsel %vm1705, 1, 0
    %v1738 = vsel %vm1706, 1, 0
    %v1739 = vsel %vm1707, 1, 0
    %v1740 = vsel %vm1708, 1, 0
    %v1741 = vsel %vm1709, 1, 0
    %v1742 = vsel %vm1710, 1, 0
    %v1743 = vsel %vm1711, 1, 0
    %v1744 = vsel %vm1712, 1, 0
    %v1745 = vsel %vm1713, 1, 0
    %v1746 = vsel %vm1714, 1, 0
    %v1747 = vsel %vm1715, 1, 0
    %v1748 = vsel %vm1716, 1, 0
    %v1749 = vsel %vm1717, 1, 0
    %v1750 = vsel %vm1718, 1, 0
    %v1751 = vsel %vm1719, 1, 0
    %v1752 = vsel %vm1720, 1, 0
    %v1753 = vsel %vm1721, 1, 0
    %v1754 = vsel %vm1722, 1, 0
    %v1755 = vsel %vm1723, 1, 0
    %v1756 = vsel %vm1724, 1, 0
    %v1757 = vsel %vm1725, 1, 0
    %v1758 = vsel %vm1726, 1, 0
    %v1759 = vsel %vm1727, 1, 0
    %v1760 = vsel %vm1728, 1, 0
    %v1761 = vsel %vm1729, 1, 0
    %v1762 = vsel %vm1730, 1, 0
    %v1763 = vsel %vm1731, 1, 0
    %v1764 = vsel %vm1732, 1, 0
    %v1765 = vsel %vm1733, 1, 0
    %v1766 = vsel %vm1734, 1, 0
    %v1767 = vsel %vm1735, 1, 0
    %vm1768 = vcmp.eq.s32.totalorder %v1736, 1
    %vm1769 = vcmp.eq.s32.totalorder %v1737, 1
    %vm1770 = vcmp.eq.s32.totalorder %v1738, 1
    %vm1771 = vcmp.eq.s32.totalorder %v1739, 1
    %vm1772 = vcmp.eq.s32.totalorder %v1740, 1
    %vm1773 = vcmp.eq.s32.totalorder %v1741, 1
    %vm1774 = vcmp.eq.s32.totalorder %v1742, 1
    %vm1775 = vcmp.eq.s32.totalorder %v1743, 1
    %vm1776 = vcmp.eq.s32.totalorder %v1744, 1
    %vm1777 = vcmp.eq.s32.totalorder %v1745, 1
    %vm1778 = vcmp.eq.s32.totalorder %v1746, 1
    %vm1779 = vcmp.eq.s32.totalorder %v1747, 1
    %vm1780 = vcmp.eq.s32.totalorder %v1748, 1
    %vm1781 = vcmp.eq.s32.totalorder %v1749, 1
    %vm1782 = vcmp.eq.s32.totalorder %v1750, 1
    %vm1783 = vcmp.eq.s32.totalorder %v1751, 1
    %vm1784 = vcmp.eq.s32.totalorder %v1752, 1
    %vm1785 = vcmp.eq.s32.totalorder %v1753, 1
    %vm1786 = vcmp.eq.s32.totalorder %v1754, 1
    %vm1787 = vcmp.eq.s32.totalorder %v1755, 1
    %vm1788 = vcmp.eq.s32.totalorder %v1756, 1
    %vm1789 = vcmp.eq.s32.totalorder %v1757, 1
    %vm1790 = vcmp.eq.s32.totalorder %v1758, 1
    %vm1791 = vcmp.eq.s32.totalorder %v1759, 1
    %vm1792 = vcmp.eq.s32.totalorder %v1760, 1
    %vm1793 = vcmp.eq.s32.totalorder %v1761, 1
    %vm1794 = vcmp.eq.s32.totalorder %v1762, 1
    %vm1795 = vcmp.eq.s32.totalorder %v1763, 1
    %vm1796 = vcmp.eq.s32.totalorder %v1764, 1
    %vm1797 = vcmp.eq.s32.totalorder %v1765, 1
    %vm1798 = vcmp.eq.s32.totalorder %v1766, 1
    %vm1799 = vcmp.eq.s32.totalorder %v1767, 1
    %v1800 = vsel %vm1768, %v45, -3e+38
    %v1801 = vsel %vm1769, %v46, -3e+38
    %v1802 = vsel %vm1770, %v47, -3e+38
    %v1803 = vsel %vm1771, %v48, -3e+38
    %v1804 = vsel %vm1772, %v49, -3e+38
    %v1805 = vsel %vm1773, %v50, -3e+38
    %v1806 = vsel %vm1774, %v51, -3e+38
    %v1807 = vsel %vm1775, %v52, -3e+38
    %v1808 = vsel %vm1776, %v53, -3e+38
    %v1809 = vsel %vm1777, %v54, -3e+38
    %v1810 = vsel %vm1778, %v55, -3e+38
    %v1811 = vsel %vm1779, %v56, -3e+38
    %v1812 = vsel %vm1780, %v57, -3e+38
    %v1813 = vsel %vm1781, %v58, -3e+38
    %v1814 = vsel %vm1782, %v59, -3e+38
    %v1815 = vsel %vm1783, %v60, -3e+38
    %v1816 = vsel %vm1784, %v61, -3e+38
    %v1817 = vsel %vm1785, %v62, -3e+38
    %v1818 = vsel %vm1786, %v63, -3e+38
    %v1819 = vsel %vm1787, %v64, -3e+38
    %v1820 = vsel %vm1788, %v65, -3e+38
    %v1821 = vsel %vm1789, %v66, -3e+38
    %v1822 = vsel %vm1790, %v67, -3e+38
    %v1823 = vsel %vm1791, %v68, -3e+38
    %v1824 = vsel %vm1792, %v69, -3e+38
    %v1825 = vsel %vm1793, %v70, -3e+38
    %v1826 = vsel %vm1794, %v71, -3e+38
    %v1827 = vsel %vm1795, %v72, -3e+38
    %v1828 = vsel %vm1796, %v73, -3e+38
    %v1829 = vsel %vm1797, %v74, -3e+38
    %v1830 = vsel %vm1798, %v75, -3e+38
    %v1831 = vsel %vm1799, %v76, -3e+38
    %v1832 = vsel %vm333, %v1800, -inf
    %v1833 = vsel %vm333, %v1802, -inf
    %v1834 = vsel %vm333, %v1804, -inf
    %v1835 = vmax.f32 %v1832, %v1834
    %v1836 = vsel %vm333, %v1806, -inf
    %v1837 = vmax.f32 %v1833, %v1836
    %v1838 = vsel %vm333, %v1808, -inf
    %v1839 = vmax.f32 %v1835, %v1838
    %v1840 = vsel %vm333, %v1810, -inf
    %v1841 = vmax.f32 %v1837, %v1840
    %v1842 = vsel %vm333, %v1812, -inf
    %v1843 = vmax.f32 %v1839, %v1842
    %v1844 = vsel %vm333, %v1814, -inf
    %v1845 = vmax.f32 %v1841, %v1844
    %v1846 = vsel %vm333, %v1816, -inf
    %v1847 = vmax.f32 %v1843, %v1846
    %v1848 = vsel %vm333, %v1818, -inf
    %v1849 = vmax.f32 %v1845, %v1848
    %v1850 = vsel %vm333, %v1820, -inf
    %v1851 = vmax.f32 %v1847, %v1850
    %v1852 = vsel %vm333, %v1822, -inf
    %v1853 = vmax.f32 %v1849, %v1852
    %v1854 = vsel %vm333, %v1824, -inf
    %v1855 = vmax.f32 %v1851, %v1854
    %v1856 = vsel %vm333, %v1826, -inf
    %v1857 = vmax.f32 %v1853, %v1856
    %v1858 = vsel %vm333, %v1828, -inf
    %v1859 = vmax.f32 %v1855, %v1858
    %v1860 = vsel %vm333, %v1830, -inf
    %v1861 = vmax.f32 %v1857, %v1860
    %v1862 = vmax.f32 %v1859, %v1861
    %v1863 = vsel %vm333, %v1801, -inf
    %v1864 = vsel %vm333, %v1803, -inf
    %v1865 = vsel %vm333, %v1805, -inf
    %v1866 = vmax.f32 %v1863, %v1865
    %v1867 = vsel %vm333, %v1807, -inf
    %v1868 = vmax.f32 %v1864, %v1867
    %v1869 = vsel %vm333, %v1809, -inf
    %v1870 = vmax.f32 %v1866, %v1869
    %v1871 = vsel %vm333, %v1811, -inf
    %v1872 = vmax.f32 %v1868, %v1871
    %v1873 = vsel %vm333, %v1813, -inf
    %v1874 = vmax.f32 %v1870, %v1873
    %v1875 = vsel %vm333, %v1815, -inf
    %v1876 = vmax.f32 %v1872, %v1875
    %v1877 = vsel %vm333, %v1817, -inf
    %v1878 = vmax.f32 %v1874, %v1877
    %v1879 = vsel %vm333, %v1819, -inf
    %v1880 = vmax.f32 %v1876, %v1879
    %v1881 = vsel %vm333, %v1821, -inf
    %v1882 = vmax.f32 %v1878, %v1881
    %v1883 = vsel %vm333, %v1823, -inf
    %v1884 = vmax.f32 %v1880, %v1883
    %v1885 = vsel %vm333, %v1825, -inf
    %v1886 = vmax.f32 %v1882, %v1885
    %v1887 = vsel %vm333, %v1827, -inf
    %v1888 = vmax.f32 %v1884, %v1887
    %v1889 = vsel %vm333, %v1829, -inf
    %v1890 = vmax.f32 %v1886, %v1889
    %v1891 = vsel %vm333, %v1831, -inf
    %v1892 = vmax.f32 %v1888, %v1891
    %v1893 = vmax.f32 %v1890, %v1892
    %v1894 = vsel %vm333, %v1862, -inf
    %v1895 = vsel %vm333, %v1893, -inf
    %v1896 = vmax.f32 %v1894, %v1895
    %v1897 = vrot.slane %v1896, 4
    %v1898 = vmax.f32 %v1896, %v1897
    %v1899 = vrot.slane %v1898, 2
    %v1900 = vmax.f32 %v1898, %v1899
    %v1901 = vrot.slane %v1900, 1
    %v1902 = vmax.f32 %v1900, %v1901
    %p1903 = scmp.le.s32.totalorder %s1613, %s1612
    %p1904 = scmp.le.s32.totalorder %s1615, %s1614
    %p1905 = por %p1903, %p1904
    %s1906 = scalar_select %p1905, 1, 0
    %v1907 = vstv %s1906
    %vm1908 = vcmp.eq.s32.totalorder %v1907, 1
    %v1909 = vsel %vm1908, 0.0, %v1902
    %v1910 = vadd.f32 %v1611, %v1909
    %s1911 = sld [smem:[#allocation3 + $0x18]]
    %s1912 = sld [smem:[#allocation3 + $0x19]]
    %s1913 = sld [smem:[#allocation3 + $0x1a]]
    %s1914 = sld [smem:[#allocation3 + $0x1b]]
    %v1915 = vstv %s1911
    %vm1916 = vcmp.le.s32.totalorder %v1915, 0
    %vm1917 = vcmp.le.s32.totalorder %v1915, 1
    %vm1918 = vcmp.le.s32.totalorder %v1915, 2
    %vm1919 = vcmp.le.s32.totalorder %v1915, 3
    %vm1920 = vcmp.le.s32.totalorder %v1915, 4
    %vm1921 = vcmp.le.s32.totalorder %v1915, 5
    %vm1922 = vcmp.le.s32.totalorder %v1915, 6
    %vm1923 = vcmp.le.s32.totalorder %v1915, 7
    %vm1924 = vcmp.le.s32.totalorder %v1915, 8
    %vm1925 = vcmp.le.s32.totalorder %v1915, 9
    %vm1926 = vcmp.le.s32.totalorder %v1915, 10
    %vm1927 = vcmp.le.s32.totalorder %v1915, 11
    %vm1928 = vcmp.le.s32.totalorder %v1915, 12
    %vm1929 = vcmp.le.s32.totalorder %v1915, 13
    %vm1930 = vcmp.le.s32.totalorder %v1915, 14
    %vm1931 = vcmp.le.s32.totalorder %v1915, 15
    %v1932 = vstv %s1912
    %vm1933 = vcmp.gt.s32.totalorder %v1932, 0
    %vm1934 = vcmp.gt.s32.totalorder %v1932, 1
    %vm1935 = vcmp.gt.s32.totalorder %v1932, 2
    %vm1936 = vcmp.gt.s32.totalorder %v1932, 3
    %vm1937 = vcmp.gt.s32.totalorder %v1932, 4
    %vm1938 = vcmp.gt.s32.totalorder %v1932, 5
    %vm1939 = vcmp.gt.s32.totalorder %v1932, 6
    %vm1940 = vcmp.gt.s32.totalorder %v1932, 7
    %vm1941 = vcmp.gt.s32.totalorder %v1932, 8
    %vm1942 = vcmp.gt.s32.totalorder %v1932, 9
    %vm1943 = vcmp.gt.s32.totalorder %v1932, 10
    %vm1944 = vcmp.gt.s32.totalorder %v1932, 11
    %vm1945 = vcmp.gt.s32.totalorder %v1932, 12
    %vm1946 = vcmp.gt.s32.totalorder %v1932, 13
    %vm1947 = vcmp.gt.s32.totalorder %v1932, 14
    %vm1948 = vcmp.gt.s32.totalorder %v1932, 15
    %vm1949 = vmand %vm1916, %vm1933
    %vm1950 = vmand %vm1917, %vm1934
    %vm1951 = vmand %vm1918, %vm1935
    %vm1952 = vmand %vm1919, %vm1936
    %vm1953 = vmand %vm1920, %vm1937
    %vm1954 = vmand %vm1921, %vm1938
    %vm1955 = vmand %vm1922, %vm1939
    %vm1956 = vmand %vm1923, %vm1940
    %vm1957 = vmand %vm1924, %vm1941
    %vm1958 = vmand %vm1925, %vm1942
    %vm1959 = vmand %vm1926, %vm1943
    %vm1960 = vmand %vm1927, %vm1944
    %vm1961 = vmand %vm1928, %vm1945
    %vm1962 = vmand %vm1929, %vm1946
    %vm1963 = vmand %vm1930, %vm1947
    %vm1964 = vmand %vm1931, %vm1948
    %v1965 = vstv %s1913
    %vm1966 = vcmp.ge.s32.totalorder %v111, %v1965
    %vm1967 = vcmp.ge.s32.totalorder %v112, %v1965
    %vm1968 = vmand %vm1949, %vm1966
    %vm1969 = vmand %vm1949, %vm1967
    %vm1970 = vmand %vm1950, %vm1966
    %vm1971 = vmand %vm1950, %vm1967
    %vm1972 = vmand %vm1951, %vm1966
    %vm1973 = vmand %vm1951, %vm1967
    %vm1974 = vmand %vm1952, %vm1966
    %vm1975 = vmand %vm1952, %vm1967
    %vm1976 = vmand %vm1953, %vm1966
    %vm1977 = vmand %vm1953, %vm1967
    %vm1978 = vmand %vm1954, %vm1966
    %vm1979 = vmand %vm1954, %vm1967
    %vm1980 = vmand %vm1955, %vm1966
    %vm1981 = vmand %vm1955, %vm1967
    %vm1982 = vmand %vm1956, %vm1966
    %vm1983 = vmand %vm1956, %vm1967
    %vm1984 = vmand %vm1957, %vm1966
    %vm1985 = vmand %vm1957, %vm1967
    %vm1986 = vmand %vm1958, %vm1966
    %vm1987 = vmand %vm1958, %vm1967
    %vm1988 = vmand %vm1959, %vm1966
    %vm1989 = vmand %vm1959, %vm1967
    %vm1990 = vmand %vm1960, %vm1966
    %vm1991 = vmand %vm1960, %vm1967
    %vm1992 = vmand %vm1961, %vm1966
    %vm1993 = vmand %vm1961, %vm1967
    %vm1994 = vmand %vm1962, %vm1966
    %vm1995 = vmand %vm1962, %vm1967
    %vm1996 = vmand %vm1963, %vm1966
    %vm1997 = vmand %vm1963, %vm1967
    %vm1998 = vmand %vm1964, %vm1966
    %vm1999 = vmand %vm1964, %vm1967
    %v2000 = vstv %s1914
    %vm2001 = vcmp.lt.s32.totalorder %v111, %v2000
    %vm2002 = vcmp.lt.s32.totalorder %v112, %v2000
    %vm2003 = vmand %vm1968, %vm2001
    %vm2004 = vmand %vm1969, %vm2002
    %vm2005 = vmand %vm1970, %vm2001
    %vm2006 = vmand %vm1971, %vm2002
    %vm2007 = vmand %vm1972, %vm2001
    %vm2008 = vmand %vm1973, %vm2002
    %vm2009 = vmand %vm1974, %vm2001
    %vm2010 = vmand %vm1975, %vm2002
    %vm2011 = vmand %vm1976, %vm2001
    %vm2012 = vmand %vm1977, %vm2002
    %vm2013 = vmand %vm1978, %vm2001
    %vm2014 = vmand %vm1979, %vm2002
    %vm2015 = vmand %vm1980, %vm2001
    %vm2016 = vmand %vm1981, %vm2002
    %vm2017 = vmand %vm1982, %vm2001
    %vm2018 = vmand %vm1983, %vm2002
    %vm2019 = vmand %vm1984, %vm2001
    %vm2020 = vmand %vm1985, %vm2002
    %vm2021 = vmand %vm1986, %vm2001
    %vm2022 = vmand %vm1987, %vm2002
    %vm2023 = vmand %vm1988, %vm2001
    %vm2024 = vmand %vm1989, %vm2002
    %vm2025 = vmand %vm1990, %vm2001
    %vm2026 = vmand %vm1991, %vm2002
    %vm2027 = vmand %vm1992, %vm2001
    %vm2028 = vmand %vm1993, %vm2002
    %vm2029 = vmand %vm1994, %vm2001
    %vm2030 = vmand %vm1995, %vm2002
    %vm2031 = vmand %vm1996, %vm2001
    %vm2032 = vmand %vm1997, %vm2002
    %vm2033 = vmand %vm1998, %vm2001
    %vm2034 = vmand %vm1999, %vm2002
    %v2035 = vsel %vm2003, 1, 0
    %v2036 = vsel %vm2004, 1, 0
    %v2037 = vsel %vm2005, 1, 0
    %v2038 = vsel %vm2006, 1, 0
    %v2039 = vsel %vm2007, 1, 0
    %v2040 = vsel %vm2008, 1, 0
    %v2041 = vsel %vm2009, 1, 0
    %v2042 = vsel %vm2010, 1, 0
    %v2043 = vsel %vm2011, 1, 0
    %v2044 = vsel %vm2012, 1, 0
    %v2045 = vsel %vm2013, 1, 0
    %v2046 = vsel %vm2014, 1, 0
    %v2047 = vsel %vm2015, 1, 0
    %v2048 = vsel %vm2016, 1, 0
    %v2049 = vsel %vm2017, 1, 0
    %v2050 = vsel %vm2018, 1, 0
    %v2051 = vsel %vm2019, 1, 0
    %v2052 = vsel %vm2020, 1, 0
    %v2053 = vsel %vm2021, 1, 0
    %v2054 = vsel %vm2022, 1, 0
    %v2055 = vsel %vm2023, 1, 0
    %v2056 = vsel %vm2024, 1, 0
    %v2057 = vsel %vm2025, 1, 0
    %v2058 = vsel %vm2026, 1, 0
    %v2059 = vsel %vm2027, 1, 0
    %v2060 = vsel %vm2028, 1, 0
    %v2061 = vsel %vm2029, 1, 0
    %v2062 = vsel %vm2030, 1, 0
    %v2063 = vsel %vm2031, 1, 0
    %v2064 = vsel %vm2032, 1, 0
    %v2065 = vsel %vm2033, 1, 0
    %v2066 = vsel %vm2034, 1, 0
    %vm2067 = vcmp.eq.s32.totalorder %v2035, 1
    %vm2068 = vcmp.eq.s32.totalorder %v2036, 1
    %vm2069 = vcmp.eq.s32.totalorder %v2037, 1
    %vm2070 = vcmp.eq.s32.totalorder %v2038, 1
    %vm2071 = vcmp.eq.s32.totalorder %v2039, 1
    %vm2072 = vcmp.eq.s32.totalorder %v2040, 1
    %vm2073 = vcmp.eq.s32.totalorder %v2041, 1
    %vm2074 = vcmp.eq.s32.totalorder %v2042, 1
    %vm2075 = vcmp.eq.s32.totalorder %v2043, 1
    %vm2076 = vcmp.eq.s32.totalorder %v2044, 1
    %vm2077 = vcmp.eq.s32.totalorder %v2045, 1
    %vm2078 = vcmp.eq.s32.totalorder %v2046, 1
    %vm2079 = vcmp.eq.s32.totalorder %v2047, 1
    %vm2080 = vcmp.eq.s32.totalorder %v2048, 1
    %vm2081 = vcmp.eq.s32.totalorder %v2049, 1
    %vm2082 = vcmp.eq.s32.totalorder %v2050, 1
    %vm2083 = vcmp.eq.s32.totalorder %v2051, 1
    %vm2084 = vcmp.eq.s32.totalorder %v2052, 1
    %vm2085 = vcmp.eq.s32.totalorder %v2053, 1
    %vm2086 = vcmp.eq.s32.totalorder %v2054, 1
    %vm2087 = vcmp.eq.s32.totalorder %v2055, 1
    %vm2088 = vcmp.eq.s32.totalorder %v2056, 1
    %vm2089 = vcmp.eq.s32.totalorder %v2057, 1
    %vm2090 = vcmp.eq.s32.totalorder %v2058, 1
    %vm2091 = vcmp.eq.s32.totalorder %v2059, 1
    %vm2092 = vcmp.eq.s32.totalorder %v2060, 1
    %vm2093 = vcmp.eq.s32.totalorder %v2061, 1
    %vm2094 = vcmp.eq.s32.totalorder %v2062, 1
    %vm2095 = vcmp.eq.s32.totalorder %v2063, 1
    %vm2096 = vcmp.eq.s32.totalorder %v2064, 1
    %vm2097 = vcmp.eq.s32.totalorder %v2065, 1
    %vm2098 = vcmp.eq.s32.totalorder %v2066, 1
    %v2099 = vsel %vm2067, %v45, -3e+38
    %v2100 = vsel %vm2068, %v46, -3e+38
    %v2101 = vsel %vm2069, %v47, -3e+38
    %v2102 = vsel %vm2070, %v48, -3e+38
    %v2103 = vsel %vm2071, %v49, -3e+38
    %v2104 = vsel %vm2072, %v50, -3e+38
    %v2105 = vsel %vm2073, %v51, -3e+38
    %v2106 = vsel %vm2074, %v52, -3e+38
    %v2107 = vsel %vm2075, %v53, -3e+38
    %v2108 = vsel %vm2076, %v54, -3e+38
    %v2109 = vsel %vm2077, %v55, -3e+38
    %v2110 = vsel %vm2078, %v56, -3e+38
    %v2111 = vsel %vm2079, %v57, -3e+38
    %v2112 = vsel %vm2080, %v58, -3e+38
    %v2113 = vsel %vm2081, %v59, -3e+38
    %v2114 = vsel %vm2082, %v60, -3e+38
    %v2115 = vsel %vm2083, %v61, -3e+38
    %v2116 = vsel %vm2084, %v62, -3e+38
    %v2117 = vsel %vm2085, %v63, -3e+38
    %v2118 = vsel %vm2086, %v64, -3e+38
    %v2119 = vsel %vm2087, %v65, -3e+38
    %v2120 = vsel %vm2088, %v66, -3e+38
    %v2121 = vsel %vm2089, %v67, -3e+38
    %v2122 = vsel %vm2090, %v68, -3e+38
    %v2123 = vsel %vm2091, %v69, -3e+38
    %v2124 = vsel %vm2092, %v70, -3e+38
    %v2125 = vsel %vm2093, %v71, -3e+38
    %v2126 = vsel %vm2094, %v72, -3e+38
    %v2127 = vsel %vm2095, %v73, -3e+38
    %v2128 = vsel %vm2096, %v74, -3e+38
    %v2129 = vsel %vm2097, %v75, -3e+38
    %v2130 = vsel %vm2098, %v76, -3e+38
    %v2131 = vsel %vm333, %v2099, -inf
    %v2132 = vsel %vm333, %v2101, -inf
    %v2133 = vsel %vm333, %v2103, -inf
    %v2134 = vmax.f32 %v2131, %v2133
    %v2135 = vsel %vm333, %v2105, -inf
    %v2136 = vmax.f32 %v2132, %v2135
    %v2137 = vsel %vm333, %v2107, -inf
    %v2138 = vmax.f32 %v2134, %v2137
    %v2139 = vsel %vm333, %v2109, -inf
    %v2140 = vmax.f32 %v2136, %v2139
    %v2141 = vsel %vm333, %v2111, -inf
    %v2142 = vmax.f32 %v2138, %v2141
    %v2143 = vsel %vm333, %v2113, -inf
    %v2144 = vmax.f32 %v2140, %v2143
    %v2145 = vsel %vm333, %v2115, -inf
    %v2146 = vmax.f32 %v2142, %v2145
    %v2147 = vsel %vm333, %v2117, -inf
    %v2148 = vmax.f32 %v2144, %v2147
    %v2149 = vsel %vm333, %v2119, -inf
    %v2150 = vmax.f32 %v2146, %v2149
    %v2151 = vsel %vm333, %v2121, -inf
    %v2152 = vmax.f32 %v2148, %v2151
    %v2153 = vsel %vm333, %v2123, -inf
    %v2154 = vmax.f32 %v2150, %v2153
    %v2155 = vsel %vm333, %v2125, -inf
    %v2156 = vmax.f32 %v2152, %v2155
    %v2157 = vsel %vm333, %v2127, -inf
    %v2158 = vmax.f32 %v2154, %v2157
    %v2159 = vsel %vm333, %v2129, -inf
    %v2160 = vmax.f32 %v2156, %v2159
    %v2161 = vmax.f32 %v2158, %v2160
    %v2162 = vsel %vm333, %v2100, -inf
    %v2163 = vsel %vm333, %v2102, -inf
    %v2164 = vsel %vm333, %v2104, -inf
    %v2165 = vmax.f32 %v2162, %v2164
    %v2166 = vsel %vm333, %v2106, -inf
    %v2167 = vmax.f32 %v2163, %v2166
    %v2168 = vsel %vm333, %v2108, -inf
    %v2169 = vmax.f32 %v2165, %v2168
    %v2170 = vsel %vm333, %v2110, -inf
    %v2171 = vmax.f32 %v2167, %v2170
    %v2172 = vsel %vm333, %v2112, -inf
    %v2173 = vmax.f32 %v2169, %v2172
    %v2174 = vsel %vm333, %v2114, -inf
    %v2175 = vmax.f32 %v2171, %v2174
    %v2176 = vsel %vm333, %v2116, -inf
    %v2177 = vmax.f32 %v2173, %v2176
    %v2178 = vsel %vm333, %v2118, -inf
    %v2179 = vmax.f32 %v2175, %v2178
    %v2180 = vsel %vm333, %v2120, -inf
    %v2181 = vmax.f32 %v2177, %v2180
    %v2182 = vsel %vm333, %v2122, -inf
    %v2183 = vmax.f32 %v2179, %v2182
    %v2184 = vsel %vm333, %v2124, -inf
    %v2185 = vmax.f32 %v2181, %v2184
    %v2186 = vsel %vm333, %v2126, -inf
    %v2187 = vmax.f32 %v2183, %v2186
    %v2188 = vsel %vm333, %v2128, -inf
    %v2189 = vmax.f32 %v2185, %v2188
    %v2190 = vsel %vm333, %v2130, -inf
    %v2191 = vmax.f32 %v2187, %v2190
    %v2192 = vmax.f32 %v2189, %v2191
    %v2193 = vsel %vm333, %v2161, -inf
    %v2194 = vsel %vm333, %v2192, -inf
    %v2195 = vmax.f32 %v2193, %v2194
    %v2196 = vrot.slane %v2195, 4
    %v2197 = vmax.f32 %v2195, %v2196
    %v2198 = vrot.slane %v2197, 2
    %v2199 = vmax.f32 %v2197, %v2198
    %v2200 = vrot.slane %v2199, 1
    %v2201 = vmax.f32 %v2199, %v2200
    %p2202 = scmp.le.s32.totalorder %s1912, %s1911
    %p2203 = scmp.le.s32.totalorder %s1914, %s1913
    %p2204 = por %p2202, %p2203
    %s2205 = scalar_select %p2204, 1, 0
    %v2206 = vstv %s2205
    %vm2207 = vcmp.eq.s32.totalorder %v2206, 1
    %v2208 = vsel %vm2207, 0.0, %v2201
    %v2209 = vadd.f32 %v1910, %v2208
    %s2210 = sld [smem:[#allocation3 + $0x1c]]
    %s2211 = sld [smem:[#allocation3 + $0x1d]]
    %s2212 = sld [smem:[#allocation3 + $0x1e]]
    %s2213 = sld [smem:[#allocation3 + $0x1f]]
    %v2214 = vstv %s2210
    %vm2215 = vcmp.le.s32.totalorder %v2214, 0
    %vm2216 = vcmp.le.s32.totalorder %v2214, 1
    %vm2217 = vcmp.le.s32.totalorder %v2214, 2
    %vm2218 = vcmp.le.s32.totalorder %v2214, 3
    %vm2219 = vcmp.le.s32.totalorder %v2214, 4
    %vm2220 = vcmp.le.s32.totalorder %v2214, 5
    %vm2221 = vcmp.le.s32.totalorder %v2214, 6
    %vm2222 = vcmp.le.s32.totalorder %v2214, 7
    %vm2223 = vcmp.le.s32.totalorder %v2214, 8
    %vm2224 = vcmp.le.s32.totalorder %v2214, 9
    %vm2225 = vcmp.le.s32.totalorder %v2214, 10
    %vm2226 = vcmp.le.s32.totalorder %v2214, 11
    %vm2227 = vcmp.le.s32.totalorder %v2214, 12
    %vm2228 = vcmp.le.s32.totalorder %v2214, 13
    %vm2229 = vcmp.le.s32.totalorder %v2214, 14
    %vm2230 = vcmp.le.s32.totalorder %v2214, 15
    %v2231 = vstv %s2211
    %vm2232 = vcmp.gt.s32.totalorder %v2231, 0
    %vm2233 = vcmp.gt.s32.totalorder %v2231, 1
    %vm2234 = vcmp.gt.s32.totalorder %v2231, 2
    %vm2235 = vcmp.gt.s32.totalorder %v2231, 3
    %vm2236 = vcmp.gt.s32.totalorder %v2231, 4
    %vm2237 = vcmp.gt.s32.totalorder %v2231, 5
    %vm2238 = vcmp.gt.s32.totalorder %v2231, 6
    %vm2239 = vcmp.gt.s32.totalorder %v2231, 7
    %vm2240 = vcmp.gt.s32.totalorder %v2231, 8
    %vm2241 = vcmp.gt.s32.totalorder %v2231, 9
    %vm2242 = vcmp.gt.s32.totalorder %v2231, 10
    %vm2243 = vcmp.gt.s32.totalorder %v2231, 11
    %vm2244 = vcmp.gt.s32.totalorder %v2231, 12
    %vm2245 = vcmp.gt.s32.totalorder %v2231, 13
    %vm2246 = vcmp.gt.s32.totalorder %v2231, 14
    %vm2247 = vcmp.gt.s32.totalorder %v2231, 15
    %vm2248 = vmand %vm2215, %vm2232
    %vm2249 = vmand %vm2216, %vm2233
    %vm2250 = vmand %vm2217, %vm2234
    %vm2251 = vmand %vm2218, %vm2235
    %vm2252 = vmand %vm2219, %vm2236
    %vm2253 = vmand %vm2220, %vm2237
    %vm2254 = vmand %vm2221, %vm2238
    %vm2255 = vmand %vm2222, %vm2239
    %vm2256 = vmand %vm2223, %vm2240
    %vm2257 = vmand %vm2224, %vm2241
    %vm2258 = vmand %vm2225, %vm2242
    %vm2259 = vmand %vm2226, %vm2243
    %vm2260 = vmand %vm2227, %vm2244
    %vm2261 = vmand %vm2228, %vm2245
    %vm2262 = vmand %vm2229, %vm2246
    %vm2263 = vmand %vm2230, %vm2247
    %v2264 = vstv %s2212
    %vm2265 = vcmp.ge.s32.totalorder %v111, %v2264
    %vm2266 = vcmp.ge.s32.totalorder %v112, %v2264
    %vm2267 = vmand %vm2248, %vm2265
    %vm2268 = vmand %vm2248, %vm2266
    %vm2269 = vmand %vm2249, %vm2265
    %vm2270 = vmand %vm2249, %vm2266
    %vm2271 = vmand %vm2250, %vm2265
    %vm2272 = vmand %vm2250, %vm2266
    %vm2273 = vmand %vm2251, %vm2265
    %vm2274 = vmand %vm2251, %vm2266
    %vm2275 = vmand %vm2252, %vm2265
    %vm2276 = vmand %vm2252, %vm2266
    %vm2277 = vmand %vm2253, %vm2265
    %vm2278 = vmand %vm2253, %vm2266
    %vm2279 = vmand %vm2254, %vm2265
    %vm2280 = vmand %vm2254, %vm2266
    %vm2281 = vmand %vm2255, %vm2265
    %vm2282 = vmand %vm2255, %vm2266
    %vm2283 = vmand %vm2256, %vm2265
    %vm2284 = vmand %vm2256, %vm2266
    %vm2285 = vmand %vm2257, %vm2265
    %vm2286 = vmand %vm2257, %vm2266
    %vm2287 = vmand %vm2258, %vm2265
    %vm2288 = vmand %vm2258, %vm2266
    %vm2289 = vmand %vm2259, %vm2265
    %vm2290 = vmand %vm2259, %vm2266
    %vm2291 = vmand %vm2260, %vm2265
    %vm2292 = vmand %vm2260, %vm2266
    %vm2293 = vmand %vm2261, %vm2265
    %vm2294 = vmand %vm2261, %vm2266
    %vm2295 = vmand %vm2262, %vm2265
    %vm2296 = vmand %vm2262, %vm2266
    %vm2297 = vmand %vm2263, %vm2265
    %vm2298 = vmand %vm2263, %vm2266
    %v2299 = vstv %s2213
    %vm2300 = vcmp.lt.s32.totalorder %v111, %v2299
    %vm2301 = vcmp.lt.s32.totalorder %v112, %v2299
    %vm2302 = vmand %vm2267, %vm2300
    %vm2303 = vmand %vm2268, %vm2301
    %vm2304 = vmand %vm2269, %vm2300
    %vm2305 = vmand %vm2270, %vm2301
    %vm2306 = vmand %vm2271, %vm2300
    %vm2307 = vmand %vm2272, %vm2301
    %vm2308 = vmand %vm2273, %vm2300
    %vm2309 = vmand %vm2274, %vm2301
    %vm2310 = vmand %vm2275, %vm2300
    %vm2311 = vmand %vm2276, %vm2301
    %vm2312 = vmand %vm2277, %vm2300
    %vm2313 = vmand %vm2278, %vm2301
    %vm2314 = vmand %vm2279, %vm2300
    %vm2315 = vmand %vm2280, %vm2301
    %vm2316 = vmand %vm2281, %vm2300
    %vm2317 = vmand %vm2282, %vm2301
    %vm2318 = vmand %vm2283, %vm2300
    %vm2319 = vmand %vm2284, %vm2301
    %vm2320 = vmand %vm2285, %vm2300
    %vm2321 = vmand %vm2286, %vm2301
    %vm2322 = vmand %vm2287, %vm2300
    %vm2323 = vmand %vm2288, %vm2301
    %vm2324 = vmand %vm2289, %vm2300
    %vm2325 = vmand %vm2290, %vm2301
    %vm2326 = vmand %vm2291, %vm2300
    %vm2327 = vmand %vm2292, %vm2301
    %vm2328 = vmand %vm2293, %vm2300
    %vm2329 = vmand %vm2294, %vm2301
    %vm2330 = vmand %vm2295, %vm2300
    %vm2331 = vmand %vm2296, %vm2301
    %vm2332 = vmand %vm2297, %vm2300
    %vm2333 = vmand %vm2298, %vm2301
    %v2334 = vsel %vm2302, 1, 0
    %v2335 = vsel %vm2303, 1, 0
    %v2336 = vsel %vm2304, 1, 0
    %v2337 = vsel %vm2305, 1, 0
    %v2338 = vsel %vm2306, 1, 0
    %v2339 = vsel %vm2307, 1, 0
    %v2340 = vsel %vm2308, 1, 0
    %v2341 = vsel %vm2309, 1, 0
    %v2342 = vsel %vm2310, 1, 0
    %v2343 = vsel %vm2311, 1, 0
    %v2344 = vsel %vm2312, 1, 0
    %v2345 = vsel %vm2313, 1, 0
    %v2346 = vsel %vm2314, 1, 0
    %v2347 = vsel %vm2315, 1, 0
    %v2348 = vsel %vm2316, 1, 0
    %v2349 = vsel %vm2317, 1, 0
    %v2350 = vsel %vm2318, 1, 0
    %v2351 = vsel %vm2319, 1, 0
    %v2352 = vsel %vm2320, 1, 0
    %v2353 = vsel %vm2321, 1, 0
    %v2354 = vsel %vm2322, 1, 0
    %v2355 = vsel %vm2323, 1, 0
    %v2356 = vsel %vm2324, 1, 0
    %v2357 = vsel %vm2325, 1, 0
    %v2358 = vsel %vm2326, 1, 0
    %v2359 = vsel %vm2327, 1, 0
    %v2360 = vsel %vm2328, 1, 0
    %v2361 = vsel %vm2329, 1, 0
    %v2362 = vsel %vm2330, 1, 0
    %v2363 = vsel %vm2331, 1, 0
    %v2364 = vsel %vm2332, 1, 0
    %v2365 = vsel %vm2333, 1, 0
    %vm2366 = vcmp.eq.s32.totalorder %v2334, 1
    %vm2367 = vcmp.eq.s32.totalorder %v2335, 1
    %vm2368 = vcmp.eq.s32.totalorder %v2336, 1
    %vm2369 = vcmp.eq.s32.totalorder %v2337, 1
    %vm2370 = vcmp.eq.s32.totalorder %v2338, 1
    %vm2371 = vcmp.eq.s32.totalorder %v2339, 1
    %vm2372 = vcmp.eq.s32.totalorder %v2340, 1
    %vm2373 = vcmp.eq.s32.totalorder %v2341, 1
    %vm2374 = vcmp.eq.s32.totalorder %v2342, 1
    %vm2375 = vcmp.eq.s32.totalorder %v2343, 1
    %vm2376 = vcmp.eq.s32.totalorder %v2344, 1
    %vm2377 = vcmp.eq.s32.totalorder %v2345, 1
    %vm2378 = vcmp.eq.s32.totalorder %v2346, 1
    %vm2379 = vcmp.eq.s32.totalorder %v2347, 1
    %vm2380 = vcmp.eq.s32.totalorder %v2348, 1
    %vm2381 = vcmp.eq.s32.totalorder %v2349, 1
    %vm2382 = vcmp.eq.s32.totalorder %v2350, 1
    %vm2383 = vcmp.eq.s32.totalorder %v2351, 1
    %vm2384 = vcmp.eq.s32.totalorder %v2352, 1
    %vm2385 = vcmp.eq.s32.totalorder %v2353, 1
    %vm2386 = vcmp.eq.s32.totalorder %v2354, 1
    %vm2387 = vcmp.eq.s32.totalorder %v2355, 1
    %vm2388 = vcmp.eq.s32.totalorder %v2356, 1
    %vm2389 = vcmp.eq.s32.totalorder %v2357, 1
    %vm2390 = vcmp.eq.s32.totalorder %v2358, 1
    %vm2391 = vcmp.eq.s32.totalorder %v2359, 1
    %vm2392 = vcmp.eq.s32.totalorder %v2360, 1
    %vm2393 = vcmp.eq.s32.totalorder %v2361, 1
    %vm2394 = vcmp.eq.s32.totalorder %v2362, 1
    %vm2395 = vcmp.eq.s32.totalorder %v2363, 1
    %vm2396 = vcmp.eq.s32.totalorder %v2364, 1
    %vm2397 = vcmp.eq.s32.totalorder %v2365, 1
    %v2398 = vsel %vm2366, %v45, -3e+38
    %v2399 = vsel %vm2367, %v46, -3e+38
    %v2400 = vsel %vm2368, %v47, -3e+38
    %v2401 = vsel %vm2369, %v48, -3e+38
    %v2402 = vsel %vm2370, %v49, -3e+38
    %v2403 = vsel %vm2371, %v50, -3e+38
    %v2404 = vsel %vm2372, %v51, -3e+38
    %v2405 = vsel %vm2373, %v52, -3e+38
    %v2406 = vsel %vm2374, %v53, -3e+38
    %v2407 = vsel %vm2375, %v54, -3e+38
    %v2408 = vsel %vm2376, %v55, -3e+38
    %v2409 = vsel %vm2377, %v56, -3e+38
    %v2410 = vsel %vm2378, %v57, -3e+38
    %v2411 = vsel %vm2379, %v58, -3e+38
    %v2412 = vsel %vm2380, %v59, -3e+38
    %v2413 = vsel %vm2381, %v60, -3e+38
    %v2414 = vsel %vm2382, %v61, -3e+38
    %v2415 = vsel %vm2383, %v62, -3e+38
    %v2416 = vsel %vm2384, %v63, -3e+38
    %v2417 = vsel %vm2385, %v64, -3e+38
    %v2418 = vsel %vm2386, %v65, -3e+38
    %v2419 = vsel %vm2387, %v66, -3e+38
    %v2420 = vsel %vm2388, %v67, -3e+38
    %v2421 = vsel %vm2389, %v68, -3e+38
    %v2422 = vsel %vm2390, %v69, -3e+38
    %v2423 = vsel %vm2391, %v70, -3e+38
    %v2424 = vsel %vm2392, %v71, -3e+38
    %v2425 = vsel %vm2393, %v72, -3e+38
    %v2426 = vsel %vm2394, %v73, -3e+38
    %v2427 = vsel %vm2395, %v74, -3e+38
    %v2428 = vsel %vm2396, %v75, -3e+38
    %v2429 = vsel %vm2397, %v76, -3e+38
    %v2430 = vsel %vm333, %v2398, -inf
    %v2431 = vsel %vm333, %v2400, -inf
    %v2432 = vsel %vm333, %v2402, -inf
    %v2433 = vmax.f32 %v2430, %v2432
    %v2434 = vsel %vm333, %v2404, -inf
    %v2435 = vmax.f32 %v2431, %v2434
    %v2436 = vsel %vm333, %v2406, -inf
    %v2437 = vmax.f32 %v2433, %v2436
    %v2438 = vsel %vm333, %v2408, -inf
    %v2439 = vmax.f32 %v2435, %v2438
    %v2440 = vsel %vm333, %v2410, -inf
    %v2441 = vmax.f32 %v2437, %v2440
    %v2442 = vsel %vm333, %v2412, -inf
    %v2443 = vmax.f32 %v2439, %v2442
    %v2444 = vsel %vm333, %v2414, -inf
    %v2445 = vmax.f32 %v2441, %v2444
    %v2446 = vsel %vm333, %v2416, -inf
    %v2447 = vmax.f32 %v2443, %v2446
    %v2448 = vsel %vm333, %v2418, -inf
    %v2449 = vmax.f32 %v2445, %v2448
    %v2450 = vsel %vm333, %v2420, -inf
    %v2451 = vmax.f32 %v2447, %v2450
    %v2452 = vsel %vm333, %v2422, -inf
    %v2453 = vmax.f32 %v2449, %v2452
    %v2454 = vsel %vm333, %v2424, -inf
    %v2455 = vmax.f32 %v2451, %v2454
    %v2456 = vsel %vm333, %v2426, -inf
    %v2457 = vmax.f32 %v2453, %v2456
    %v2458 = vsel %vm333, %v2428, -inf
    %v2459 = vmax.f32 %v2455, %v2458
    %v2460 = vmax.f32 %v2457, %v2459
    %v2461 = vsel %vm333, %v2399, -inf
    %v2462 = vsel %vm333, %v2401, -inf
    %v2463 = vsel %vm333, %v2403, -inf
    %v2464 = vmax.f32 %v2461, %v2463
    %v2465 = vsel %vm333, %v2405, -inf
    %v2466 = vmax.f32 %v2462, %v2465
    %v2467 = vsel %vm333, %v2407, -inf
    %v2468 = vmax.f32 %v2464, %v2467
    %v2469 = vsel %vm333, %v2409, -inf
    %v2470 = vmax.f32 %v2466, %v2469
    %v2471 = vsel %vm333, %v2411, -inf
    %v2472 = vmax.f32 %v2468, %v2471
    %v2473 = vsel %vm333, %v2413, -inf
    %v2474 = vmax.f32 %v2470, %v2473
    %v2475 = vsel %vm333, %v2415, -inf
    %v2476 = vmax.f32 %v2472, %v2475
    %v2477 = vsel %vm333, %v2417, -inf
    %v2478 = vmax.f32 %v2474, %v2477
    %v2479 = vsel %vm333, %v2419, -inf
    %v2480 = vmax.f32 %v2476, %v2479
    %v2481 = vsel %vm333, %v2421, -inf
    %v2482 = vmax.f32 %v2478, %v2481
    %v2483 = vsel %vm333, %v2423, -inf
    %v2484 = vmax.f32 %v2480, %v2483
    %v2485 = vsel %vm333, %v2425, -inf
    %v2486 = vmax.f32 %v2482, %v2485
    %v2487 = vsel %vm333, %v2427, -inf
    %v2488 = vmax.f32 %v2484, %v2487
    %v2489 = vsel %vm333, %v2429, -inf
    %v2490 = vmax.f32 %v2486, %v2489
    %v2491 = vmax.f32 %v2488, %v2490
    %v2492 = vsel %vm333, %v2460, -inf
    %v2493 = vsel %vm333, %v2491, -inf
    %v2494 = vmax.f32 %v2492, %v2493
    %v2495 = vrot.slane %v2494, 4
    %v2496 = vmax.f32 %v2494, %v2495
    %v2497 = vrot.slane %v2496, 2
    %v2498 = vmax.f32 %v2496, %v2497
    %v2499 = vrot.slane %v2498, 1
    %v2500 = vmax.f32 %v2498, %v2499
    %p2501 = scmp.le.s32.totalorder %s2211, %s2210
    %p2502 = scmp.le.s32.totalorder %s2213, %s2212
    %p2503 = por %p2501, %p2502
    %s2504 = scalar_select %p2503, 1, 0
    %v2505 = vstv %s2504
    %vm2506 = vcmp.eq.s32.totalorder %v2505, 1
    %v2507 = vsel %vm2506, 0.0, %v2500
    %v2508 = vadd.f32 %v2209, %v2507
    %v2509 = vmul.f32 %v2508, 0.25
    %2510 = vst.msk [vmem:[#allocation2 + $0x1] sm:$0x1] %vm1311, %v2509
    %s2511 = sld [smem:[#allocation3 + $0x20]]
    %s2512 = sld [smem:[#allocation3 + $0x21]]
    %s2513 = sld [smem:[#allocation3 + $0x22]]
    %s2514 = sld [smem:[#allocation3 + $0x23]]
    %v2515 = vstv %s2511
    %vm2516 = vcmp.le.s32.totalorder %v2515, 0
    %vm2517 = vcmp.le.s32.totalorder %v2515, 1
    %vm2518 = vcmp.le.s32.totalorder %v2515, 2
    %vm2519 = vcmp.le.s32.totalorder %v2515, 3
    %vm2520 = vcmp.le.s32.totalorder %v2515, 4
    %vm2521 = vcmp.le.s32.totalorder %v2515, 5
    %vm2522 = vcmp.le.s32.totalorder %v2515, 6
    %vm2523 = vcmp.le.s32.totalorder %v2515, 7
    %vm2524 = vcmp.le.s32.totalorder %v2515, 8
    %vm2525 = vcmp.le.s32.totalorder %v2515, 9
    %vm2526 = vcmp.le.s32.totalorder %v2515, 10
    %vm2527 = vcmp.le.s32.totalorder %v2515, 11
    %vm2528 = vcmp.le.s32.totalorder %v2515, 12
    %vm2529 = vcmp.le.s32.totalorder %v2515, 13
    %vm2530 = vcmp.le.s32.totalorder %v2515, 14
    %vm2531 = vcmp.le.s32.totalorder %v2515, 15
    %v2532 = vstv %s2512
    %vm2533 = vcmp.gt.s32.totalorder %v2532, 0
    %vm2534 = vcmp.gt.s32.totalorder %v2532, 1
    %vm2535 = vcmp.gt.s32.totalorder %v2532, 2
    %vm2536 = vcmp.gt.s32.totalorder %v2532, 3
    %vm2537 = vcmp.gt.s32.totalorder %v2532, 4
    %vm2538 = vcmp.gt.s32.totalorder %v2532, 5
    %vm2539 = vcmp.gt.s32.totalorder %v2532, 6
    %vm2540 = vcmp.gt.s32.totalorder %v2532, 7
    %vm2541 = vcmp.gt.s32.totalorder %v2532, 8
    %vm2542 = vcmp.gt.s32.totalorder %v2532, 9
    %vm2543 = vcmp.gt.s32.totalorder %v2532, 10
    %vm2544 = vcmp.gt.s32.totalorder %v2532, 11
    %vm2545 = vcmp.gt.s32.totalorder %v2532, 12
    %vm2546 = vcmp.gt.s32.totalorder %v2532, 13
    %vm2547 = vcmp.gt.s32.totalorder %v2532, 14
    %vm2548 = vcmp.gt.s32.totalorder %v2532, 15
    %vm2549 = vmand %vm2516, %vm2533
    %vm2550 = vmand %vm2517, %vm2534
    %vm2551 = vmand %vm2518, %vm2535
    %vm2552 = vmand %vm2519, %vm2536
    %vm2553 = vmand %vm2520, %vm2537
    %vm2554 = vmand %vm2521, %vm2538
    %vm2555 = vmand %vm2522, %vm2539
    %vm2556 = vmand %vm2523, %vm2540
    %vm2557 = vmand %vm2524, %vm2541
    %vm2558 = vmand %vm2525, %vm2542
    %vm2559 = vmand %vm2526, %vm2543
    %vm2560 = vmand %vm2527, %vm2544
    %vm2561 = vmand %vm2528, %vm2545
    %vm2562 = vmand %vm2529, %vm2546
    %vm2563 = vmand %vm2530, %vm2547
    %vm2564 = vmand %vm2531, %vm2548
    %v2565 = vstv %s2513
    %vm2566 = vcmp.ge.s32.totalorder %v111, %v2565
    %vm2567 = vcmp.ge.s32.totalorder %v112, %v2565
    %vm2568 = vmand %vm2549, %vm2566
    %vm2569 = vmand %vm2549, %vm2567
    %vm2570 = vmand %vm2550, %vm2566
    %vm2571 = vmand %vm2550, %vm2567
    %vm2572 = vmand %vm2551, %vm2566
    %vm2573 = vmand %vm2551, %vm2567
    %vm2574 = vmand %vm2552, %vm2566
    %vm2575 = vmand %vm2552, %vm2567
    %vm2576 = vmand %vm2553, %vm2566
    %vm2577 = vmand %vm2553, %vm2567
    %vm2578 = vmand %vm2554, %vm2566
    %vm2579 = vmand %vm2554, %vm2567
    %vm2580 = vmand %vm2555, %vm2566
    %vm2581 = vmand %vm2555, %vm2567
    %vm2582 = vmand %vm2556, %vm2566
    %vm2583 = vmand %vm2556, %vm2567
    %vm2584 = vmand %vm2557, %vm2566
    %vm2585 = vmand %vm2557, %vm2567
    %vm2586 = vmand %vm2558, %vm2566
    %vm2587 = vmand %vm2558, %vm2567
    %vm2588 = vmand %vm2559, %vm2566
    %vm2589 = vmand %vm2559, %vm2567
    %vm2590 = vmand %vm2560, %vm2566
    %vm2591 = vmand %vm2560, %vm2567
    %vm2592 = vmand %vm2561, %vm2566
    %vm2593 = vmand %vm2561, %vm2567
    %vm2594 = vmand %vm2562, %vm2566
    %vm2595 = vmand %vm2562, %vm2567
    %vm2596 = vmand %vm2563, %vm2566
    %vm2597 = vmand %vm2563, %vm2567
    %vm2598 = vmand %vm2564, %vm2566
    %vm2599 = vmand %vm2564, %vm2567
    %v2600 = vstv %s2514
    %vm2601 = vcmp.lt.s32.totalorder %v111, %v2600
    %vm2602 = vcmp.lt.s32.totalorder %v112, %v2600
    %vm2603 = vmand %vm2568, %vm2601
    %vm2604 = vmand %vm2569, %vm2602
    %vm2605 = vmand %vm2570, %vm2601
    %vm2606 = vmand %vm2571, %vm2602
    %vm2607 = vmand %vm2572, %vm2601
    %vm2608 = vmand %vm2573, %vm2602
    %vm2609 = vmand %vm2574, %vm2601
    %vm2610 = vmand %vm2575, %vm2602
    %vm2611 = vmand %vm2576, %vm2601
    %vm2612 = vmand %vm2577, %vm2602
    %vm2613 = vmand %vm2578, %vm2601
    %vm2614 = vmand %vm2579, %vm2602
    %vm2615 = vmand %vm2580, %vm2601
    %vm2616 = vmand %vm2581, %vm2602
    %vm2617 = vmand %vm2582, %vm2601
    %vm2618 = vmand %vm2583, %vm2602
    %vm2619 = vmand %vm2584, %vm2601
    %vm2620 = vmand %vm2585, %vm2602
    %vm2621 = vmand %vm2586, %vm2601
    %vm2622 = vmand %vm2587, %vm2602
    %vm2623 = vmand %vm2588, %vm2601
    %vm2624 = vmand %vm2589, %vm2602
    %vm2625 = vmand %vm2590, %vm2601
    %vm2626 = vmand %vm2591, %vm2602
    %vm2627 = vmand %vm2592, %vm2601
    %vm2628 = vmand %vm2593, %vm2602
    %vm2629 = vmand %vm2594, %vm2601
    %vm2630 = vmand %vm2595, %vm2602
    %vm2631 = vmand %vm2596, %vm2601
    %vm2632 = vmand %vm2597, %vm2602
    %vm2633 = vmand %vm2598, %vm2601
    %vm2634 = vmand %vm2599, %vm2602
    %v2635 = vsel %vm2603, 1, 0
    %v2636 = vsel %vm2604, 1, 0
    %v2637 = vsel %vm2605, 1, 0
    %v2638 = vsel %vm2606, 1, 0
    %v2639 = vsel %vm2607, 1, 0
    %v2640 = vsel %vm2608, 1, 0
    %v2641 = vsel %vm2609, 1, 0
    %v2642 = vsel %vm2610, 1, 0
    %v2643 = vsel %vm2611, 1, 0
    %v2644 = vsel %vm2612, 1, 0
    %v2645 = vsel %vm2613, 1, 0
    %v2646 = vsel %vm2614, 1, 0
    %v2647 = vsel %vm2615, 1, 0
    %v2648 = vsel %vm2616, 1, 0
    %v2649 = vsel %vm2617, 1, 0
    %v2650 = vsel %vm2618, 1, 0
    %v2651 = vsel %vm2619, 1, 0
    %v2652 = vsel %vm2620, 1, 0
    %v2653 = vsel %vm2621, 1, 0
    %v2654 = vsel %vm2622, 1, 0
    %v2655 = vsel %vm2623, 1, 0
    %v2656 = vsel %vm2624, 1, 0
    %v2657 = vsel %vm2625, 1, 0
    %v2658 = vsel %vm2626, 1, 0
    %v2659 = vsel %vm2627, 1, 0
    %v2660 = vsel %vm2628, 1, 0
    %v2661 = vsel %vm2629, 1, 0
    %v2662 = vsel %vm2630, 1, 0
    %v2663 = vsel %vm2631, 1, 0
    %v2664 = vsel %vm2632, 1, 0
    %v2665 = vsel %vm2633, 1, 0
    %v2666 = vsel %vm2634, 1, 0
    %vm2667 = vcmp.eq.s32.totalorder %v2635, 1
    %vm2668 = vcmp.eq.s32.totalorder %v2636, 1
    %vm2669 = vcmp.eq.s32.totalorder %v2637, 1
    %vm2670 = vcmp.eq.s32.totalorder %v2638, 1
    %vm2671 = vcmp.eq.s32.totalorder %v2639, 1
    %vm2672 = vcmp.eq.s32.totalorder %v2640, 1
    %vm2673 = vcmp.eq.s32.totalorder %v2641, 1
    %vm2674 = vcmp.eq.s32.totalorder %v2642, 1
    %vm2675 = vcmp.eq.s32.totalorder %v2643, 1
    %vm2676 = vcmp.eq.s32.totalorder %v2644, 1
    %vm2677 = vcmp.eq.s32.totalorder %v2645, 1
    %vm2678 = vcmp.eq.s32.totalorder %v2646, 1
    %vm2679 = vcmp.eq.s32.totalorder %v2647, 1
    %vm2680 = vcmp.eq.s32.totalorder %v2648, 1
    %vm2681 = vcmp.eq.s32.totalorder %v2649, 1
    %vm2682 = vcmp.eq.s32.totalorder %v2650, 1
    %vm2683 = vcmp.eq.s32.totalorder %v2651, 1
    %vm2684 = vcmp.eq.s32.totalorder %v2652, 1
    %vm2685 = vcmp.eq.s32.totalorder %v2653, 1
    %vm2686 = vcmp.eq.s32.totalorder %v2654, 1
    %vm2687 = vcmp.eq.s32.totalorder %v2655, 1
    %vm2688 = vcmp.eq.s32.totalorder %v2656, 1
    %vm2689 = vcmp.eq.s32.totalorder %v2657, 1
    %vm2690 = vcmp.eq.s32.totalorder %v2658, 1
    %vm2691 = vcmp.eq.s32.totalorder %v2659, 1
    %vm2692 = vcmp.eq.s32.totalorder %v2660, 1
    %vm2693 = vcmp.eq.s32.totalorder %v2661, 1
    %vm2694 = vcmp.eq.s32.totalorder %v2662, 1
    %vm2695 = vcmp.eq.s32.totalorder %v2663, 1
    %vm2696 = vcmp.eq.s32.totalorder %v2664, 1
    %vm2697 = vcmp.eq.s32.totalorder %v2665, 1
    %vm2698 = vcmp.eq.s32.totalorder %v2666, 1
    %v2699 = vsel %vm2667, %v45, -3e+38
    %v2700 = vsel %vm2668, %v46, -3e+38
    %v2701 = vsel %vm2669, %v47, -3e+38
    %v2702 = vsel %vm2670, %v48, -3e+38
    %v2703 = vsel %vm2671, %v49, -3e+38
    %v2704 = vsel %vm2672, %v50, -3e+38
    %v2705 = vsel %vm2673, %v51, -3e+38
    %v2706 = vsel %vm2674, %v52, -3e+38
    %v2707 = vsel %vm2675, %v53, -3e+38
    %v2708 = vsel %vm2676, %v54, -3e+38
    %v2709 = vsel %vm2677, %v55, -3e+38
    %v2710 = vsel %vm2678, %v56, -3e+38
    %v2711 = vsel %vm2679, %v57, -3e+38
    %v2712 = vsel %vm2680, %v58, -3e+38
    %v2713 = vsel %vm2681, %v59, -3e+38
    %v2714 = vsel %vm2682, %v60, -3e+38
    %v2715 = vsel %vm2683, %v61, -3e+38
    %v2716 = vsel %vm2684, %v62, -3e+38
    %v2717 = vsel %vm2685, %v63, -3e+38
    %v2718 = vsel %vm2686, %v64, -3e+38
    %v2719 = vsel %vm2687, %v65, -3e+38
    %v2720 = vsel %vm2688, %v66, -3e+38
    %v2721 = vsel %vm2689, %v67, -3e+38
    %v2722 = vsel %vm2690, %v68, -3e+38
    %v2723 = vsel %vm2691, %v69, -3e+38
    %v2724 = vsel %vm2692, %v70, -3e+38
    %v2725 = vsel %vm2693, %v71, -3e+38
    %v2726 = vsel %vm2694, %v72, -3e+38
    %v2727 = vsel %vm2695, %v73, -3e+38
    %v2728 = vsel %vm2696, %v74, -3e+38
    %v2729 = vsel %vm2697, %v75, -3e+38
    %v2730 = vsel %vm2698, %v76, -3e+38
    %v2731 = vsel %vm333, %v2699, -inf
    %v2732 = vsel %vm333, %v2701, -inf
    %v2733 = vsel %vm333, %v2703, -inf
    %v2734 = vmax.f32 %v2731, %v2733
    %v2735 = vsel %vm333, %v2705, -inf
    %v2736 = vmax.f32 %v2732, %v2735
    %v2737 = vsel %vm333, %v2707, -inf
    %v2738 = vmax.f32 %v2734, %v2737
    %v2739 = vsel %vm333, %v2709, -inf
    %v2740 = vmax.f32 %v2736, %v2739
    %v2741 = vsel %vm333, %v2711, -inf
    %v2742 = vmax.f32 %v2738, %v2741
    %v2743 = vsel %vm333, %v2713, -inf
    %v2744 = vmax.f32 %v2740, %v2743
    %v2745 = vsel %vm333, %v2715, -inf
    %v2746 = vmax.f32 %v2742, %v2745
    %v2747 = vsel %vm333, %v2717, -inf
    %v2748 = vmax.f32 %v2744, %v2747
    %v2749 = vsel %vm333, %v2719, -inf
    %v2750 = vmax.f32 %v2746, %v2749
    %v2751 = vsel %vm333, %v2721, -inf
    %v2752 = vmax.f32 %v2748, %v2751
    %v2753 = vsel %vm333, %v2723, -inf
    %v2754 = vmax.f32 %v2750, %v2753
    %v2755 = vsel %vm333, %v2725, -inf
    %v2756 = vmax.f32 %v2752, %v2755
    %v2757 = vsel %vm333, %v2727, -inf
    %v2758 = vmax.f32 %v2754, %v2757
    %v2759 = vsel %vm333, %v2729, -inf
    %v2760 = vmax.f32 %v2756, %v2759
    %v2761 = vmax.f32 %v2758, %v2760
    %v2762 = vsel %vm333, %v2700, -inf
    %v2763 = vsel %vm333, %v2702, -inf
    %v2764 = vsel %vm333, %v2704, -inf
    %v2765 = vmax.f32 %v2762, %v2764
    %v2766 = vsel %vm333, %v2706, -inf
    %v2767 = vmax.f32 %v2763, %v2766
    %v2768 = vsel %vm333, %v2708, -inf
    %v2769 = vmax.f32 %v2765, %v2768
    %v2770 = vsel %vm333, %v2710, -inf
    %v2771 = vmax.f32 %v2767, %v2770
    %v2772 = vsel %vm333, %v2712, -inf
    %v2773 = vmax.f32 %v2769, %v2772
    %v2774 = vsel %vm333, %v2714, -inf
    %v2775 = vmax.f32 %v2771, %v2774
    %v2776 = vsel %vm333, %v2716, -inf
    %v2777 = vmax.f32 %v2773, %v2776
    %v2778 = vsel %vm333, %v2718, -inf
    %v2779 = vmax.f32 %v2775, %v2778
    %v2780 = vsel %vm333, %v2720, -inf
    %v2781 = vmax.f32 %v2777, %v2780
    %v2782 = vsel %vm333, %v2722, -inf
    %v2783 = vmax.f32 %v2779, %v2782
    %v2784 = vsel %vm333, %v2724, -inf
    %v2785 = vmax.f32 %v2781, %v2784
    %v2786 = vsel %vm333, %v2726, -inf
    %v2787 = vmax.f32 %v2783, %v2786
    %v2788 = vsel %vm333, %v2728, -inf
    %v2789 = vmax.f32 %v2785, %v2788
    %v2790 = vsel %vm333, %v2730, -inf
    %v2791 = vmax.f32 %v2787, %v2790
    %v2792 = vmax.f32 %v2789, %v2791
    %v2793 = vsel %vm333, %v2761, -inf
    %v2794 = vsel %vm333, %v2792, -inf
    %v2795 = vmax.f32 %v2793, %v2794
    %v2796 = vrot.slane %v2795, 4
    %v2797 = vmax.f32 %v2795, %v2796
    %v2798 = vrot.slane %v2797, 2
    %v2799 = vmax.f32 %v2797, %v2798
    %v2800 = vrot.slane %v2799, 1
    %v2801 = vmax.f32 %v2799, %v2800
    %p2802 = scmp.le.s32.totalorder %s2512, %s2511
    %p2803 = scmp.le.s32.totalorder %s2514, %s2513
    %p2804 = por %p2802, %p2803
    %s2805 = scalar_select %p2804, 1, 0
    %v2806 = vstv %s2805
    %vm2807 = vcmp.eq.s32.totalorder %v2806, 1
    %v2808 = vsel %vm2807, 0.0, %v2801
    %v2809 = vadd.f32 %v2808, 0.0
    %s2810 = sld [smem:[#allocation3 + $0x24]]
    %s2811 = sld [smem:[#allocation3 + $0x25]]
    %s2812 = sld [smem:[#allocation3 + $0x26]]
    %s2813 = sld [smem:[#allocation3 + $0x27]]
    %v2814 = vstv %s2810
    %vm2815 = vcmp.le.s32.totalorder %v2814, 0
    %vm2816 = vcmp.le.s32.totalorder %v2814, 1
    %vm2817 = vcmp.le.s32.totalorder %v2814, 2
    %vm2818 = vcmp.le.s32.totalorder %v2814, 3
    %vm2819 = vcmp.le.s32.totalorder %v2814, 4
    %vm2820 = vcmp.le.s32.totalorder %v2814, 5
    %vm2821 = vcmp.le.s32.totalorder %v2814, 6
    %vm2822 = vcmp.le.s32.totalorder %v2814, 7
    %vm2823 = vcmp.le.s32.totalorder %v2814, 8
    %vm2824 = vcmp.le.s32.totalorder %v2814, 9
    %vm2825 = vcmp.le.s32.totalorder %v2814, 10
    %vm2826 = vcmp.le.s32.totalorder %v2814, 11
    %vm2827 = vcmp.le.s32.totalorder %v2814, 12
    %vm2828 = vcmp.le.s32.totalorder %v2814, 13
    %vm2829 = vcmp.le.s32.totalorder %v2814, 14
    %vm2830 = vcmp.le.s32.totalorder %v2814, 15
    %v2831 = vstv %s2811
    %vm2832 = vcmp.gt.s32.totalorder %v2831, 0
    %vm2833 = vcmp.gt.s32.totalorder %v2831, 1
    %vm2834 = vcmp.gt.s32.totalorder %v2831, 2
    %vm2835 = vcmp.gt.s32.totalorder %v2831, 3
    %vm2836 = vcmp.gt.s32.totalorder %v2831, 4
    %vm2837 = vcmp.gt.s32.totalorder %v2831, 5
    %vm2838 = vcmp.gt.s32.totalorder %v2831, 6
    %vm2839 = vcmp.gt.s32.totalorder %v2831, 7
    %vm2840 = vcmp.gt.s32.totalorder %v2831, 8
    %vm2841 = vcmp.gt.s32.totalorder %v2831, 9
    %vm2842 = vcmp.gt.s32.totalorder %v2831, 10
    %vm2843 = vcmp.gt.s32.totalorder %v2831, 11
    %vm2844 = vcmp.gt.s32.totalorder %v2831, 12
    %vm2845 = vcmp.gt.s32.totalorder %v2831, 13
    %vm2846 = vcmp.gt.s32.totalorder %v2831, 14
    %vm2847 = vcmp.gt.s32.totalorder %v2831, 15
    %vm2848 = vmand %vm2815, %vm2832
    %vm2849 = vmand %vm2816, %vm2833
    %vm2850 = vmand %vm2817, %vm2834
    %vm2851 = vmand %vm2818, %vm2835
    %vm2852 = vmand %vm2819, %vm2836
    %vm2853 = vmand %vm2820, %vm2837
    %vm2854 = vmand %vm2821, %vm2838
    %vm2855 = vmand %vm2822, %vm2839
    %vm2856 = vmand %vm2823, %vm2840
    %vm2857 = vmand %vm2824, %vm2841
    %vm2858 = vmand %vm2825, %vm2842
    %vm2859 = vmand %vm2826, %vm2843
    %vm2860 = vmand %vm2827, %vm2844
    %vm2861 = vmand %vm2828, %vm2845
    %vm2862 = vmand %vm2829, %vm2846
    %vm2863 = vmand %vm2830, %vm2847
    %v2864 = vstv %s2812
    %vm2865 = vcmp.ge.s32.totalorder %v111, %v2864
    %vm2866 = vcmp.ge.s32.totalorder %v112, %v2864
    %vm2867 = vmand %vm2848, %vm2865
    %vm2868 = vmand %vm2848, %vm2866
    %vm2869 = vmand %vm2849, %vm2865
    %vm2870 = vmand %vm2849, %vm2866
    %vm2871 = vmand %vm2850, %vm2865
    %vm2872 = vmand %vm2850, %vm2866
    %vm2873 = vmand %vm2851, %vm2865
    %vm2874 = vmand %vm2851, %vm2866
    %vm2875 = vmand %vm2852, %vm2865
    %vm2876 = vmand %vm2852, %vm2866
    %vm2877 = vmand %vm2853, %vm2865
    %vm2878 = vmand %vm2853, %vm2866
    %vm2879 = vmand %vm2854, %vm2865
    %vm2880 = vmand %vm2854, %vm2866
    %vm2881 = vmand %vm2855, %vm2865
    %vm2882 = vmand %vm2855, %vm2866
    %vm2883 = vmand %vm2856, %vm2865
    %vm2884 = vmand %vm2856, %vm2866
    %vm2885 = vmand %vm2857, %vm2865
    %vm2886 = vmand %vm2857, %vm2866
    %vm2887 = vmand %vm2858, %vm2865
    %vm2888 = vmand %vm2858, %vm2866
    %vm2889 = vmand %vm2859, %vm2865
    %vm2890 = vmand %vm2859, %vm2866
    %vm2891 = vmand %vm2860, %vm2865
    %vm2892 = vmand %vm2860, %vm2866
    %vm2893 = vmand %vm2861, %vm2865
    %vm2894 = vmand %vm2861, %vm2866
    %vm2895 = vmand %vm2862, %vm2865
    %vm2896 = vmand %vm2862, %vm2866
    %vm2897 = vmand %vm2863, %vm2865
    %vm2898 = vmand %vm2863, %vm2866
    %v2899 = vstv %s2813
    %vm2900 = vcmp.lt.s32.totalorder %v111, %v2899
    %vm2901 = vcmp.lt.s32.totalorder %v112, %v2899
    %vm2902 = vmand %vm2867, %vm2900
    %vm2903 = vmand %vm2868, %vm2901
    %vm2904 = vmand %vm2869, %vm2900
    %vm2905 = vmand %vm2870, %vm2901
    %vm2906 = vmand %vm2871, %vm2900
    %vm2907 = vmand %vm2872, %vm2901
    %vm2908 = vmand %vm2873, %vm2900
    %vm2909 = vmand %vm2874, %vm2901
    %vm2910 = vmand %vm2875, %vm2900
    %vm2911 = vmand %vm2876, %vm2901
    %vm2912 = vmand %vm2877, %vm2900
    %vm2913 = vmand %vm2878, %vm2901
    %vm2914 = vmand %vm2879, %vm2900
    %vm2915 = vmand %vm2880, %vm2901
    %vm2916 = vmand %vm2881, %vm2900
    %vm2917 = vmand %vm2882, %vm2901
    %vm2918 = vmand %vm2883, %vm2900
    %vm2919 = vmand %vm2884, %vm2901
    %vm2920 = vmand %vm2885, %vm2900
    %vm2921 = vmand %vm2886, %vm2901
    %vm2922 = vmand %vm2887, %vm2900
    %vm2923 = vmand %vm2888, %vm2901
    %vm2924 = vmand %vm2889, %vm2900
    %vm2925 = vmand %vm2890, %vm2901
    %vm2926 = vmand %vm2891, %vm2900
    %vm2927 = vmand %vm2892, %vm2901
    %vm2928 = vmand %vm2893, %vm2900
    %vm2929 = vmand %vm2894, %vm2901
    %vm2930 = vmand %vm2895, %vm2900
    %vm2931 = vmand %vm2896, %vm2901
    %vm2932 = vmand %vm2897, %vm2900
    %vm2933 = vmand %vm2898, %vm2901
    %v2934 = vsel %vm2902, 1, 0
    %v2935 = vsel %vm2903, 1, 0
    %v2936 = vsel %vm2904, 1, 0
    %v2937 = vsel %vm2905, 1, 0
    %v2938 = vsel %vm2906, 1, 0
    %v2939 = vsel %vm2907, 1, 0
    %v2940 = vsel %vm2908, 1, 0
    %v2941 = vsel %vm2909, 1, 0
    %v2942 = vsel %vm2910, 1, 0
    %v2943 = vsel %vm2911, 1, 0
    %v2944 = vsel %vm2912, 1, 0
    %v2945 = vsel %vm2913, 1, 0
    %v2946 = vsel %vm2914, 1, 0
    %v2947 = vsel %vm2915, 1, 0
    %v2948 = vsel %vm2916, 1, 0
    %v2949 = vsel %vm2917, 1, 0
    %v2950 = vsel %vm2918, 1, 0
    %v2951 = vsel %vm2919, 1, 0
    %v2952 = vsel %vm2920, 1, 0
    %v2953 = vsel %vm2921, 1, 0
    %v2954 = vsel %vm2922, 1, 0
    %v2955 = vsel %vm2923, 1, 0
    %v2956 = vsel %vm2924, 1, 0
    %v2957 = vsel %vm2925, 1, 0
    %v2958 = vsel %vm2926, 1, 0
    %v2959 = vsel %vm2927, 1, 0
    %v2960 = vsel %vm2928, 1, 0
    %v2961 = vsel %vm2929, 1, 0
    %v2962 = vsel %vm2930, 1, 0
    %v2963 = vsel %vm2931, 1, 0
    %v2964 = vsel %vm2932, 1, 0
    %v2965 = vsel %vm2933, 1, 0
    %vm2966 = vcmp.eq.s32.totalorder %v2934, 1
    %vm2967 = vcmp.eq.s32.totalorder %v2935, 1
    %vm2968 = vcmp.eq.s32.totalorder %v2936, 1
    %vm2969 = vcmp.eq.s32.totalorder %v2937, 1
    %vm2970 = vcmp.eq.s32.totalorder %v2938, 1
    %vm2971 = vcmp.eq.s32.totalorder %v2939, 1
    %vm2972 = vcmp.eq.s32.totalorder %v2940, 1
    %vm2973 = vcmp.eq.s32.totalorder %v2941, 1
    %vm2974 = vcmp.eq.s32.totalorder %v2942, 1
    %vm2975 = vcmp.eq.s32.totalorder %v2943, 1
    %vm2976 = vcmp.eq.s32.totalorder %v2944, 1
    %vm2977 = vcmp.eq.s32.totalorder %v2945, 1
    %vm2978 = vcmp.eq.s32.totalorder %v2946, 1
    %vm2979 = vcmp.eq.s32.totalorder %v2947, 1
    %vm2980 = vcmp.eq.s32.totalorder %v2948, 1
    %vm2981 = vcmp.eq.s32.totalorder %v2949, 1
    %vm2982 = vcmp.eq.s32.totalorder %v2950, 1
    %vm2983 = vcmp.eq.s32.totalorder %v2951, 1
    %vm2984 = vcmp.eq.s32.totalorder %v2952, 1
    %vm2985 = vcmp.eq.s32.totalorder %v2953, 1
    %vm2986 = vcmp.eq.s32.totalorder %v2954, 1
    %vm2987 = vcmp.eq.s32.totalorder %v2955, 1
    %vm2988 = vcmp.eq.s32.totalorder %v2956, 1
    %vm2989 = vcmp.eq.s32.totalorder %v2957, 1
    %vm2990 = vcmp.eq.s32.totalorder %v2958, 1
    %vm2991 = vcmp.eq.s32.totalorder %v2959, 1
    %vm2992 = vcmp.eq.s32.totalorder %v2960, 1
    %vm2993 = vcmp.eq.s32.totalorder %v2961, 1
    %vm2994 = vcmp.eq.s32.totalorder %v2962, 1
    %vm2995 = vcmp.eq.s32.totalorder %v2963, 1
    %vm2996 = vcmp.eq.s32.totalorder %v2964, 1
    %vm2997 = vcmp.eq.s32.totalorder %v2965, 1
    %v2998 = vsel %vm2966, %v45, -3e+38
    %v2999 = vsel %vm2967, %v46, -3e+38
    %v3000 = vsel %vm2968, %v47, -3e+38
    %v3001 = vsel %vm2969, %v48, -3e+38
    %v3002 = vsel %vm2970, %v49, -3e+38
    %v3003 = vsel %vm2971, %v50, -3e+38
    %v3004 = vsel %vm2972, %v51, -3e+38
    %v3005 = vsel %vm2973, %v52, -3e+38
    %v3006 = vsel %vm2974, %v53, -3e+38
    %v3007 = vsel %vm2975, %v54, -3e+38
    %v3008 = vsel %vm2976, %v55, -3e+38
    %v3009 = vsel %vm2977, %v56, -3e+38
    %v3010 = vsel %vm2978, %v57, -3e+38
    %v3011 = vsel %vm2979, %v58, -3e+38
    %v3012 = vsel %vm2980, %v59, -3e+38
    %v3013 = vsel %vm2981, %v60, -3e+38
    %v3014 = vsel %vm2982, %v61, -3e+38
    %v3015 = vsel %vm2983, %v62, -3e+38
    %v3016 = vsel %vm2984, %v63, -3e+38
    %v3017 = vsel %vm2985, %v64, -3e+38
    %v3018 = vsel %vm2986, %v65, -3e+38
    %v3019 = vsel %vm2987, %v66, -3e+38
    %v3020 = vsel %vm2988, %v67, -3e+38
    %v3021 = vsel %vm2989, %v68, -3e+38
    %v3022 = vsel %vm2990, %v69, -3e+38
    %v3023 = vsel %vm2991, %v70, -3e+38
    %v3024 = vsel %vm2992, %v71, -3e+38
    %v3025 = vsel %vm2993, %v72, -3e+38
    %v3026 = vsel %vm2994, %v73, -3e+38
    %v3027 = vsel %vm2995, %v74, -3e+38
    %v3028 = vsel %vm2996, %v75, -3e+38
    %v3029 = vsel %vm2997, %v76, -3e+38
    %v3030 = vsel %vm333, %v2998, -inf
    %v3031 = vsel %vm333, %v3000, -inf
    %v3032 = vsel %vm333, %v3002, -inf
    %v3033 = vmax.f32 %v3030, %v3032
    %v3034 = vsel %vm333, %v3004, -inf
    %v3035 = vmax.f32 %v3031, %v3034
    %v3036 = vsel %vm333, %v3006, -inf
    %v3037 = vmax.f32 %v3033, %v3036
    %v3038 = vsel %vm333, %v3008, -inf
    %v3039 = vmax.f32 %v3035, %v3038
    %v3040 = vsel %vm333, %v3010, -inf
    %v3041 = vmax.f32 %v3037, %v3040
    %v3042 = vsel %vm333, %v3012, -inf
    %v3043 = vmax.f32 %v3039, %v3042
    %v3044 = vsel %vm333, %v3014, -inf
    %v3045 = vmax.f32 %v3041, %v3044
    %v3046 = vsel %vm333, %v3016, -inf
    %v3047 = vmax.f32 %v3043, %v3046
    %v3048 = vsel %vm333, %v3018, -inf
    %v3049 = vmax.f32 %v3045, %v3048
    %v3050 = vsel %vm333, %v3020, -inf
    %v3051 = vmax.f32 %v3047, %v3050
    %v3052 = vsel %vm333, %v3022, -inf
    %v3053 = vmax.f32 %v3049, %v3052
    %v3054 = vsel %vm333, %v3024, -inf
    %v3055 = vmax.f32 %v3051, %v3054
    %v3056 = vsel %vm333, %v3026, -inf
    %v3057 = vmax.f32 %v3053, %v3056
    %v3058 = vsel %vm333, %v3028, -inf
    %v3059 = vmax.f32 %v3055, %v3058
    %v3060 = vmax.f32 %v3057, %v3059
    %v3061 = vsel %vm333, %v2999, -inf
    %v3062 = vsel %vm333, %v3001, -inf
    %v3063 = vsel %vm333, %v3003, -inf
    %v3064 = vmax.f32 %v3061, %v3063
    %v3065 = vsel %vm333, %v3005, -inf
    %v3066 = vmax.f32 %v3062, %v3065
    %v3067 = vsel %vm333, %v3007, -inf
    %v3068 = vmax.f32 %v3064, %v3067
    %v3069 = vsel %vm333, %v3009, -inf
    %v3070 = vmax.f32 %v3066, %v3069
    %v3071 = vsel %vm333, %v3011, -inf
    %v3072 = vmax.f32 %v3068, %v3071
    %v3073 = vsel %vm333, %v3013, -inf
    %v3074 = vmax.f32 %v3070, %v3073
    %v3075 = vsel %vm333, %v3015, -inf
    %v3076 = vmax.f32 %v3072, %v3075
    %v3077 = vsel %vm333, %v3017, -inf
    %v3078 = vmax.f32 %v3074, %v3077
    %v3079 = vsel %vm333, %v3019, -inf
    %v3080 = vmax.f32 %v3076, %v3079
    %v3081 = vsel %vm333, %v3021, -inf
    %v3082 = vmax.f32 %v3078, %v3081
    %v3083 = vsel %vm333, %v3023, -inf
    %v3084 = vmax.f32 %v3080, %v3083
    %v3085 = vsel %vm333, %v3025, -inf
    %v3086 = vmax.f32 %v3082, %v3085
    %v3087 = vsel %vm333, %v3027, -inf
    %v3088 = vmax.f32 %v3084, %v3087
    %v3089 = vsel %vm333, %v3029, -inf
    %v3090 = vmax.f32 %v3086, %v3089
    %v3091 = vmax.f32 %v3088, %v3090
    %v3092 = vsel %vm333, %v3060, -inf
    %v3093 = vsel %vm333, %v3091, -inf
    %v3094 = vmax.f32 %v3092, %v3093
    %v3095 = vrot.slane %v3094, 4
    %v3096 = vmax.f32 %v3094, %v3095
    %v3097 = vrot.slane %v3096, 2
    %v3098 = vmax.f32 %v3096, %v3097
    %v3099 = vrot.slane %v3098, 1
    %v3100 = vmax.f32 %v3098, %v3099
    %p3101 = scmp.le.s32.totalorder %s2811, %s2810
    %p3102 = scmp.le.s32.totalorder %s2813, %s2812
    %p3103 = por %p3101, %p3102
    %s3104 = scalar_select %p3103, 1, 0
    %v3105 = vstv %s3104
    %vm3106 = vcmp.eq.s32.totalorder %v3105, 1
    %v3107 = vsel %vm3106, 0.0, %v3100
    %v3108 = vadd.f32 %v2809, %v3107
    %s3109 = sld [smem:[#allocation3 + $0x28]]
    %s3110 = sld [smem:[#allocation3 + $0x29]]
    %s3111 = sld [smem:[#allocation3 + $0x2a]]
    %s3112 = sld [smem:[#allocation3 + $0x2b]]
    %v3113 = vstv %s3109
    %vm3114 = vcmp.le.s32.totalorder %v3113, 0
    %vm3115 = vcmp.le.s32.totalorder %v3113, 1
    %vm3116 = vcmp.le.s32.totalorder %v3113, 2
    %vm3117 = vcmp.le.s32.totalorder %v3113, 3
    %vm3118 = vcmp.le.s32.totalorder %v3113, 4
    %vm3119 = vcmp.le.s32.totalorder %v3113, 5
    %vm3120 = vcmp.le.s32.totalorder %v3113, 6
    %vm3121 = vcmp.le.s32.totalorder %v3113, 7
    %vm3122 = vcmp.le.s32.totalorder %v3113, 8
    %vm3123 = vcmp.le.s32.totalorder %v3113, 9
    %vm3124 = vcmp.le.s32.totalorder %v3113, 10
    %vm3125 = vcmp.le.s32.totalorder %v3113, 11
    %vm3126 = vcmp.le.s32.totalorder %v3113, 12
    %vm3127 = vcmp.le.s32.totalorder %v3113, 13
    %vm3128 = vcmp.le.s32.totalorder %v3113, 14
    %vm3129 = vcmp.le.s32.totalorder %v3113, 15
    %v3130 = vstv %s3110
    %vm3131 = vcmp.gt.s32.totalorder %v3130, 0
    %vm3132 = vcmp.gt.s32.totalorder %v3130, 1
    %vm3133 = vcmp.gt.s32.totalorder %v3130, 2
    %vm3134 = vcmp.gt.s32.totalorder %v3130, 3
    %vm3135 = vcmp.gt.s32.totalorder %v3130, 4
    %vm3136 = vcmp.gt.s32.totalorder %v3130, 5
    %vm3137 = vcmp.gt.s32.totalorder %v3130, 6
    %vm3138 = vcmp.gt.s32.totalorder %v3130, 7
    %vm3139 = vcmp.gt.s32.totalorder %v3130, 8
    %vm3140 = vcmp.gt.s32.totalorder %v3130, 9
    %vm3141 = vcmp.gt.s32.totalorder %v3130, 10
    %vm3142 = vcmp.gt.s32.totalorder %v3130, 11
    %vm3143 = vcmp.gt.s32.totalorder %v3130, 12
    %vm3144 = vcmp.gt.s32.totalorder %v3130, 13
    %vm3145 = vcmp.gt.s32.totalorder %v3130, 14
    %vm3146 = vcmp.gt.s32.totalorder %v3130, 15
    %vm3147 = vmand %vm3114, %vm3131
    %vm3148 = vmand %vm3115, %vm3132
    %vm3149 = vmand %vm3116, %vm3133
    %vm3150 = vmand %vm3117, %vm3134
    %vm3151 = vmand %vm3118, %vm3135
    %vm3152 = vmand %vm3119, %vm3136
    %vm3153 = vmand %vm3120, %vm3137
    %vm3154 = vmand %vm3121, %vm3138
    %vm3155 = vmand %vm3122, %vm3139
    %vm3156 = vmand %vm3123, %vm3140
    %vm3157 = vmand %vm3124, %vm3141
    %vm3158 = vmand %vm3125, %vm3142
    %vm3159 = vmand %vm3126, %vm3143
    %vm3160 = vmand %vm3127, %vm3144
    %vm3161 = vmand %vm3128, %vm3145
    %vm3162 = vmand %vm3129, %vm3146
    %v3163 = vstv %s3111
    %vm3164 = vcmp.ge.s32.totalorder %v111, %v3163
    %vm3165 = vcmp.ge.s32.totalorder %v112, %v3163
    %vm3166 = vmand %vm3147, %vm3164
    %vm3167 = vmand %vm3147, %vm3165
    %vm3168 = vmand %vm3148, %vm3164
    %vm3169 = vmand %vm3148, %vm3165
    %vm3170 = vmand %vm3149, %vm3164
    %vm3171 = vmand %vm3149, %vm3165
    %vm3172 = vmand %vm3150, %vm3164
    %vm3173 = vmand %vm3150, %vm3165
    %vm3174 = vmand %vm3151, %vm3164
    %vm3175 = vmand %vm3151, %vm3165
    %vm3176 = vmand %vm3152, %vm3164
    %vm3177 = vmand %vm3152, %vm3165
    %vm3178 = vmand %vm3153, %vm3164
    %vm3179 = vmand %vm3153, %vm3165
    %vm3180 = vmand %vm3154, %vm3164
    %vm3181 = vmand %vm3154, %vm3165
    %vm3182 = vmand %vm3155, %vm3164
    %vm3183 = vmand %vm3155, %vm3165
    %vm3184 = vmand %vm3156, %vm3164
    %vm3185 = vmand %vm3156, %vm3165
    %vm3186 = vmand %vm3157, %vm3164
    %vm3187 = vmand %vm3157, %vm3165
    %vm3188 = vmand %vm3158, %vm3164
    %vm3189 = vmand %vm3158, %vm3165
    %vm3190 = vmand %vm3159, %vm3164
    %vm3191 = vmand %vm3159, %vm3165
    %vm3192 = vmand %vm3160, %vm3164
    %vm3193 = vmand %vm3160, %vm3165
    %vm3194 = vmand %vm3161, %vm3164
    %vm3195 = vmand %vm3161, %vm3165
    %vm3196 = vmand %vm3162, %vm3164
    %vm3197 = vmand %vm3162, %vm3165
    %v3198 = vstv %s3112
    %vm3199 = vcmp.lt.s32.totalorder %v111, %v3198
    %vm3200 = vcmp.lt.s32.totalorder %v112, %v3198
    %vm3201 = vmand %vm3166, %vm3199
    %vm3202 = vmand %vm3167, %vm3200
    %vm3203 = vmand %vm3168, %vm3199
    %vm3204 = vmand %vm3169, %vm3200
    %vm3205 = vmand %vm3170, %vm3199
    %vm3206 = vmand %vm3171, %vm3200
    %vm3207 = vmand %vm3172, %vm3199
    %vm3208 = vmand %vm3173, %vm3200
    %vm3209 = vmand %vm3174, %vm3199
    %vm3210 = vmand %vm3175, %vm3200
    %vm3211 = vmand %vm3176, %vm3199
    %vm3212 = vmand %vm3177, %vm3200
    %vm3213 = vmand %vm3178, %vm3199
    %vm3214 = vmand %vm3179, %vm3200
    %vm3215 = vmand %vm3180, %vm3199
    %vm3216 = vmand %vm3181, %vm3200
    %vm3217 = vmand %vm3182, %vm3199
    %vm3218 = vmand %vm3183, %vm3200
    %vm3219 = vmand %vm3184, %vm3199
    %vm3220 = vmand %vm3185, %vm3200
    %vm3221 = vmand %vm3186, %vm3199
    %vm3222 = vmand %vm3187, %vm3200
    %vm3223 = vmand %vm3188, %vm3199
    %vm3224 = vmand %vm3189, %vm3200
    %vm3225 = vmand %vm3190, %vm3199
    %vm3226 = vmand %vm3191, %vm3200
    %vm3227 = vmand %vm3192, %vm3199
    %vm3228 = vmand %vm3193, %vm3200
    %vm3229 = vmand %vm3194, %vm3199
    %vm3230 = vmand %vm3195, %vm3200
    %vm3231 = vmand %vm3196, %vm3199
    %vm3232 = vmand %vm3197, %vm3200
    %v3233 = vsel %vm3201, 1, 0
    %v3234 = vsel %vm3202, 1, 0
    %v3235 = vsel %vm3203, 1, 0
    %v3236 = vsel %vm3204, 1, 0
    %v3237 = vsel %vm3205, 1, 0
    %v3238 = vsel %vm3206, 1, 0
    %v3239 = vsel %vm3207, 1, 0
    %v3240 = vsel %vm3208, 1, 0
    %v3241 = vsel %vm3209, 1, 0
    %v3242 = vsel %vm3210, 1, 0
    %v3243 = vsel %vm3211, 1, 0
    %v3244 = vsel %vm3212, 1, 0
    %v3245 = vsel %vm3213, 1, 0
    %v3246 = vsel %vm3214, 1, 0
    %v3247 = vsel %vm3215, 1, 0
    %v3248 = vsel %vm3216, 1, 0
    %v3249 = vsel %vm3217, 1, 0
    %v3250 = vsel %vm3218, 1, 0
    %v3251 = vsel %vm3219, 1, 0
    %v3252 = vsel %vm3220, 1, 0
    %v3253 = vsel %vm3221, 1, 0
    %v3254 = vsel %vm3222, 1, 0
    %v3255 = vsel %vm3223, 1, 0
    %v3256 = vsel %vm3224, 1, 0
    %v3257 = vsel %vm3225, 1, 0
    %v3258 = vsel %vm3226, 1, 0
    %v3259 = vsel %vm3227, 1, 0
    %v3260 = vsel %vm3228, 1, 0
    %v3261 = vsel %vm3229, 1, 0
    %v3262 = vsel %vm3230, 1, 0
    %v3263 = vsel %vm3231, 1, 0
    %v3264 = vsel %vm3232, 1, 0
    %vm3265 = vcmp.eq.s32.totalorder %v3233, 1
    %vm3266 = vcmp.eq.s32.totalorder %v3234, 1
    %vm3267 = vcmp.eq.s32.totalorder %v3235, 1
    %vm3268 = vcmp.eq.s32.totalorder %v3236, 1
    %vm3269 = vcmp.eq.s32.totalorder %v3237, 1
    %vm3270 = vcmp.eq.s32.totalorder %v3238, 1
    %vm3271 = vcmp.eq.s32.totalorder %v3239, 1
    %vm3272 = vcmp.eq.s32.totalorder %v3240, 1
    %vm3273 = vcmp.eq.s32.totalorder %v3241, 1
    %vm3274 = vcmp.eq.s32.totalorder %v3242, 1
    %vm3275 = vcmp.eq.s32.totalorder %v3243, 1
    %vm3276 = vcmp.eq.s32.totalorder %v3244, 1
    %vm3277 = vcmp.eq.s32.totalorder %v3245, 1
    %vm3278 = vcmp.eq.s32.totalorder %v3246, 1
    %vm3279 = vcmp.eq.s32.totalorder %v3247, 1
    %vm3280 = vcmp.eq.s32.totalorder %v3248, 1
    %vm3281 = vcmp.eq.s32.totalorder %v3249, 1
    %vm3282 = vcmp.eq.s32.totalorder %v3250, 1
    %vm3283 = vcmp.eq.s32.totalorder %v3251, 1
    %vm3284 = vcmp.eq.s32.totalorder %v3252, 1
    %vm3285 = vcmp.eq.s32.totalorder %v3253, 1
    %vm3286 = vcmp.eq.s32.totalorder %v3254, 1
    %vm3287 = vcmp.eq.s32.totalorder %v3255, 1
    %vm3288 = vcmp.eq.s32.totalorder %v3256, 1
    %vm3289 = vcmp.eq.s32.totalorder %v3257, 1
    %vm3290 = vcmp.eq.s32.totalorder %v3258, 1
    %vm3291 = vcmp.eq.s32.totalorder %v3259, 1
    %vm3292 = vcmp.eq.s32.totalorder %v3260, 1
    %vm3293 = vcmp.eq.s32.totalorder %v3261, 1
    %vm3294 = vcmp.eq.s32.totalorder %v3262, 1
    %vm3295 = vcmp.eq.s32.totalorder %v3263, 1
    %vm3296 = vcmp.eq.s32.totalorder %v3264, 1
    %v3297 = vsel %vm3265, %v45, -3e+38
    %v3298 = vsel %vm3266, %v46, -3e+38
    %v3299 = vsel %vm3267, %v47, -3e+38
    %v3300 = vsel %vm3268, %v48, -3e+38
    %v3301 = vsel %vm3269, %v49, -3e+38
    %v3302 = vsel %vm3270, %v50, -3e+38
    %v3303 = vsel %vm3271, %v51, -3e+38
    %v3304 = vsel %vm3272, %v52, -3e+38
    %v3305 = vsel %vm3273, %v53, -3e+38
    %v3306 = vsel %vm3274, %v54, -3e+38
    %v3307 = vsel %vm3275, %v55, -3e+38
    %v3308 = vsel %vm3276, %v56, -3e+38
    %v3309 = vsel %vm3277, %v57, -3e+38
    %v3310 = vsel %vm3278, %v58, -3e+38
    %v3311 = vsel %vm3279, %v59, -3e+38
    %v3312 = vsel %vm3280, %v60, -3e+38
    %v3313 = vsel %vm3281, %v61, -3e+38
    %v3314 = vsel %vm3282, %v62, -3e+38
    %v3315 = vsel %vm3283, %v63, -3e+38
    %v3316 = vsel %vm3284, %v64, -3e+38
    %v3317 = vsel %vm3285, %v65, -3e+38
    %v3318 = vsel %vm3286, %v66, -3e+38
    %v3319 = vsel %vm3287, %v67, -3e+38
    %v3320 = vsel %vm3288, %v68, -3e+38
    %v3321 = vsel %vm3289, %v69, -3e+38
    %v3322 = vsel %vm3290, %v70, -3e+38
    %v3323 = vsel %vm3291, %v71, -3e+38
    %v3324 = vsel %vm3292, %v72, -3e+38
    %v3325 = vsel %vm3293, %v73, -3e+38
    %v3326 = vsel %vm3294, %v74, -3e+38
    %v3327 = vsel %vm3295, %v75, -3e+38
    %v3328 = vsel %vm3296, %v76, -3e+38
    %v3329 = vsel %vm333, %v3297, -inf
    %v3330 = vsel %vm333, %v3299, -inf
    %v3331 = vsel %vm333, %v3301, -inf
    %v3332 = vmax.f32 %v3329, %v3331
    %v3333 = vsel %vm333, %v3303, -inf
    %v3334 = vmax.f32 %v3330, %v3333
    %v3335 = vsel %vm333, %v3305, -inf
    %v3336 = vmax.f32 %v3332, %v3335
    %v3337 = vsel %vm333, %v3307, -inf
    %v3338 = vmax.f32 %v3334, %v3337
    %v3339 = vsel %vm333, %v3309, -inf
    %v3340 = vmax.f32 %v3336, %v3339
    %v3341 = vsel %vm333, %v3311, -inf
    %v3342 = vmax.f32 %v3338, %v3341
    %v3343 = vsel %vm333, %v3313, -inf
    %v3344 = vmax.f32 %v3340, %v3343
    %v3345 = vsel %vm333, %v3315, -inf
    %v3346 = vmax.f32 %v3342, %v3345
    %v3347 = vsel %vm333, %v3317, -inf
    %v3348 = vmax.f32 %v3344, %v3347
    %v3349 = vsel %vm333, %v3319, -inf
    %v3350 = vmax.f32 %v3346, %v3349
    %v3351 = vsel %vm333, %v3321, -inf
    %v3352 = vmax.f32 %v3348, %v3351
    %v3353 = vsel %vm333, %v3323, -inf
    %v3354 = vmax.f32 %v3350, %v3353
    %v3355 = vsel %vm333, %v3325, -inf
    %v3356 = vmax.f32 %v3352, %v3355
    %v3357 = vsel %vm333, %v3327, -inf
    %v3358 = vmax.f32 %v3354, %v3357
    %v3359 = vmax.f32 %v3356, %v3358
    %v3360 = vsel %vm333, %v3298, -inf
    %v3361 = vsel %vm333, %v3300, -inf
    %v3362 = vsel %vm333, %v3302, -inf
    %v3363 = vmax.f32 %v3360, %v3362
    %v3364 = vsel %vm333, %v3304, -inf
    %v3365 = vmax.f32 %v3361, %v3364
    %v3366 = vsel %vm333, %v3306, -inf
    %v3367 = vmax.f32 %v3363, %v3366
    %v3368 = vsel %vm333, %v3308, -inf
    %v3369 = vmax.f32 %v3365, %v3368
    %v3370 = vsel %vm333, %v3310, -inf
    %v3371 = vmax.f32 %v3367, %v3370
    %v3372 = vsel %vm333, %v3312, -inf
    %v3373 = vmax.f32 %v3369, %v3372
    %v3374 = vsel %vm333, %v3314, -inf
    %v3375 = vmax.f32 %v3371, %v3374
    %v3376 = vsel %vm333, %v3316, -inf
    %v3377 = vmax.f32 %v3373, %v3376
    %v3378 = vsel %vm333, %v3318, -inf
    %v3379 = vmax.f32 %v3375, %v3378
    %v3380 = vsel %vm333, %v3320, -inf
    %v3381 = vmax.f32 %v3377, %v3380
    %v3382 = vsel %vm333, %v3322, -inf
    %v3383 = vmax.f32 %v3379, %v3382
    %v3384 = vsel %vm333, %v3324, -inf
    %v3385 = vmax.f32 %v3381, %v3384
    %v3386 = vsel %vm333, %v3326, -inf
    %v3387 = vmax.f32 %v3383, %v3386
    %v3388 = vsel %vm333, %v3328, -inf
    %v3389 = vmax.f32 %v3385, %v3388
    %v3390 = vmax.f32 %v3387, %v3389
    %v3391 = vsel %vm333, %v3359, -inf
    %v3392 = vsel %vm333, %v3390, -inf
    %v3393 = vmax.f32 %v3391, %v3392
    %v3394 = vrot.slane %v3393, 4
    %v3395 = vmax.f32 %v3393, %v3394
    %v3396 = vrot.slane %v3395, 2
    %v3397 = vmax.f32 %v3395, %v3396
    %v3398 = vrot.slane %v3397, 1
    %v3399 = vmax.f32 %v3397, %v3398
    %p3400 = scmp.le.s32.totalorder %s3110, %s3109
    %p3401 = scmp.le.s32.totalorder %s3112, %s3111
    %p3402 = por %p3400, %p3401
    %s3403 = scalar_select %p3402, 1, 0
    %v3404 = vstv %s3403
    %vm3405 = vcmp.eq.s32.totalorder %v3404, 1
    %v3406 = vsel %vm3405, 0.0, %v3399
    %v3407 = vadd.f32 %v3108, %v3406
    %s3408 = sld [smem:[#allocation3 + $0x2c]]
    %s3409 = sld [smem:[#allocation3 + $0x2d]]
    %s3410 = sld [smem:[#allocation3 + $0x2e]]
    %s3411 = sld [smem:[#allocation3 + $0x2f]]
    %v3412 = vstv %s3408
    %vm3413 = vcmp.le.s32.totalorder %v3412, 0
    %vm3414 = vcmp.le.s32.totalorder %v3412, 1
    %vm3415 = vcmp.le.s32.totalorder %v3412, 2
    %vm3416 = vcmp.le.s32.totalorder %v3412, 3
    %vm3417 = vcmp.le.s32.totalorder %v3412, 4
    %vm3418 = vcmp.le.s32.totalorder %v3412, 5
    %vm3419 = vcmp.le.s32.totalorder %v3412, 6
    %vm3420 = vcmp.le.s32.totalorder %v3412, 7
    %vm3421 = vcmp.le.s32.totalorder %v3412, 8
    %vm3422 = vcmp.le.s32.totalorder %v3412, 9
    %vm3423 = vcmp.le.s32.totalorder %v3412, 10
    %vm3424 = vcmp.le.s32.totalorder %v3412, 11
    %vm3425 = vcmp.le.s32.totalorder %v3412, 12
    %vm3426 = vcmp.le.s32.totalorder %v3412, 13
    %vm3427 = vcmp.le.s32.totalorder %v3412, 14
    %vm3428 = vcmp.le.s32.totalorder %v3412, 15
    %v3429 = vstv %s3409
    %vm3430 = vcmp.gt.s32.totalorder %v3429, 0
    %vm3431 = vcmp.gt.s32.totalorder %v3429, 1
    %vm3432 = vcmp.gt.s32.totalorder %v3429, 2
    %vm3433 = vcmp.gt.s32.totalorder %v3429, 3
    %vm3434 = vcmp.gt.s32.totalorder %v3429, 4
    %vm3435 = vcmp.gt.s32.totalorder %v3429, 5
    %vm3436 = vcmp.gt.s32.totalorder %v3429, 6
    %vm3437 = vcmp.gt.s32.totalorder %v3429, 7
    %vm3438 = vcmp.gt.s32.totalorder %v3429, 8
    %vm3439 = vcmp.gt.s32.totalorder %v3429, 9
    %vm3440 = vcmp.gt.s32.totalorder %v3429, 10
    %vm3441 = vcmp.gt.s32.totalorder %v3429, 11
    %vm3442 = vcmp.gt.s32.totalorder %v3429, 12
    %vm3443 = vcmp.gt.s32.totalorder %v3429, 13
    %vm3444 = vcmp.gt.s32.totalorder %v3429, 14
    %vm3445 = vcmp.gt.s32.totalorder %v3429, 15
    %vm3446 = vmand %vm3413, %vm3430
    %vm3447 = vmand %vm3414, %vm3431
    %vm3448 = vmand %vm3415, %vm3432
    %vm3449 = vmand %vm3416, %vm3433
    %vm3450 = vmand %vm3417, %vm3434
    %vm3451 = vmand %vm3418, %vm3435
    %vm3452 = vmand %vm3419, %vm3436
    %vm3453 = vmand %vm3420, %vm3437
    %vm3454 = vmand %vm3421, %vm3438
    %vm3455 = vmand %vm3422, %vm3439
    %vm3456 = vmand %vm3423, %vm3440
    %vm3457 = vmand %vm3424, %vm3441
    %vm3458 = vmand %vm3425, %vm3442
    %vm3459 = vmand %vm3426, %vm3443
    %vm3460 = vmand %vm3427, %vm3444
    %vm3461 = vmand %vm3428, %vm3445
    %v3462 = vstv %s3410
    %vm3463 = vcmp.ge.s32.totalorder %v111, %v3462
    %vm3464 = vcmp.ge.s32.totalorder %v112, %v3462
    %vm3465 = vmand %vm3446, %vm3463
    %vm3466 = vmand %vm3446, %vm3464
    %vm3467 = vmand %vm3447, %vm3463
    %vm3468 = vmand %vm3447, %vm3464
    %vm3469 = vmand %vm3448, %vm3463
    %vm3470 = vmand %vm3448, %vm3464
    %vm3471 = vmand %vm3449, %vm3463
    %vm3472 = vmand %vm3449, %vm3464
    %vm3473 = vmand %vm3450, %vm3463
    %vm3474 = vmand %vm3450, %vm3464
    %vm3475 = vmand %vm3451, %vm3463
    %vm3476 = vmand %vm3451, %vm3464
    %vm3477 = vmand %vm3452, %vm3463
    %vm3478 = vmand %vm3452, %vm3464
    %vm3479 = vmand %vm3453, %vm3463
    %vm3480 = vmand %vm3453, %vm3464
    %vm3481 = vmand %vm3454, %vm3463
    %vm3482 = vmand %vm3454, %vm3464
    %vm3483 = vmand %vm3455, %vm3463
    %vm3484 = vmand %vm3455, %vm3464
    %vm3485 = vmand %vm3456, %vm3463
    %vm3486 = vmand %vm3456, %vm3464
    %vm3487 = vmand %vm3457, %vm3463
    %vm3488 = vmand %vm3457, %vm3464
    %vm3489 = vmand %vm3458, %vm3463
    %vm3490 = vmand %vm3458, %vm3464
    %vm3491 = vmand %vm3459, %vm3463
    %vm3492 = vmand %vm3459, %vm3464
    %vm3493 = vmand %vm3460, %vm3463
    %vm3494 = vmand %vm3460, %vm3464
    %vm3495 = vmand %vm3461, %vm3463
    %vm3496 = vmand %vm3461, %vm3464
    %v3497 = vstv %s3411
    %vm3498 = vcmp.lt.s32.totalorder %v111, %v3497
    %vm3499 = vcmp.lt.s32.totalorder %v112, %v3497
    %vm3500 = vmand %vm3465, %vm3498
    %vm3501 = vmand %vm3466, %vm3499
    %vm3502 = vmand %vm3467, %vm3498
    %vm3503 = vmand %vm3468, %vm3499
    %vm3504 = vmand %vm3469, %vm3498
    %vm3505 = vmand %vm3470, %vm3499
    %vm3506 = vmand %vm3471, %vm3498
    %vm3507 = vmand %vm3472, %vm3499
    %vm3508 = vmand %vm3473, %vm3498
    %vm3509 = vmand %vm3474, %vm3499
    %vm3510 = vmand %vm3475, %vm3498
    %vm3511 = vmand %vm3476, %vm3499
    %vm3512 = vmand %vm3477, %vm3498
    %vm3513 = vmand %vm3478, %vm3499
    %vm3514 = vmand %vm3479, %vm3498
    %vm3515 = vmand %vm3480, %vm3499
    %vm3516 = vmand %vm3481, %vm3498
    %vm3517 = vmand %vm3482, %vm3499
    %vm3518 = vmand %vm3483, %vm3498
    %vm3519 = vmand %vm3484, %vm3499
    %vm3520 = vmand %vm3485, %vm3498
    %vm3521 = vmand %vm3486, %vm3499
    %vm3522 = vmand %vm3487, %vm3498
    %vm3523 = vmand %vm3488, %vm3499
    %vm3524 = vmand %vm3489, %vm3498
    %vm3525 = vmand %vm3490, %vm3499
    %vm3526 = vmand %vm3491, %vm3498
    %vm3527 = vmand %vm3492, %vm3499
    %vm3528 = vmand %vm3493, %vm3498
    %vm3529 = vmand %vm3494, %vm3499
    %vm3530 = vmand %vm3495, %vm3498
    %vm3531 = vmand %vm3496, %vm3499
    %v3532 = vsel %vm3500, 1, 0
    %v3533 = vsel %vm3501, 1, 0
    %v3534 = vsel %vm3502, 1, 0
    %v3535 = vsel %vm3503, 1, 0
    %v3536 = vsel %vm3504, 1, 0
    %v3537 = vsel %vm3505, 1, 0
    %v3538 = vsel %vm3506, 1, 0
    %v3539 = vsel %vm3507, 1, 0
    %v3540 = vsel %vm3508, 1, 0
    %v3541 = vsel %vm3509, 1, 0
    %v3542 = vsel %vm3510, 1, 0
    %v3543 = vsel %vm3511, 1, 0
    %v3544 = vsel %vm3512, 1, 0
    %v3545 = vsel %vm3513, 1, 0
    %v3546 = vsel %vm3514, 1, 0
    %v3547 = vsel %vm3515, 1, 0
    %v3548 = vsel %vm3516, 1, 0
    %v3549 = vsel %vm3517, 1, 0
    %v3550 = vsel %vm3518, 1, 0
    %v3551 = vsel %vm3519, 1, 0
    %v3552 = vsel %vm3520, 1, 0
    %v3553 = vsel %vm3521, 1, 0
    %v3554 = vsel %vm3522, 1, 0
    %v3555 = vsel %vm3523, 1, 0
    %v3556 = vsel %vm3524, 1, 0
    %v3557 = vsel %vm3525, 1, 0
    %v3558 = vsel %vm3526, 1, 0
    %v3559 = vsel %vm3527, 1, 0
    %v3560 = vsel %vm3528, 1, 0
    %v3561 = vsel %vm3529, 1, 0
    %v3562 = vsel %vm3530, 1, 0
    %v3563 = vsel %vm3531, 1, 0
    %vm3564 = vcmp.eq.s32.totalorder %v3532, 1
    %vm3565 = vcmp.eq.s32.totalorder %v3533, 1
    %vm3566 = vcmp.eq.s32.totalorder %v3534, 1
    %vm3567 = vcmp.eq.s32.totalorder %v3535, 1
    %vm3568 = vcmp.eq.s32.totalorder %v3536, 1
    %vm3569 = vcmp.eq.s32.totalorder %v3537, 1
    %vm3570 = vcmp.eq.s32.totalorder %v3538, 1
    %vm3571 = vcmp.eq.s32.totalorder %v3539, 1
    %vm3572 = vcmp.eq.s32.totalorder %v3540, 1
    %vm3573 = vcmp.eq.s32.totalorder %v3541, 1
    %vm3574 = vcmp.eq.s32.totalorder %v3542, 1
    %vm3575 = vcmp.eq.s32.totalorder %v3543, 1
    %vm3576 = vcmp.eq.s32.totalorder %v3544, 1
    %vm3577 = vcmp.eq.s32.totalorder %v3545, 1
    %vm3578 = vcmp.eq.s32.totalorder %v3546, 1
    %vm3579 = vcmp.eq.s32.totalorder %v3547, 1
    %vm3580 = vcmp.eq.s32.totalorder %v3548, 1
    %vm3581 = vcmp.eq.s32.totalorder %v3549, 1
    %vm3582 = vcmp.eq.s32.totalorder %v3550, 1
    %vm3583 = vcmp.eq.s32.totalorder %v3551, 1
    %vm3584 = vcmp.eq.s32.totalorder %v3552, 1
    %vm3585 = vcmp.eq.s32.totalorder %v3553, 1
    %vm3586 = vcmp.eq.s32.totalorder %v3554, 1
    %vm3587 = vcmp.eq.s32.totalorder %v3555, 1
    %vm3588 = vcmp.eq.s32.totalorder %v3556, 1
    %vm3589 = vcmp.eq.s32.totalorder %v3557, 1
    %vm3590 = vcmp.eq.s32.totalorder %v3558, 1
    %vm3591 = vcmp.eq.s32.totalorder %v3559, 1
    %vm3592 = vcmp.eq.s32.totalorder %v3560, 1
    %vm3593 = vcmp.eq.s32.totalorder %v3561, 1
    %vm3594 = vcmp.eq.s32.totalorder %v3562, 1
    %vm3595 = vcmp.eq.s32.totalorder %v3563, 1
    %v3596 = vsel %vm3564, %v45, -3e+38
    %v3597 = vsel %vm3565, %v46, -3e+38
    %v3598 = vsel %vm3566, %v47, -3e+38
    %v3599 = vsel %vm3567, %v48, -3e+38
    %v3600 = vsel %vm3568, %v49, -3e+38
    %v3601 = vsel %vm3569, %v50, -3e+38
    %v3602 = vsel %vm3570, %v51, -3e+38
    %v3603 = vsel %vm3571, %v52, -3e+38
    %v3604 = vsel %vm3572, %v53, -3e+38
    %v3605 = vsel %vm3573, %v54, -3e+38
    %v3606 = vsel %vm3574, %v55, -3e+38
    %v3607 = vsel %vm3575, %v56, -3e+38
    %v3608 = vsel %vm3576, %v57, -3e+38
    %v3609 = vsel %vm3577, %v58, -3e+38
    %v3610 = vsel %vm3578, %v59, -3e+38
    %v3611 = vsel %vm3579, %v60, -3e+38
    %v3612 = vsel %vm3580, %v61, -3e+38
    %v3613 = vsel %vm3581, %v62, -3e+38
    %v3614 = vsel %vm3582, %v63, -3e+38
    %v3615 = vsel %vm3583, %v64, -3e+38
    %v3616 = vsel %vm3584, %v65, -3e+38
    %v3617 = vsel %vm3585, %v66, -3e+38
    %v3618 = vsel %vm3586, %v67, -3e+38
    %v3619 = vsel %vm3587, %v68, -3e+38
    %v3620 = vsel %vm3588, %v69, -3e+38
    %v3621 = vsel %vm3589, %v70, -3e+38
    %v3622 = vsel %vm3590, %v71, -3e+38
    %v3623 = vsel %vm3591, %v72, -3e+38
    %v3624 = vsel %vm3592, %v73, -3e+38
    %v3625 = vsel %vm3593, %v74, -3e+38
    %v3626 = vsel %vm3594, %v75, -3e+38
    %v3627 = vsel %vm3595, %v76, -3e+38
    %v3628 = vsel %vm333, %v3596, -inf
    %v3629 = vsel %vm333, %v3598, -inf
    %v3630 = vsel %vm333, %v3600, -inf
    %v3631 = vmax.f32 %v3628, %v3630
    %v3632 = vsel %vm333, %v3602, -inf
    %v3633 = vmax.f32 %v3629, %v3632
    %v3634 = vsel %vm333, %v3604, -inf
    %v3635 = vmax.f32 %v3631, %v3634
    %v3636 = vsel %vm333, %v3606, -inf
    %v3637 = vmax.f32 %v3633, %v3636
    %v3638 = vsel %vm333, %v3608, -inf
    %v3639 = vmax.f32 %v3635, %v3638
    %v3640 = vsel %vm333, %v3610, -inf
    %v3641 = vmax.f32 %v3637, %v3640
    %v3642 = vsel %vm333, %v3612, -inf
    %v3643 = vmax.f32 %v3639, %v3642
    %v3644 = vsel %vm333, %v3614, -inf
    %v3645 = vmax.f32 %v3641, %v3644
    %v3646 = vsel %vm333, %v3616, -inf
    %v3647 = vmax.f32 %v3643, %v3646
    %v3648 = vsel %vm333, %v3618, -inf
    %v3649 = vmax.f32 %v3645, %v3648
    %v3650 = vsel %vm333, %v3620, -inf
    %v3651 = vmax.f32 %v3647, %v3650
    %v3652 = vsel %vm333, %v3622, -inf
    %v3653 = vmax.f32 %v3649, %v3652
    %v3654 = vsel %vm333, %v3624, -inf
    %v3655 = vmax.f32 %v3651, %v3654
    %v3656 = vsel %vm333, %v3626, -inf
    %v3657 = vmax.f32 %v3653, %v3656
    %v3658 = vmax.f32 %v3655, %v3657
    %v3659 = vsel %vm333, %v3597, -inf
    %v3660 = vsel %vm333, %v3599, -inf
    %v3661 = vsel %vm333, %v3601, -inf
    %v3662 = vmax.f32 %v3659, %v3661
    %v3663 = vsel %vm333, %v3603, -inf
    %v3664 = vmax.f32 %v3660, %v3663
    %v3665 = vsel %vm333, %v3605, -inf
    %v3666 = vmax.f32 %v3662, %v3665
    %v3667 = vsel %vm333, %v3607, -inf
    %v3668 = vmax.f32 %v3664, %v3667
    %v3669 = vsel %vm333, %v3609, -inf
    %v3670 = vmax.f32 %v3666, %v3669
    %v3671 = vsel %vm333, %v3611, -inf
    %v3672 = vmax.f32 %v3668, %v3671
    %v3673 = vsel %vm333, %v3613, -inf
    %v3674 = vmax.f32 %v3670, %v3673
    %v3675 = vsel %vm333, %v3615, -inf
    %v3676 = vmax.f32 %v3672, %v3675
    %v3677 = vsel %vm333, %v3617, -inf
    %v3678 = vmax.f32 %v3674, %v3677
    %v3679 = vsel %vm333, %v3619, -inf
    %v3680 = vmax.f32 %v3676, %v3679
    %v3681 = vsel %vm333, %v3621, -inf
    %v3682 = vmax.f32 %v3678, %v3681
    %v3683 = vsel %vm333, %v3623, -inf
    %v3684 = vmax.f32 %v3680, %v3683
    %v3685 = vsel %vm333, %v3625, -inf
    %v3686 = vmax.f32 %v3682, %v3685
    %v3687 = vsel %vm333, %v3627, -inf
    %v3688 = vmax.f32 %v3684, %v3687
    %v3689 = vmax.f32 %v3686, %v3688
    %v3690 = vsel %vm333, %v3658, -inf
    %v3691 = vsel %vm333, %v3689, -inf
    %v3692 = vmax.f32 %v3690, %v3691
    %v3693 = vrot.slane %v3692, 4
    %v3694 = vmax.f32 %v3692, %v3693
    %v3695 = vrot.slane %v3694, 2
    %v3696 = vmax.f32 %v3694, %v3695
    %v3697 = vrot.slane %v3696, 1
    %v3698 = vmax.f32 %v3696, %v3697
    %p3699 = scmp.le.s32.totalorder %s3409, %s3408
    %p3700 = scmp.le.s32.totalorder %s3411, %s3410
    %p3701 = por %p3699, %p3700
    %s3702 = scalar_select %p3701, 1, 0
    %v3703 = vstv %s3702
    %vm3704 = vcmp.eq.s32.totalorder %v3703, 1
    %v3705 = vsel %vm3704, 0.0, %v3698
    %v3706 = vadd.f32 %v3407, %v3705
    %v3707 = vmul.f32 %v3706, 0.25
    %3708 = vst.msk [vmem:[#allocation2 + $0x2] sm:$0x1] %vm1311, %v3707
    %s3709 = sld [smem:[#allocation3 + $0x30]]
    %s3710 = sld [smem:[#allocation3 + $0x31]]
    %s3711 = sld [smem:[#allocation3 + $0x32]]
    %s3712 = sld [smem:[#allocation3 + $0x33]]
    %v3713 = vstv %s3709
    %vm3714 = vcmp.le.s32.totalorder %v3713, 0
    %vm3715 = vcmp.le.s32.totalorder %v3713, 1
    %vm3716 = vcmp.le.s32.totalorder %v3713, 2
    %vm3717 = vcmp.le.s32.totalorder %v3713, 3
    %vm3718 = vcmp.le.s32.totalorder %v3713, 4
    %vm3719 = vcmp.le.s32.totalorder %v3713, 5
    %vm3720 = vcmp.le.s32.totalorder %v3713, 6
    %vm3721 = vcmp.le.s32.totalorder %v3713, 7
    %vm3722 = vcmp.le.s32.totalorder %v3713, 8
    %vm3723 = vcmp.le.s32.totalorder %v3713, 9
    %vm3724 = vcmp.le.s32.totalorder %v3713, 10
    %vm3725 = vcmp.le.s32.totalorder %v3713, 11
    %vm3726 = vcmp.le.s32.totalorder %v3713, 12
    %vm3727 = vcmp.le.s32.totalorder %v3713, 13
    %vm3728 = vcmp.le.s32.totalorder %v3713, 14
    %vm3729 = vcmp.le.s32.totalorder %v3713, 15
    %v3730 = vstv %s3710
    %vm3731 = vcmp.gt.s32.totalorder %v3730, 0
    %vm3732 = vcmp.gt.s32.totalorder %v3730, 1
    %vm3733 = vcmp.gt.s32.totalorder %v3730, 2
    %vm3734 = vcmp.gt.s32.totalorder %v3730, 3
    %vm3735 = vcmp.gt.s32.totalorder %v3730, 4
    %vm3736 = vcmp.gt.s32.totalorder %v3730, 5
    %vm3737 = vcmp.gt.s32.totalorder %v3730, 6
    %vm3738 = vcmp.gt.s32.totalorder %v3730, 7
    %vm3739 = vcmp.gt.s32.totalorder %v3730, 8
    %vm3740 = vcmp.gt.s32.totalorder %v3730, 9
    %vm3741 = vcmp.gt.s32.totalorder %v3730, 10
    %vm3742 = vcmp.gt.s32.totalorder %v3730, 11
    %vm3743 = vcmp.gt.s32.totalorder %v3730, 12
    %vm3744 = vcmp.gt.s32.totalorder %v3730, 13
    %vm3745 = vcmp.gt.s32.totalorder %v3730, 14
    %vm3746 = vcmp.gt.s32.totalorder %v3730, 15
    %vm3747 = vmand %vm3714, %vm3731
    %vm3748 = vmand %vm3715, %vm3732
    %vm3749 = vmand %vm3716, %vm3733
    %vm3750 = vmand %vm3717, %vm3734
    %vm3751 = vmand %vm3718, %vm3735
    %vm3752 = vmand %vm3719, %vm3736
    %vm3753 = vmand %vm3720, %vm3737
    %vm3754 = vmand %vm3721, %vm3738
    %vm3755 = vmand %vm3722, %vm3739
    %vm3756 = vmand %vm3723, %vm3740
    %vm3757 = vmand %vm3724, %vm3741
    %vm3758 = vmand %vm3725, %vm3742
    %vm3759 = vmand %vm3726, %vm3743
    %vm3760 = vmand %vm3727, %vm3744
    %vm3761 = vmand %vm3728, %vm3745
    %vm3762 = vmand %vm3729, %vm3746
    %v3763 = vstv %s3711
    %vm3764 = vcmp.ge.s32.totalorder %v111, %v3763
    %vm3765 = vcmp.ge.s32.totalorder %v112, %v3763
    %vm3766 = vmand %vm3747, %vm3764
    %vm3767 = vmand %vm3747, %vm3765
    %vm3768 = vmand %vm3748, %vm3764
    %vm3769 = vmand %vm3748, %vm3765
    %vm3770 = vmand %vm3749, %vm3764
    %vm3771 = vmand %vm3749, %vm3765
    %vm3772 = vmand %vm3750, %vm3764
    %vm3773 = vmand %vm3750, %vm3765
    %vm3774 = vmand %vm3751, %vm3764
    %vm3775 = vmand %vm3751, %vm3765
    %vm3776 = vmand %vm3752, %vm3764
    %vm3777 = vmand %vm3752, %vm3765
    %vm3778 = vmand %vm3753, %vm3764
    %vm3779 = vmand %vm3753, %vm3765
    %vm3780 = vmand %vm3754, %vm3764
    %vm3781 = vmand %vm3754, %vm3765
    %vm3782 = vmand %vm3755, %vm3764
    %vm3783 = vmand %vm3755, %vm3765
    %vm3784 = vmand %vm3756, %vm3764
    %vm3785 = vmand %vm3756, %vm3765
    %vm3786 = vmand %vm3757, %vm3764
    %vm3787 = vmand %vm3757, %vm3765
    %vm3788 = vmand %vm3758, %vm3764
    %vm3789 = vmand %vm3758, %vm3765
    %vm3790 = vmand %vm3759, %vm3764
    %vm3791 = vmand %vm3759, %vm3765
    %vm3792 = vmand %vm3760, %vm3764
    %vm3793 = vmand %vm3760, %vm3765
    %vm3794 = vmand %vm3761, %vm3764
    %vm3795 = vmand %vm3761, %vm3765
    %vm3796 = vmand %vm3762, %vm3764
    %vm3797 = vmand %vm3762, %vm3765
    %v3798 = vstv %s3712
    %vm3799 = vcmp.lt.s32.totalorder %v111, %v3798
    %vm3800 = vcmp.lt.s32.totalorder %v112, %v3798
    %vm3801 = vmand %vm3766, %vm3799
    %vm3802 = vmand %vm3767, %vm3800
    %vm3803 = vmand %vm3768, %vm3799
    %vm3804 = vmand %vm3769, %vm3800
    %vm3805 = vmand %vm3770, %vm3799
    %vm3806 = vmand %vm3771, %vm3800
    %vm3807 = vmand %vm3772, %vm3799
    %vm3808 = vmand %vm3773, %vm3800
    %vm3809 = vmand %vm3774, %vm3799
    %vm3810 = vmand %vm3775, %vm3800
    %vm3811 = vmand %vm3776, %vm3799
    %vm3812 = vmand %vm3777, %vm3800
    %vm3813 = vmand %vm3778, %vm3799
    %vm3814 = vmand %vm3779, %vm3800
    %vm3815 = vmand %vm3780, %vm3799
    %vm3816 = vmand %vm3781, %vm3800
    %vm3817 = vmand %vm3782, %vm3799
    %vm3818 = vmand %vm3783, %vm3800
    %vm3819 = vmand %vm3784, %vm3799
    %vm3820 = vmand %vm3785, %vm3800
    %vm3821 = vmand %vm3786, %vm3799
    %vm3822 = vmand %vm3787, %vm3800
    %vm3823 = vmand %vm3788, %vm3799
    %vm3824 = vmand %vm3789, %vm3800
    %vm3825 = vmand %vm3790, %vm3799
    %vm3826 = vmand %vm3791, %vm3800
    %vm3827 = vmand %vm3792, %vm3799
    %vm3828 = vmand %vm3793, %vm3800
    %vm3829 = vmand %vm3794, %vm3799
    %vm3830 = vmand %vm3795, %vm3800
    %vm3831 = vmand %vm3796, %vm3799
    %vm3832 = vmand %vm3797, %vm3800
    %v3833 = vsel %vm3801, 1, 0
    %v3834 = vsel %vm3802, 1, 0
    %v3835 = vsel %vm3803, 1, 0
    %v3836 = vsel %vm3804, 1, 0
    %v3837 = vsel %vm3805, 1, 0
    %v3838 = vsel %vm3806, 1, 0
    %v3839 = vsel %vm3807, 1, 0
    %v3840 = vsel %vm3808, 1, 0
    %v3841 = vsel %vm3809, 1, 0
    %v3842 = vsel %vm3810, 1, 0
    %v3843 = vsel %vm3811, 1, 0
    %v3844 = vsel %vm3812, 1, 0
    %v3845 = vsel %vm3813, 1, 0
    %v3846 = vsel %vm3814, 1, 0
    %v3847 = vsel %vm3815, 1, 0
    %v3848 = vsel %vm3816, 1, 0
    %v3849 = vsel %vm3817, 1, 0
    %v3850 = vsel %vm3818, 1, 0
    %v3851 = vsel %vm3819, 1, 0
    %v3852 = vsel %vm3820, 1, 0
    %v3853 = vsel %vm3821, 1, 0
    %v3854 = vsel %vm3822, 1, 0
    %v3855 = vsel %vm3823, 1, 0
    %v3856 = vsel %vm3824, 1, 0
    %v3857 = vsel %vm3825, 1, 0
    %v3858 = vsel %vm3826, 1, 0
    %v3859 = vsel %vm3827, 1, 0
    %v3860 = vsel %vm3828, 1, 0
    %v3861 = vsel %vm3829, 1, 0
    %v3862 = vsel %vm3830, 1, 0
    %v3863 = vsel %vm3831, 1, 0
    %v3864 = vsel %vm3832, 1, 0
    %vm3865 = vcmp.eq.s32.totalorder %v3833, 1
    %vm3866 = vcmp.eq.s32.totalorder %v3834, 1
    %vm3867 = vcmp.eq.s32.totalorder %v3835, 1
    %vm3868 = vcmp.eq.s32.totalorder %v3836, 1
    %vm3869 = vcmp.eq.s32.totalorder %v3837, 1
    %vm3870 = vcmp.eq.s32.totalorder %v3838, 1
    %vm3871 = vcmp.eq.s32.totalorder %v3839, 1
    %vm3872 = vcmp.eq.s32.totalorder %v3840, 1
    %vm3873 = vcmp.eq.s32.totalorder %v3841, 1
    %vm3874 = vcmp.eq.s32.totalorder %v3842, 1
    %vm3875 = vcmp.eq.s32.totalorder %v3843, 1
    %vm3876 = vcmp.eq.s32.totalorder %v3844, 1
    %vm3877 = vcmp.eq.s32.totalorder %v3845, 1
    %vm3878 = vcmp.eq.s32.totalorder %v3846, 1
    %vm3879 = vcmp.eq.s32.totalorder %v3847, 1
    %vm3880 = vcmp.eq.s32.totalorder %v3848, 1
    %vm3881 = vcmp.eq.s32.totalorder %v3849, 1
    %vm3882 = vcmp.eq.s32.totalorder %v3850, 1
    %vm3883 = vcmp.eq.s32.totalorder %v3851, 1
    %vm3884 = vcmp.eq.s32.totalorder %v3852, 1
    %vm3885 = vcmp.eq.s32.totalorder %v3853, 1
    %vm3886 = vcmp.eq.s32.totalorder %v3854, 1
    %vm3887 = vcmp.eq.s32.totalorder %v3855, 1
    %vm3888 = vcmp.eq.s32.totalorder %v3856, 1
    %vm3889 = vcmp.eq.s32.totalorder %v3857, 1
    %vm3890 = vcmp.eq.s32.totalorder %v3858, 1
    %vm3891 = vcmp.eq.s32.totalorder %v3859, 1
    %vm3892 = vcmp.eq.s32.totalorder %v3860, 1
    %vm3893 = vcmp.eq.s32.totalorder %v3861, 1
    %vm3894 = vcmp.eq.s32.totalorder %v3862, 1
    %vm3895 = vcmp.eq.s32.totalorder %v3863, 1
    %vm3896 = vcmp.eq.s32.totalorder %v3864, 1
    %v3897 = vsel %vm3865, %v45, -3e+38
    %v3898 = vsel %vm3866, %v46, -3e+38
    %v3899 = vsel %vm3867, %v47, -3e+38
    %v3900 = vsel %vm3868, %v48, -3e+38
    %v3901 = vsel %vm3869, %v49, -3e+38
    %v3902 = vsel %vm3870, %v50, -3e+38
    %v3903 = vsel %vm3871, %v51, -3e+38
    %v3904 = vsel %vm3872, %v52, -3e+38
    %v3905 = vsel %vm3873, %v53, -3e+38
    %v3906 = vsel %vm3874, %v54, -3e+38
    %v3907 = vsel %vm3875, %v55, -3e+38
    %v3908 = vsel %vm3876, %v56, -3e+38
    %v3909 = vsel %vm3877, %v57, -3e+38
    %v3910 = vsel %vm3878, %v58, -3e+38
    %v3911 = vsel %vm3879, %v59, -3e+38
    %v3912 = vsel %vm3880, %v60, -3e+38
    %v3913 = vsel %vm3881, %v61, -3e+38
    %v3914 = vsel %vm3882, %v62, -3e+38
    %v3915 = vsel %vm3883, %v63, -3e+38
    %v3916 = vsel %vm3884, %v64, -3e+38
    %v3917 = vsel %vm3885, %v65, -3e+38
    %v3918 = vsel %vm3886, %v66, -3e+38
    %v3919 = vsel %vm3887, %v67, -3e+38
    %v3920 = vsel %vm3888, %v68, -3e+38
    %v3921 = vsel %vm3889, %v69, -3e+38
    %v3922 = vsel %vm3890, %v70, -3e+38
    %v3923 = vsel %vm3891, %v71, -3e+38
    %v3924 = vsel %vm3892, %v72, -3e+38
    %v3925 = vsel %vm3893, %v73, -3e+38
    %v3926 = vsel %vm3894, %v74, -3e+38
    %v3927 = vsel %vm3895, %v75, -3e+38
    %v3928 = vsel %vm3896, %v76, -3e+38
    %v3929 = vsel %vm333, %v3897, -inf
    %v3930 = vsel %vm333, %v3899, -inf
    %v3931 = vsel %vm333, %v3901, -inf
    %v3932 = vmax.f32 %v3929, %v3931
    %v3933 = vsel %vm333, %v3903, -inf
    %v3934 = vmax.f32 %v3930, %v3933
    %v3935 = vsel %vm333, %v3905, -inf
    %v3936 = vmax.f32 %v3932, %v3935
    %v3937 = vsel %vm333, %v3907, -inf
    %v3938 = vmax.f32 %v3934, %v3937
    %v3939 = vsel %vm333, %v3909, -inf
    %v3940 = vmax.f32 %v3936, %v3939
    %v3941 = vsel %vm333, %v3911, -inf
    %v3942 = vmax.f32 %v3938, %v3941
    %v3943 = vsel %vm333, %v3913, -inf
    %v3944 = vmax.f32 %v3940, %v3943
    %v3945 = vsel %vm333, %v3915, -inf
    %v3946 = vmax.f32 %v3942, %v3945
    %v3947 = vsel %vm333, %v3917, -inf
    %v3948 = vmax.f32 %v3944, %v3947
    %v3949 = vsel %vm333, %v3919, -inf
    %v3950 = vmax.f32 %v3946, %v3949
    %v3951 = vsel %vm333, %v3921, -inf
    %v3952 = vmax.f32 %v3948, %v3951
    %v3953 = vsel %vm333, %v3923, -inf
    %v3954 = vmax.f32 %v3950, %v3953
    %v3955 = vsel %vm333, %v3925, -inf
    %v3956 = vmax.f32 %v3952, %v3955
    %v3957 = vsel %vm333, %v3927, -inf
    %v3958 = vmax.f32 %v3954, %v3957
    %v3959 = vmax.f32 %v3956, %v3958
    %v3960 = vsel %vm333, %v3898, -inf
    %v3961 = vsel %vm333, %v3900, -inf
    %v3962 = vsel %vm333, %v3902, -inf
    %v3963 = vmax.f32 %v3960, %v3962
    %v3964 = vsel %vm333, %v3904, -inf
    %v3965 = vmax.f32 %v3961, %v3964
    %v3966 = vsel %vm333, %v3906, -inf
    %v3967 = vmax.f32 %v3963, %v3966
    %v3968 = vsel %vm333, %v3908, -inf
    %v3969 = vmax.f32 %v3965, %v3968
    %v3970 = vsel %vm333, %v3910, -inf
    %v3971 = vmax.f32 %v3967, %v3970
    %v3972 = vsel %vm333, %v3912, -inf
    %v3973 = vmax.f32 %v3969, %v3972
    %v3974 = vsel %vm333, %v3914, -inf
    %v3975 = vmax.f32 %v3971, %v3974
    %v3976 = vsel %vm333, %v3916, -inf
    %v3977 = vmax.f32 %v3973, %v3976
    %v3978 = vsel %vm333, %v3918, -inf
    %v3979 = vmax.f32 %v3975, %v3978
    %v3980 = vsel %vm333, %v3920, -inf
    %v3981 = vmax.f32 %v3977, %v3980
    %v3982 = vsel %vm333, %v3922, -inf
    %v3983 = vmax.f32 %v3979, %v3982
    %v3984 = vsel %vm333, %v3924, -inf
    %v3985 = vmax.f32 %v3981, %v3984
    %v3986 = vsel %vm333, %v3926, -inf
    %v3987 = vmax.f32 %v3983, %v3986
    %v3988 = vsel %vm333, %v3928, -inf
    %v3989 = vmax.f32 %v3985, %v3988
    %v3990 = vmax.f32 %v3987, %v3989
    %v3991 = vsel %vm333, %v3959, -inf
    %v3992 = vsel %vm333, %v3990, -inf
    %v3993 = vmax.f32 %v3991, %v3992
    %v3994 = vrot.slane %v3993, 4
    %v3995 = vmax.f32 %v3993, %v3994
    %v3996 = vrot.slane %v3995, 2
    %v3997 = vmax.f32 %v3995, %v3996
    %v3998 = vrot.slane %v3997, 1
    %v3999 = vmax.f32 %v3997, %v3998
    %p4000 = scmp.le.s32.totalorder %s3710, %s3709
    %p4001 = scmp.le.s32.totalorder %s3712, %s3711
    %p4002 = por %p4000, %p4001
    %s4003 = scalar_select %p4002, 1, 0
    %v4004 = vstv %s4003
    %vm4005 = vcmp.eq.s32.totalorder %v4004, 1
    %v4006 = vsel %vm4005, 0.0, %v3999
    %v4007 = vadd.f32 %v4006, 0.0
    %s4008 = sld [smem:[#allocation3 + $0x34]]
    %s4009 = sld [smem:[#allocation3 + $0x35]]
    %s4010 = sld [smem:[#allocation3 + $0x36]]
    %s4011 = sld [smem:[#allocation3 + $0x37]]
    %v4012 = vstv %s4008
    %vm4013 = vcmp.le.s32.totalorder %v4012, 0
    %vm4014 = vcmp.le.s32.totalorder %v4012, 1
    %vm4015 = vcmp.le.s32.totalorder %v4012, 2
    %vm4016 = vcmp.le.s32.totalorder %v4012, 3
    %vm4017 = vcmp.le.s32.totalorder %v4012, 4
    %vm4018 = vcmp.le.s32.totalorder %v4012, 5
    %vm4019 = vcmp.le.s32.totalorder %v4012, 6
    %vm4020 = vcmp.le.s32.totalorder %v4012, 7
    %vm4021 = vcmp.le.s32.totalorder %v4012, 8
    %vm4022 = vcmp.le.s32.totalorder %v4012, 9
    %vm4023 = vcmp.le.s32.totalorder %v4012, 10
    %vm4024 = vcmp.le.s32.totalorder %v4012, 11
    %vm4025 = vcmp.le.s32.totalorder %v4012, 12
    %vm4026 = vcmp.le.s32.totalorder %v4012, 13
    %vm4027 = vcmp.le.s32.totalorder %v4012, 14
    %vm4028 = vcmp.le.s32.totalorder %v4012, 15
    %v4029 = vstv %s4009
    %vm4030 = vcmp.gt.s32.totalorder %v4029, 0
    %vm4031 = vcmp.gt.s32.totalorder %v4029, 1
    %vm4032 = vcmp.gt.s32.totalorder %v4029, 2
    %vm4033 = vcmp.gt.s32.totalorder %v4029, 3
    %vm4034 = vcmp.gt.s32.totalorder %v4029, 4
    %vm4035 = vcmp.gt.s32.totalorder %v4029, 5
    %vm4036 = vcmp.gt.s32.totalorder %v4029, 6
    %vm4037 = vcmp.gt.s32.totalorder %v4029, 7
    %vm4038 = vcmp.gt.s32.totalorder %v4029, 8
    %vm4039 = vcmp.gt.s32.totalorder %v4029, 9
    %vm4040 = vcmp.gt.s32.totalorder %v4029, 10
    %vm4041 = vcmp.gt.s32.totalorder %v4029, 11
    %vm4042 = vcmp.gt.s32.totalorder %v4029, 12
    %vm4043 = vcmp.gt.s32.totalorder %v4029, 13
    %vm4044 = vcmp.gt.s32.totalorder %v4029, 14
    %vm4045 = vcmp.gt.s32.totalorder %v4029, 15
    %vm4046 = vmand %vm4013, %vm4030
    %vm4047 = vmand %vm4014, %vm4031
    %vm4048 = vmand %vm4015, %vm4032
    %vm4049 = vmand %vm4016, %vm4033
    %vm4050 = vmand %vm4017, %vm4034
    %vm4051 = vmand %vm4018, %vm4035
    %vm4052 = vmand %vm4019, %vm4036
    %vm4053 = vmand %vm4020, %vm4037
    %vm4054 = vmand %vm4021, %vm4038
    %vm4055 = vmand %vm4022, %vm4039
    %vm4056 = vmand %vm4023, %vm4040
    %vm4057 = vmand %vm4024, %vm4041
    %vm4058 = vmand %vm4025, %vm4042
    %vm4059 = vmand %vm4026, %vm4043
    %vm4060 = vmand %vm4027, %vm4044
    %vm4061 = vmand %vm4028, %vm4045
    %v4062 = vstv %s4010
    %vm4063 = vcmp.ge.s32.totalorder %v111, %v4062
    %vm4064 = vcmp.ge.s32.totalorder %v112, %v4062
    %vm4065 = vmand %vm4046, %vm4063
    %vm4066 = vmand %vm4046, %vm4064
    %vm4067 = vmand %vm4047, %vm4063
    %vm4068 = vmand %vm4047, %vm4064
    %vm4069 = vmand %vm4048, %vm4063
    %vm4070 = vmand %vm4048, %vm4064
    %vm4071 = vmand %vm4049, %vm4063
    %vm4072 = vmand %vm4049, %vm4064
    %vm4073 = vmand %vm4050, %vm4063
    %vm4074 = vmand %vm4050, %vm4064
    %vm4075 = vmand %vm4051, %vm4063
    %vm4076 = vmand %vm4051, %vm4064
    %vm4077 = vmand %vm4052, %vm4063
    %vm4078 = vmand %vm4052, %vm4064
    %vm4079 = vmand %vm4053, %vm4063
    %vm4080 = vmand %vm4053, %vm4064
    %vm4081 = vmand %vm4054, %vm4063
    %vm4082 = vmand %vm4054, %vm4064
    %vm4083 = vmand %vm4055, %vm4063
    %vm4084 = vmand %vm4055, %vm4064
    %vm4085 = vmand %vm4056, %vm4063
    %vm4086 = vmand %vm4056, %vm4064
    %vm4087 = vmand %vm4057, %vm4063
    %vm4088 = vmand %vm4057, %vm4064
    %vm4089 = vmand %vm4058, %vm4063
    %vm4090 = vmand %vm4058, %vm4064
    %vm4091 = vmand %vm4059, %vm4063
    %vm4092 = vmand %vm4059, %vm4064
    %vm4093 = vmand %vm4060, %vm4063
    %vm4094 = vmand %vm4060, %vm4064
    %vm4095 = vmand %vm4061, %vm4063
    %vm4096 = vmand %vm4061, %vm4064
    %v4097 = vstv %s4011
    %vm4098 = vcmp.lt.s32.totalorder %v111, %v4097
    %vm4099 = vcmp.lt.s32.totalorder %v112, %v4097
    %vm4100 = vmand %vm4065, %vm4098
    %vm4101 = vmand %vm4066, %vm4099
    %vm4102 = vmand %vm4067, %vm4098
    %vm4103 = vmand %vm4068, %vm4099
    %vm4104 = vmand %vm4069, %vm4098
    %vm4105 = vmand %vm4070, %vm4099
    %vm4106 = vmand %vm4071, %vm4098
    %vm4107 = vmand %vm4072, %vm4099
    %vm4108 = vmand %vm4073, %vm4098
    %vm4109 = vmand %vm4074, %vm4099
    %vm4110 = vmand %vm4075, %vm4098
    %vm4111 = vmand %vm4076, %vm4099
    %vm4112 = vmand %vm4077, %vm4098
    %vm4113 = vmand %vm4078, %vm4099
    %vm4114 = vmand %vm4079, %vm4098
    %vm4115 = vmand %vm4080, %vm4099
    %vm4116 = vmand %vm4081, %vm4098
    %vm4117 = vmand %vm4082, %vm4099
    %vm4118 = vmand %vm4083, %vm4098
    %vm4119 = vmand %vm4084, %vm4099
    %vm4120 = vmand %vm4085, %vm4098
    %vm4121 = vmand %vm4086, %vm4099
    %vm4122 = vmand %vm4087, %vm4098
    %vm4123 = vmand %vm4088, %vm4099
    %vm4124 = vmand %vm4089, %vm4098
    %vm4125 = vmand %vm4090, %vm4099
    %vm4126 = vmand %vm4091, %vm4098
    %vm4127 = vmand %vm4092, %vm4099
    %vm4128 = vmand %vm4093, %vm4098
    %vm4129 = vmand %vm4094, %vm4099
    %vm4130 = vmand %vm4095, %vm4098
    %vm4131 = vmand %vm4096, %vm4099
    %v4132 = vsel %vm4100, 1, 0
    %v4133 = vsel %vm4101, 1, 0
    %v4134 = vsel %vm4102, 1, 0
    %v4135 = vsel %vm4103, 1, 0
    %v4136 = vsel %vm4104, 1, 0
    %v4137 = vsel %vm4105, 1, 0
    %v4138 = vsel %vm4106, 1, 0
    %v4139 = vsel %vm4107, 1, 0
    %v4140 = vsel %vm4108, 1, 0
    %v4141 = vsel %vm4109, 1, 0
    %v4142 = vsel %vm4110, 1, 0
    %v4143 = vsel %vm4111, 1, 0
    %v4144 = vsel %vm4112, 1, 0
    %v4145 = vsel %vm4113, 1, 0
    %v4146 = vsel %vm4114, 1, 0
    %v4147 = vsel %vm4115, 1, 0
    %v4148 = vsel %vm4116, 1, 0
    %v4149 = vsel %vm4117, 1, 0
    %v4150 = vsel %vm4118, 1, 0
    %v4151 = vsel %vm4119, 1, 0
    %v4152 = vsel %vm4120, 1, 0
    %v4153 = vsel %vm4121, 1, 0
    %v4154 = vsel %vm4122, 1, 0
    %v4155 = vsel %vm4123, 1, 0
    %v4156 = vsel %vm4124, 1, 0
    %v4157 = vsel %vm4125, 1, 0
    %v4158 = vsel %vm4126, 1, 0
    %v4159 = vsel %vm4127, 1, 0
    %v4160 = vsel %vm4128, 1, 0
    %v4161 = vsel %vm4129, 1, 0
    %v4162 = vsel %vm4130, 1, 0
    %v4163 = vsel %vm4131, 1, 0
    %vm4164 = vcmp.eq.s32.totalorder %v4132, 1
    %vm4165 = vcmp.eq.s32.totalorder %v4133, 1
    %vm4166 = vcmp.eq.s32.totalorder %v4134, 1
    %vm4167 = vcmp.eq.s32.totalorder %v4135, 1
    %vm4168 = vcmp.eq.s32.totalorder %v4136, 1
    %vm4169 = vcmp.eq.s32.totalorder %v4137, 1
    %vm4170 = vcmp.eq.s32.totalorder %v4138, 1
    %vm4171 = vcmp.eq.s32.totalorder %v4139, 1
    %vm4172 = vcmp.eq.s32.totalorder %v4140, 1
    %vm4173 = vcmp.eq.s32.totalorder %v4141, 1
    %vm4174 = vcmp.eq.s32.totalorder %v4142, 1
    %vm4175 = vcmp.eq.s32.totalorder %v4143, 1
    %vm4176 = vcmp.eq.s32.totalorder %v4144, 1
    %vm4177 = vcmp.eq.s32.totalorder %v4145, 1
    %vm4178 = vcmp.eq.s32.totalorder %v4146, 1
    %vm4179 = vcmp.eq.s32.totalorder %v4147, 1
    %vm4180 = vcmp.eq.s32.totalorder %v4148, 1
    %vm4181 = vcmp.eq.s32.totalorder %v4149, 1
    %vm4182 = vcmp.eq.s32.totalorder %v4150, 1
    %vm4183 = vcmp.eq.s32.totalorder %v4151, 1
    %vm4184 = vcmp.eq.s32.totalorder %v4152, 1
    %vm4185 = vcmp.eq.s32.totalorder %v4153, 1
    %vm4186 = vcmp.eq.s32.totalorder %v4154, 1
    %vm4187 = vcmp.eq.s32.totalorder %v4155, 1
    %vm4188 = vcmp.eq.s32.totalorder %v4156, 1
    %vm4189 = vcmp.eq.s32.totalorder %v4157, 1
    %vm4190 = vcmp.eq.s32.totalorder %v4158, 1
    %vm4191 = vcmp.eq.s32.totalorder %v4159, 1
    %vm4192 = vcmp.eq.s32.totalorder %v4160, 1
    %vm4193 = vcmp.eq.s32.totalorder %v4161, 1
    %vm4194 = vcmp.eq.s32.totalorder %v4162, 1
    %vm4195 = vcmp.eq.s32.totalorder %v4163, 1
    %v4196 = vsel %vm4164, %v45, -3e+38
    %v4197 = vsel %vm4165, %v46, -3e+38
    %v4198 = vsel %vm4166, %v47, -3e+38
    %v4199 = vsel %vm4167, %v48, -3e+38
    %v4200 = vsel %vm4168, %v49, -3e+38
    %v4201 = vsel %vm4169, %v50, -3e+38
    %v4202 = vsel %vm4170, %v51, -3e+38
    %v4203 = vsel %vm4171, %v52, -3e+38
    %v4204 = vsel %vm4172, %v53, -3e+38
    %v4205 = vsel %vm4173, %v54, -3e+38
    %v4206 = vsel %vm4174, %v55, -3e+38
    %v4207 = vsel %vm4175, %v56, -3e+38
    %v4208 = vsel %vm4176, %v57, -3e+38
    %v4209 = vsel %vm4177, %v58, -3e+38
    %v4210 = vsel %vm4178, %v59, -3e+38
    %v4211 = vsel %vm4179, %v60, -3e+38
    %v4212 = vsel %vm4180, %v61, -3e+38
    %v4213 = vsel %vm4181, %v62, -3e+38
    %v4214 = vsel %vm4182, %v63, -3e+38
    %v4215 = vsel %vm4183, %v64, -3e+38
    %v4216 = vsel %vm4184, %v65, -3e+38
    %v4217 = vsel %vm4185, %v66, -3e+38
    %v4218 = vsel %vm4186, %v67, -3e+38
    %v4219 = vsel %vm4187, %v68, -3e+38
    %v4220 = vsel %vm4188, %v69, -3e+38
    %v4221 = vsel %vm4189, %v70, -3e+38
    %v4222 = vsel %vm4190, %v71, -3e+38
    %v4223 = vsel %vm4191, %v72, -3e+38
    %v4224 = vsel %vm4192, %v73, -3e+38
    %v4225 = vsel %vm4193, %v74, -3e+38
    %v4226 = vsel %vm4194, %v75, -3e+38
    %v4227 = vsel %vm4195, %v76, -3e+38
    %v4228 = vsel %vm333, %v4196, -inf
    %v4229 = vsel %vm333, %v4198, -inf
    %v4230 = vsel %vm333, %v4200, -inf
    %v4231 = vmax.f32 %v4228, %v4230
    %v4232 = vsel %vm333, %v4202, -inf
    %v4233 = vmax.f32 %v4229, %v4232
    %v4234 = vsel %vm333, %v4204, -inf
    %v4235 = vmax.f32 %v4231, %v4234
    %v4236 = vsel %vm333, %v4206, -inf
    %v4237 = vmax.f32 %v4233, %v4236
    %v4238 = vsel %vm333, %v4208, -inf
    %v4239 = vmax.f32 %v4235, %v4238
    %v4240 = vsel %vm333, %v4210, -inf
    %v4241 = vmax.f32 %v4237, %v4240
    %v4242 = vsel %vm333, %v4212, -inf
    %v4243 = vmax.f32 %v4239, %v4242
    %v4244 = vsel %vm333, %v4214, -inf
    %v4245 = vmax.f32 %v4241, %v4244
    %v4246 = vsel %vm333, %v4216, -inf
    %v4247 = vmax.f32 %v4243, %v4246
    %v4248 = vsel %vm333, %v4218, -inf
    %v4249 = vmax.f32 %v4245, %v4248
    %v4250 = vsel %vm333, %v4220, -inf
    %v4251 = vmax.f32 %v4247, %v4250
    %v4252 = vsel %vm333, %v4222, -inf
    %v4253 = vmax.f32 %v4249, %v4252
    %v4254 = vsel %vm333, %v4224, -inf
    %v4255 = vmax.f32 %v4251, %v4254
    %v4256 = vsel %vm333, %v4226, -inf
    %v4257 = vmax.f32 %v4253, %v4256
    %v4258 = vmax.f32 %v4255, %v4257
    %v4259 = vsel %vm333, %v4197, -inf
    %v4260 = vsel %vm333, %v4199, -inf
    %v4261 = vsel %vm333, %v4201, -inf
    %v4262 = vmax.f32 %v4259, %v4261
    %v4263 = vsel %vm333, %v4203, -inf
    %v4264 = vmax.f32 %v4260, %v4263
    %v4265 = vsel %vm333, %v4205, -inf
    %v4266 = vmax.f32 %v4262, %v4265
    %v4267 = vsel %vm333, %v4207, -inf
    %v4268 = vmax.f32 %v4264, %v4267
    %v4269 = vsel %vm333, %v4209, -inf
    %v4270 = vmax.f32 %v4266, %v4269
    %v4271 = vsel %vm333, %v4211, -inf
    %v4272 = vmax.f32 %v4268, %v4271
    %v4273 = vsel %vm333, %v4213, -inf
    %v4274 = vmax.f32 %v4270, %v4273
    %v4275 = vsel %vm333, %v4215, -inf
    %v4276 = vmax.f32 %v4272, %v4275
    %v4277 = vsel %vm333, %v4217, -inf
    %v4278 = vmax.f32 %v4274, %v4277
    %v4279 = vsel %vm333, %v4219, -inf
    %v4280 = vmax.f32 %v4276, %v4279
    %v4281 = vsel %vm333, %v4221, -inf
    %v4282 = vmax.f32 %v4278, %v4281
    %v4283 = vsel %vm333, %v4223, -inf
    %v4284 = vmax.f32 %v4280, %v4283
    %v4285 = vsel %vm333, %v4225, -inf
    %v4286 = vmax.f32 %v4282, %v4285
    %v4287 = vsel %vm333, %v4227, -inf
    %v4288 = vmax.f32 %v4284, %v4287
    %v4289 = vmax.f32 %v4286, %v4288
    %v4290 = vsel %vm333, %v4258, -inf
    %v4291 = vsel %vm333, %v4289, -inf
    %v4292 = vmax.f32 %v4290, %v4291
    %v4293 = vrot.slane %v4292, 4
    %v4294 = vmax.f32 %v4292, %v4293
    %v4295 = vrot.slane %v4294, 2
    %v4296 = vmax.f32 %v4294, %v4295
    %v4297 = vrot.slane %v4296, 1
    %v4298 = vmax.f32 %v4296, %v4297
    %p4299 = scmp.le.s32.totalorder %s4009, %s4008
    %p4300 = scmp.le.s32.totalorder %s4011, %s4010
    %p4301 = por %p4299, %p4300
    %s4302 = scalar_select %p4301, 1, 0
    %v4303 = vstv %s4302
    %vm4304 = vcmp.eq.s32.totalorder %v4303, 1
    %v4305 = vsel %vm4304, 0.0, %v4298
    %v4306 = vadd.f32 %v4007, %v4305
    %s4307 = sld [smem:[#allocation3 + $0x38]]
    %s4308 = sld [smem:[#allocation3 + $0x39]]
    %s4309 = sld [smem:[#allocation3 + $0x3a]]
    %s4310 = sld [smem:[#allocation3 + $0x3b]]
    %v4311 = vstv %s4307
    %vm4312 = vcmp.le.s32.totalorder %v4311, 0
    %vm4313 = vcmp.le.s32.totalorder %v4311, 1
    %vm4314 = vcmp.le.s32.totalorder %v4311, 2
    %vm4315 = vcmp.le.s32.totalorder %v4311, 3
    %vm4316 = vcmp.le.s32.totalorder %v4311, 4
    %vm4317 = vcmp.le.s32.totalorder %v4311, 5
    %vm4318 = vcmp.le.s32.totalorder %v4311, 6
    %vm4319 = vcmp.le.s32.totalorder %v4311, 7
    %vm4320 = vcmp.le.s32.totalorder %v4311, 8
    %vm4321 = vcmp.le.s32.totalorder %v4311, 9
    %vm4322 = vcmp.le.s32.totalorder %v4311, 10
    %vm4323 = vcmp.le.s32.totalorder %v4311, 11
    %vm4324 = vcmp.le.s32.totalorder %v4311, 12
    %vm4325 = vcmp.le.s32.totalorder %v4311, 13
    %vm4326 = vcmp.le.s32.totalorder %v4311, 14
    %vm4327 = vcmp.le.s32.totalorder %v4311, 15
    %v4328 = vstv %s4308
    %vm4329 = vcmp.gt.s32.totalorder %v4328, 0
    %vm4330 = vcmp.gt.s32.totalorder %v4328, 1
    %vm4331 = vcmp.gt.s32.totalorder %v4328, 2
    %vm4332 = vcmp.gt.s32.totalorder %v4328, 3
    %vm4333 = vcmp.gt.s32.totalorder %v4328, 4
    %vm4334 = vcmp.gt.s32.totalorder %v4328, 5
    %vm4335 = vcmp.gt.s32.totalorder %v4328, 6
    %vm4336 = vcmp.gt.s32.totalorder %v4328, 7
    %vm4337 = vcmp.gt.s32.totalorder %v4328, 8
    %vm4338 = vcmp.gt.s32.totalorder %v4328, 9
    %vm4339 = vcmp.gt.s32.totalorder %v4328, 10
    %vm4340 = vcmp.gt.s32.totalorder %v4328, 11
    %vm4341 = vcmp.gt.s32.totalorder %v4328, 12
    %vm4342 = vcmp.gt.s32.totalorder %v4328, 13
    %vm4343 = vcmp.gt.s32.totalorder %v4328, 14
    %vm4344 = vcmp.gt.s32.totalorder %v4328, 15
    %vm4345 = vmand %vm4312, %vm4329
    %vm4346 = vmand %vm4313, %vm4330
    %vm4347 = vmand %vm4314, %vm4331
    %vm4348 = vmand %vm4315, %vm4332
    %vm4349 = vmand %vm4316, %vm4333
    %vm4350 = vmand %vm4317, %vm4334
    %vm4351 = vmand %vm4318, %vm4335
    %vm4352 = vmand %vm4319, %vm4336
    %vm4353 = vmand %vm4320, %vm4337
    %vm4354 = vmand %vm4321, %vm4338
    %vm4355 = vmand %vm4322, %vm4339
    %vm4356 = vmand %vm4323, %vm4340
    %vm4357 = vmand %vm4324, %vm4341
    %vm4358 = vmand %vm4325, %vm4342
    %vm4359 = vmand %vm4326, %vm4343
    %vm4360 = vmand %vm4327, %vm4344
    %v4361 = vstv %s4309
    %vm4362 = vcmp.ge.s32.totalorder %v111, %v4361
    %vm4363 = vcmp.ge.s32.totalorder %v112, %v4361
    %vm4364 = vmand %vm4345, %vm4362
    %vm4365 = vmand %vm4345, %vm4363
    %vm4366 = vmand %vm4346, %vm4362
    %vm4367 = vmand %vm4346, %vm4363
    %vm4368 = vmand %vm4347, %vm4362
    %vm4369 = vmand %vm4347, %vm4363
    %vm4370 = vmand %vm4348, %vm4362
    %vm4371 = vmand %vm4348, %vm4363
    %vm4372 = vmand %vm4349, %vm4362
    %vm4373 = vmand %vm4349, %vm4363
    %vm4374 = vmand %vm4350, %vm4362
    %vm4375 = vmand %vm4350, %vm4363
    %vm4376 = vmand %vm4351, %vm4362
    %vm4377 = vmand %vm4351, %vm4363
    %vm4378 = vmand %vm4352, %vm4362
    %vm4379 = vmand %vm4352, %vm4363
    %vm4380 = vmand %vm4353, %vm4362
    %vm4381 = vmand %vm4353, %vm4363
    %vm4382 = vmand %vm4354, %vm4362
    %vm4383 = vmand %vm4354, %vm4363
    %vm4384 = vmand %vm4355, %vm4362
    %vm4385 = vmand %vm4355, %vm4363
    %vm4386 = vmand %vm4356, %vm4362
    %vm4387 = vmand %vm4356, %vm4363
    %vm4388 = vmand %vm4357, %vm4362
    %vm4389 = vmand %vm4357, %vm4363
    %vm4390 = vmand %vm4358, %vm4362
    %vm4391 = vmand %vm4358, %vm4363
    %vm4392 = vmand %vm4359, %vm4362
    %vm4393 = vmand %vm4359, %vm4363
    %vm4394 = vmand %vm4360, %vm4362
    %vm4395 = vmand %vm4360, %vm4363
    %v4396 = vstv %s4310
    %vm4397 = vcmp.lt.s32.totalorder %v111, %v4396
    %vm4398 = vcmp.lt.s32.totalorder %v112, %v4396
    %vm4399 = vmand %vm4364, %vm4397
    %vm4400 = vmand %vm4365, %vm4398
    %vm4401 = vmand %vm4366, %vm4397
    %vm4402 = vmand %vm4367, %vm4398
    %vm4403 = vmand %vm4368, %vm4397
    %vm4404 = vmand %vm4369, %vm4398
    %vm4405 = vmand %vm4370, %vm4397
    %vm4406 = vmand %vm4371, %vm4398
    %vm4407 = vmand %vm4372, %vm4397
    %vm4408 = vmand %vm4373, %vm4398
    %vm4409 = vmand %vm4374, %vm4397
    %vm4410 = vmand %vm4375, %vm4398
    %vm4411 = vmand %vm4376, %vm4397
    %vm4412 = vmand %vm4377, %vm4398
    %vm4413 = vmand %vm4378, %vm4397
    %vm4414 = vmand %vm4379, %vm4398
    %vm4415 = vmand %vm4380, %vm4397
    %vm4416 = vmand %vm4381, %vm4398
    %vm4417 = vmand %vm4382, %vm4397
    %vm4418 = vmand %vm4383, %vm4398
    %vm4419 = vmand %vm4384, %vm4397
    %vm4420 = vmand %vm4385, %vm4398
    %vm4421 = vmand %vm4386, %vm4397
    %vm4422 = vmand %vm4387, %vm4398
    %vm4423 = vmand %vm4388, %vm4397
    %vm4424 = vmand %vm4389, %vm4398
    %vm4425 = vmand %vm4390, %vm4397
    %vm4426 = vmand %vm4391, %vm4398
    %vm4427 = vmand %vm4392, %vm4397
    %vm4428 = vmand %vm4393, %vm4398
    %vm4429 = vmand %vm4394, %vm4397
    %vm4430 = vmand %vm4395, %vm4398
    %v4431 = vsel %vm4399, 1, 0
    %v4432 = vsel %vm4400, 1, 0
    %v4433 = vsel %vm4401, 1, 0
    %v4434 = vsel %vm4402, 1, 0
    %v4435 = vsel %vm4403, 1, 0
    %v4436 = vsel %vm4404, 1, 0
    %v4437 = vsel %vm4405, 1, 0
    %v4438 = vsel %vm4406, 1, 0
    %v4439 = vsel %vm4407, 1, 0
    %v4440 = vsel %vm4408, 1, 0
    %v4441 = vsel %vm4409, 1, 0
    %v4442 = vsel %vm4410, 1, 0
    %v4443 = vsel %vm4411, 1, 0
    %v4444 = vsel %vm4412, 1, 0
    %v4445 = vsel %vm4413, 1, 0
    %v4446 = vsel %vm4414, 1, 0
    %v4447 = vsel %vm4415, 1, 0
    %v4448 = vsel %vm4416, 1, 0
    %v4449 = vsel %vm4417, 1, 0
    %v4450 = vsel %vm4418, 1, 0
    %v4451 = vsel %vm4419, 1, 0
    %v4452 = vsel %vm4420, 1, 0
    %v4453 = vsel %vm4421, 1, 0
    %v4454 = vsel %vm4422, 1, 0
    %v4455 = vsel %vm4423, 1, 0
    %v4456 = vsel %vm4424, 1, 0
    %v4457 = vsel %vm4425, 1, 0
    %v4458 = vsel %vm4426, 1, 0
    %v4459 = vsel %vm4427, 1, 0
    %v4460 = vsel %vm4428, 1, 0
    %v4461 = vsel %vm4429, 1, 0
    %v4462 = vsel %vm4430, 1, 0
    %vm4463 = vcmp.eq.s32.totalorder %v4431, 1
    %vm4464 = vcmp.eq.s32.totalorder %v4432, 1
    %vm4465 = vcmp.eq.s32.totalorder %v4433, 1
    %vm4466 = vcmp.eq.s32.totalorder %v4434, 1
    %vm4467 = vcmp.eq.s32.totalorder %v4435, 1
    %vm4468 = vcmp.eq.s32.totalorder %v4436, 1
    %vm4469 = vcmp.eq.s32.totalorder %v4437, 1
    %vm4470 = vcmp.eq.s32.totalorder %v4438, 1
    %vm4471 = vcmp.eq.s32.totalorder %v4439, 1
    %vm4472 = vcmp.eq.s32.totalorder %v4440, 1
    %vm4473 = vcmp.eq.s32.totalorder %v4441, 1
    %vm4474 = vcmp.eq.s32.totalorder %v4442, 1
    %vm4475 = vcmp.eq.s32.totalorder %v4443, 1
    %vm4476 = vcmp.eq.s32.totalorder %v4444, 1
    %vm4477 = vcmp.eq.s32.totalorder %v4445, 1
    %vm4478 = vcmp.eq.s32.totalorder %v4446, 1
    %vm4479 = vcmp.eq.s32.totalorder %v4447, 1
    %vm4480 = vcmp.eq.s32.totalorder %v4448, 1
    %vm4481 = vcmp.eq.s32.totalorder %v4449, 1
    %vm4482 = vcmp.eq.s32.totalorder %v4450, 1
    %vm4483 = vcmp.eq.s32.totalorder %v4451, 1
    %vm4484 = vcmp.eq.s32.totalorder %v4452, 1
    %vm4485 = vcmp.eq.s32.totalorder %v4453, 1
    %vm4486 = vcmp.eq.s32.totalorder %v4454, 1
    %vm4487 = vcmp.eq.s32.totalorder %v4455, 1
    %vm4488 = vcmp.eq.s32.totalorder %v4456, 1
    %vm4489 = vcmp.eq.s32.totalorder %v4457, 1
    %vm4490 = vcmp.eq.s32.totalorder %v4458, 1
    %vm4491 = vcmp.eq.s32.totalorder %v4459, 1
    %vm4492 = vcmp.eq.s32.totalorder %v4460, 1
    %vm4493 = vcmp.eq.s32.totalorder %v4461, 1
    %vm4494 = vcmp.eq.s32.totalorder %v4462, 1
    %v4495 = vsel %vm4463, %v45, -3e+38
    %v4496 = vsel %vm4464, %v46, -3e+38
    %v4497 = vsel %vm4465, %v47, -3e+38
    %v4498 = vsel %vm4466, %v48, -3e+38
    %v4499 = vsel %vm4467, %v49, -3e+38
    %v4500 = vsel %vm4468, %v50, -3e+38
    %v4501 = vsel %vm4469, %v51, -3e+38
    %v4502 = vsel %vm4470, %v52, -3e+38
    %v4503 = vsel %vm4471, %v53, -3e+38
    %v4504 = vsel %vm4472, %v54, -3e+38
    %v4505 = vsel %vm4473, %v55, -3e+38
    %v4506 = vsel %vm4474, %v56, -3e+38
    %v4507 = vsel %vm4475, %v57, -3e+38
    %v4508 = vsel %vm4476, %v58, -3e+38
    %v4509 = vsel %vm4477, %v59, -3e+38
    %v4510 = vsel %vm4478, %v60, -3e+38
    %v4511 = vsel %vm4479, %v61, -3e+38
    %v4512 = vsel %vm4480, %v62, -3e+38
    %v4513 = vsel %vm4481, %v63, -3e+38
    %v4514 = vsel %vm4482, %v64, -3e+38
    %v4515 = vsel %vm4483, %v65, -3e+38
    %v4516 = vsel %vm4484, %v66, -3e+38
    %v4517 = vsel %vm4485, %v67, -3e+38
    %v4518 = vsel %vm4486, %v68, -3e+38
    %v4519 = vsel %vm4487, %v69, -3e+38
    %v4520 = vsel %vm4488, %v70, -3e+38
    %v4521 = vsel %vm4489, %v71, -3e+38
    %v4522 = vsel %vm4490, %v72, -3e+38
    %v4523 = vsel %vm4491, %v73, -3e+38
    %v4524 = vsel %vm4492, %v74, -3e+38
    %v4525 = vsel %vm4493, %v75, -3e+38
    %v4526 = vsel %vm4494, %v76, -3e+38
    %v4527 = vsel %vm333, %v4495, -inf
    %v4528 = vsel %vm333, %v4497, -inf
    %v4529 = vsel %vm333, %v4499, -inf
    %v4530 = vmax.f32 %v4527, %v4529
    %v4531 = vsel %vm333, %v4501, -inf
    %v4532 = vmax.f32 %v4528, %v4531
    %v4533 = vsel %vm333, %v4503, -inf
    %v4534 = vmax.f32 %v4530, %v4533
    %v4535 = vsel %vm333, %v4505, -inf
    %v4536 = vmax.f32 %v4532, %v4535
    %v4537 = vsel %vm333, %v4507, -inf
    %v4538 = vmax.f32 %v4534, %v4537
    %v4539 = vsel %vm333, %v4509, -inf
    %v4540 = vmax.f32 %v4536, %v4539
    %v4541 = vsel %vm333, %v4511, -inf
    %v4542 = vmax.f32 %v4538, %v4541
    %v4543 = vsel %vm333, %v4513, -inf
    %v4544 = vmax.f32 %v4540, %v4543
    %v4545 = vsel %vm333, %v4515, -inf
    %v4546 = vmax.f32 %v4542, %v4545
    %v4547 = vsel %vm333, %v4517, -inf
    %v4548 = vmax.f32 %v4544, %v4547
    %v4549 = vsel %vm333, %v4519, -inf
    %v4550 = vmax.f32 %v4546, %v4549
    %v4551 = vsel %vm333, %v4521, -inf
    %v4552 = vmax.f32 %v4548, %v4551
    %v4553 = vsel %vm333, %v4523, -inf
    %v4554 = vmax.f32 %v4550, %v4553
    %v4555 = vsel %vm333, %v4525, -inf
    %v4556 = vmax.f32 %v4552, %v4555
    %v4557 = vmax.f32 %v4554, %v4556
    %v4558 = vsel %vm333, %v4496, -inf
    %v4559 = vsel %vm333, %v4498, -inf
    %v4560 = vsel %vm333, %v4500, -inf
    %v4561 = vmax.f32 %v4558, %v4560
    %v4562 = vsel %vm333, %v4502, -inf
    %v4563 = vmax.f32 %v4559, %v4562
    %v4564 = vsel %vm333, %v4504, -inf
    %v4565 = vmax.f32 %v4561, %v4564
    %v4566 = vsel %vm333, %v4506, -inf
    %v4567 = vmax.f32 %v4563, %v4566
    %v4568 = vsel %vm333, %v4508, -inf
    %v4569 = vmax.f32 %v4565, %v4568
    %v4570 = vsel %vm333, %v4510, -inf
    %v4571 = vmax.f32 %v4567, %v4570
    %v4572 = vsel %vm333, %v4512, -inf
    %v4573 = vmax.f32 %v4569, %v4572
    %v4574 = vsel %vm333, %v4514, -inf
    %v4575 = vmax.f32 %v4571, %v4574
    %v4576 = vsel %vm333, %v4516, -inf
    %v4577 = vmax.f32 %v4573, %v4576
    %v4578 = vsel %vm333, %v4518, -inf
    %v4579 = vmax.f32 %v4575, %v4578
    %v4580 = vsel %vm333, %v4520, -inf
    %v4581 = vmax.f32 %v4577, %v4580
    %v4582 = vsel %vm333, %v4522, -inf
    %v4583 = vmax.f32 %v4579, %v4582
    %v4584 = vsel %vm333, %v4524, -inf
    %v4585 = vmax.f32 %v4581, %v4584
    %v4586 = vsel %vm333, %v4526, -inf
    %v4587 = vmax.f32 %v4583, %v4586
    %v4588 = vmax.f32 %v4585, %v4587
    %v4589 = vsel %vm333, %v4557, -inf
    %v4590 = vsel %vm333, %v4588, -inf
    %v4591 = vmax.f32 %v4589, %v4590
    %v4592 = vrot.slane %v4591, 4
    %v4593 = vmax.f32 %v4591, %v4592
    %v4594 = vrot.slane %v4593, 2
    %v4595 = vmax.f32 %v4593, %v4594
    %v4596 = vrot.slane %v4595, 1
    %v4597 = vmax.f32 %v4595, %v4596
    %p4598 = scmp.le.s32.totalorder %s4308, %s4307
    %p4599 = scmp.le.s32.totalorder %s4310, %s4309
    %p4600 = por %p4598, %p4599
    %s4601 = scalar_select %p4600, 1, 0
    %v4602 = vstv %s4601
    %vm4603 = vcmp.eq.s32.totalorder %v4602, 1
    %v4604 = vsel %vm4603, 0.0, %v4597
    %v4605 = vadd.f32 %v4306, %v4604
    %s4606 = sld [smem:[#allocation3 + $0x3c]]
    %s4607 = sld [smem:[#allocation3 + $0x3d]]
    %s4608 = sld [smem:[#allocation3 + $0x3e]]
    %s4609 = sld [smem:[#allocation3 + $0x3f]]
    %v4610 = vstv %s4606
    %vm4611 = vcmp.le.s32.totalorder %v4610, 0
    %vm4612 = vcmp.le.s32.totalorder %v4610, 1
    %vm4613 = vcmp.le.s32.totalorder %v4610, 2
    %vm4614 = vcmp.le.s32.totalorder %v4610, 3
    %vm4615 = vcmp.le.s32.totalorder %v4610, 4
    %vm4616 = vcmp.le.s32.totalorder %v4610, 5
    %vm4617 = vcmp.le.s32.totalorder %v4610, 6
    %vm4618 = vcmp.le.s32.totalorder %v4610, 7
    %vm4619 = vcmp.le.s32.totalorder %v4610, 8
    %vm4620 = vcmp.le.s32.totalorder %v4610, 9
    %vm4621 = vcmp.le.s32.totalorder %v4610, 10
    %vm4622 = vcmp.le.s32.totalorder %v4610, 11
    %vm4623 = vcmp.le.s32.totalorder %v4610, 12
    %vm4624 = vcmp.le.s32.totalorder %v4610, 13
    %vm4625 = vcmp.le.s32.totalorder %v4610, 14
    %vm4626 = vcmp.le.s32.totalorder %v4610, 15
    %v4627 = vstv %s4607
    %vm4628 = vcmp.gt.s32.totalorder %v4627, 0
    %vm4629 = vcmp.gt.s32.totalorder %v4627, 1
    %vm4630 = vcmp.gt.s32.totalorder %v4627, 2
    %vm4631 = vcmp.gt.s32.totalorder %v4627, 3
    %vm4632 = vcmp.gt.s32.totalorder %v4627, 4
    %vm4633 = vcmp.gt.s32.totalorder %v4627, 5
    %vm4634 = vcmp.gt.s32.totalorder %v4627, 6
    %vm4635 = vcmp.gt.s32.totalorder %v4627, 7
    %vm4636 = vcmp.gt.s32.totalorder %v4627, 8
    %vm4637 = vcmp.gt.s32.totalorder %v4627, 9
    %vm4638 = vcmp.gt.s32.totalorder %v4627, 10
    %vm4639 = vcmp.gt.s32.totalorder %v4627, 11
    %vm4640 = vcmp.gt.s32.totalorder %v4627, 12
    %vm4641 = vcmp.gt.s32.totalorder %v4627, 13
    %vm4642 = vcmp.gt.s32.totalorder %v4627, 14
    %vm4643 = vcmp.gt.s32.totalorder %v4627, 15
    %vm4644 = vmand %vm4611, %vm4628
    %vm4645 = vmand %vm4612, %vm4629
    %vm4646 = vmand %vm4613, %vm4630
    %vm4647 = vmand %vm4614, %vm4631
    %vm4648 = vmand %vm4615, %vm4632
    %vm4649 = vmand %vm4616, %vm4633
    %vm4650 = vmand %vm4617, %vm4634
    %vm4651 = vmand %vm4618, %vm4635
    %vm4652 = vmand %vm4619, %vm4636
    %vm4653 = vmand %vm4620, %vm4637
    %vm4654 = vmand %vm4621, %vm4638
    %vm4655 = vmand %vm4622, %vm4639
    %vm4656 = vmand %vm4623, %vm4640
    %vm4657 = vmand %vm4624, %vm4641
    %vm4658 = vmand %vm4625, %vm4642
    %vm4659 = vmand %vm4626, %vm4643
    %v4660 = vstv %s4608
    %vm4661 = vcmp.ge.s32.totalorder %v111, %v4660
    %vm4662 = vcmp.ge.s32.totalorder %v112, %v4660
    %vm4663 = vmand %vm4644, %vm4661
    %vm4664 = vmand %vm4644, %vm4662
    %vm4665 = vmand %vm4645, %vm4661
    %vm4666 = vmand %vm4645, %vm4662
    %vm4667 = vmand %vm4646, %vm4661
    %vm4668 = vmand %vm4646, %vm4662
    %vm4669 = vmand %vm4647, %vm4661
    %vm4670 = vmand %vm4647, %vm4662
    %vm4671 = vmand %vm4648, %vm4661
    %vm4672 = vmand %vm4648, %vm4662
    %vm4673 = vmand %vm4649, %vm4661
    %vm4674 = vmand %vm4649, %vm4662
    %vm4675 = vmand %vm4650, %vm4661
    %vm4676 = vmand %vm4650, %vm4662
    %vm4677 = vmand %vm4651, %vm4661
    %vm4678 = vmand %vm4651, %vm4662
    %vm4679 = vmand %vm4652, %vm4661
    %vm4680 = vmand %vm4652, %vm4662
    %vm4681 = vmand %vm4653, %vm4661
    %vm4682 = vmand %vm4653, %vm4662
    %vm4683 = vmand %vm4654, %vm4661
    %vm4684 = vmand %vm4654, %vm4662
    %vm4685 = vmand %vm4655, %vm4661
    %vm4686 = vmand %vm4655, %vm4662
    %vm4687 = vmand %vm4656, %vm4661
    %vm4688 = vmand %vm4656, %vm4662
    %vm4689 = vmand %vm4657, %vm4661
    %vm4690 = vmand %vm4657, %vm4662
    %vm4691 = vmand %vm4658, %vm4661
    %vm4692 = vmand %vm4658, %vm4662
    %vm4693 = vmand %vm4659, %vm4661
    %vm4694 = vmand %vm4659, %vm4662
    %v4695 = vstv %s4609
    %vm4696 = vcmp.lt.s32.totalorder %v111, %v4695
    %vm4697 = vcmp.lt.s32.totalorder %v112, %v4695
    %vm4698 = vmand %vm4663, %vm4696
    %vm4699 = vmand %vm4664, %vm4697
    %vm4700 = vmand %vm4665, %vm4696
    %vm4701 = vmand %vm4666, %vm4697
    %vm4702 = vmand %vm4667, %vm4696
    %vm4703 = vmand %vm4668, %vm4697
    %vm4704 = vmand %vm4669, %vm4696
    %vm4705 = vmand %vm4670, %vm4697
    %vm4706 = vmand %vm4671, %vm4696
    %vm4707 = vmand %vm4672, %vm4697
    %vm4708 = vmand %vm4673, %vm4696
    %vm4709 = vmand %vm4674, %vm4697
    %vm4710 = vmand %vm4675, %vm4696
    %vm4711 = vmand %vm4676, %vm4697
    %vm4712 = vmand %vm4677, %vm4696
    %vm4713 = vmand %vm4678, %vm4697
    %vm4714 = vmand %vm4679, %vm4696
    %vm4715 = vmand %vm4680, %vm4697
    %vm4716 = vmand %vm4681, %vm4696
    %vm4717 = vmand %vm4682, %vm4697
    %vm4718 = vmand %vm4683, %vm4696
    %vm4719 = vmand %vm4684, %vm4697
    %vm4720 = vmand %vm4685, %vm4696
    %vm4721 = vmand %vm4686, %vm4697
    %vm4722 = vmand %vm4687, %vm4696
    %vm4723 = vmand %vm4688, %vm4697
    %vm4724 = vmand %vm4689, %vm4696
    %vm4725 = vmand %vm4690, %vm4697
    %vm4726 = vmand %vm4691, %vm4696
    %vm4727 = vmand %vm4692, %vm4697
    %vm4728 = vmand %vm4693, %vm4696
    %vm4729 = vmand %vm4694, %vm4697
    %v4730 = vsel %vm4698, 1, 0
    %v4731 = vsel %vm4699, 1, 0
    %v4732 = vsel %vm4700, 1, 0
    %v4733 = vsel %vm4701, 1, 0
    %v4734 = vsel %vm4702, 1, 0
    %v4735 = vsel %vm4703, 1, 0
    %v4736 = vsel %vm4704, 1, 0
    %v4737 = vsel %vm4705, 1, 0
    %v4738 = vsel %vm4706, 1, 0
    %v4739 = vsel %vm4707, 1, 0
    %v4740 = vsel %vm4708, 1, 0
    %v4741 = vsel %vm4709, 1, 0
    %v4742 = vsel %vm4710, 1, 0
    %v4743 = vsel %vm4711, 1, 0
    %v4744 = vsel %vm4712, 1, 0
    %v4745 = vsel %vm4713, 1, 0
    %v4746 = vsel %vm4714, 1, 0
    %v4747 = vsel %vm4715, 1, 0
    %v4748 = vsel %vm4716, 1, 0
    %v4749 = vsel %vm4717, 1, 0
    %v4750 = vsel %vm4718, 1, 0
    %v4751 = vsel %vm4719, 1, 0
    %v4752 = vsel %vm4720, 1, 0
    %v4753 = vsel %vm4721, 1, 0
    %v4754 = vsel %vm4722, 1, 0
    %v4755 = vsel %vm4723, 1, 0
    %v4756 = vsel %vm4724, 1, 0
    %v4757 = vsel %vm4725, 1, 0
    %v4758 = vsel %vm4726, 1, 0
    %v4759 = vsel %vm4727, 1, 0
    %v4760 = vsel %vm4728, 1, 0
    %v4761 = vsel %vm4729, 1, 0
    %vm4762 = vcmp.eq.s32.totalorder %v4730, 1
    %vm4763 = vcmp.eq.s32.totalorder %v4731, 1
    %vm4764 = vcmp.eq.s32.totalorder %v4732, 1
    %vm4765 = vcmp.eq.s32.totalorder %v4733, 1
    %vm4766 = vcmp.eq.s32.totalorder %v4734, 1
    %vm4767 = vcmp.eq.s32.totalorder %v4735, 1
    %vm4768 = vcmp.eq.s32.totalorder %v4736, 1
    %vm4769 = vcmp.eq.s32.totalorder %v4737, 1
    %vm4770 = vcmp.eq.s32.totalorder %v4738, 1
    %vm4771 = vcmp.eq.s32.totalorder %v4739, 1
    %vm4772 = vcmp.eq.s32.totalorder %v4740, 1
    %vm4773 = vcmp.eq.s32.totalorder %v4741, 1
    %vm4774 = vcmp.eq.s32.totalorder %v4742, 1
    %vm4775 = vcmp.eq.s32.totalorder %v4743, 1
    %vm4776 = vcmp.eq.s32.totalorder %v4744, 1
    %vm4777 = vcmp.eq.s32.totalorder %v4745, 1
    %vm4778 = vcmp.eq.s32.totalorder %v4746, 1
    %vm4779 = vcmp.eq.s32.totalorder %v4747, 1
    %vm4780 = vcmp.eq.s32.totalorder %v4748, 1
    %vm4781 = vcmp.eq.s32.totalorder %v4749, 1
    %vm4782 = vcmp.eq.s32.totalorder %v4750, 1
    %vm4783 = vcmp.eq.s32.totalorder %v4751, 1
    %vm4784 = vcmp.eq.s32.totalorder %v4752, 1
    %vm4785 = vcmp.eq.s32.totalorder %v4753, 1
    %vm4786 = vcmp.eq.s32.totalorder %v4754, 1
    %vm4787 = vcmp.eq.s32.totalorder %v4755, 1
    %vm4788 = vcmp.eq.s32.totalorder %v4756, 1
    %vm4789 = vcmp.eq.s32.totalorder %v4757, 1
    %vm4790 = vcmp.eq.s32.totalorder %v4758, 1
    %vm4791 = vcmp.eq.s32.totalorder %v4759, 1
    %vm4792 = vcmp.eq.s32.totalorder %v4760, 1
    %vm4793 = vcmp.eq.s32.totalorder %v4761, 1
    %v4794 = vsel %vm4762, %v45, -3e+38
    %v4795 = vsel %vm4763, %v46, -3e+38
    %v4796 = vsel %vm4764, %v47, -3e+38
    %v4797 = vsel %vm4765, %v48, -3e+38
    %v4798 = vsel %vm4766, %v49, -3e+38
    %v4799 = vsel %vm4767, %v50, -3e+38
    %v4800 = vsel %vm4768, %v51, -3e+38
    %v4801 = vsel %vm4769, %v52, -3e+38
    %v4802 = vsel %vm4770, %v53, -3e+38
    %v4803 = vsel %vm4771, %v54, -3e+38
    %v4804 = vsel %vm4772, %v55, -3e+38
    %v4805 = vsel %vm4773, %v56, -3e+38
    %v4806 = vsel %vm4774, %v57, -3e+38
    %v4807 = vsel %vm4775, %v58, -3e+38
    %v4808 = vsel %vm4776, %v59, -3e+38
    %v4809 = vsel %vm4777, %v60, -3e+38
    %v4810 = vsel %vm4778, %v61, -3e+38
    %v4811 = vsel %vm4779, %v62, -3e+38
    %v4812 = vsel %vm4780, %v63, -3e+38
    %v4813 = vsel %vm4781, %v64, -3e+38
    %v4814 = vsel %vm4782, %v65, -3e+38
    %v4815 = vsel %vm4783, %v66, -3e+38
    %v4816 = vsel %vm4784, %v67, -3e+38
    %v4817 = vsel %vm4785, %v68, -3e+38
    %v4818 = vsel %vm4786, %v69, -3e+38
    %v4819 = vsel %vm4787, %v70, -3e+38
    %v4820 = vsel %vm4788, %v71, -3e+38
    %v4821 = vsel %vm4789, %v72, -3e+38
    %v4822 = vsel %vm4790, %v73, -3e+38
    %v4823 = vsel %vm4791, %v74, -3e+38
    %v4824 = vsel %vm4792, %v75, -3e+38
    %v4825 = vsel %vm4793, %v76, -3e+38
    %v4826 = vsel %vm333, %v4794, -inf
    %v4827 = vsel %vm333, %v4796, -inf
    %v4828 = vsel %vm333, %v4798, -inf
    %v4829 = vmax.f32 %v4826, %v4828
    %v4830 = vsel %vm333, %v4800, -inf
    %v4831 = vmax.f32 %v4827, %v4830
    %v4832 = vsel %vm333, %v4802, -inf
    %v4833 = vmax.f32 %v4829, %v4832
    %v4834 = vsel %vm333, %v4804, -inf
    %v4835 = vmax.f32 %v4831, %v4834
    %v4836 = vsel %vm333, %v4806, -inf
    %v4837 = vmax.f32 %v4833, %v4836
    %v4838 = vsel %vm333, %v4808, -inf
    %v4839 = vmax.f32 %v4835, %v4838
    %v4840 = vsel %vm333, %v4810, -inf
    %v4841 = vmax.f32 %v4837, %v4840
    %v4842 = vsel %vm333, %v4812, -inf
    %v4843 = vmax.f32 %v4839, %v4842
    %v4844 = vsel %vm333, %v4814, -inf
    %v4845 = vmax.f32 %v4841, %v4844
    %v4846 = vsel %vm333, %v4816, -inf
    %v4847 = vmax.f32 %v4843, %v4846
    %v4848 = vsel %vm333, %v4818, -inf
    %v4849 = vmax.f32 %v4845, %v4848
    %v4850 = vsel %vm333, %v4820, -inf
    %v4851 = vmax.f32 %v4847, %v4850
    %v4852 = vsel %vm333, %v4822, -inf
    %v4853 = vmax.f32 %v4849, %v4852
    %v4854 = vsel %vm333, %v4824, -inf
    %v4855 = vmax.f32 %v4851, %v4854
    %v4856 = vmax.f32 %v4853, %v4855
    %v4857 = vsel %vm333, %v4795, -inf
    %v4858 = vsel %vm333, %v4797, -inf
    %v4859 = vsel %vm333, %v4799, -inf
    %v4860 = vmax.f32 %v4857, %v4859
    %v4861 = vsel %vm333, %v4801, -inf
    %v4862 = vmax.f32 %v4858, %v4861
    %v4863 = vsel %vm333, %v4803, -inf
    %v4864 = vmax.f32 %v4860, %v4863
    %v4865 = vsel %vm333, %v4805, -inf
    %v4866 = vmax.f32 %v4862, %v4865
    %v4867 = vsel %vm333, %v4807, -inf
    %v4868 = vmax.f32 %v4864, %v4867
    %v4869 = vsel %vm333, %v4809, -inf
    %v4870 = vmax.f32 %v4866, %v4869
    %v4871 = vsel %vm333, %v4811, -inf
    %v4872 = vmax.f32 %v4868, %v4871
    %v4873 = vsel %vm333, %v4813, -inf
    %v4874 = vmax.f32 %v4870, %v4873
    %v4875 = vsel %vm333, %v4815, -inf
    %v4876 = vmax.f32 %v4872, %v4875
    %v4877 = vsel %vm333, %v4817, -inf
    %v4878 = vmax.f32 %v4874, %v4877
    %v4879 = vsel %vm333, %v4819, -inf
    %v4880 = vmax.f32 %v4876, %v4879
    %v4881 = vsel %vm333, %v4821, -inf
    %v4882 = vmax.f32 %v4878, %v4881
    %v4883 = vsel %vm333, %v4823, -inf
    %v4884 = vmax.f32 %v4880, %v4883
    %v4885 = vsel %vm333, %v4825, -inf
    %v4886 = vmax.f32 %v4882, %v4885
    %v4887 = vmax.f32 %v4884, %v4886
    %v4888 = vsel %vm333, %v4856, -inf
    %v4889 = vsel %vm333, %v4887, -inf
    %v4890 = vmax.f32 %v4888, %v4889
    %v4891 = vrot.slane %v4890, 4
    %v4892 = vmax.f32 %v4890, %v4891
    %v4893 = vrot.slane %v4892, 2
    %v4894 = vmax.f32 %v4892, %v4893
    %v4895 = vrot.slane %v4894, 1
    %v4896 = vmax.f32 %v4894, %v4895
    %p4897 = scmp.le.s32.totalorder %s4607, %s4606
    %p4898 = scmp.le.s32.totalorder %s4609, %s4608
    %p4899 = por %p4897, %p4898
    %s4900 = scalar_select %p4899, 1, 0
    %v4901 = vstv %s4900
    %vm4902 = vcmp.eq.s32.totalorder %v4901, 1
    %v4903 = vsel %vm4902, 0.0, %v4896
    %v4904 = vadd.f32 %v4605, %v4903
    %v4905 = vmul.f32 %v4904, 0.25
    %4906 = vst.msk [vmem:[#allocation2 + $0x3] sm:$0x1] %vm1311, %v4905
    %s4907 = sld [smem:[#allocation3 + $0x40]]
    %s4908 = sld [smem:[#allocation3 + $0x41]]
    %s4909 = sld [smem:[#allocation3 + $0x42]]
    %s4910 = sld [smem:[#allocation3 + $0x43]]
    %v4911 = vstv %s4907
    %vm4912 = vcmp.le.s32.totalorder %v4911, 0
    %vm4913 = vcmp.le.s32.totalorder %v4911, 1
    %vm4914 = vcmp.le.s32.totalorder %v4911, 2
    %vm4915 = vcmp.le.s32.totalorder %v4911, 3
    %vm4916 = vcmp.le.s32.totalorder %v4911, 4
    %vm4917 = vcmp.le.s32.totalorder %v4911, 5
    %vm4918 = vcmp.le.s32.totalorder %v4911, 6
    %vm4919 = vcmp.le.s32.totalorder %v4911, 7
    %vm4920 = vcmp.le.s32.totalorder %v4911, 8
    %vm4921 = vcmp.le.s32.totalorder %v4911, 9
    %vm4922 = vcmp.le.s32.totalorder %v4911, 10
    %vm4923 = vcmp.le.s32.totalorder %v4911, 11
    %vm4924 = vcmp.le.s32.totalorder %v4911, 12
    %vm4925 = vcmp.le.s32.totalorder %v4911, 13
    %vm4926 = vcmp.le.s32.totalorder %v4911, 14
    %vm4927 = vcmp.le.s32.totalorder %v4911, 15
    %v4928 = vstv %s4908
    %vm4929 = vcmp.gt.s32.totalorder %v4928, 0
    %vm4930 = vcmp.gt.s32.totalorder %v4928, 1
    %vm4931 = vcmp.gt.s32.totalorder %v4928, 2
    %vm4932 = vcmp.gt.s32.totalorder %v4928, 3
    %vm4933 = vcmp.gt.s32.totalorder %v4928, 4
    %vm4934 = vcmp.gt.s32.totalorder %v4928, 5
    %vm4935 = vcmp.gt.s32.totalorder %v4928, 6
    %vm4936 = vcmp.gt.s32.totalorder %v4928, 7
    %vm4937 = vcmp.gt.s32.totalorder %v4928, 8
    %vm4938 = vcmp.gt.s32.totalorder %v4928, 9
    %vm4939 = vcmp.gt.s32.totalorder %v4928, 10
    %vm4940 = vcmp.gt.s32.totalorder %v4928, 11
    %vm4941 = vcmp.gt.s32.totalorder %v4928, 12
    %vm4942 = vcmp.gt.s32.totalorder %v4928, 13
    %vm4943 = vcmp.gt.s32.totalorder %v4928, 14
    %vm4944 = vcmp.gt.s32.totalorder %v4928, 15
    %vm4945 = vmand %vm4912, %vm4929
    %vm4946 = vmand %vm4913, %vm4930
    %vm4947 = vmand %vm4914, %vm4931
    %vm4948 = vmand %vm4915, %vm4932
    %vm4949 = vmand %vm4916, %vm4933
    %vm4950 = vmand %vm4917, %vm4934
    %vm4951 = vmand %vm4918, %vm4935
    %vm4952 = vmand %vm4919, %vm4936
    %vm4953 = vmand %vm4920, %vm4937
    %vm4954 = vmand %vm4921, %vm4938
    %vm4955 = vmand %vm4922, %vm4939
    %vm4956 = vmand %vm4923, %vm4940
    %vm4957 = vmand %vm4924, %vm4941
    %vm4958 = vmand %vm4925, %vm4942
    %vm4959 = vmand %vm4926, %vm4943
    %vm4960 = vmand %vm4927, %vm4944
    %v4961 = vstv %s4909
    %vm4962 = vcmp.ge.s32.totalorder %v111, %v4961
    %vm4963 = vcmp.ge.s32.totalorder %v112, %v4961
    %vm4964 = vmand %vm4945, %vm4962
    %vm4965 = vmand %vm4945, %vm4963
    %vm4966 = vmand %vm4946, %vm4962
    %vm4967 = vmand %vm4946, %vm4963
    %vm4968 = vmand %vm4947, %vm4962
    %vm4969 = vmand %vm4947, %vm4963
    %vm4970 = vmand %vm4948, %vm4962
    %vm4971 = vmand %vm4948, %vm4963
    %vm4972 = vmand %vm4949, %vm4962
    %vm4973 = vmand %vm4949, %vm4963
    %vm4974 = vmand %vm4950, %vm4962
    %vm4975 = vmand %vm4950, %vm4963
    %vm4976 = vmand %vm4951, %vm4962
    %vm4977 = vmand %vm4951, %vm4963
    %vm4978 = vmand %vm4952, %vm4962
    %vm4979 = vmand %vm4952, %vm4963
    %vm4980 = vmand %vm4953, %vm4962
    %vm4981 = vmand %vm4953, %vm4963
    %vm4982 = vmand %vm4954, %vm4962
    %vm4983 = vmand %vm4954, %vm4963
    %vm4984 = vmand %vm4955, %vm4962
    %vm4985 = vmand %vm4955, %vm4963
    %vm4986 = vmand %vm4956, %vm4962
    %vm4987 = vmand %vm4956, %vm4963
    %vm4988 = vmand %vm4957, %vm4962
    %vm4989 = vmand %vm4957, %vm4963
    %vm4990 = vmand %vm4958, %vm4962
    %vm4991 = vmand %vm4958, %vm4963
    %vm4992 = vmand %vm4959, %vm4962
    %vm4993 = vmand %vm4959, %vm4963
    %vm4994 = vmand %vm4960, %vm4962
    %vm4995 = vmand %vm4960, %vm4963
    %v4996 = vstv %s4910
    %vm4997 = vcmp.lt.s32.totalorder %v111, %v4996
    %vm4998 = vcmp.lt.s32.totalorder %v112, %v4996
    %vm4999 = vmand %vm4964, %vm4997
    %vm5000 = vmand %vm4965, %vm4998
    %vm5001 = vmand %vm4966, %vm4997
    %vm5002 = vmand %vm4967, %vm4998
    %vm5003 = vmand %vm4968, %vm4997
    %vm5004 = vmand %vm4969, %vm4998
    %vm5005 = vmand %vm4970, %vm4997
    %vm5006 = vmand %vm4971, %vm4998
    %vm5007 = vmand %vm4972, %vm4997
    %vm5008 = vmand %vm4973, %vm4998
    %vm5009 = vmand %vm4974, %vm4997
    %vm5010 = vmand %vm4975, %vm4998
    %vm5011 = vmand %vm4976, %vm4997
    %vm5012 = vmand %vm4977, %vm4998
    %vm5013 = vmand %vm4978, %vm4997
    %vm5014 = vmand %vm4979, %vm4998
    %vm5015 = vmand %vm4980, %vm4997
    %vm5016 = vmand %vm4981, %vm4998
    %vm5017 = vmand %vm4982, %vm4997
    %vm5018 = vmand %vm4983, %vm4998
    %vm5019 = vmand %vm4984, %vm4997
    %vm5020 = vmand %vm4985, %vm4998
    %vm5021 = vmand %vm4986, %vm4997
    %vm5022 = vmand %vm4987, %vm4998
    %vm5023 = vmand %vm4988, %vm4997
    %vm5024 = vmand %vm4989, %vm4998
    %vm5025 = vmand %vm4990, %vm4997
    %vm5026 = vmand %vm4991, %vm4998
    %vm5027 = vmand %vm4992, %vm4997
    %vm5028 = vmand %vm4993, %vm4998
    %vm5029 = vmand %vm4994, %vm4997
    %vm5030 = vmand %vm4995, %vm4998
    %v5031 = vsel %vm4999, 1, 0
    %v5032 = vsel %vm5000, 1, 0
    %v5033 = vsel %vm5001, 1, 0
    %v5034 = vsel %vm5002, 1, 0
    %v5035 = vsel %vm5003, 1, 0
    %v5036 = vsel %vm5004, 1, 0
    %v5037 = vsel %vm5005, 1, 0
    %v5038 = vsel %vm5006, 1, 0
    %v5039 = vsel %vm5007, 1, 0
    %v5040 = vsel %vm5008, 1, 0
    %v5041 = vsel %vm5009, 1, 0
    %v5042 = vsel %vm5010, 1, 0
    %v5043 = vsel %vm5011, 1, 0
    %v5044 = vsel %vm5012, 1, 0
    %v5045 = vsel %vm5013, 1, 0
    %v5046 = vsel %vm5014, 1, 0
    %v5047 = vsel %vm5015, 1, 0
    %v5048 = vsel %vm5016, 1, 0
    %v5049 = vsel %vm5017, 1, 0
    %v5050 = vsel %vm5018, 1, 0
    %v5051 = vsel %vm5019, 1, 0
    %v5052 = vsel %vm5020, 1, 0
    %v5053 = vsel %vm5021, 1, 0
    %v5054 = vsel %vm5022, 1, 0
    %v5055 = vsel %vm5023, 1, 0
    %v5056 = vsel %vm5024, 1, 0
    %v5057 = vsel %vm5025, 1, 0
    %v5058 = vsel %vm5026, 1, 0
    %v5059 = vsel %vm5027, 1, 0
    %v5060 = vsel %vm5028, 1, 0
    %v5061 = vsel %vm5029, 1, 0
    %v5062 = vsel %vm5030, 1, 0
    %vm5063 = vcmp.eq.s32.totalorder %v5031, 1
    %vm5064 = vcmp.eq.s32.totalorder %v5032, 1
    %vm5065 = vcmp.eq.s32.totalorder %v5033, 1
    %vm5066 = vcmp.eq.s32.totalorder %v5034, 1
    %vm5067 = vcmp.eq.s32.totalorder %v5035, 1
    %vm5068 = vcmp.eq.s32.totalorder %v5036, 1
    %vm5069 = vcmp.eq.s32.totalorder %v5037, 1
    %vm5070 = vcmp.eq.s32.totalorder %v5038, 1
    %vm5071 = vcmp.eq.s32.totalorder %v5039, 1
    %vm5072 = vcmp.eq.s32.totalorder %v5040, 1
    %vm5073 = vcmp.eq.s32.totalorder %v5041, 1
    %vm5074 = vcmp.eq.s32.totalorder %v5042, 1
    %vm5075 = vcmp.eq.s32.totalorder %v5043, 1
    %vm5076 = vcmp.eq.s32.totalorder %v5044, 1
    %vm5077 = vcmp.eq.s32.totalorder %v5045, 1
    %vm5078 = vcmp.eq.s32.totalorder %v5046, 1
    %vm5079 = vcmp.eq.s32.totalorder %v5047, 1
    %vm5080 = vcmp.eq.s32.totalorder %v5048, 1
    %vm5081 = vcmp.eq.s32.totalorder %v5049, 1
    %vm5082 = vcmp.eq.s32.totalorder %v5050, 1
    %vm5083 = vcmp.eq.s32.totalorder %v5051, 1
    %vm5084 = vcmp.eq.s32.totalorder %v5052, 1
    %vm5085 = vcmp.eq.s32.totalorder %v5053, 1
    %vm5086 = vcmp.eq.s32.totalorder %v5054, 1
    %vm5087 = vcmp.eq.s32.totalorder %v5055, 1
    %vm5088 = vcmp.eq.s32.totalorder %v5056, 1
    %vm5089 = vcmp.eq.s32.totalorder %v5057, 1
    %vm5090 = vcmp.eq.s32.totalorder %v5058, 1
    %vm5091 = vcmp.eq.s32.totalorder %v5059, 1
    %vm5092 = vcmp.eq.s32.totalorder %v5060, 1
    %vm5093 = vcmp.eq.s32.totalorder %v5061, 1
    %vm5094 = vcmp.eq.s32.totalorder %v5062, 1
    %v5095 = vsel %vm5063, %v78, -3e+38
    %v5096 = vsel %vm5064, %v79, -3e+38
    %v5097 = vsel %vm5065, %v80, -3e+38
    %v5098 = vsel %vm5066, %v81, -3e+38
    %v5099 = vsel %vm5067, %v82, -3e+38
    %v5100 = vsel %vm5068, %v83, -3e+38
    %v5101 = vsel %vm5069, %v84, -3e+38
    %v5102 = vsel %vm5070, %v85, -3e+38
    %v5103 = vsel %vm5071, %v86, -3e+38
    %v5104 = vsel %vm5072, %v87, -3e+38
    %v5105 = vsel %vm5073, %v88, -3e+38
    %v5106 = vsel %vm5074, %v89, -3e+38
    %v5107 = vsel %vm5075, %v90, -3e+38
    %v5108 = vsel %vm5076, %v91, -3e+38
    %v5109 = vsel %vm5077, %v92, -3e+38
    %v5110 = vsel %vm5078, %v93, -3e+38
    %v5111 = vsel %vm5079, %v94, -3e+38
    %v5112 = vsel %vm5080, %v95, -3e+38
    %v5113 = vsel %vm5081, %v96, -3e+38
    %v5114 = vsel %vm5082, %v97, -3e+38
    %v5115 = vsel %vm5083, %v98, -3e+38
    %v5116 = vsel %vm5084, %v99, -3e+38
    %v5117 = vsel %vm5085, %v100, -3e+38
    %v5118 = vsel %vm5086, %v101, -3e+38
    %v5119 = vsel %vm5087, %v102, -3e+38
    %v5120 = vsel %vm5088, %v103, -3e+38
    %v5121 = vsel %vm5089, %v104, -3e+38
    %v5122 = vsel %vm5090, %v105, -3e+38
    %v5123 = vsel %vm5091, %v106, -3e+38
    %v5124 = vsel %vm5092, %v107, -3e+38
    %v5125 = vsel %vm5093, %v108, -3e+38
    %v5126 = vsel %vm5094, %v109, -3e+38
    %v5127 = vsel %vm333, %v5095, -inf
    %v5128 = vsel %vm333, %v5097, -inf
    %v5129 = vsel %vm333, %v5099, -inf
    %v5130 = vmax.f32 %v5127, %v5129
    %v5131 = vsel %vm333, %v5101, -inf
    %v5132 = vmax.f32 %v5128, %v5131
    %v5133 = vsel %vm333, %v5103, -inf
    %v5134 = vmax.f32 %v5130, %v5133
    %v5135 = vsel %vm333, %v5105, -inf
    %v5136 = vmax.f32 %v5132, %v5135
    %v5137 = vsel %vm333, %v5107, -inf
    %v5138 = vmax.f32 %v5134, %v5137
    %v5139 = vsel %vm333, %v5109, -inf
    %v5140 = vmax.f32 %v5136, %v5139
    %v5141 = vsel %vm333, %v5111, -inf
    %v5142 = vmax.f32 %v5138, %v5141
    %v5143 = vsel %vm333, %v5113, -inf
    %v5144 = vmax.f32 %v5140, %v5143
    %v5145 = vsel %vm333, %v5115, -inf
    %v5146 = vmax.f32 %v5142, %v5145
    %v5147 = vsel %vm333, %v5117, -inf
    %v5148 = vmax.f32 %v5144, %v5147
    %v5149 = vsel %vm333, %v5119, -inf
    %v5150 = vmax.f32 %v5146, %v5149
    %v5151 = vsel %vm333, %v5121, -inf
    %v5152 = vmax.f32 %v5148, %v5151
    %v5153 = vsel %vm333, %v5123, -inf
    %v5154 = vmax.f32 %v5150, %v5153
    %v5155 = vsel %vm333, %v5125, -inf
    %v5156 = vmax.f32 %v5152, %v5155
    %v5157 = vmax.f32 %v5154, %v5156
    %v5158 = vsel %vm333, %v5096, -inf
    %v5159 = vsel %vm333, %v5098, -inf
    %v5160 = vsel %vm333, %v5100, -inf
    %v5161 = vmax.f32 %v5158, %v5160
    %v5162 = vsel %vm333, %v5102, -inf
    %v5163 = vmax.f32 %v5159, %v5162
    %v5164 = vsel %vm333, %v5104, -inf
    %v5165 = vmax.f32 %v5161, %v5164
    %v5166 = vsel %vm333, %v5106, -inf
    %v5167 = vmax.f32 %v5163, %v5166
    %v5168 = vsel %vm333, %v5108, -inf
    %v5169 = vmax.f32 %v5165, %v5168
    %v5170 = vsel %vm333, %v5110, -inf
    %v5171 = vmax.f32 %v5167, %v5170
    %v5172 = vsel %vm333, %v5112, -inf
    %v5173 = vmax.f32 %v5169, %v5172
    %v5174 = vsel %vm333, %v5114, -inf
    %v5175 = vmax.f32 %v5171, %v5174
    %v5176 = vsel %vm333, %v5116, -inf
    %v5177 = vmax.f32 %v5173, %v5176
    %v5178 = vsel %vm333, %v5118, -inf
    %v5179 = vmax.f32 %v5175, %v5178
    %v5180 = vsel %vm333, %v5120, -inf
    %v5181 = vmax.f32 %v5177, %v5180
    %v5182 = vsel %vm333, %v5122, -inf
    %v5183 = vmax.f32 %v5179, %v5182
    %v5184 = vsel %vm333, %v5124, -inf
    %v5185 = vmax.f32 %v5181, %v5184
    %v5186 = vsel %vm333, %v5126, -inf
    %v5187 = vmax.f32 %v5183, %v5186
    %v5188 = vmax.f32 %v5185, %v5187
    %v5189 = vsel %vm333, %v5157, -inf
    %v5190 = vsel %vm333, %v5188, -inf
    %v5191 = vmax.f32 %v5189, %v5190
    %v5192 = vrot.slane %v5191, 4
    %v5193 = vmax.f32 %v5191, %v5192
    %v5194 = vrot.slane %v5193, 2
    %v5195 = vmax.f32 %v5193, %v5194
    %v5196 = vrot.slane %v5195, 1
    %v5197 = vmax.f32 %v5195, %v5196
    %p5198 = scmp.le.s32.totalorder %s4908, %s4907
    %p5199 = scmp.le.s32.totalorder %s4910, %s4909
    %p5200 = por %p5198, %p5199
    %s5201 = scalar_select %p5200, 1, 0
    %v5202 = vstv %s5201
    %vm5203 = vcmp.eq.s32.totalorder %v5202, 1
    %v5204 = vsel %vm5203, 0.0, %v5197
    %v5205 = vadd.f32 %v5204, 0.0
    %s5206 = sld [smem:[#allocation3 + $0x44]]
    %s5207 = sld [smem:[#allocation3 + $0x45]]
    %s5208 = sld [smem:[#allocation3 + $0x46]]
    %s5209 = sld [smem:[#allocation3 + $0x47]]
    %v5210 = vstv %s5206
    %vm5211 = vcmp.le.s32.totalorder %v5210, 0
    %vm5212 = vcmp.le.s32.totalorder %v5210, 1
    %vm5213 = vcmp.le.s32.totalorder %v5210, 2
    %vm5214 = vcmp.le.s32.totalorder %v5210, 3
    %vm5215 = vcmp.le.s32.totalorder %v5210, 4
    %vm5216 = vcmp.le.s32.totalorder %v5210, 5
    %vm5217 = vcmp.le.s32.totalorder %v5210, 6
    %vm5218 = vcmp.le.s32.totalorder %v5210, 7
    %vm5219 = vcmp.le.s32.totalorder %v5210, 8
    %vm5220 = vcmp.le.s32.totalorder %v5210, 9
    %vm5221 = vcmp.le.s32.totalorder %v5210, 10
    %vm5222 = vcmp.le.s32.totalorder %v5210, 11
    %vm5223 = vcmp.le.s32.totalorder %v5210, 12
    %vm5224 = vcmp.le.s32.totalorder %v5210, 13
    %vm5225 = vcmp.le.s32.totalorder %v5210, 14
    %vm5226 = vcmp.le.s32.totalorder %v5210, 15
    %v5227 = vstv %s5207
    %vm5228 = vcmp.gt.s32.totalorder %v5227, 0
    %vm5229 = vcmp.gt.s32.totalorder %v5227, 1
    %vm5230 = vcmp.gt.s32.totalorder %v5227, 2
    %vm5231 = vcmp.gt.s32.totalorder %v5227, 3
    %vm5232 = vcmp.gt.s32.totalorder %v5227, 4
    %vm5233 = vcmp.gt.s32.totalorder %v5227, 5
    %vm5234 = vcmp.gt.s32.totalorder %v5227, 6
    %vm5235 = vcmp.gt.s32.totalorder %v5227, 7
    %vm5236 = vcmp.gt.s32.totalorder %v5227, 8
    %vm5237 = vcmp.gt.s32.totalorder %v5227, 9
    %vm5238 = vcmp.gt.s32.totalorder %v5227, 10
    %vm5239 = vcmp.gt.s32.totalorder %v5227, 11
    %vm5240 = vcmp.gt.s32.totalorder %v5227, 12
    %vm5241 = vcmp.gt.s32.totalorder %v5227, 13
    %vm5242 = vcmp.gt.s32.totalorder %v5227, 14
    %vm5243 = vcmp.gt.s32.totalorder %v5227, 15
    %vm5244 = vmand %vm5211, %vm5228
    %vm5245 = vmand %vm5212, %vm5229
    %vm5246 = vmand %vm5213, %vm5230
    %vm5247 = vmand %vm5214, %vm5231
    %vm5248 = vmand %vm5215, %vm5232
    %vm5249 = vmand %vm5216, %vm5233
    %vm5250 = vmand %vm5217, %vm5234
    %vm5251 = vmand %vm5218, %vm5235
    %vm5252 = vmand %vm5219, %vm5236
    %vm5253 = vmand %vm5220, %vm5237
    %vm5254 = vmand %vm5221, %vm5238
    %vm5255 = vmand %vm5222, %vm5239
    %vm5256 = vmand %vm5223, %vm5240
    %vm5257 = vmand %vm5224, %vm5241
    %vm5258 = vmand %vm5225, %vm5242
    %vm5259 = vmand %vm5226, %vm5243
    %v5260 = vstv %s5208
    %vm5261 = vcmp.ge.s32.totalorder %v111, %v5260
    %vm5262 = vcmp.ge.s32.totalorder %v112, %v5260
    %vm5263 = vmand %vm5244, %vm5261
    %vm5264 = vmand %vm5244, %vm5262
    %vm5265 = vmand %vm5245, %vm5261
    %vm5266 = vmand %vm5245, %vm5262
    %vm5267 = vmand %vm5246, %vm5261
    %vm5268 = vmand %vm5246, %vm5262
    %vm5269 = vmand %vm5247, %vm5261
    %vm5270 = vmand %vm5247, %vm5262
    %vm5271 = vmand %vm5248, %vm5261
    %vm5272 = vmand %vm5248, %vm5262
    %vm5273 = vmand %vm5249, %vm5261
    %vm5274 = vmand %vm5249, %vm5262
    %vm5275 = vmand %vm5250, %vm5261
    %vm5276 = vmand %vm5250, %vm5262
    %vm5277 = vmand %vm5251, %vm5261
    %vm5278 = vmand %vm5251, %vm5262
    %vm5279 = vmand %vm5252, %vm5261
    %vm5280 = vmand %vm5252, %vm5262
    %vm5281 = vmand %vm5253, %vm5261
    %vm5282 = vmand %vm5253, %vm5262
    %vm5283 = vmand %vm5254, %vm5261
    %vm5284 = vmand %vm5254, %vm5262
    %vm5285 = vmand %vm5255, %vm5261
    %vm5286 = vmand %vm5255, %vm5262
    %vm5287 = vmand %vm5256, %vm5261
    %vm5288 = vmand %vm5256, %vm5262
    %vm5289 = vmand %vm5257, %vm5261
    %vm5290 = vmand %vm5257, %vm5262
    %vm5291 = vmand %vm5258, %vm5261
    %vm5292 = vmand %vm5258, %vm5262
    %vm5293 = vmand %vm5259, %vm5261
    %vm5294 = vmand %vm5259, %vm5262
    %v5295 = vstv %s5209
    %vm5296 = vcmp.lt.s32.totalorder %v111, %v5295
    %vm5297 = vcmp.lt.s32.totalorder %v112, %v5295
    %vm5298 = vmand %vm5263, %vm5296
    %vm5299 = vmand %vm5264, %vm5297
    %vm5300 = vmand %vm5265, %vm5296
    %vm5301 = vmand %vm5266, %vm5297
    %vm5302 = vmand %vm5267, %vm5296
    %vm5303 = vmand %vm5268, %vm5297
    %vm5304 = vmand %vm5269, %vm5296
    %vm5305 = vmand %vm5270, %vm5297
    %vm5306 = vmand %vm5271, %vm5296
    %vm5307 = vmand %vm5272, %vm5297
    %vm5308 = vmand %vm5273, %vm5296
    %vm5309 = vmand %vm5274, %vm5297
    %vm5310 = vmand %vm5275, %vm5296
    %vm5311 = vmand %vm5276, %vm5297
    %vm5312 = vmand %vm5277, %vm5296
    %vm5313 = vmand %vm5278, %vm5297
    %vm5314 = vmand %vm5279, %vm5296
    %vm5315 = vmand %vm5280, %vm5297
    %vm5316 = vmand %vm5281, %vm5296
    %vm5317 = vmand %vm5282, %vm5297
    %vm5318 = vmand %vm5283, %vm5296
    %vm5319 = vmand %vm5284, %vm5297
    %vm5320 = vmand %vm5285, %vm5296
    %vm5321 = vmand %vm5286, %vm5297
    %vm5322 = vmand %vm5287, %vm5296
    %vm5323 = vmand %vm5288, %vm5297
    %vm5324 = vmand %vm5289, %vm5296
    %vm5325 = vmand %vm5290, %vm5297
    %vm5326 = vmand %vm5291, %vm5296
    %vm5327 = vmand %vm5292, %vm5297
    %vm5328 = vmand %vm5293, %vm5296
    %vm5329 = vmand %vm5294, %vm5297
    %v5330 = vsel %vm5298, 1, 0
    %v5331 = vsel %vm5299, 1, 0
    %v5332 = vsel %vm5300, 1, 0
    %v5333 = vsel %vm5301, 1, 0
    %v5334 = vsel %vm5302, 1, 0
    %v5335 = vsel %vm5303, 1, 0
    %v5336 = vsel %vm5304, 1, 0
    %v5337 = vsel %vm5305, 1, 0
    %v5338 = vsel %vm5306, 1, 0
    %v5339 = vsel %vm5307, 1, 0
    %v5340 = vsel %vm5308, 1, 0
    %v5341 = vsel %vm5309, 1, 0
    %v5342 = vsel %vm5310, 1, 0
    %v5343 = vsel %vm5311, 1, 0
    %v5344 = vsel %vm5312, 1, 0
    %v5345 = vsel %vm5313, 1, 0
    %v5346 = vsel %vm5314, 1, 0
    %v5347 = vsel %vm5315, 1, 0
    %v5348 = vsel %vm5316, 1, 0
    %v5349 = vsel %vm5317, 1, 0
    %v5350 = vsel %vm5318, 1, 0
    %v5351 = vsel %vm5319, 1, 0
    %v5352 = vsel %vm5320, 1, 0
    %v5353 = vsel %vm5321, 1, 0
    %v5354 = vsel %vm5322, 1, 0
    %v5355 = vsel %vm5323, 1, 0
    %v5356 = vsel %vm5324, 1, 0
    %v5357 = vsel %vm5325, 1, 0
    %v5358 = vsel %vm5326, 1, 0
    %v5359 = vsel %vm5327, 1, 0
    %v5360 = vsel %vm5328, 1, 0
    %v5361 = vsel %vm5329, 1, 0
    %vm5362 = vcmp.eq.s32.totalorder %v5330, 1
    %vm5363 = vcmp.eq.s32.totalorder %v5331, 1
    %vm5364 = vcmp.eq.s32.totalorder %v5332, 1
    %vm5365 = vcmp.eq.s32.totalorder %v5333, 1
    %vm5366 = vcmp.eq.s32.totalorder %v5334, 1
    %vm5367 = vcmp.eq.s32.totalorder %v5335, 1
    %vm5368 = vcmp.eq.s32.totalorder %v5336, 1
    %vm5369 = vcmp.eq.s32.totalorder %v5337, 1
    %vm5370 = vcmp.eq.s32.totalorder %v5338, 1
    %vm5371 = vcmp.eq.s32.totalorder %v5339, 1
    %vm5372 = vcmp.eq.s32.totalorder %v5340, 1
    %vm5373 = vcmp.eq.s32.totalorder %v5341, 1
    %vm5374 = vcmp.eq.s32.totalorder %v5342, 1
    %vm5375 = vcmp.eq.s32.totalorder %v5343, 1
    %vm5376 = vcmp.eq.s32.totalorder %v5344, 1
    %vm5377 = vcmp.eq.s32.totalorder %v5345, 1
    %vm5378 = vcmp.eq.s32.totalorder %v5346, 1
    %vm5379 = vcmp.eq.s32.totalorder %v5347, 1
    %vm5380 = vcmp.eq.s32.totalorder %v5348, 1
    %vm5381 = vcmp.eq.s32.totalorder %v5349, 1
    %vm5382 = vcmp.eq.s32.totalorder %v5350, 1
    %vm5383 = vcmp.eq.s32.totalorder %v5351, 1
    %vm5384 = vcmp.eq.s32.totalorder %v5352, 1
    %vm5385 = vcmp.eq.s32.totalorder %v5353, 1
    %vm5386 = vcmp.eq.s32.totalorder %v5354, 1
    %vm5387 = vcmp.eq.s32.totalorder %v5355, 1
    %vm5388 = vcmp.eq.s32.totalorder %v5356, 1
    %vm5389 = vcmp.eq.s32.totalorder %v5357, 1
    %vm5390 = vcmp.eq.s32.totalorder %v5358, 1
    %vm5391 = vcmp.eq.s32.totalorder %v5359, 1
    %vm5392 = vcmp.eq.s32.totalorder %v5360, 1
    %vm5393 = vcmp.eq.s32.totalorder %v5361, 1
    %v5394 = vsel %vm5362, %v78, -3e+38
    %v5395 = vsel %vm5363, %v79, -3e+38
    %v5396 = vsel %vm5364, %v80, -3e+38
    %v5397 = vsel %vm5365, %v81, -3e+38
    %v5398 = vsel %vm5366, %v82, -3e+38
    %v5399 = vsel %vm5367, %v83, -3e+38
    %v5400 = vsel %vm5368, %v84, -3e+38
    %v5401 = vsel %vm5369, %v85, -3e+38
    %v5402 = vsel %vm5370, %v86, -3e+38
    %v5403 = vsel %vm5371, %v87, -3e+38
    %v5404 = vsel %vm5372, %v88, -3e+38
    %v5405 = vsel %vm5373, %v89, -3e+38
    %v5406 = vsel %vm5374, %v90, -3e+38
    %v5407 = vsel %vm5375, %v91, -3e+38
    %v5408 = vsel %vm5376, %v92, -3e+38
    %v5409 = vsel %vm5377, %v93, -3e+38
    %v5410 = vsel %vm5378, %v94, -3e+38
    %v5411 = vsel %vm5379, %v95, -3e+38
    %v5412 = vsel %vm5380, %v96, -3e+38
    %v5413 = vsel %vm5381, %v97, -3e+38
    %v5414 = vsel %vm5382, %v98, -3e+38
    %v5415 = vsel %vm5383, %v99, -3e+38
    %v5416 = vsel %vm5384, %v100, -3e+38
    %v5417 = vsel %vm5385, %v101, -3e+38
    %v5418 = vsel %vm5386, %v102, -3e+38
    %v5419 = vsel %vm5387, %v103, -3e+38
    %v5420 = vsel %vm5388, %v104, -3e+38
    %v5421 = vsel %vm5389, %v105, -3e+38
    %v5422 = vsel %vm5390, %v106, -3e+38
    %v5423 = vsel %vm5391, %v107, -3e+38
    %v5424 = vsel %vm5392, %v108, -3e+38
    %v5425 = vsel %vm5393, %v109, -3e+38
    %v5426 = vsel %vm333, %v5394, -inf
    %v5427 = vsel %vm333, %v5396, -inf
    %v5428 = vsel %vm333, %v5398, -inf
    %v5429 = vmax.f32 %v5426, %v5428
    %v5430 = vsel %vm333, %v5400, -inf
    %v5431 = vmax.f32 %v5427, %v5430
    %v5432 = vsel %vm333, %v5402, -inf
    %v5433 = vmax.f32 %v5429, %v5432
    %v5434 = vsel %vm333, %v5404, -inf
    %v5435 = vmax.f32 %v5431, %v5434
    %v5436 = vsel %vm333, %v5406, -inf
    %v5437 = vmax.f32 %v5433, %v5436
    %v5438 = vsel %vm333, %v5408, -inf
    %v5439 = vmax.f32 %v5435, %v5438
    %v5440 = vsel %vm333, %v5410, -inf
    %v5441 = vmax.f32 %v5437, %v5440
    %v5442 = vsel %vm333, %v5412, -inf
    %v5443 = vmax.f32 %v5439, %v5442
    %v5444 = vsel %vm333, %v5414, -inf
    %v5445 = vmax.f32 %v5441, %v5444
    %v5446 = vsel %vm333, %v5416, -inf
    %v5447 = vmax.f32 %v5443, %v5446
    %v5448 = vsel %vm333, %v5418, -inf
    %v5449 = vmax.f32 %v5445, %v5448
    %v5450 = vsel %vm333, %v5420, -inf
    %v5451 = vmax.f32 %v5447, %v5450
    %v5452 = vsel %vm333, %v5422, -inf
    %v5453 = vmax.f32 %v5449, %v5452
    %v5454 = vsel %vm333, %v5424, -inf
    %v5455 = vmax.f32 %v5451, %v5454
    %v5456 = vmax.f32 %v5453, %v5455
    %v5457 = vsel %vm333, %v5395, -inf
    %v5458 = vsel %vm333, %v5397, -inf
    %v5459 = vsel %vm333, %v5399, -inf
    %v5460 = vmax.f32 %v5457, %v5459
    %v5461 = vsel %vm333, %v5401, -inf
    %v5462 = vmax.f32 %v5458, %v5461
    %v5463 = vsel %vm333, %v5403, -inf
    %v5464 = vmax.f32 %v5460, %v5463
    %v5465 = vsel %vm333, %v5405, -inf
    %v5466 = vmax.f32 %v5462, %v5465
    %v5467 = vsel %vm333, %v5407, -inf
    %v5468 = vmax.f32 %v5464, %v5467
    %v5469 = vsel %vm333, %v5409, -inf
    %v5470 = vmax.f32 %v5466, %v5469
    %v5471 = vsel %vm333, %v5411, -inf
    %v5472 = vmax.f32 %v5468, %v5471
    %v5473 = vsel %vm333, %v5413, -inf
    %v5474 = vmax.f32 %v5470, %v5473
    %v5475 = vsel %vm333, %v5415, -inf
    %v5476 = vmax.f32 %v5472, %v5475
    %v5477 = vsel %vm333, %v5417, -inf
    %v5478 = vmax.f32 %v5474, %v5477
    %v5479 = vsel %vm333, %v5419, -inf
    %v5480 = vmax.f32 %v5476, %v5479
    %v5481 = vsel %vm333, %v5421, -inf
    %v5482 = vmax.f32 %v5478, %v5481
    %v5483 = vsel %vm333, %v5423, -inf
    %v5484 = vmax.f32 %v5480, %v5483
    %v5485 = vsel %vm333, %v5425, -inf
    %v5486 = vmax.f32 %v5482, %v5485
    %v5487 = vmax.f32 %v5484, %v5486
    %v5488 = vsel %vm333, %v5456, -inf
    %v5489 = vsel %vm333, %v5487, -inf
    %v5490 = vmax.f32 %v5488, %v5489
    %v5491 = vrot.slane %v5490, 4
    %v5492 = vmax.f32 %v5490, %v5491
    %v5493 = vrot.slane %v5492, 2
    %v5494 = vmax.f32 %v5492, %v5493
    %v5495 = vrot.slane %v5494, 1
    %v5496 = vmax.f32 %v5494, %v5495
    %p5497 = scmp.le.s32.totalorder %s5207, %s5206
    %p5498 = scmp.le.s32.totalorder %s5209, %s5208
    %p5499 = por %p5497, %p5498
    %s5500 = scalar_select %p5499, 1, 0
    %v5501 = vstv %s5500
    %vm5502 = vcmp.eq.s32.totalorder %v5501, 1
    %v5503 = vsel %vm5502, 0.0, %v5496
    %v5504 = vadd.f32 %v5205, %v5503
    %s5505 = sld [smem:[#allocation3 + $0x48]]
    %s5506 = sld [smem:[#allocation3 + $0x49]]
    %s5507 = sld [smem:[#allocation3 + $0x4a]]
    %s5508 = sld [smem:[#allocation3 + $0x4b]]
    %v5509 = vstv %s5505
    %vm5510 = vcmp.le.s32.totalorder %v5509, 0
    %vm5511 = vcmp.le.s32.totalorder %v5509, 1
    %vm5512 = vcmp.le.s32.totalorder %v5509, 2
    %vm5513 = vcmp.le.s32.totalorder %v5509, 3
    %vm5514 = vcmp.le.s32.totalorder %v5509, 4
    %vm5515 = vcmp.le.s32.totalorder %v5509, 5
    %vm5516 = vcmp.le.s32.totalorder %v5509, 6
    %vm5517 = vcmp.le.s32.totalorder %v5509, 7
    %vm5518 = vcmp.le.s32.totalorder %v5509, 8
    %vm5519 = vcmp.le.s32.totalorder %v5509, 9
    %vm5520 = vcmp.le.s32.totalorder %v5509, 10
    %vm5521 = vcmp.le.s32.totalorder %v5509, 11
    %vm5522 = vcmp.le.s32.totalorder %v5509, 12
    %vm5523 = vcmp.le.s32.totalorder %v5509, 13
    %vm5524 = vcmp.le.s32.totalorder %v5509, 14
    %vm5525 = vcmp.le.s32.totalorder %v5509, 15
    %v5526 = vstv %s5506
    %vm5527 = vcmp.gt.s32.totalorder %v5526, 0
    %vm5528 = vcmp.gt.s32.totalorder %v5526, 1
    %vm5529 = vcmp.gt.s32.totalorder %v5526, 2
    %vm5530 = vcmp.gt.s32.totalorder %v5526, 3
    %vm5531 = vcmp.gt.s32.totalorder %v5526, 4
    %vm5532 = vcmp.gt.s32.totalorder %v5526, 5
    %vm5533 = vcmp.gt.s32.totalorder %v5526, 6
    %vm5534 = vcmp.gt.s32.totalorder %v5526, 7
    %vm5535 = vcmp.gt.s32.totalorder %v5526, 8
    %vm5536 = vcmp.gt.s32.totalorder %v5526, 9
    %vm5537 = vcmp.gt.s32.totalorder %v5526, 10
    %vm5538 = vcmp.gt.s32.totalorder %v5526, 11
    %vm5539 = vcmp.gt.s32.totalorder %v5526, 12
    %vm5540 = vcmp.gt.s32.totalorder %v5526, 13
    %vm5541 = vcmp.gt.s32.totalorder %v5526, 14
    %vm5542 = vcmp.gt.s32.totalorder %v5526, 15
    %vm5543 = vmand %vm5510, %vm5527
    %vm5544 = vmand %vm5511, %vm5528
    %vm5545 = vmand %vm5512, %vm5529
    %vm5546 = vmand %vm5513, %vm5530
    %vm5547 = vmand %vm5514, %vm5531
    %vm5548 = vmand %vm5515, %vm5532
    %vm5549 = vmand %vm5516, %vm5533
    %vm5550 = vmand %vm5517, %vm5534
    %vm5551 = vmand %vm5518, %vm5535
    %vm5552 = vmand %vm5519, %vm5536
    %vm5553 = vmand %vm5520, %vm5537
    %vm5554 = vmand %vm5521, %vm5538
    %vm5555 = vmand %vm5522, %vm5539
    %vm5556 = vmand %vm5523, %vm5540
    %vm5557 = vmand %vm5524, %vm5541
    %vm5558 = vmand %vm5525, %vm5542
    %v5559 = vstv %s5507
    %vm5560 = vcmp.ge.s32.totalorder %v111, %v5559
    %vm5561 = vcmp.ge.s32.totalorder %v112, %v5559
    %vm5562 = vmand %vm5543, %vm5560
    %vm5563 = vmand %vm5543, %vm5561
    %vm5564 = vmand %vm5544, %vm5560
    %vm5565 = vmand %vm5544, %vm5561
    %vm5566 = vmand %vm5545, %vm5560
    %vm5567 = vmand %vm5545, %vm5561
    %vm5568 = vmand %vm5546, %vm5560
    %vm5569 = vmand %vm5546, %vm5561
    %vm5570 = vmand %vm5547, %vm5560
    %vm5571 = vmand %vm5547, %vm5561
    %vm5572 = vmand %vm5548, %vm5560
    %vm5573 = vmand %vm5548, %vm5561
    %vm5574 = vmand %vm5549, %vm5560
    %vm5575 = vmand %vm5549, %vm5561
    %vm5576 = vmand %vm5550, %vm5560
    %vm5577 = vmand %vm5550, %vm5561
    %vm5578 = vmand %vm5551, %vm5560
    %vm5579 = vmand %vm5551, %vm5561
    %vm5580 = vmand %vm5552, %vm5560
    %vm5581 = vmand %vm5552, %vm5561
    %vm5582 = vmand %vm5553, %vm5560
    %vm5583 = vmand %vm5553, %vm5561
    %vm5584 = vmand %vm5554, %vm5560
    %vm5585 = vmand %vm5554, %vm5561
    %vm5586 = vmand %vm5555, %vm5560
    %vm5587 = vmand %vm5555, %vm5561
    %vm5588 = vmand %vm5556, %vm5560
    %vm5589 = vmand %vm5556, %vm5561
    %vm5590 = vmand %vm5557, %vm5560
    %vm5591 = vmand %vm5557, %vm5561
    %vm5592 = vmand %vm5558, %vm5560
    %vm5593 = vmand %vm5558, %vm5561
    %v5594 = vstv %s5508
    %vm5595 = vcmp.lt.s32.totalorder %v111, %v5594
    %vm5596 = vcmp.lt.s32.totalorder %v112, %v5594
    %vm5597 = vmand %vm5562, %vm5595
    %vm5598 = vmand %vm5563, %vm5596
    %vm5599 = vmand %vm5564, %vm5595
    %vm5600 = vmand %vm5565, %vm5596
    %vm5601 = vmand %vm5566, %vm5595
    %vm5602 = vmand %vm5567, %vm5596
    %vm5603 = vmand %vm5568, %vm5595
    %vm5604 = vmand %vm5569, %vm5596
    %vm5605 = vmand %vm5570, %vm5595
    %vm5606 = vmand %vm5571, %vm5596
    %vm5607 = vmand %vm5572, %vm5595
    %vm5608 = vmand %vm5573, %vm5596
    %vm5609 = vmand %vm5574, %vm5595
    %vm5610 = vmand %vm5575, %vm5596
    %vm5611 = vmand %vm5576, %vm5595
    %vm5612 = vmand %vm5577, %vm5596
    %vm5613 = vmand %vm5578, %vm5595
    %vm5614 = vmand %vm5579, %vm5596
    %vm5615 = vmand %vm5580, %vm5595
    %vm5616 = vmand %vm5581, %vm5596
    %vm5617 = vmand %vm5582, %vm5595
    %vm5618 = vmand %vm5583, %vm5596
    %vm5619 = vmand %vm5584, %vm5595
    %vm5620 = vmand %vm5585, %vm5596
    %vm5621 = vmand %vm5586, %vm5595
    %vm5622 = vmand %vm5587, %vm5596
    %vm5623 = vmand %vm5588, %vm5595
    %vm5624 = vmand %vm5589, %vm5596
    %vm5625 = vmand %vm5590, %vm5595
    %vm5626 = vmand %vm5591, %vm5596
    %vm5627 = vmand %vm5592, %vm5595
    %vm5628 = vmand %vm5593, %vm5596
    %v5629 = vsel %vm5597, 1, 0
    %v5630 = vsel %vm5598, 1, 0
    %v5631 = vsel %vm5599, 1, 0
    %v5632 = vsel %vm5600, 1, 0
    %v5633 = vsel %vm5601, 1, 0
    %v5634 = vsel %vm5602, 1, 0
    %v5635 = vsel %vm5603, 1, 0
    %v5636 = vsel %vm5604, 1, 0
    %v5637 = vsel %vm5605, 1, 0
    %v5638 = vsel %vm5606, 1, 0
    %v5639 = vsel %vm5607, 1, 0
    %v5640 = vsel %vm5608, 1, 0
    %v5641 = vsel %vm5609, 1, 0
    %v5642 = vsel %vm5610, 1, 0
    %v5643 = vsel %vm5611, 1, 0
    %v5644 = vsel %vm5612, 1, 0
    %v5645 = vsel %vm5613, 1, 0
    %v5646 = vsel %vm5614, 1, 0
    %v5647 = vsel %vm5615, 1, 0
    %v5648 = vsel %vm5616, 1, 0
    %v5649 = vsel %vm5617, 1, 0
    %v5650 = vsel %vm5618, 1, 0
    %v5651 = vsel %vm5619, 1, 0
    %v5652 = vsel %vm5620, 1, 0
    %v5653 = vsel %vm5621, 1, 0
    %v5654 = vsel %vm5622, 1, 0
    %v5655 = vsel %vm5623, 1, 0
    %v5656 = vsel %vm5624, 1, 0
    %v5657 = vsel %vm5625, 1, 0
    %v5658 = vsel %vm5626, 1, 0
    %v5659 = vsel %vm5627, 1, 0
    %v5660 = vsel %vm5628, 1, 0
    %vm5661 = vcmp.eq.s32.totalorder %v5629, 1
    %vm5662 = vcmp.eq.s32.totalorder %v5630, 1
    %vm5663 = vcmp.eq.s32.totalorder %v5631, 1
    %vm5664 = vcmp.eq.s32.totalorder %v5632, 1
    %vm5665 = vcmp.eq.s32.totalorder %v5633, 1
    %vm5666 = vcmp.eq.s32.totalorder %v5634, 1
    %vm5667 = vcmp.eq.s32.totalorder %v5635, 1
    %vm5668 = vcmp.eq.s32.totalorder %v5636, 1
    %vm5669 = vcmp.eq.s32.totalorder %v5637, 1
    %vm5670 = vcmp.eq.s32.totalorder %v5638, 1
    %vm5671 = vcmp.eq.s32.totalorder %v5639, 1
    %vm5672 = vcmp.eq.s32.totalorder %v5640, 1
    %vm5673 = vcmp.eq.s32.totalorder %v5641, 1
    %vm5674 = vcmp.eq.s32.totalorder %v5642, 1
    %vm5675 = vcmp.eq.s32.totalorder %v5643, 1
    %vm5676 = vcmp.eq.s32.totalorder %v5644, 1
    %vm5677 = vcmp.eq.s32.totalorder %v5645, 1
    %vm5678 = vcmp.eq.s32.totalorder %v5646, 1
    %vm5679 = vcmp.eq.s32.totalorder %v5647, 1
    %vm5680 = vcmp.eq.s32.totalorder %v5648, 1
    %vm5681 = vcmp.eq.s32.totalorder %v5649, 1
    %vm5682 = vcmp.eq.s32.totalorder %v5650, 1
    %vm5683 = vcmp.eq.s32.totalorder %v5651, 1
    %vm5684 = vcmp.eq.s32.totalorder %v5652, 1
    %vm5685 = vcmp.eq.s32.totalorder %v5653, 1
    %vm5686 = vcmp.eq.s32.totalorder %v5654, 1
    %vm5687 = vcmp.eq.s32.totalorder %v5655, 1
    %vm5688 = vcmp.eq.s32.totalorder %v5656, 1
    %vm5689 = vcmp.eq.s32.totalorder %v5657, 1
    %vm5690 = vcmp.eq.s32.totalorder %v5658, 1
    %vm5691 = vcmp.eq.s32.totalorder %v5659, 1
    %vm5692 = vcmp.eq.s32.totalorder %v5660, 1
    %v5693 = vsel %vm5661, %v78, -3e+38
    %v5694 = vsel %vm5662, %v79, -3e+38
    %v5695 = vsel %vm5663, %v80, -3e+38
    %v5696 = vsel %vm5664, %v81, -3e+38
    %v5697 = vsel %vm5665, %v82, -3e+38
    %v5698 = vsel %vm5666, %v83, -3e+38
    %v5699 = vsel %vm5667, %v84, -3e+38
    %v5700 = vsel %vm5668, %v85, -3e+38
    %v5701 = vsel %vm5669, %v86, -3e+38
    %v5702 = vsel %vm5670, %v87, -3e+38
    %v5703 = vsel %vm5671, %v88, -3e+38
    %v5704 = vsel %vm5672, %v89, -3e+38
    %v5705 = vsel %vm5673, %v90, -3e+38
    %v5706 = vsel %vm5674, %v91, -3e+38
    %v5707 = vsel %vm5675, %v92, -3e+38
    %v5708 = vsel %vm5676, %v93, -3e+38
    %v5709 = vsel %vm5677, %v94, -3e+38
    %v5710 = vsel %vm5678, %v95, -3e+38
    %v5711 = vsel %vm5679, %v96, -3e+38
    %v5712 = vsel %vm5680, %v97, -3e+38
    %v5713 = vsel %vm5681, %v98, -3e+38
    %v5714 = vsel %vm5682, %v99, -3e+38
    %v5715 = vsel %vm5683, %v100, -3e+38
    %v5716 = vsel %vm5684, %v101, -3e+38
    %v5717 = vsel %vm5685, %v102, -3e+38
    %v5718 = vsel %vm5686, %v103, -3e+38
    %v5719 = vsel %vm5687, %v104, -3e+38
    %v5720 = vsel %vm5688, %v105, -3e+38
    %v5721 = vsel %vm5689, %v106, -3e+38
    %v5722 = vsel %vm5690, %v107, -3e+38
    %v5723 = vsel %vm5691, %v108, -3e+38
    %v5724 = vsel %vm5692, %v109, -3e+38
    %v5725 = vsel %vm333, %v5693, -inf
    %v5726 = vsel %vm333, %v5695, -inf
    %v5727 = vsel %vm333, %v5697, -inf
    %v5728 = vmax.f32 %v5725, %v5727
    %v5729 = vsel %vm333, %v5699, -inf
    %v5730 = vmax.f32 %v5726, %v5729
    %v5731 = vsel %vm333, %v5701, -inf
    %v5732 = vmax.f32 %v5728, %v5731
    %v5733 = vsel %vm333, %v5703, -inf
    %v5734 = vmax.f32 %v5730, %v5733
    %v5735 = vsel %vm333, %v5705, -inf
    %v5736 = vmax.f32 %v5732, %v5735
    %v5737 = vsel %vm333, %v5707, -inf
    %v5738 = vmax.f32 %v5734, %v5737
    %v5739 = vsel %vm333, %v5709, -inf
    %v5740 = vmax.f32 %v5736, %v5739
    %v5741 = vsel %vm333, %v5711, -inf
    %v5742 = vmax.f32 %v5738, %v5741
    %v5743 = vsel %vm333, %v5713, -inf
    %v5744 = vmax.f32 %v5740, %v5743
    %v5745 = vsel %vm333, %v5715, -inf
    %v5746 = vmax.f32 %v5742, %v5745
    %v5747 = vsel %vm333, %v5717, -inf
    %v5748 = vmax.f32 %v5744, %v5747
    %v5749 = vsel %vm333, %v5719, -inf
    %v5750 = vmax.f32 %v5746, %v5749
    %v5751 = vsel %vm333, %v5721, -inf
    %v5752 = vmax.f32 %v5748, %v5751
    %v5753 = vsel %vm333, %v5723, -inf
    %v5754 = vmax.f32 %v5750, %v5753
    %v5755 = vmax.f32 %v5752, %v5754
    %v5756 = vsel %vm333, %v5694, -inf
    %v5757 = vsel %vm333, %v5696, -inf
    %v5758 = vsel %vm333, %v5698, -inf
    %v5759 = vmax.f32 %v5756, %v5758
    %v5760 = vsel %vm333, %v5700, -inf
    %v5761 = vmax.f32 %v5757, %v5760
    %v5762 = vsel %vm333, %v5702, -inf
    %v5763 = vmax.f32 %v5759, %v5762
    %v5764 = vsel %vm333, %v5704, -inf
    %v5765 = vmax.f32 %v5761, %v5764
    %v5766 = vsel %vm333, %v5706, -inf
    %v5767 = vmax.f32 %v5763, %v5766
    %v5768 = vsel %vm333, %v5708, -inf
    %v5769 = vmax.f32 %v5765, %v5768
    %v5770 = vsel %vm333, %v5710, -inf
    %v5771 = vmax.f32 %v5767, %v5770
    %v5772 = vsel %vm333, %v5712, -inf
    %v5773 = vmax.f32 %v5769, %v5772
    %v5774 = vsel %vm333, %v5714, -inf
    %v5775 = vmax.f32 %v5771, %v5774
    %v5776 = vsel %vm333, %v5716, -inf
    %v5777 = vmax.f32 %v5773, %v5776
    %v5778 = vsel %vm333, %v5718, -inf
    %v5779 = vmax.f32 %v5775, %v5778
    %v5780 = vsel %vm333, %v5720, -inf
    %v5781 = vmax.f32 %v5777, %v5780
    %v5782 = vsel %vm333, %v5722, -inf
    %v5783 = vmax.f32 %v5779, %v5782
    %v5784 = vsel %vm333, %v5724, -inf
    %v5785 = vmax.f32 %v5781, %v5784
    %v5786 = vmax.f32 %v5783, %v5785
    %v5787 = vsel %vm333, %v5755, -inf
    %v5788 = vsel %vm333, %v5786, -inf
    %v5789 = vmax.f32 %v5787, %v5788
    %v5790 = vrot.slane %v5789, 4
    %v5791 = vmax.f32 %v5789, %v5790
    %v5792 = vrot.slane %v5791, 2
    %v5793 = vmax.f32 %v5791, %v5792
    %v5794 = vrot.slane %v5793, 1
    %v5795 = vmax.f32 %v5793, %v5794
    %p5796 = scmp.le.s32.totalorder %s5506, %s5505
    %p5797 = scmp.le.s32.totalorder %s5508, %s5507
    %p5798 = por %p5796, %p5797
    %s5799 = scalar_select %p5798, 1, 0
    %v5800 = vstv %s5799
    %vm5801 = vcmp.eq.s32.totalorder %v5800, 1
    %v5802 = vsel %vm5801, 0.0, %v5795
    %v5803 = vadd.f32 %v5504, %v5802
    %s5804 = sld [smem:[#allocation3 + $0x4c]]
    %s5805 = sld [smem:[#allocation3 + $0x4d]]
    %s5806 = sld [smem:[#allocation3 + $0x4e]]
    %s5807 = sld [smem:[#allocation3 + $0x4f]]
    %v5808 = vstv %s5804
    %vm5809 = vcmp.le.s32.totalorder %v5808, 0
    %vm5810 = vcmp.le.s32.totalorder %v5808, 1
    %vm5811 = vcmp.le.s32.totalorder %v5808, 2
    %vm5812 = vcmp.le.s32.totalorder %v5808, 3
    %vm5813 = vcmp.le.s32.totalorder %v5808, 4
    %vm5814 = vcmp.le.s32.totalorder %v5808, 5
    %vm5815 = vcmp.le.s32.totalorder %v5808, 6
    %vm5816 = vcmp.le.s32.totalorder %v5808, 7
    %vm5817 = vcmp.le.s32.totalorder %v5808, 8
    %vm5818 = vcmp.le.s32.totalorder %v5808, 9
    %vm5819 = vcmp.le.s32.totalorder %v5808, 10
    %vm5820 = vcmp.le.s32.totalorder %v5808, 11
    %vm5821 = vcmp.le.s32.totalorder %v5808, 12
    %vm5822 = vcmp.le.s32.totalorder %v5808, 13
    %vm5823 = vcmp.le.s32.totalorder %v5808, 14
    %vm5824 = vcmp.le.s32.totalorder %v5808, 15
    %v5825 = vstv %s5805
    %vm5826 = vcmp.gt.s32.totalorder %v5825, 0
    %vm5827 = vcmp.gt.s32.totalorder %v5825, 1
    %vm5828 = vcmp.gt.s32.totalorder %v5825, 2
    %vm5829 = vcmp.gt.s32.totalorder %v5825, 3
    %vm5830 = vcmp.gt.s32.totalorder %v5825, 4
    %vm5831 = vcmp.gt.s32.totalorder %v5825, 5
    %vm5832 = vcmp.gt.s32.totalorder %v5825, 6
    %vm5833 = vcmp.gt.s32.totalorder %v5825, 7
    %vm5834 = vcmp.gt.s32.totalorder %v5825, 8
    %vm5835 = vcmp.gt.s32.totalorder %v5825, 9
    %vm5836 = vcmp.gt.s32.totalorder %v5825, 10
    %vm5837 = vcmp.gt.s32.totalorder %v5825, 11
    %vm5838 = vcmp.gt.s32.totalorder %v5825, 12
    %vm5839 = vcmp.gt.s32.totalorder %v5825, 13
    %vm5840 = vcmp.gt.s32.totalorder %v5825, 14
    %vm5841 = vcmp.gt.s32.totalorder %v5825, 15
    %vm5842 = vmand %vm5809, %vm5826
    %vm5843 = vmand %vm5810, %vm5827
    %vm5844 = vmand %vm5811, %vm5828
    %vm5845 = vmand %vm5812, %vm5829
    %vm5846 = vmand %vm5813, %vm5830
    %vm5847 = vmand %vm5814, %vm5831
    %vm5848 = vmand %vm5815, %vm5832
    %vm5849 = vmand %vm5816, %vm5833
    %vm5850 = vmand %vm5817, %vm5834
    %vm5851 = vmand %vm5818, %vm5835
    %vm5852 = vmand %vm5819, %vm5836
    %vm5853 = vmand %vm5820, %vm5837
    %vm5854 = vmand %vm5821, %vm5838
    %vm5855 = vmand %vm5822, %vm5839
    %vm5856 = vmand %vm5823, %vm5840
    %vm5857 = vmand %vm5824, %vm5841
    %v5858 = vstv %s5806
    %vm5859 = vcmp.ge.s32.totalorder %v111, %v5858
    %vm5860 = vcmp.ge.s32.totalorder %v112, %v5858
    %vm5861 = vmand %vm5842, %vm5859
    %vm5862 = vmand %vm5842, %vm5860
    %vm5863 = vmand %vm5843, %vm5859
    %vm5864 = vmand %vm5843, %vm5860
    %vm5865 = vmand %vm5844, %vm5859
    %vm5866 = vmand %vm5844, %vm5860
    %vm5867 = vmand %vm5845, %vm5859
    %vm5868 = vmand %vm5845, %vm5860
    %vm5869 = vmand %vm5846, %vm5859
    %vm5870 = vmand %vm5846, %vm5860
    %vm5871 = vmand %vm5847, %vm5859
    %vm5872 = vmand %vm5847, %vm5860
    %vm5873 = vmand %vm5848, %vm5859
    %vm5874 = vmand %vm5848, %vm5860
    %vm5875 = vmand %vm5849, %vm5859
    %vm5876 = vmand %vm5849, %vm5860
    %vm5877 = vmand %vm5850, %vm5859
    %vm5878 = vmand %vm5850, %vm5860
    %vm5879 = vmand %vm5851, %vm5859
    %vm5880 = vmand %vm5851, %vm5860
    %vm5881 = vmand %vm5852, %vm5859
    %vm5882 = vmand %vm5852, %vm5860
    %vm5883 = vmand %vm5853, %vm5859
    %vm5884 = vmand %vm5853, %vm5860
    %vm5885 = vmand %vm5854, %vm5859
    %vm5886 = vmand %vm5854, %vm5860
    %vm5887 = vmand %vm5855, %vm5859
    %vm5888 = vmand %vm5855, %vm5860
    %vm5889 = vmand %vm5856, %vm5859
    %vm5890 = vmand %vm5856, %vm5860
    %vm5891 = vmand %vm5857, %vm5859
    %vm5892 = vmand %vm5857, %vm5860
    %v5893 = vstv %s5807
    %vm5894 = vcmp.lt.s32.totalorder %v111, %v5893
    %vm5895 = vcmp.lt.s32.totalorder %v112, %v5893
    %vm5896 = vmand %vm5861, %vm5894
    %vm5897 = vmand %vm5862, %vm5895
    %vm5898 = vmand %vm5863, %vm5894
    %vm5899 = vmand %vm5864, %vm5895
    %vm5900 = vmand %vm5865, %vm5894
    %vm5901 = vmand %vm5866, %vm5895
    %vm5902 = vmand %vm5867, %vm5894
    %vm5903 = vmand %vm5868, %vm5895
    %vm5904 = vmand %vm5869, %vm5894
    %vm5905 = vmand %vm5870, %vm5895
    %vm5906 = vmand %vm5871, %vm5894
    %vm5907 = vmand %vm5872, %vm5895
    %vm5908 = vmand %vm5873, %vm5894
    %vm5909 = vmand %vm5874, %vm5895
    %vm5910 = vmand %vm5875, %vm5894
    %vm5911 = vmand %vm5876, %vm5895
    %vm5912 = vmand %vm5877, %vm5894
    %vm5913 = vmand %vm5878, %vm5895
    %vm5914 = vmand %vm5879, %vm5894
    %vm5915 = vmand %vm5880, %vm5895
    %vm5916 = vmand %vm5881, %vm5894
    %vm5917 = vmand %vm5882, %vm5895
    %vm5918 = vmand %vm5883, %vm5894
    %vm5919 = vmand %vm5884, %vm5895
    %vm5920 = vmand %vm5885, %vm5894
    %vm5921 = vmand %vm5886, %vm5895
    %vm5922 = vmand %vm5887, %vm5894
    %vm5923 = vmand %vm5888, %vm5895
    %vm5924 = vmand %vm5889, %vm5894
    %vm5925 = vmand %vm5890, %vm5895
    %vm5926 = vmand %vm5891, %vm5894
    %vm5927 = vmand %vm5892, %vm5895
    %v5928 = vsel %vm5896, 1, 0
    %v5929 = vsel %vm5897, 1, 0
    %v5930 = vsel %vm5898, 1, 0
    %v5931 = vsel %vm5899, 1, 0
    %v5932 = vsel %vm5900, 1, 0
    %v5933 = vsel %vm5901, 1, 0
    %v5934 = vsel %vm5902, 1, 0
    %v5935 = vsel %vm5903, 1, 0
    %v5936 = vsel %vm5904, 1, 0
    %v5937 = vsel %vm5905, 1, 0
    %v5938 = vsel %vm5906, 1, 0
    %v5939 = vsel %vm5907, 1, 0
    %v5940 = vsel %vm5908, 1, 0
    %v5941 = vsel %vm5909, 1, 0
    %v5942 = vsel %vm5910, 1, 0
    %v5943 = vsel %vm5911, 1, 0
    %v5944 = vsel %vm5912, 1, 0
    %v5945 = vsel %vm5913, 1, 0
    %v5946 = vsel %vm5914, 1, 0
    %v5947 = vsel %vm5915, 1, 0
    %v5948 = vsel %vm5916, 1, 0
    %v5949 = vsel %vm5917, 1, 0
    %v5950 = vsel %vm5918, 1, 0
    %v5951 = vsel %vm5919, 1, 0
    %v5952 = vsel %vm5920, 1, 0
    %v5953 = vsel %vm5921, 1, 0
    %v5954 = vsel %vm5922, 1, 0
    %v5955 = vsel %vm5923, 1, 0
    %v5956 = vsel %vm5924, 1, 0
    %v5957 = vsel %vm5925, 1, 0
    %v5958 = vsel %vm5926, 1, 0
    %v5959 = vsel %vm5927, 1, 0
    %vm5960 = vcmp.eq.s32.totalorder %v5928, 1
    %vm5961 = vcmp.eq.s32.totalorder %v5929, 1
    %vm5962 = vcmp.eq.s32.totalorder %v5930, 1
    %vm5963 = vcmp.eq.s32.totalorder %v5931, 1
    %vm5964 = vcmp.eq.s32.totalorder %v5932, 1
    %vm5965 = vcmp.eq.s32.totalorder %v5933, 1
    %vm5966 = vcmp.eq.s32.totalorder %v5934, 1
    %vm5967 = vcmp.eq.s32.totalorder %v5935, 1
    %vm5968 = vcmp.eq.s32.totalorder %v5936, 1
    %vm5969 = vcmp.eq.s32.totalorder %v5937, 1
    %vm5970 = vcmp.eq.s32.totalorder %v5938, 1
    %vm5971 = vcmp.eq.s32.totalorder %v5939, 1
    %vm5972 = vcmp.eq.s32.totalorder %v5940, 1
    %vm5973 = vcmp.eq.s32.totalorder %v5941, 1
    %vm5974 = vcmp.eq.s32.totalorder %v5942, 1
    %vm5975 = vcmp.eq.s32.totalorder %v5943, 1
    %vm5976 = vcmp.eq.s32.totalorder %v5944, 1
    %vm5977 = vcmp.eq.s32.totalorder %v5945, 1
    %vm5978 = vcmp.eq.s32.totalorder %v5946, 1
    %vm5979 = vcmp.eq.s32.totalorder %v5947, 1
    %vm5980 = vcmp.eq.s32.totalorder %v5948, 1
    %vm5981 = vcmp.eq.s32.totalorder %v5949, 1
    %vm5982 = vcmp.eq.s32.totalorder %v5950, 1
    %vm5983 = vcmp.eq.s32.totalorder %v5951, 1
    %vm5984 = vcmp.eq.s32.totalorder %v5952, 1
    %vm5985 = vcmp.eq.s32.totalorder %v5953, 1
    %vm5986 = vcmp.eq.s32.totalorder %v5954, 1
    %vm5987 = vcmp.eq.s32.totalorder %v5955, 1
    %vm5988 = vcmp.eq.s32.totalorder %v5956, 1
    %vm5989 = vcmp.eq.s32.totalorder %v5957, 1
    %vm5990 = vcmp.eq.s32.totalorder %v5958, 1
    %vm5991 = vcmp.eq.s32.totalorder %v5959, 1
    %v5992 = vsel %vm5960, %v78, -3e+38
    %v5993 = vsel %vm5961, %v79, -3e+38
    %v5994 = vsel %vm5962, %v80, -3e+38
    %v5995 = vsel %vm5963, %v81, -3e+38
    %v5996 = vsel %vm5964, %v82, -3e+38
    %v5997 = vsel %vm5965, %v83, -3e+38
    %v5998 = vsel %vm5966, %v84, -3e+38
    %v5999 = vsel %vm5967, %v85, -3e+38
    %v6000 = vsel %vm5968, %v86, -3e+38
    %v6001 = vsel %vm5969, %v87, -3e+38
    %v6002 = vsel %vm5970, %v88, -3e+38
    %v6003 = vsel %vm5971, %v89, -3e+38
    %v6004 = vsel %vm5972, %v90, -3e+38
    %v6005 = vsel %vm5973, %v91, -3e+38
    %v6006 = vsel %vm5974, %v92, -3e+38
    %v6007 = vsel %vm5975, %v93, -3e+38
    %v6008 = vsel %vm5976, %v94, -3e+38
    %v6009 = vsel %vm5977, %v95, -3e+38
    %v6010 = vsel %vm5978, %v96, -3e+38
    %v6011 = vsel %vm5979, %v97, -3e+38
    %v6012 = vsel %vm5980, %v98, -3e+38
    %v6013 = vsel %vm5981, %v99, -3e+38
    %v6014 = vsel %vm5982, %v100, -3e+38
    %v6015 = vsel %vm5983, %v101, -3e+38
    %v6016 = vsel %vm5984, %v102, -3e+38
    %v6017 = vsel %vm5985, %v103, -3e+38
    %v6018 = vsel %vm5986, %v104, -3e+38
    %v6019 = vsel %vm5987, %v105, -3e+38
    %v6020 = vsel %vm5988, %v106, -3e+38
    %v6021 = vsel %vm5989, %v107, -3e+38
    %v6022 = vsel %vm5990, %v108, -3e+38
    %v6023 = vsel %vm5991, %v109, -3e+38
    %v6024 = vsel %vm333, %v5992, -inf
    %v6025 = vsel %vm333, %v5994, -inf
    %v6026 = vsel %vm333, %v5996, -inf
    %v6027 = vmax.f32 %v6024, %v6026
    %v6028 = vsel %vm333, %v5998, -inf
    %v6029 = vmax.f32 %v6025, %v6028
    %v6030 = vsel %vm333, %v6000, -inf
    %v6031 = vmax.f32 %v6027, %v6030
    %v6032 = vsel %vm333, %v6002, -inf
    %v6033 = vmax.f32 %v6029, %v6032
    %v6034 = vsel %vm333, %v6004, -inf
    %v6035 = vmax.f32 %v6031, %v6034
    %v6036 = vsel %vm333, %v6006, -inf
    %v6037 = vmax.f32 %v6033, %v6036
    %v6038 = vsel %vm333, %v6008, -inf
    %v6039 = vmax.f32 %v6035, %v6038
    %v6040 = vsel %vm333, %v6010, -inf
    %v6041 = vmax.f32 %v6037, %v6040
    %v6042 = vsel %vm333, %v6012, -inf
    %v6043 = vmax.f32 %v6039, %v6042
    %v6044 = vsel %vm333, %v6014, -inf
    %v6045 = vmax.f32 %v6041, %v6044
    %v6046 = vsel %vm333, %v6016, -inf
    %v6047 = vmax.f32 %v6043, %v6046
    %v6048 = vsel %vm333, %v6018, -inf
    %v6049 = vmax.f32 %v6045, %v6048
    %v6050 = vsel %vm333, %v6020, -inf
    %v6051 = vmax.f32 %v6047, %v6050
    %v6052 = vsel %vm333, %v6022, -inf
    %v6053 = vmax.f32 %v6049, %v6052
    %v6054 = vmax.f32 %v6051, %v6053
    %v6055 = vsel %vm333, %v5993, -inf
    %v6056 = vsel %vm333, %v5995, -inf
    %v6057 = vsel %vm333, %v5997, -inf
    %v6058 = vmax.f32 %v6055, %v6057
    %v6059 = vsel %vm333, %v5999, -inf
    %v6060 = vmax.f32 %v6056, %v6059
    %v6061 = vsel %vm333, %v6001, -inf
    %v6062 = vmax.f32 %v6058, %v6061
    %v6063 = vsel %vm333, %v6003, -inf
    %v6064 = vmax.f32 %v6060, %v6063
    %v6065 = vsel %vm333, %v6005, -inf
    %v6066 = vmax.f32 %v6062, %v6065
    %v6067 = vsel %vm333, %v6007, -inf
    %v6068 = vmax.f32 %v6064, %v6067
    %v6069 = vsel %vm333, %v6009, -inf
    %v6070 = vmax.f32 %v6066, %v6069
    %v6071 = vsel %vm333, %v6011, -inf
    %v6072 = vmax.f32 %v6068, %v6071
    %v6073 = vsel %vm333, %v6013, -inf
    %v6074 = vmax.f32 %v6070, %v6073
    %v6075 = vsel %vm333, %v6015, -inf
    %v6076 = vmax.f32 %v6072, %v6075
    %v6077 = vsel %vm333, %v6017, -inf
    %v6078 = vmax.f32 %v6074, %v6077
    %v6079 = vsel %vm333, %v6019, -inf
    %v6080 = vmax.f32 %v6076, %v6079
    %v6081 = vsel %vm333, %v6021, -inf
    %v6082 = vmax.f32 %v6078, %v6081
    %v6083 = vsel %vm333, %v6023, -inf
    %v6084 = vmax.f32 %v6080, %v6083
    %v6085 = vmax.f32 %v6082, %v6084
    %v6086 = vsel %vm333, %v6054, -inf
    %v6087 = vsel %vm333, %v6085, -inf
    %v6088 = vmax.f32 %v6086, %v6087
    %v6089 = vrot.slane %v6088, 4
    %v6090 = vmax.f32 %v6088, %v6089
    %v6091 = vrot.slane %v6090, 2
    %v6092 = vmax.f32 %v6090, %v6091
    %v6093 = vrot.slane %v6092, 1
    %v6094 = vmax.f32 %v6092, %v6093
    %p6095 = scmp.le.s32.totalorder %s5805, %s5804
    %p6096 = scmp.le.s32.totalorder %s5807, %s5806
    %p6097 = por %p6095, %p6096
    %s6098 = scalar_select %p6097, 1, 0
    %v6099 = vstv %s6098
    %vm6100 = vcmp.eq.s32.totalorder %v6099, 1
    %v6101 = vsel %vm6100, 0.0, %v6094
    %v6102 = vadd.f32 %v5803, %v6101
    %v6103 = vmul.f32 %v6102, 0.25
    %6104 = vst.msk [vmem:[#allocation2 + $0x4] sm:$0x1] %vm1311, %v6103
    %s6105 = sld [smem:[#allocation3 + $0x50]]
    %s6106 = sld [smem:[#allocation3 + $0x51]]
    %s6107 = sld [smem:[#allocation3 + $0x52]]
    %s6108 = sld [smem:[#allocation3 + $0x53]]
    %v6109 = vstv %s6105
    %vm6110 = vcmp.le.s32.totalorder %v6109, 0
    %vm6111 = vcmp.le.s32.totalorder %v6109, 1
    %vm6112 = vcmp.le.s32.totalorder %v6109, 2
    %vm6113 = vcmp.le.s32.totalorder %v6109, 3
    %vm6114 = vcmp.le.s32.totalorder %v6109, 4
    %vm6115 = vcmp.le.s32.totalorder %v6109, 5
    %vm6116 = vcmp.le.s32.totalorder %v6109, 6
    %vm6117 = vcmp.le.s32.totalorder %v6109, 7
    %vm6118 = vcmp.le.s32.totalorder %v6109, 8
    %vm6119 = vcmp.le.s32.totalorder %v6109, 9
    %vm6120 = vcmp.le.s32.totalorder %v6109, 10
    %vm6121 = vcmp.le.s32.totalorder %v6109, 11
    %vm6122 = vcmp.le.s32.totalorder %v6109, 12
    %vm6123 = vcmp.le.s32.totalorder %v6109, 13
    %vm6124 = vcmp.le.s32.totalorder %v6109, 14
    %vm6125 = vcmp.le.s32.totalorder %v6109, 15
    %v6126 = vstv %s6106
    %vm6127 = vcmp.gt.s32.totalorder %v6126, 0
    %vm6128 = vcmp.gt.s32.totalorder %v6126, 1
    %vm6129 = vcmp.gt.s32.totalorder %v6126, 2
    %vm6130 = vcmp.gt.s32.totalorder %v6126, 3
    %vm6131 = vcmp.gt.s32.totalorder %v6126, 4
    %vm6132 = vcmp.gt.s32.totalorder %v6126, 5
    %vm6133 = vcmp.gt.s32.totalorder %v6126, 6
    %vm6134 = vcmp.gt.s32.totalorder %v6126, 7
    %vm6135 = vcmp.gt.s32.totalorder %v6126, 8
    %vm6136 = vcmp.gt.s32.totalorder %v6126, 9
    %vm6137 = vcmp.gt.s32.totalorder %v6126, 10
    %vm6138 = vcmp.gt.s32.totalorder %v6126, 11
    %vm6139 = vcmp.gt.s32.totalorder %v6126, 12
    %vm6140 = vcmp.gt.s32.totalorder %v6126, 13
    %vm6141 = vcmp.gt.s32.totalorder %v6126, 14
    %vm6142 = vcmp.gt.s32.totalorder %v6126, 15
    %vm6143 = vmand %vm6110, %vm6127
    %vm6144 = vmand %vm6111, %vm6128
    %vm6145 = vmand %vm6112, %vm6129
    %vm6146 = vmand %vm6113, %vm6130
    %vm6147 = vmand %vm6114, %vm6131
    %vm6148 = vmand %vm6115, %vm6132
    %vm6149 = vmand %vm6116, %vm6133
    %vm6150 = vmand %vm6117, %vm6134
    %vm6151 = vmand %vm6118, %vm6135
    %vm6152 = vmand %vm6119, %vm6136
    %vm6153 = vmand %vm6120, %vm6137
    %vm6154 = vmand %vm6121, %vm6138
    %vm6155 = vmand %vm6122, %vm6139
    %vm6156 = vmand %vm6123, %vm6140
    %vm6157 = vmand %vm6124, %vm6141
    %vm6158 = vmand %vm6125, %vm6142
    %v6159 = vstv %s6107
    %vm6160 = vcmp.ge.s32.totalorder %v111, %v6159
    %vm6161 = vcmp.ge.s32.totalorder %v112, %v6159
    %vm6162 = vmand %vm6143, %vm6160
    %vm6163 = vmand %vm6143, %vm6161
    %vm6164 = vmand %vm6144, %vm6160
    %vm6165 = vmand %vm6144, %vm6161
    %vm6166 = vmand %vm6145, %vm6160
    %vm6167 = vmand %vm6145, %vm6161
    %vm6168 = vmand %vm6146, %vm6160
    %vm6169 = vmand %vm6146, %vm6161
    %vm6170 = vmand %vm6147, %vm6160
    %vm6171 = vmand %vm6147, %vm6161
    %vm6172 = vmand %vm6148, %vm6160
    %vm6173 = vmand %vm6148, %vm6161
    %vm6174 = vmand %vm6149, %vm6160
    %vm6175 = vmand %vm6149, %vm6161
    %vm6176 = vmand %vm6150, %vm6160
    %vm6177 = vmand %vm6150, %vm6161
    %vm6178 = vmand %vm6151, %vm6160
    %vm6179 = vmand %vm6151, %vm6161
    %vm6180 = vmand %vm6152, %vm6160
    %vm6181 = vmand %vm6152, %vm6161
    %vm6182 = vmand %vm6153, %vm6160
    %vm6183 = vmand %vm6153, %vm6161
    %vm6184 = vmand %vm6154, %vm6160
    %vm6185 = vmand %vm6154, %vm6161
    %vm6186 = vmand %vm6155, %vm6160
    %vm6187 = vmand %vm6155, %vm6161
    %vm6188 = vmand %vm6156, %vm6160
    %vm6189 = vmand %vm6156, %vm6161
    %vm6190 = vmand %vm6157, %vm6160
    %vm6191 = vmand %vm6157, %vm6161
    %vm6192 = vmand %vm6158, %vm6160
    %vm6193 = vmand %vm6158, %vm6161
    %v6194 = vstv %s6108
    %vm6195 = vcmp.lt.s32.totalorder %v111, %v6194
    %vm6196 = vcmp.lt.s32.totalorder %v112, %v6194
    %vm6197 = vmand %vm6162, %vm6195
    %vm6198 = vmand %vm6163, %vm6196
    %vm6199 = vmand %vm6164, %vm6195
    %vm6200 = vmand %vm6165, %vm6196
    %vm6201 = vmand %vm6166, %vm6195
    %vm6202 = vmand %vm6167, %vm6196
    %vm6203 = vmand %vm6168, %vm6195
    %vm6204 = vmand %vm6169, %vm6196
    %vm6205 = vmand %vm6170, %vm6195
    %vm6206 = vmand %vm6171, %vm6196
    %vm6207 = vmand %vm6172, %vm6195
    %vm6208 = vmand %vm6173, %vm6196
    %vm6209 = vmand %vm6174, %vm6195
    %vm6210 = vmand %vm6175, %vm6196
    %vm6211 = vmand %vm6176, %vm6195
    %vm6212 = vmand %vm6177, %vm6196
    %vm6213 = vmand %vm6178, %vm6195
    %vm6214 = vmand %vm6179, %vm6196
    %vm6215 = vmand %vm6180, %vm6195
    %vm6216 = vmand %vm6181, %vm6196
    %vm6217 = vmand %vm6182, %vm6195
    %vm6218 = vmand %vm6183, %vm6196
    %vm6219 = vmand %vm6184, %vm6195
    %vm6220 = vmand %vm6185, %vm6196
    %vm6221 = vmand %vm6186, %vm6195
    %vm6222 = vmand %vm6187, %vm6196
    %vm6223 = vmand %vm6188, %vm6195
    %vm6224 = vmand %vm6189, %vm6196
    %vm6225 = vmand %vm6190, %vm6195
    %vm6226 = vmand %vm6191, %vm6196
    %vm6227 = vmand %vm6192, %vm6195
    %vm6228 = vmand %vm6193, %vm6196
    %v6229 = vsel %vm6197, 1, 0
    %v6230 = vsel %vm6198, 1, 0
    %v6231 = vsel %vm6199, 1, 0
    %v6232 = vsel %vm6200, 1, 0
    %v6233 = vsel %vm6201, 1, 0
    %v6234 = vsel %vm6202, 1, 0
    %v6235 = vsel %vm6203, 1, 0
    %v6236 = vsel %vm6204, 1, 0
    %v6237 = vsel %vm6205, 1, 0
    %v6238 = vsel %vm6206, 1, 0
    %v6239 = vsel %vm6207, 1, 0
    %v6240 = vsel %vm6208, 1, 0
    %v6241 = vsel %vm6209, 1, 0
    %v6242 = vsel %vm6210, 1, 0
    %v6243 = vsel %vm6211, 1, 0
    %v6244 = vsel %vm6212, 1, 0
    %v6245 = vsel %vm6213, 1, 0
    %v6246 = vsel %vm6214, 1, 0
    %v6247 = vsel %vm6215, 1, 0
    %v6248 = vsel %vm6216, 1, 0
    %v6249 = vsel %vm6217, 1, 0
    %v6250 = vsel %vm6218, 1, 0
    %v6251 = vsel %vm6219, 1, 0
    %v6252 = vsel %vm6220, 1, 0
    %v6253 = vsel %vm6221, 1, 0
    %v6254 = vsel %vm6222, 1, 0
    %v6255 = vsel %vm6223, 1, 0
    %v6256 = vsel %vm6224, 1, 0
    %v6257 = vsel %vm6225, 1, 0
    %v6258 = vsel %vm6226, 1, 0
    %v6259 = vsel %vm6227, 1, 0
    %v6260 = vsel %vm6228, 1, 0
    %vm6261 = vcmp.eq.s32.totalorder %v6229, 1
    %vm6262 = vcmp.eq.s32.totalorder %v6230, 1
    %vm6263 = vcmp.eq.s32.totalorder %v6231, 1
    %vm6264 = vcmp.eq.s32.totalorder %v6232, 1
    %vm6265 = vcmp.eq.s32.totalorder %v6233, 1
    %vm6266 = vcmp.eq.s32.totalorder %v6234, 1
    %vm6267 = vcmp.eq.s32.totalorder %v6235, 1
    %vm6268 = vcmp.eq.s32.totalorder %v6236, 1
    %vm6269 = vcmp.eq.s32.totalorder %v6237, 1
    %vm6270 = vcmp.eq.s32.totalorder %v6238, 1
    %vm6271 = vcmp.eq.s32.totalorder %v6239, 1
    %vm6272 = vcmp.eq.s32.totalorder %v6240, 1
    %vm6273 = vcmp.eq.s32.totalorder %v6241, 1
    %vm6274 = vcmp.eq.s32.totalorder %v6242, 1
    %vm6275 = vcmp.eq.s32.totalorder %v6243, 1
    %vm6276 = vcmp.eq.s32.totalorder %v6244, 1
    %vm6277 = vcmp.eq.s32.totalorder %v6245, 1
    %vm6278 = vcmp.eq.s32.totalorder %v6246, 1
    %vm6279 = vcmp.eq.s32.totalorder %v6247, 1
    %vm6280 = vcmp.eq.s32.totalorder %v6248, 1
    %vm6281 = vcmp.eq.s32.totalorder %v6249, 1
    %vm6282 = vcmp.eq.s32.totalorder %v6250, 1
    %vm6283 = vcmp.eq.s32.totalorder %v6251, 1
    %vm6284 = vcmp.eq.s32.totalorder %v6252, 1
    %vm6285 = vcmp.eq.s32.totalorder %v6253, 1
    %vm6286 = vcmp.eq.s32.totalorder %v6254, 1
    %vm6287 = vcmp.eq.s32.totalorder %v6255, 1
    %vm6288 = vcmp.eq.s32.totalorder %v6256, 1
    %vm6289 = vcmp.eq.s32.totalorder %v6257, 1
    %vm6290 = vcmp.eq.s32.totalorder %v6258, 1
    %vm6291 = vcmp.eq.s32.totalorder %v6259, 1
    %vm6292 = vcmp.eq.s32.totalorder %v6260, 1
    %v6293 = vsel %vm6261, %v78, -3e+38
    %v6294 = vsel %vm6262, %v79, -3e+38
    %v6295 = vsel %vm6263, %v80, -3e+38
    %v6296 = vsel %vm6264, %v81, -3e+38
    %v6297 = vsel %vm6265, %v82, -3e+38
    %v6298 = vsel %vm6266, %v83, -3e+38
    %v6299 = vsel %vm6267, %v84, -3e+38
    %v6300 = vsel %vm6268, %v85, -3e+38
    %v6301 = vsel %vm6269, %v86, -3e+38
    %v6302 = vsel %vm6270, %v87, -3e+38
    %v6303 = vsel %vm6271, %v88, -3e+38
    %v6304 = vsel %vm6272, %v89, -3e+38
    %v6305 = vsel %vm6273, %v90, -3e+38
    %v6306 = vsel %vm6274, %v91, -3e+38
    %v6307 = vsel %vm6275, %v92, -3e+38
    %v6308 = vsel %vm6276, %v93, -3e+38
    %v6309 = vsel %vm6277, %v94, -3e+38
    %v6310 = vsel %vm6278, %v95, -3e+38
    %v6311 = vsel %vm6279, %v96, -3e+38
    %v6312 = vsel %vm6280, %v97, -3e+38
    %v6313 = vsel %vm6281, %v98, -3e+38
    %v6314 = vsel %vm6282, %v99, -3e+38
    %v6315 = vsel %vm6283, %v100, -3e+38
    %v6316 = vsel %vm6284, %v101, -3e+38
    %v6317 = vsel %vm6285, %v102, -3e+38
    %v6318 = vsel %vm6286, %v103, -3e+38
    %v6319 = vsel %vm6287, %v104, -3e+38
    %v6320 = vsel %vm6288, %v105, -3e+38
    %v6321 = vsel %vm6289, %v106, -3e+38
    %v6322 = vsel %vm6290, %v107, -3e+38
    %v6323 = vsel %vm6291, %v108, -3e+38
    %v6324 = vsel %vm6292, %v109, -3e+38
    %v6325 = vsel %vm333, %v6293, -inf
    %v6326 = vsel %vm333, %v6295, -inf
    %v6327 = vsel %vm333, %v6297, -inf
    %v6328 = vmax.f32 %v6325, %v6327
    %v6329 = vsel %vm333, %v6299, -inf
    %v6330 = vmax.f32 %v6326, %v6329
    %v6331 = vsel %vm333, %v6301, -inf
    %v6332 = vmax.f32 %v6328, %v6331
    %v6333 = vsel %vm333, %v6303, -inf
    %v6334 = vmax.f32 %v6330, %v6333
    %v6335 = vsel %vm333, %v6305, -inf
    %v6336 = vmax.f32 %v6332, %v6335
    %v6337 = vsel %vm333, %v6307, -inf
    %v6338 = vmax.f32 %v6334, %v6337
    %v6339 = vsel %vm333, %v6309, -inf
    %v6340 = vmax.f32 %v6336, %v6339
    %v6341 = vsel %vm333, %v6311, -inf
    %v6342 = vmax.f32 %v6338, %v6341
    %v6343 = vsel %vm333, %v6313, -inf
    %v6344 = vmax.f32 %v6340, %v6343
    %v6345 = vsel %vm333, %v6315, -inf
    %v6346 = vmax.f32 %v6342, %v6345
    %v6347 = vsel %vm333, %v6317, -inf
    %v6348 = vmax.f32 %v6344, %v6347
    %v6349 = vsel %vm333, %v6319, -inf
    %v6350 = vmax.f32 %v6346, %v6349
    %v6351 = vsel %vm333, %v6321, -inf
    %v6352 = vmax.f32 %v6348, %v6351
    %v6353 = vsel %vm333, %v6323, -inf
    %v6354 = vmax.f32 %v6350, %v6353
    %v6355 = vmax.f32 %v6352, %v6354
    %v6356 = vsel %vm333, %v6294, -inf
    %v6357 = vsel %vm333, %v6296, -inf
    %v6358 = vsel %vm333, %v6298, -inf
    %v6359 = vmax.f32 %v6356, %v6358
    %v6360 = vsel %vm333, %v6300, -inf
    %v6361 = vmax.f32 %v6357, %v6360
    %v6362 = vsel %vm333, %v6302, -inf
    %v6363 = vmax.f32 %v6359, %v6362
    %v6364 = vsel %vm333, %v6304, -inf
    %v6365 = vmax.f32 %v6361, %v6364
    %v6366 = vsel %vm333, %v6306, -inf
    %v6367 = vmax.f32 %v6363, %v6366
    %v6368 = vsel %vm333, %v6308, -inf
    %v6369 = vmax.f32 %v6365, %v6368
    %v6370 = vsel %vm333, %v6310, -inf
    %v6371 = vmax.f32 %v6367, %v6370
    %v6372 = vsel %vm333, %v6312, -inf
    %v6373 = vmax.f32 %v6369, %v6372
    %v6374 = vsel %vm333, %v6314, -inf
    %v6375 = vmax.f32 %v6371, %v6374
    %v6376 = vsel %vm333, %v6316, -inf
    %v6377 = vmax.f32 %v6373, %v6376
    %v6378 = vsel %vm333, %v6318, -inf
    %v6379 = vmax.f32 %v6375, %v6378
    %v6380 = vsel %vm333, %v6320, -inf
    %v6381 = vmax.f32 %v6377, %v6380
    %v6382 = vsel %vm333, %v6322, -inf
    %v6383 = vmax.f32 %v6379, %v6382
    %v6384 = vsel %vm333, %v6324, -inf
    %v6385 = vmax.f32 %v6381, %v6384
    %v6386 = vmax.f32 %v6383, %v6385
    %v6387 = vsel %vm333, %v6355, -inf
    %v6388 = vsel %vm333, %v6386, -inf
    %v6389 = vmax.f32 %v6387, %v6388
    %v6390 = vrot.slane %v6389, 4
    %v6391 = vmax.f32 %v6389, %v6390
    %v6392 = vrot.slane %v6391, 2
    %v6393 = vmax.f32 %v6391, %v6392
    %v6394 = vrot.slane %v6393, 1
    %v6395 = vmax.f32 %v6393, %v6394
    %p6396 = scmp.le.s32.totalorder %s6106, %s6105
    %p6397 = scmp.le.s32.totalorder %s6108, %s6107
    %p6398 = por %p6396, %p6397
    %s6399 = scalar_select %p6398, 1, 0
    %v6400 = vstv %s6399
    %vm6401 = vcmp.eq.s32.totalorder %v6400, 1
    %v6402 = vsel %vm6401, 0.0, %v6395
    %v6403 = vadd.f32 %v6402, 0.0
    %s6404 = sld [smem:[#allocation3 + $0x54]]
    %s6405 = sld [smem:[#allocation3 + $0x55]]
    %s6406 = sld [smem:[#allocation3 + $0x56]]
    %s6407 = sld [smem:[#allocation3 + $0x57]]
    %v6408 = vstv %s6404
    %vm6409 = vcmp.le.s32.totalorder %v6408, 0
    %vm6410 = vcmp.le.s32.totalorder %v6408, 1
    %vm6411 = vcmp.le.s32.totalorder %v6408, 2
    %vm6412 = vcmp.le.s32.totalorder %v6408, 3
    %vm6413 = vcmp.le.s32.totalorder %v6408, 4
    %vm6414 = vcmp.le.s32.totalorder %v6408, 5
    %vm6415 = vcmp.le.s32.totalorder %v6408, 6
    %vm6416 = vcmp.le.s32.totalorder %v6408, 7
    %vm6417 = vcmp.le.s32.totalorder %v6408, 8
    %vm6418 = vcmp.le.s32.totalorder %v6408, 9
    %vm6419 = vcmp.le.s32.totalorder %v6408, 10
    %vm6420 = vcmp.le.s32.totalorder %v6408, 11
    %vm6421 = vcmp.le.s32.totalorder %v6408, 12
    %vm6422 = vcmp.le.s32.totalorder %v6408, 13
    %vm6423 = vcmp.le.s32.totalorder %v6408, 14
    %vm6424 = vcmp.le.s32.totalorder %v6408, 15
    %v6425 = vstv %s6405
    %vm6426 = vcmp.gt.s32.totalorder %v6425, 0
    %vm6427 = vcmp.gt.s32.totalorder %v6425, 1
    %vm6428 = vcmp.gt.s32.totalorder %v6425, 2
    %vm6429 = vcmp.gt.s32.totalorder %v6425, 3
    %vm6430 = vcmp.gt.s32.totalorder %v6425, 4
    %vm6431 = vcmp.gt.s32.totalorder %v6425, 5
    %vm6432 = vcmp.gt.s32.totalorder %v6425, 6
    %vm6433 = vcmp.gt.s32.totalorder %v6425, 7
    %vm6434 = vcmp.gt.s32.totalorder %v6425, 8
    %vm6435 = vcmp.gt.s32.totalorder %v6425, 9
    %vm6436 = vcmp.gt.s32.totalorder %v6425, 10
    %vm6437 = vcmp.gt.s32.totalorder %v6425, 11
    %vm6438 = vcmp.gt.s32.totalorder %v6425, 12
    %vm6439 = vcmp.gt.s32.totalorder %v6425, 13
    %vm6440 = vcmp.gt.s32.totalorder %v6425, 14
    %vm6441 = vcmp.gt.s32.totalorder %v6425, 15
    %vm6442 = vmand %vm6409, %vm6426
    %vm6443 = vmand %vm6410, %vm6427
    %vm6444 = vmand %vm6411, %vm6428
    %vm6445 = vmand %vm6412, %vm6429
    %vm6446 = vmand %vm6413, %vm6430
    %vm6447 = vmand %vm6414, %vm6431
    %vm6448 = vmand %vm6415, %vm6432
    %vm6449 = vmand %vm6416, %vm6433
    %vm6450 = vmand %vm6417, %vm6434
    %vm6451 = vmand %vm6418, %vm6435
    %vm6452 = vmand %vm6419, %vm6436
    %vm6453 = vmand %vm6420, %vm6437
    %vm6454 = vmand %vm6421, %vm6438
    %vm6455 = vmand %vm6422, %vm6439
    %vm6456 = vmand %vm6423, %vm6440
    %vm6457 = vmand %vm6424, %vm6441
    %v6458 = vstv %s6406
    %vm6459 = vcmp.ge.s32.totalorder %v111, %v6458
    %vm6460 = vcmp.ge.s32.totalorder %v112, %v6458
    %vm6461 = vmand %vm6442, %vm6459
    %vm6462 = vmand %vm6442, %vm6460
    %vm6463 = vmand %vm6443, %vm6459
    %vm6464 = vmand %vm6443, %vm6460
    %vm6465 = vmand %vm6444, %vm6459
    %vm6466 = vmand %vm6444, %vm6460
    %vm6467 = vmand %vm6445, %vm6459
    %vm6468 = vmand %vm6445, %vm6460
    %vm6469 = vmand %vm6446, %vm6459
    %vm6470 = vmand %vm6446, %vm6460
    %vm6471 = vmand %vm6447, %vm6459
    %vm6472 = vmand %vm6447, %vm6460
    %vm6473 = vmand %vm6448, %vm6459
    %vm6474 = vmand %vm6448, %vm6460
    %vm6475 = vmand %vm6449, %vm6459
    %vm6476 = vmand %vm6449, %vm6460
    %vm6477 = vmand %vm6450, %vm6459
    %vm6478 = vmand %vm6450, %vm6460
    %vm6479 = vmand %vm6451, %vm6459
    %vm6480 = vmand %vm6451, %vm6460
    %vm6481 = vmand %vm6452, %vm6459
    %vm6482 = vmand %vm6452, %vm6460
    %vm6483 = vmand %vm6453, %vm6459
    %vm6484 = vmand %vm6453, %vm6460
    %vm6485 = vmand %vm6454, %vm6459
    %vm6486 = vmand %vm6454, %vm6460
    %vm6487 = vmand %vm6455, %vm6459
    %vm6488 = vmand %vm6455, %vm6460
    %vm6489 = vmand %vm6456, %vm6459
    %vm6490 = vmand %vm6456, %vm6460
    %vm6491 = vmand %vm6457, %vm6459
    %vm6492 = vmand %vm6457, %vm6460
    %v6493 = vstv %s6407
    %vm6494 = vcmp.lt.s32.totalorder %v111, %v6493
    %vm6495 = vcmp.lt.s32.totalorder %v112, %v6493
    %vm6496 = vmand %vm6461, %vm6494
    %vm6497 = vmand %vm6462, %vm6495
    %vm6498 = vmand %vm6463, %vm6494
    %vm6499 = vmand %vm6464, %vm6495
    %vm6500 = vmand %vm6465, %vm6494
    %vm6501 = vmand %vm6466, %vm6495
    %vm6502 = vmand %vm6467, %vm6494
    %vm6503 = vmand %vm6468, %vm6495
    %vm6504 = vmand %vm6469, %vm6494
    %vm6505 = vmand %vm6470, %vm6495
    %vm6506 = vmand %vm6471, %vm6494
    %vm6507 = vmand %vm6472, %vm6495
    %vm6508 = vmand %vm6473, %vm6494
    %vm6509 = vmand %vm6474, %vm6495
    %vm6510 = vmand %vm6475, %vm6494
    %vm6511 = vmand %vm6476, %vm6495
    %vm6512 = vmand %vm6477, %vm6494
    %vm6513 = vmand %vm6478, %vm6495
    %vm6514 = vmand %vm6479, %vm6494
    %vm6515 = vmand %vm6480, %vm6495
    %vm6516 = vmand %vm6481, %vm6494
    %vm6517 = vmand %vm6482, %vm6495
    %vm6518 = vmand %vm6483, %vm6494
    %vm6519 = vmand %vm6484, %vm6495
    %vm6520 = vmand %vm6485, %vm6494
    %vm6521 = vmand %vm6486, %vm6495
    %vm6522 = vmand %vm6487, %vm6494
    %vm6523 = vmand %vm6488, %vm6495
    %vm6524 = vmand %vm6489, %vm6494
    %vm6525 = vmand %vm6490, %vm6495
    %vm6526 = vmand %vm6491, %vm6494
    %vm6527 = vmand %vm6492, %vm6495
    %v6528 = vsel %vm6496, 1, 0
    %v6529 = vsel %vm6497, 1, 0
    %v6530 = vsel %vm6498, 1, 0
    %v6531 = vsel %vm6499, 1, 0
    %v6532 = vsel %vm6500, 1, 0
    %v6533 = vsel %vm6501, 1, 0
    %v6534 = vsel %vm6502, 1, 0
    %v6535 = vsel %vm6503, 1, 0
    %v6536 = vsel %vm6504, 1, 0
    %v6537 = vsel %vm6505, 1, 0
    %v6538 = vsel %vm6506, 1, 0
    %v6539 = vsel %vm6507, 1, 0
    %v6540 = vsel %vm6508, 1, 0
    %v6541 = vsel %vm6509, 1, 0
    %v6542 = vsel %vm6510, 1, 0
    %v6543 = vsel %vm6511, 1, 0
    %v6544 = vsel %vm6512, 1, 0
    %v6545 = vsel %vm6513, 1, 0
    %v6546 = vsel %vm6514, 1, 0
    %v6547 = vsel %vm6515, 1, 0
    %v6548 = vsel %vm6516, 1, 0
    %v6549 = vsel %vm6517, 1, 0
    %v6550 = vsel %vm6518, 1, 0
    %v6551 = vsel %vm6519, 1, 0
    %v6552 = vsel %vm6520, 1, 0
    %v6553 = vsel %vm6521, 1, 0
    %v6554 = vsel %vm6522, 1, 0
    %v6555 = vsel %vm6523, 1, 0
    %v6556 = vsel %vm6524, 1, 0
    %v6557 = vsel %vm6525, 1, 0
    %v6558 = vsel %vm6526, 1, 0
    %v6559 = vsel %vm6527, 1, 0
    %vm6560 = vcmp.eq.s32.totalorder %v6528, 1
    %vm6561 = vcmp.eq.s32.totalorder %v6529, 1
    %vm6562 = vcmp.eq.s32.totalorder %v6530, 1
    %vm6563 = vcmp.eq.s32.totalorder %v6531, 1
    %vm6564 = vcmp.eq.s32.totalorder %v6532, 1
    %vm6565 = vcmp.eq.s32.totalorder %v6533, 1
    %vm6566 = vcmp.eq.s32.totalorder %v6534, 1
    %vm6567 = vcmp.eq.s32.totalorder %v6535, 1
    %vm6568 = vcmp.eq.s32.totalorder %v6536, 1
    %vm6569 = vcmp.eq.s32.totalorder %v6537, 1
    %vm6570 = vcmp.eq.s32.totalorder %v6538, 1
    %vm6571 = vcmp.eq.s32.totalorder %v6539, 1
    %vm6572 = vcmp.eq.s32.totalorder %v6540, 1
    %vm6573 = vcmp.eq.s32.totalorder %v6541, 1
    %vm6574 = vcmp.eq.s32.totalorder %v6542, 1
    %vm6575 = vcmp.eq.s32.totalorder %v6543, 1
    %vm6576 = vcmp.eq.s32.totalorder %v6544, 1
    %vm6577 = vcmp.eq.s32.totalorder %v6545, 1
    %vm6578 = vcmp.eq.s32.totalorder %v6546, 1
    %vm6579 = vcmp.eq.s32.totalorder %v6547, 1
    %vm6580 = vcmp.eq.s32.totalorder %v6548, 1
    %vm6581 = vcmp.eq.s32.totalorder %v6549, 1
    %vm6582 = vcmp.eq.s32.totalorder %v6550, 1
    %vm6583 = vcmp.eq.s32.totalorder %v6551, 1
    %vm6584 = vcmp.eq.s32.totalorder %v6552, 1
    %vm6585 = vcmp.eq.s32.totalorder %v6553, 1
    %vm6586 = vcmp.eq.s32.totalorder %v6554, 1
    %vm6587 = vcmp.eq.s32.totalorder %v6555, 1
    %vm6588 = vcmp.eq.s32.totalorder %v6556, 1
    %vm6589 = vcmp.eq.s32.totalorder %v6557, 1
    %vm6590 = vcmp.eq.s32.totalorder %v6558, 1
    %vm6591 = vcmp.eq.s32.totalorder %v6559, 1
    %v6592 = vsel %vm6560, %v78, -3e+38
    %v6593 = vsel %vm6561, %v79, -3e+38
    %v6594 = vsel %vm6562, %v80, -3e+38
    %v6595 = vsel %vm6563, %v81, -3e+38
    %v6596 = vsel %vm6564, %v82, -3e+38
    %v6597 = vsel %vm6565, %v83, -3e+38
    %v6598 = vsel %vm6566, %v84, -3e+38
    %v6599 = vsel %vm6567, %v85, -3e+38
    %v6600 = vsel %vm6568, %v86, -3e+38
    %v6601 = vsel %vm6569, %v87, -3e+38
    %v6602 = vsel %vm6570, %v88, -3e+38
    %v6603 = vsel %vm6571, %v89, -3e+38
    %v6604 = vsel %vm6572, %v90, -3e+38
    %v6605 = vsel %vm6573, %v91, -3e+38
    %v6606 = vsel %vm6574, %v92, -3e+38
    %v6607 = vsel %vm6575, %v93, -3e+38
    %v6608 = vsel %vm6576, %v94, -3e+38
    %v6609 = vsel %vm6577, %v95, -3e+38
    %v6610 = vsel %vm6578, %v96, -3e+38
    %v6611 = vsel %vm6579, %v97, -3e+38
    %v6612 = vsel %vm6580, %v98, -3e+38
    %v6613 = vsel %vm6581, %v99, -3e+38
    %v6614 = vsel %vm6582, %v100, -3e+38
    %v6615 = vsel %vm6583, %v101, -3e+38
    %v6616 = vsel %vm6584, %v102, -3e+38
    %v6617 = vsel %vm6585, %v103, -3e+38
    %v6618 = vsel %vm6586, %v104, -3e+38
    %v6619 = vsel %vm6587, %v105, -3e+38
    %v6620 = vsel %vm6588, %v106, -3e+38
    %v6621 = vsel %vm6589, %v107, -3e+38
    %v6622 = vsel %vm6590, %v108, -3e+38
    %v6623 = vsel %vm6591, %v109, -3e+38
    %v6624 = vsel %vm333, %v6592, -inf
    %v6625 = vsel %vm333, %v6594, -inf
    %v6626 = vsel %vm333, %v6596, -inf
    %v6627 = vmax.f32 %v6624, %v6626
    %v6628 = vsel %vm333, %v6598, -inf
    %v6629 = vmax.f32 %v6625, %v6628
    %v6630 = vsel %vm333, %v6600, -inf
    %v6631 = vmax.f32 %v6627, %v6630
    %v6632 = vsel %vm333, %v6602, -inf
    %v6633 = vmax.f32 %v6629, %v6632
    %v6634 = vsel %vm333, %v6604, -inf
    %v6635 = vmax.f32 %v6631, %v6634
    %v6636 = vsel %vm333, %v6606, -inf
    %v6637 = vmax.f32 %v6633, %v6636
    %v6638 = vsel %vm333, %v6608, -inf
    %v6639 = vmax.f32 %v6635, %v6638
    %v6640 = vsel %vm333, %v6610, -inf
    %v6641 = vmax.f32 %v6637, %v6640
    %v6642 = vsel %vm333, %v6612, -inf
    %v6643 = vmax.f32 %v6639, %v6642
    %v6644 = vsel %vm333, %v6614, -inf
    %v6645 = vmax.f32 %v6641, %v6644
    %v6646 = vsel %vm333, %v6616, -inf
    %v6647 = vmax.f32 %v6643, %v6646
    %v6648 = vsel %vm333, %v6618, -inf
    %v6649 = vmax.f32 %v6645, %v6648
    %v6650 = vsel %vm333, %v6620, -inf
    %v6651 = vmax.f32 %v6647, %v6650
    %v6652 = vsel %vm333, %v6622, -inf
    %v6653 = vmax.f32 %v6649, %v6652
    %v6654 = vmax.f32 %v6651, %v6653
    %v6655 = vsel %vm333, %v6593, -inf
    %v6656 = vsel %vm333, %v6595, -inf
    %v6657 = vsel %vm333, %v6597, -inf
    %v6658 = vmax.f32 %v6655, %v6657
    %v6659 = vsel %vm333, %v6599, -inf
    %v6660 = vmax.f32 %v6656, %v6659
    %v6661 = vsel %vm333, %v6601, -inf
    %v6662 = vmax.f32 %v6658, %v6661
    %v6663 = vsel %vm333, %v6603, -inf
    %v6664 = vmax.f32 %v6660, %v6663
    %v6665 = vsel %vm333, %v6605, -inf
    %v6666 = vmax.f32 %v6662, %v6665
    %v6667 = vsel %vm333, %v6607, -inf
    %v6668 = vmax.f32 %v6664, %v6667
    %v6669 = vsel %vm333, %v6609, -inf
    %v6670 = vmax.f32 %v6666, %v6669
    %v6671 = vsel %vm333, %v6611, -inf
    %v6672 = vmax.f32 %v6668, %v6671
    %v6673 = vsel %vm333, %v6613, -inf
    %v6674 = vmax.f32 %v6670, %v6673
    %v6675 = vsel %vm333, %v6615, -inf
    %v6676 = vmax.f32 %v6672, %v6675
    %v6677 = vsel %vm333, %v6617, -inf
    %v6678 = vmax.f32 %v6674, %v6677
    %v6679 = vsel %vm333, %v6619, -inf
    %v6680 = vmax.f32 %v6676, %v6679
    %v6681 = vsel %vm333, %v6621, -inf
    %v6682 = vmax.f32 %v6678, %v6681
    %v6683 = vsel %vm333, %v6623, -inf
    %v6684 = vmax.f32 %v6680, %v6683
    %v6685 = vmax.f32 %v6682, %v6684
    %v6686 = vsel %vm333, %v6654, -inf
    %v6687 = vsel %vm333, %v6685, -inf
    %v6688 = vmax.f32 %v6686, %v6687
    %v6689 = vrot.slane %v6688, 4
    %v6690 = vmax.f32 %v6688, %v6689
    %v6691 = vrot.slane %v6690, 2
    %v6692 = vmax.f32 %v6690, %v6691
    %v6693 = vrot.slane %v6692, 1
    %v6694 = vmax.f32 %v6692, %v6693
    %p6695 = scmp.le.s32.totalorder %s6405, %s6404
    %p6696 = scmp.le.s32.totalorder %s6407, %s6406
    %p6697 = por %p6695, %p6696
    %s6698 = scalar_select %p6697, 1, 0
    %v6699 = vstv %s6698
    %vm6700 = vcmp.eq.s32.totalorder %v6699, 1
    %v6701 = vsel %vm6700, 0.0, %v6694
    %v6702 = vadd.f32 %v6403, %v6701
    %s6703 = sld [smem:[#allocation3 + $0x58]]
    %s6704 = sld [smem:[#allocation3 + $0x59]]
    %s6705 = sld [smem:[#allocation3 + $0x5a]]
    %s6706 = sld [smem:[#allocation3 + $0x5b]]
    %v6707 = vstv %s6703
    %vm6708 = vcmp.le.s32.totalorder %v6707, 0
    %vm6709 = vcmp.le.s32.totalorder %v6707, 1
    %vm6710 = vcmp.le.s32.totalorder %v6707, 2
    %vm6711 = vcmp.le.s32.totalorder %v6707, 3
    %vm6712 = vcmp.le.s32.totalorder %v6707, 4
    %vm6713 = vcmp.le.s32.totalorder %v6707, 5
    %vm6714 = vcmp.le.s32.totalorder %v6707, 6
    %vm6715 = vcmp.le.s32.totalorder %v6707, 7
    %vm6716 = vcmp.le.s32.totalorder %v6707, 8
    %vm6717 = vcmp.le.s32.totalorder %v6707, 9
    %vm6718 = vcmp.le.s32.totalorder %v6707, 10
    %vm6719 = vcmp.le.s32.totalorder %v6707, 11
    %vm6720 = vcmp.le.s32.totalorder %v6707, 12
    %vm6721 = vcmp.le.s32.totalorder %v6707, 13
    %vm6722 = vcmp.le.s32.totalorder %v6707, 14
    %vm6723 = vcmp.le.s32.totalorder %v6707, 15
    %v6724 = vstv %s6704
    %vm6725 = vcmp.gt.s32.totalorder %v6724, 0
    %vm6726 = vcmp.gt.s32.totalorder %v6724, 1
    %vm6727 = vcmp.gt.s32.totalorder %v6724, 2
    %vm6728 = vcmp.gt.s32.totalorder %v6724, 3
    %vm6729 = vcmp.gt.s32.totalorder %v6724, 4
    %vm6730 = vcmp.gt.s32.totalorder %v6724, 5
    %vm6731 = vcmp.gt.s32.totalorder %v6724, 6
    %vm6732 = vcmp.gt.s32.totalorder %v6724, 7
    %vm6733 = vcmp.gt.s32.totalorder %v6724, 8
    %vm6734 = vcmp.gt.s32.totalorder %v6724, 9
    %vm6735 = vcmp.gt.s32.totalorder %v6724, 10
    %vm6736 = vcmp.gt.s32.totalorder %v6724, 11
    %vm6737 = vcmp.gt.s32.totalorder %v6724, 12
    %vm6738 = vcmp.gt.s32.totalorder %v6724, 13
    %vm6739 = vcmp.gt.s32.totalorder %v6724, 14
    %vm6740 = vcmp.gt.s32.totalorder %v6724, 15
    %vm6741 = vmand %vm6708, %vm6725
    %vm6742 = vmand %vm6709, %vm6726
    %vm6743 = vmand %vm6710, %vm6727
    %vm6744 = vmand %vm6711, %vm6728
    %vm6745 = vmand %vm6712, %vm6729
    %vm6746 = vmand %vm6713, %vm6730
    %vm6747 = vmand %vm6714, %vm6731
    %vm6748 = vmand %vm6715, %vm6732
    %vm6749 = vmand %vm6716, %vm6733
    %vm6750 = vmand %vm6717, %vm6734
    %vm6751 = vmand %vm6718, %vm6735
    %vm6752 = vmand %vm6719, %vm6736
    %vm6753 = vmand %vm6720, %vm6737
    %vm6754 = vmand %vm6721, %vm6738
    %vm6755 = vmand %vm6722, %vm6739
    %vm6756 = vmand %vm6723, %vm6740
    %v6757 = vstv %s6705
    %vm6758 = vcmp.ge.s32.totalorder %v111, %v6757
    %vm6759 = vcmp.ge.s32.totalorder %v112, %v6757
    %vm6760 = vmand %vm6741, %vm6758
    %vm6761 = vmand %vm6741, %vm6759
    %vm6762 = vmand %vm6742, %vm6758
    %vm6763 = vmand %vm6742, %vm6759
    %vm6764 = vmand %vm6743, %vm6758
    %vm6765 = vmand %vm6743, %vm6759
    %vm6766 = vmand %vm6744, %vm6758
    %vm6767 = vmand %vm6744, %vm6759
    %vm6768 = vmand %vm6745, %vm6758
    %vm6769 = vmand %vm6745, %vm6759
    %vm6770 = vmand %vm6746, %vm6758
    %vm6771 = vmand %vm6746, %vm6759
    %vm6772 = vmand %vm6747, %vm6758
    %vm6773 = vmand %vm6747, %vm6759
    %vm6774 = vmand %vm6748, %vm6758
    %vm6775 = vmand %vm6748, %vm6759
    %vm6776 = vmand %vm6749, %vm6758
    %vm6777 = vmand %vm6749, %vm6759
    %vm6778 = vmand %vm6750, %vm6758
    %vm6779 = vmand %vm6750, %vm6759
    %vm6780 = vmand %vm6751, %vm6758
    %vm6781 = vmand %vm6751, %vm6759
    %vm6782 = vmand %vm6752, %vm6758
    %vm6783 = vmand %vm6752, %vm6759
    %vm6784 = vmand %vm6753, %vm6758
    %vm6785 = vmand %vm6753, %vm6759
    %vm6786 = vmand %vm6754, %vm6758
    %vm6787 = vmand %vm6754, %vm6759
    %vm6788 = vmand %vm6755, %vm6758
    %vm6789 = vmand %vm6755, %vm6759
    %vm6790 = vmand %vm6756, %vm6758
    %vm6791 = vmand %vm6756, %vm6759
    %v6792 = vstv %s6706
    %vm6793 = vcmp.lt.s32.totalorder %v111, %v6792
    %vm6794 = vcmp.lt.s32.totalorder %v112, %v6792
    %vm6795 = vmand %vm6760, %vm6793
    %vm6796 = vmand %vm6761, %vm6794
    %vm6797 = vmand %vm6762, %vm6793
    %vm6798 = vmand %vm6763, %vm6794
    %vm6799 = vmand %vm6764, %vm6793
    %vm6800 = vmand %vm6765, %vm6794
    %vm6801 = vmand %vm6766, %vm6793
    %vm6802 = vmand %vm6767, %vm6794
    %vm6803 = vmand %vm6768, %vm6793
    %vm6804 = vmand %vm6769, %vm6794
    %vm6805 = vmand %vm6770, %vm6793
    %vm6806 = vmand %vm6771, %vm6794
    %vm6807 = vmand %vm6772, %vm6793
    %vm6808 = vmand %vm6773, %vm6794
    %vm6809 = vmand %vm6774, %vm6793
    %vm6810 = vmand %vm6775, %vm6794
    %vm6811 = vmand %vm6776, %vm6793
    %vm6812 = vmand %vm6777, %vm6794
    %vm6813 = vmand %vm6778, %vm6793
    %vm6814 = vmand %vm6779, %vm6794
    %vm6815 = vmand %vm6780, %vm6793
    %vm6816 = vmand %vm6781, %vm6794
    %vm6817 = vmand %vm6782, %vm6793
    %vm6818 = vmand %vm6783, %vm6794
    %vm6819 = vmand %vm6784, %vm6793
    %vm6820 = vmand %vm6785, %vm6794
    %vm6821 = vmand %vm6786, %vm6793
    %vm6822 = vmand %vm6787, %vm6794
    %vm6823 = vmand %vm6788, %vm6793
    %vm6824 = vmand %vm6789, %vm6794
    %vm6825 = vmand %vm6790, %vm6793
    %vm6826 = vmand %vm6791, %vm6794
    %v6827 = vsel %vm6795, 1, 0
    %v6828 = vsel %vm6796, 1, 0
    %v6829 = vsel %vm6797, 1, 0
    %v6830 = vsel %vm6798, 1, 0
    %v6831 = vsel %vm6799, 1, 0
    %v6832 = vsel %vm6800, 1, 0
    %v6833 = vsel %vm6801, 1, 0
    %v6834 = vsel %vm6802, 1, 0
    %v6835 = vsel %vm6803, 1, 0
    %v6836 = vsel %vm6804, 1, 0
    %v6837 = vsel %vm6805, 1, 0
    %v6838 = vsel %vm6806, 1, 0
    %v6839 = vsel %vm6807, 1, 0
    %v6840 = vsel %vm6808, 1, 0
    %v6841 = vsel %vm6809, 1, 0
    %v6842 = vsel %vm6810, 1, 0
    %v6843 = vsel %vm6811, 1, 0
    %v6844 = vsel %vm6812, 1, 0
    %v6845 = vsel %vm6813, 1, 0
    %v6846 = vsel %vm6814, 1, 0
    %v6847 = vsel %vm6815, 1, 0
    %v6848 = vsel %vm6816, 1, 0
    %v6849 = vsel %vm6817, 1, 0
    %v6850 = vsel %vm6818, 1, 0
    %v6851 = vsel %vm6819, 1, 0
    %v6852 = vsel %vm6820, 1, 0
    %v6853 = vsel %vm6821, 1, 0
    %v6854 = vsel %vm6822, 1, 0
    %v6855 = vsel %vm6823, 1, 0
    %v6856 = vsel %vm6824, 1, 0
    %v6857 = vsel %vm6825, 1, 0
    %v6858 = vsel %vm6826, 1, 0
    %vm6859 = vcmp.eq.s32.totalorder %v6827, 1
    %vm6860 = vcmp.eq.s32.totalorder %v6828, 1
    %vm6861 = vcmp.eq.s32.totalorder %v6829, 1
    %vm6862 = vcmp.eq.s32.totalorder %v6830, 1
    %vm6863 = vcmp.eq.s32.totalorder %v6831, 1
    %vm6864 = vcmp.eq.s32.totalorder %v6832, 1
    %vm6865 = vcmp.eq.s32.totalorder %v6833, 1
    %vm6866 = vcmp.eq.s32.totalorder %v6834, 1
    %vm6867 = vcmp.eq.s32.totalorder %v6835, 1
    %vm6868 = vcmp.eq.s32.totalorder %v6836, 1
    %vm6869 = vcmp.eq.s32.totalorder %v6837, 1
    %vm6870 = vcmp.eq.s32.totalorder %v6838, 1
    %vm6871 = vcmp.eq.s32.totalorder %v6839, 1
    %vm6872 = vcmp.eq.s32.totalorder %v6840, 1
    %vm6873 = vcmp.eq.s32.totalorder %v6841, 1
    %vm6874 = vcmp.eq.s32.totalorder %v6842, 1
    %vm6875 = vcmp.eq.s32.totalorder %v6843, 1
    %vm6876 = vcmp.eq.s32.totalorder %v6844, 1
    %vm6877 = vcmp.eq.s32.totalorder %v6845, 1
    %vm6878 = vcmp.eq.s32.totalorder %v6846, 1
    %vm6879 = vcmp.eq.s32.totalorder %v6847, 1
    %vm6880 = vcmp.eq.s32.totalorder %v6848, 1
    %vm6881 = vcmp.eq.s32.totalorder %v6849, 1
    %vm6882 = vcmp.eq.s32.totalorder %v6850, 1
    %vm6883 = vcmp.eq.s32.totalorder %v6851, 1
    %vm6884 = vcmp.eq.s32.totalorder %v6852, 1
    %vm6885 = vcmp.eq.s32.totalorder %v6853, 1
    %vm6886 = vcmp.eq.s32.totalorder %v6854, 1
    %vm6887 = vcmp.eq.s32.totalorder %v6855, 1
    %vm6888 = vcmp.eq.s32.totalorder %v6856, 1
    %vm6889 = vcmp.eq.s32.totalorder %v6857, 1
    %vm6890 = vcmp.eq.s32.totalorder %v6858, 1
    %v6891 = vsel %vm6859, %v78, -3e+38
    %v6892 = vsel %vm6860, %v79, -3e+38
    %v6893 = vsel %vm6861, %v80, -3e+38
    %v6894 = vsel %vm6862, %v81, -3e+38
    %v6895 = vsel %vm6863, %v82, -3e+38
    %v6896 = vsel %vm6864, %v83, -3e+38
    %v6897 = vsel %vm6865, %v84, -3e+38
    %v6898 = vsel %vm6866, %v85, -3e+38
    %v6899 = vsel %vm6867, %v86, -3e+38
    %v6900 = vsel %vm6868, %v87, -3e+38
    %v6901 = vsel %vm6869, %v88, -3e+38
    %v6902 = vsel %vm6870, %v89, -3e+38
    %v6903 = vsel %vm6871, %v90, -3e+38
    %v6904 = vsel %vm6872, %v91, -3e+38
    %v6905 = vsel %vm6873, %v92, -3e+38
    %v6906 = vsel %vm6874, %v93, -3e+38
    %v6907 = vsel %vm6875, %v94, -3e+38
    %v6908 = vsel %vm6876, %v95, -3e+38
    %v6909 = vsel %vm6877, %v96, -3e+38
    %v6910 = vsel %vm6878, %v97, -3e+38
    %v6911 = vsel %vm6879, %v98, -3e+38
    %v6912 = vsel %vm6880, %v99, -3e+38
    %v6913 = vsel %vm6881, %v100, -3e+38
    %v6914 = vsel %vm6882, %v101, -3e+38
    %v6915 = vsel %vm6883, %v102, -3e+38
    %v6916 = vsel %vm6884, %v103, -3e+38
    %v6917 = vsel %vm6885, %v104, -3e+38
    %v6918 = vsel %vm6886, %v105, -3e+38
    %v6919 = vsel %vm6887, %v106, -3e+38
    %v6920 = vsel %vm6888, %v107, -3e+38
    %v6921 = vsel %vm6889, %v108, -3e+38
    %v6922 = vsel %vm6890, %v109, -3e+38
    %v6923 = vsel %vm333, %v6891, -inf
    %v6924 = vsel %vm333, %v6893, -inf
    %v6925 = vsel %vm333, %v6895, -inf
    %v6926 = vmax.f32 %v6923, %v6925
    %v6927 = vsel %vm333, %v6897, -inf
    %v6928 = vmax.f32 %v6924, %v6927
    %v6929 = vsel %vm333, %v6899, -inf
    %v6930 = vmax.f32 %v6926, %v6929
    %v6931 = vsel %vm333, %v6901, -inf
    %v6932 = vmax.f32 %v6928, %v6931
    %v6933 = vsel %vm333, %v6903, -inf
    %v6934 = vmax.f32 %v6930, %v6933
    %v6935 = vsel %vm333, %v6905, -inf
    %v6936 = vmax.f32 %v6932, %v6935
    %v6937 = vsel %vm333, %v6907, -inf
    %v6938 = vmax.f32 %v6934, %v6937
    %v6939 = vsel %vm333, %v6909, -inf
    %v6940 = vmax.f32 %v6936, %v6939
    %v6941 = vsel %vm333, %v6911, -inf
    %v6942 = vmax.f32 %v6938, %v6941
    %v6943 = vsel %vm333, %v6913, -inf
    %v6944 = vmax.f32 %v6940, %v6943
    %v6945 = vsel %vm333, %v6915, -inf
    %v6946 = vmax.f32 %v6942, %v6945
    %v6947 = vsel %vm333, %v6917, -inf
    %v6948 = vmax.f32 %v6944, %v6947
    %v6949 = vsel %vm333, %v6919, -inf
    %v6950 = vmax.f32 %v6946, %v6949
    %v6951 = vsel %vm333, %v6921, -inf
    %v6952 = vmax.f32 %v6948, %v6951
    %v6953 = vmax.f32 %v6950, %v6952
    %v6954 = vsel %vm333, %v6892, -inf
    %v6955 = vsel %vm333, %v6894, -inf
    %v6956 = vsel %vm333, %v6896, -inf
    %v6957 = vmax.f32 %v6954, %v6956
    %v6958 = vsel %vm333, %v6898, -inf
    %v6959 = vmax.f32 %v6955, %v6958
    %v6960 = vsel %vm333, %v6900, -inf
    %v6961 = vmax.f32 %v6957, %v6960
    %v6962 = vsel %vm333, %v6902, -inf
    %v6963 = vmax.f32 %v6959, %v6962
    %v6964 = vsel %vm333, %v6904, -inf
    %v6965 = vmax.f32 %v6961, %v6964
    %v6966 = vsel %vm333, %v6906, -inf
    %v6967 = vmax.f32 %v6963, %v6966
    %v6968 = vsel %vm333, %v6908, -inf
    %v6969 = vmax.f32 %v6965, %v6968
    %v6970 = vsel %vm333, %v6910, -inf
    %v6971 = vmax.f32 %v6967, %v6970
    %v6972 = vsel %vm333, %v6912, -inf
    %v6973 = vmax.f32 %v6969, %v6972
    %v6974 = vsel %vm333, %v6914, -inf
    %v6975 = vmax.f32 %v6971, %v6974
    %v6976 = vsel %vm333, %v6916, -inf
    %v6977 = vmax.f32 %v6973, %v6976
    %v6978 = vsel %vm333, %v6918, -inf
    %v6979 = vmax.f32 %v6975, %v6978
    %v6980 = vsel %vm333, %v6920, -inf
    %v6981 = vmax.f32 %v6977, %v6980
    %v6982 = vsel %vm333, %v6922, -inf
    %v6983 = vmax.f32 %v6979, %v6982
    %v6984 = vmax.f32 %v6981, %v6983
    %v6985 = vsel %vm333, %v6953, -inf
    %v6986 = vsel %vm333, %v6984, -inf
    %v6987 = vmax.f32 %v6985, %v6986
    %v6988 = vrot.slane %v6987, 4
    %v6989 = vmax.f32 %v6987, %v6988
    %v6990 = vrot.slane %v6989, 2
    %v6991 = vmax.f32 %v6989, %v6990
    %v6992 = vrot.slane %v6991, 1
    %v6993 = vmax.f32 %v6991, %v6992
    %p6994 = scmp.le.s32.totalorder %s6704, %s6703
    %p6995 = scmp.le.s32.totalorder %s6706, %s6705
    %p6996 = por %p6994, %p6995
    %s6997 = scalar_select %p6996, 1, 0
    %v6998 = vstv %s6997
    %vm6999 = vcmp.eq.s32.totalorder %v6998, 1
    %v7000 = vsel %vm6999, 0.0, %v6993
    %v7001 = vadd.f32 %v6702, %v7000
    %s7002 = sld [smem:[#allocation3 + $0x5c]]
    %s7003 = sld [smem:[#allocation3 + $0x5d]]
    %s7004 = sld [smem:[#allocation3 + $0x5e]]
    %s7005 = sld [smem:[#allocation3 + $0x5f]]
    %v7006 = vstv %s7002
    %vm7007 = vcmp.le.s32.totalorder %v7006, 0
    %vm7008 = vcmp.le.s32.totalorder %v7006, 1
    %vm7009 = vcmp.le.s32.totalorder %v7006, 2
    %vm7010 = vcmp.le.s32.totalorder %v7006, 3
    %vm7011 = vcmp.le.s32.totalorder %v7006, 4
    %vm7012 = vcmp.le.s32.totalorder %v7006, 5
    %vm7013 = vcmp.le.s32.totalorder %v7006, 6
    %vm7014 = vcmp.le.s32.totalorder %v7006, 7
    %vm7015 = vcmp.le.s32.totalorder %v7006, 8
    %vm7016 = vcmp.le.s32.totalorder %v7006, 9
    %vm7017 = vcmp.le.s32.totalorder %v7006, 10
    %vm7018 = vcmp.le.s32.totalorder %v7006, 11
    %vm7019 = vcmp.le.s32.totalorder %v7006, 12
    %vm7020 = vcmp.le.s32.totalorder %v7006, 13
    %vm7021 = vcmp.le.s32.totalorder %v7006, 14
    %vm7022 = vcmp.le.s32.totalorder %v7006, 15
    %v7023 = vstv %s7003
    %vm7024 = vcmp.gt.s32.totalorder %v7023, 0
    %vm7025 = vcmp.gt.s32.totalorder %v7023, 1
    %vm7026 = vcmp.gt.s32.totalorder %v7023, 2
    %vm7027 = vcmp.gt.s32.totalorder %v7023, 3
    %vm7028 = vcmp.gt.s32.totalorder %v7023, 4
    %vm7029 = vcmp.gt.s32.totalorder %v7023, 5
    %vm7030 = vcmp.gt.s32.totalorder %v7023, 6
    %vm7031 = vcmp.gt.s32.totalorder %v7023, 7
    %vm7032 = vcmp.gt.s32.totalorder %v7023, 8
    %vm7033 = vcmp.gt.s32.totalorder %v7023, 9
    %vm7034 = vcmp.gt.s32.totalorder %v7023, 10
    %vm7035 = vcmp.gt.s32.totalorder %v7023, 11
    %vm7036 = vcmp.gt.s32.totalorder %v7023, 12
    %vm7037 = vcmp.gt.s32.totalorder %v7023, 13
    %vm7038 = vcmp.gt.s32.totalorder %v7023, 14
    %vm7039 = vcmp.gt.s32.totalorder %v7023, 15
    %vm7040 = vmand %vm7007, %vm7024
    %vm7041 = vmand %vm7008, %vm7025
    %vm7042 = vmand %vm7009, %vm7026
    %vm7043 = vmand %vm7010, %vm7027
    %vm7044 = vmand %vm7011, %vm7028
    %vm7045 = vmand %vm7012, %vm7029
    %vm7046 = vmand %vm7013, %vm7030
    %vm7047 = vmand %vm7014, %vm7031
    %vm7048 = vmand %vm7015, %vm7032
    %vm7049 = vmand %vm7016, %vm7033
    %vm7050 = vmand %vm7017, %vm7034
    %vm7051 = vmand %vm7018, %vm7035
    %vm7052 = vmand %vm7019, %vm7036
    %vm7053 = vmand %vm7020, %vm7037
    %vm7054 = vmand %vm7021, %vm7038
    %vm7055 = vmand %vm7022, %vm7039
    %v7056 = vstv %s7004
    %vm7057 = vcmp.ge.s32.totalorder %v111, %v7056
    %vm7058 = vcmp.ge.s32.totalorder %v112, %v7056
    %vm7059 = vmand %vm7040, %vm7057
    %vm7060 = vmand %vm7040, %vm7058
    %vm7061 = vmand %vm7041, %vm7057
    %vm7062 = vmand %vm7041, %vm7058
    %vm7063 = vmand %vm7042, %vm7057
    %vm7064 = vmand %vm7042, %vm7058
    %vm7065 = vmand %vm7043, %vm7057
    %vm7066 = vmand %vm7043, %vm7058
    %vm7067 = vmand %vm7044, %vm7057
    %vm7068 = vmand %vm7044, %vm7058
    %vm7069 = vmand %vm7045, %vm7057
    %vm7070 = vmand %vm7045, %vm7058
    %vm7071 = vmand %vm7046, %vm7057
    %vm7072 = vmand %vm7046, %vm7058
    %vm7073 = vmand %vm7047, %vm7057
    %vm7074 = vmand %vm7047, %vm7058
    %vm7075 = vmand %vm7048, %vm7057
    %vm7076 = vmand %vm7048, %vm7058
    %vm7077 = vmand %vm7049, %vm7057
    %vm7078 = vmand %vm7049, %vm7058
    %vm7079 = vmand %vm7050, %vm7057
    %vm7080 = vmand %vm7050, %vm7058
    %vm7081 = vmand %vm7051, %vm7057
    %vm7082 = vmand %vm7051, %vm7058
    %vm7083 = vmand %vm7052, %vm7057
    %vm7084 = vmand %vm7052, %vm7058
    %vm7085 = vmand %vm7053, %vm7057
    %vm7086 = vmand %vm7053, %vm7058
    %vm7087 = vmand %vm7054, %vm7057
    %vm7088 = vmand %vm7054, %vm7058
    %vm7089 = vmand %vm7055, %vm7057
    %vm7090 = vmand %vm7055, %vm7058
    %v7091 = vstv %s7005
    %vm7092 = vcmp.lt.s32.totalorder %v111, %v7091
    %vm7093 = vcmp.lt.s32.totalorder %v112, %v7091
    %vm7094 = vmand %vm7059, %vm7092
    %vm7095 = vmand %vm7060, %vm7093
    %vm7096 = vmand %vm7061, %vm7092
    %vm7097 = vmand %vm7062, %vm7093
    %vm7098 = vmand %vm7063, %vm7092
    %vm7099 = vmand %vm7064, %vm7093
    %vm7100 = vmand %vm7065, %vm7092
    %vm7101 = vmand %vm7066, %vm7093
    %vm7102 = vmand %vm7067, %vm7092
    %vm7103 = vmand %vm7068, %vm7093
    %vm7104 = vmand %vm7069, %vm7092
    %vm7105 = vmand %vm7070, %vm7093
    %vm7106 = vmand %vm7071, %vm7092
    %vm7107 = vmand %vm7072, %vm7093
    %vm7108 = vmand %vm7073, %vm7092
    %vm7109 = vmand %vm7074, %vm7093
    %vm7110 = vmand %vm7075, %vm7092
    %vm7111 = vmand %vm7076, %vm7093
    %vm7112 = vmand %vm7077, %vm7092
    %vm7113 = vmand %vm7078, %vm7093
    %vm7114 = vmand %vm7079, %vm7092
    %vm7115 = vmand %vm7080, %vm7093
    %vm7116 = vmand %vm7081, %vm7092
    %vm7117 = vmand %vm7082, %vm7093
    %vm7118 = vmand %vm7083, %vm7092
    %vm7119 = vmand %vm7084, %vm7093
    %vm7120 = vmand %vm7085, %vm7092
    %vm7121 = vmand %vm7086, %vm7093
    %vm7122 = vmand %vm7087, %vm7092
    %vm7123 = vmand %vm7088, %vm7093
    %vm7124 = vmand %vm7089, %vm7092
    %vm7125 = vmand %vm7090, %vm7093
    %v7126 = vsel %vm7094, 1, 0
    %v7127 = vsel %vm7095, 1, 0
    %v7128 = vsel %vm7096, 1, 0
    %v7129 = vsel %vm7097, 1, 0
    %v7130 = vsel %vm7098, 1, 0
    %v7131 = vsel %vm7099, 1, 0
    %v7132 = vsel %vm7100, 1, 0
    %v7133 = vsel %vm7101, 1, 0
    %v7134 = vsel %vm7102, 1, 0
    %v7135 = vsel %vm7103, 1, 0
    %v7136 = vsel %vm7104, 1, 0
    %v7137 = vsel %vm7105, 1, 0
    %v7138 = vsel %vm7106, 1, 0
    %v7139 = vsel %vm7107, 1, 0
    %v7140 = vsel %vm7108, 1, 0
    %v7141 = vsel %vm7109, 1, 0
    %v7142 = vsel %vm7110, 1, 0
    %v7143 = vsel %vm7111, 1, 0
    %v7144 = vsel %vm7112, 1, 0
    %v7145 = vsel %vm7113, 1, 0
    %v7146 = vsel %vm7114, 1, 0
    %v7147 = vsel %vm7115, 1, 0
    %v7148 = vsel %vm7116, 1, 0
    %v7149 = vsel %vm7117, 1, 0
    %v7150 = vsel %vm7118, 1, 0
    %v7151 = vsel %vm7119, 1, 0
    %v7152 = vsel %vm7120, 1, 0
    %v7153 = vsel %vm7121, 1, 0
    %v7154 = vsel %vm7122, 1, 0
    %v7155 = vsel %vm7123, 1, 0
    %v7156 = vsel %vm7124, 1, 0
    %v7157 = vsel %vm7125, 1, 0
    %vm7158 = vcmp.eq.s32.totalorder %v7126, 1
    %vm7159 = vcmp.eq.s32.totalorder %v7127, 1
    %vm7160 = vcmp.eq.s32.totalorder %v7128, 1
    %vm7161 = vcmp.eq.s32.totalorder %v7129, 1
    %vm7162 = vcmp.eq.s32.totalorder %v7130, 1
    %vm7163 = vcmp.eq.s32.totalorder %v7131, 1
    %vm7164 = vcmp.eq.s32.totalorder %v7132, 1
    %vm7165 = vcmp.eq.s32.totalorder %v7133, 1
    %vm7166 = vcmp.eq.s32.totalorder %v7134, 1
    %vm7167 = vcmp.eq.s32.totalorder %v7135, 1
    %vm7168 = vcmp.eq.s32.totalorder %v7136, 1
    %vm7169 = vcmp.eq.s32.totalorder %v7137, 1
    %vm7170 = vcmp.eq.s32.totalorder %v7138, 1
    %vm7171 = vcmp.eq.s32.totalorder %v7139, 1
    %vm7172 = vcmp.eq.s32.totalorder %v7140, 1
    %vm7173 = vcmp.eq.s32.totalorder %v7141, 1
    %vm7174 = vcmp.eq.s32.totalorder %v7142, 1
    %vm7175 = vcmp.eq.s32.totalorder %v7143, 1
    %vm7176 = vcmp.eq.s32.totalorder %v7144, 1
    %vm7177 = vcmp.eq.s32.totalorder %v7145, 1
    %vm7178 = vcmp.eq.s32.totalorder %v7146, 1
    %vm7179 = vcmp.eq.s32.totalorder %v7147, 1
    %vm7180 = vcmp.eq.s32.totalorder %v7148, 1
    %vm7181 = vcmp.eq.s32.totalorder %v7149, 1
    %vm7182 = vcmp.eq.s32.totalorder %v7150, 1
    %vm7183 = vcmp.eq.s32.totalorder %v7151, 1
    %vm7184 = vcmp.eq.s32.totalorder %v7152, 1
    %vm7185 = vcmp.eq.s32.totalorder %v7153, 1
    %vm7186 = vcmp.eq.s32.totalorder %v7154, 1
    %vm7187 = vcmp.eq.s32.totalorder %v7155, 1
    %vm7188 = vcmp.eq.s32.totalorder %v7156, 1
    %vm7189 = vcmp.eq.s32.totalorder %v7157, 1
    %v7190 = vsel %vm7158, %v78, -3e+38
    %v7191 = vsel %vm7159, %v79, -3e+38
    %v7192 = vsel %vm7160, %v80, -3e+38
    %v7193 = vsel %vm7161, %v81, -3e+38
    %v7194 = vsel %vm7162, %v82, -3e+38
    %v7195 = vsel %vm7163, %v83, -3e+38
    %v7196 = vsel %vm7164, %v84, -3e+38
    %v7197 = vsel %vm7165, %v85, -3e+38
    %v7198 = vsel %vm7166, %v86, -3e+38
    %v7199 = vsel %vm7167, %v87, -3e+38
    %v7200 = vsel %vm7168, %v88, -3e+38
    %v7201 = vsel %vm7169, %v89, -3e+38
    %v7202 = vsel %vm7170, %v90, -3e+38
    %v7203 = vsel %vm7171, %v91, -3e+38
    %v7204 = vsel %vm7172, %v92, -3e+38
    %v7205 = vsel %vm7173, %v93, -3e+38
    %v7206 = vsel %vm7174, %v94, -3e+38
    %v7207 = vsel %vm7175, %v95, -3e+38
    %v7208 = vsel %vm7176, %v96, -3e+38
    %v7209 = vsel %vm7177, %v97, -3e+38
    %v7210 = vsel %vm7178, %v98, -3e+38
    %v7211 = vsel %vm7179, %v99, -3e+38
    %v7212 = vsel %vm7180, %v100, -3e+38
    %v7213 = vsel %vm7181, %v101, -3e+38
    %v7214 = vsel %vm7182, %v102, -3e+38
    %v7215 = vsel %vm7183, %v103, -3e+38
    %v7216 = vsel %vm7184, %v104, -3e+38
    %v7217 = vsel %vm7185, %v105, -3e+38
    %v7218 = vsel %vm7186, %v106, -3e+38
    %v7219 = vsel %vm7187, %v107, -3e+38
    %v7220 = vsel %vm7188, %v108, -3e+38
    %v7221 = vsel %vm7189, %v109, -3e+38
    %v7222 = vsel %vm333, %v7190, -inf
    %v7223 = vsel %vm333, %v7192, -inf
    %v7224 = vsel %vm333, %v7194, -inf
    %v7225 = vmax.f32 %v7222, %v7224
    %v7226 = vsel %vm333, %v7196, -inf
    %v7227 = vmax.f32 %v7223, %v7226
    %v7228 = vsel %vm333, %v7198, -inf
    %v7229 = vmax.f32 %v7225, %v7228
    %v7230 = vsel %vm333, %v7200, -inf
    %v7231 = vmax.f32 %v7227, %v7230
    %v7232 = vsel %vm333, %v7202, -inf
    %v7233 = vmax.f32 %v7229, %v7232
    %v7234 = vsel %vm333, %v7204, -inf
    %v7235 = vmax.f32 %v7231, %v7234
    %v7236 = vsel %vm333, %v7206, -inf
    %v7237 = vmax.f32 %v7233, %v7236
    %v7238 = vsel %vm333, %v7208, -inf
    %v7239 = vmax.f32 %v7235, %v7238
    %v7240 = vsel %vm333, %v7210, -inf
    %v7241 = vmax.f32 %v7237, %v7240
    %v7242 = vsel %vm333, %v7212, -inf
    %v7243 = vmax.f32 %v7239, %v7242
    %v7244 = vsel %vm333, %v7214, -inf
    %v7245 = vmax.f32 %v7241, %v7244
    %v7246 = vsel %vm333, %v7216, -inf
    %v7247 = vmax.f32 %v7243, %v7246
    %v7248 = vsel %vm333, %v7218, -inf
    %v7249 = vmax.f32 %v7245, %v7248
    %v7250 = vsel %vm333, %v7220, -inf
    %v7251 = vmax.f32 %v7247, %v7250
    %v7252 = vmax.f32 %v7249, %v7251
    %v7253 = vsel %vm333, %v7191, -inf
    %v7254 = vsel %vm333, %v7193, -inf
    %v7255 = vsel %vm333, %v7195, -inf
    %v7256 = vmax.f32 %v7253, %v7255
    %v7257 = vsel %vm333, %v7197, -inf
    %v7258 = vmax.f32 %v7254, %v7257
    %v7259 = vsel %vm333, %v7199, -inf
    %v7260 = vmax.f32 %v7256, %v7259
    %v7261 = vsel %vm333, %v7201, -inf
    %v7262 = vmax.f32 %v7258, %v7261
    %v7263 = vsel %vm333, %v7203, -inf
    %v7264 = vmax.f32 %v7260, %v7263
    %v7265 = vsel %vm333, %v7205, -inf
    %v7266 = vmax.f32 %v7262, %v7265
    %v7267 = vsel %vm333, %v7207, -inf
    %v7268 = vmax.f32 %v7264, %v7267
    %v7269 = vsel %vm333, %v7209, -inf
    %v7270 = vmax.f32 %v7266, %v7269
    %v7271 = vsel %vm333, %v7211, -inf
    %v7272 = vmax.f32 %v7268, %v7271
    %v7273 = vsel %vm333, %v7213, -inf
    %v7274 = vmax.f32 %v7270, %v7273
    %v7275 = vsel %vm333, %v7215, -inf
    %v7276 = vmax.f32 %v7272, %v7275
    %v7277 = vsel %vm333, %v7217, -inf
    %v7278 = vmax.f32 %v7274, %v7277
    %v7279 = vsel %vm333, %v7219, -inf
    %v7280 = vmax.f32 %v7276, %v7279
    %v7281 = vsel %vm333, %v7221, -inf
    %v7282 = vmax.f32 %v7278, %v7281
    %v7283 = vmax.f32 %v7280, %v7282
    %v7284 = vsel %vm333, %v7252, -inf
    %v7285 = vsel %vm333, %v7283, -inf
    %v7286 = vmax.f32 %v7284, %v7285
    %v7287 = vrot.slane %v7286, 4
    %v7288 = vmax.f32 %v7286, %v7287
    %v7289 = vrot.slane %v7288, 2
    %v7290 = vmax.f32 %v7288, %v7289
    %v7291 = vrot.slane %v7290, 1
    %v7292 = vmax.f32 %v7290, %v7291
    %p7293 = scmp.le.s32.totalorder %s7003, %s7002
    %p7294 = scmp.le.s32.totalorder %s7005, %s7004
    %p7295 = por %p7293, %p7294
    %s7296 = scalar_select %p7295, 1, 0
    %v7297 = vstv %s7296
    %vm7298 = vcmp.eq.s32.totalorder %v7297, 1
    %v7299 = vsel %vm7298, 0.0, %v7292
    %v7300 = vadd.f32 %v7001, %v7299
    %v7301 = vmul.f32 %v7300, 0.25
    %7302 = vst.msk [vmem:[#allocation2 + $0x5] sm:$0x1] %vm1311, %v7301
    %s7303 = sld [smem:[#allocation3 + $0x60]]
    %s7304 = sld [smem:[#allocation3 + $0x61]]
    %s7305 = sld [smem:[#allocation3 + $0x62]]
    %s7306 = sld [smem:[#allocation3 + $0x63]]
    %v7307 = vstv %s7303
    %vm7308 = vcmp.le.s32.totalorder %v7307, 0
    %vm7309 = vcmp.le.s32.totalorder %v7307, 1
    %vm7310 = vcmp.le.s32.totalorder %v7307, 2
    %vm7311 = vcmp.le.s32.totalorder %v7307, 3
    %vm7312 = vcmp.le.s32.totalorder %v7307, 4
    %vm7313 = vcmp.le.s32.totalorder %v7307, 5
    %vm7314 = vcmp.le.s32.totalorder %v7307, 6
    %vm7315 = vcmp.le.s32.totalorder %v7307, 7
    %vm7316 = vcmp.le.s32.totalorder %v7307, 8
    %vm7317 = vcmp.le.s32.totalorder %v7307, 9
    %vm7318 = vcmp.le.s32.totalorder %v7307, 10
    %vm7319 = vcmp.le.s32.totalorder %v7307, 11
    %vm7320 = vcmp.le.s32.totalorder %v7307, 12
    %vm7321 = vcmp.le.s32.totalorder %v7307, 13
    %vm7322 = vcmp.le.s32.totalorder %v7307, 14
    %vm7323 = vcmp.le.s32.totalorder %v7307, 15
    %v7324 = vstv %s7304
    %vm7325 = vcmp.gt.s32.totalorder %v7324, 0
    %vm7326 = vcmp.gt.s32.totalorder %v7324, 1
    %vm7327 = vcmp.gt.s32.totalorder %v7324, 2
    %vm7328 = vcmp.gt.s32.totalorder %v7324, 3
    %vm7329 = vcmp.gt.s32.totalorder %v7324, 4
    %vm7330 = vcmp.gt.s32.totalorder %v7324, 5
    %vm7331 = vcmp.gt.s32.totalorder %v7324, 6
    %vm7332 = vcmp.gt.s32.totalorder %v7324, 7
    %vm7333 = vcmp.gt.s32.totalorder %v7324, 8
    %vm7334 = vcmp.gt.s32.totalorder %v7324, 9
    %vm7335 = vcmp.gt.s32.totalorder %v7324, 10
    %vm7336 = vcmp.gt.s32.totalorder %v7324, 11
    %vm7337 = vcmp.gt.s32.totalorder %v7324, 12
    %vm7338 = vcmp.gt.s32.totalorder %v7324, 13
    %vm7339 = vcmp.gt.s32.totalorder %v7324, 14
    %vm7340 = vcmp.gt.s32.totalorder %v7324, 15
    %vm7341 = vmand %vm7308, %vm7325
    %vm7342 = vmand %vm7309, %vm7326
    %vm7343 = vmand %vm7310, %vm7327
    %vm7344 = vmand %vm7311, %vm7328
    %vm7345 = vmand %vm7312, %vm7329
    %vm7346 = vmand %vm7313, %vm7330
    %vm7347 = vmand %vm7314, %vm7331
    %vm7348 = vmand %vm7315, %vm7332
    %vm7349 = vmand %vm7316, %vm7333
    %vm7350 = vmand %vm7317, %vm7334
    %vm7351 = vmand %vm7318, %vm7335
    %vm7352 = vmand %vm7319, %vm7336
    %vm7353 = vmand %vm7320, %vm7337
    %vm7354 = vmand %vm7321, %vm7338
    %vm7355 = vmand %vm7322, %vm7339
    %vm7356 = vmand %vm7323, %vm7340
    %v7357 = vstv %s7305
    %vm7358 = vcmp.ge.s32.totalorder %v111, %v7357
    %vm7359 = vcmp.ge.s32.totalorder %v112, %v7357
    %vm7360 = vmand %vm7341, %vm7358
    %vm7361 = vmand %vm7341, %vm7359
    %vm7362 = vmand %vm7342, %vm7358
    %vm7363 = vmand %vm7342, %vm7359
    %vm7364 = vmand %vm7343, %vm7358
    %vm7365 = vmand %vm7343, %vm7359
    %vm7366 = vmand %vm7344, %vm7358
    %vm7367 = vmand %vm7344, %vm7359
    %vm7368 = vmand %vm7345, %vm7358
    %vm7369 = vmand %vm7345, %vm7359
    %vm7370 = vmand %vm7346, %vm7358
    %vm7371 = vmand %vm7346, %vm7359
    %vm7372 = vmand %vm7347, %vm7358
    %vm7373 = vmand %vm7347, %vm7359
    %vm7374 = vmand %vm7348, %vm7358
    %vm7375 = vmand %vm7348, %vm7359
    %vm7376 = vmand %vm7349, %vm7358
    %vm7377 = vmand %vm7349, %vm7359
    %vm7378 = vmand %vm7350, %vm7358
    %vm7379 = vmand %vm7350, %vm7359
    %vm7380 = vmand %vm7351, %vm7358
    %vm7381 = vmand %vm7351, %vm7359
    %vm7382 = vmand %vm7352, %vm7358
    %vm7383 = vmand %vm7352, %vm7359
    %vm7384 = vmand %vm7353, %vm7358
    %vm7385 = vmand %vm7353, %vm7359
    %vm7386 = vmand %vm7354, %vm7358
    %vm7387 = vmand %vm7354, %vm7359
    %vm7388 = vmand %vm7355, %vm7358
    %vm7389 = vmand %vm7355, %vm7359
    %vm7390 = vmand %vm7356, %vm7358
    %vm7391 = vmand %vm7356, %vm7359
    %v7392 = vstv %s7306
    %vm7393 = vcmp.lt.s32.totalorder %v111, %v7392
    %vm7394 = vcmp.lt.s32.totalorder %v112, %v7392
    %vm7395 = vmand %vm7360, %vm7393
    %vm7396 = vmand %vm7361, %vm7394
    %vm7397 = vmand %vm7362, %vm7393
    %vm7398 = vmand %vm7363, %vm7394
    %vm7399 = vmand %vm7364, %vm7393
    %vm7400 = vmand %vm7365, %vm7394
    %vm7401 = vmand %vm7366, %vm7393
    %vm7402 = vmand %vm7367, %vm7394
    %vm7403 = vmand %vm7368, %vm7393
    %vm7404 = vmand %vm7369, %vm7394
    %vm7405 = vmand %vm7370, %vm7393
    %vm7406 = vmand %vm7371, %vm7394
    %vm7407 = vmand %vm7372, %vm7393
    %vm7408 = vmand %vm7373, %vm7394
    %vm7409 = vmand %vm7374, %vm7393
    %vm7410 = vmand %vm7375, %vm7394
    %vm7411 = vmand %vm7376, %vm7393
    %vm7412 = vmand %vm7377, %vm7394
    %vm7413 = vmand %vm7378, %vm7393
    %vm7414 = vmand %vm7379, %vm7394
    %vm7415 = vmand %vm7380, %vm7393
    %vm7416 = vmand %vm7381, %vm7394
    %vm7417 = vmand %vm7382, %vm7393
    %vm7418 = vmand %vm7383, %vm7394
    %vm7419 = vmand %vm7384, %vm7393
    %vm7420 = vmand %vm7385, %vm7394
    %vm7421 = vmand %vm7386, %vm7393
    %vm7422 = vmand %vm7387, %vm7394
    %vm7423 = vmand %vm7388, %vm7393
    %vm7424 = vmand %vm7389, %vm7394
    %vm7425 = vmand %vm7390, %vm7393
    %vm7426 = vmand %vm7391, %vm7394
    %v7427 = vsel %vm7395, 1, 0
    %v7428 = vsel %vm7396, 1, 0
    %v7429 = vsel %vm7397, 1, 0
    %v7430 = vsel %vm7398, 1, 0
    %v7431 = vsel %vm7399, 1, 0
    %v7432 = vsel %vm7400, 1, 0
    %v7433 = vsel %vm7401, 1, 0
    %v7434 = vsel %vm7402, 1, 0
    %v7435 = vsel %vm7403, 1, 0
    %v7436 = vsel %vm7404, 1, 0
    %v7437 = vsel %vm7405, 1, 0
    %v7438 = vsel %vm7406, 1, 0
    %v7439 = vsel %vm7407, 1, 0
    %v7440 = vsel %vm7408, 1, 0
    %v7441 = vsel %vm7409, 1, 0
    %v7442 = vsel %vm7410, 1, 0
    %v7443 = vsel %vm7411, 1, 0
    %v7444 = vsel %vm7412, 1, 0
    %v7445 = vsel %vm7413, 1, 0
    %v7446 = vsel %vm7414, 1, 0
    %v7447 = vsel %vm7415, 1, 0
    %v7448 = vsel %vm7416, 1, 0
    %v7449 = vsel %vm7417, 1, 0
    %v7450 = vsel %vm7418, 1, 0
    %v7451 = vsel %vm7419, 1, 0
    %v7452 = vsel %vm7420, 1, 0
    %v7453 = vsel %vm7421, 1, 0
    %v7454 = vsel %vm7422, 1, 0
    %v7455 = vsel %vm7423, 1, 0
    %v7456 = vsel %vm7424, 1, 0
    %v7457 = vsel %vm7425, 1, 0
    %v7458 = vsel %vm7426, 1, 0
    %vm7459 = vcmp.eq.s32.totalorder %v7427, 1
    %vm7460 = vcmp.eq.s32.totalorder %v7428, 1
    %vm7461 = vcmp.eq.s32.totalorder %v7429, 1
    %vm7462 = vcmp.eq.s32.totalorder %v7430, 1
    %vm7463 = vcmp.eq.s32.totalorder %v7431, 1
    %vm7464 = vcmp.eq.s32.totalorder %v7432, 1
    %vm7465 = vcmp.eq.s32.totalorder %v7433, 1
    %vm7466 = vcmp.eq.s32.totalorder %v7434, 1
    %vm7467 = vcmp.eq.s32.totalorder %v7435, 1
    %vm7468 = vcmp.eq.s32.totalorder %v7436, 1
    %vm7469 = vcmp.eq.s32.totalorder %v7437, 1
    %vm7470 = vcmp.eq.s32.totalorder %v7438, 1
    %vm7471 = vcmp.eq.s32.totalorder %v7439, 1
    %vm7472 = vcmp.eq.s32.totalorder %v7440, 1
    %vm7473 = vcmp.eq.s32.totalorder %v7441, 1
    %vm7474 = vcmp.eq.s32.totalorder %v7442, 1
    %vm7475 = vcmp.eq.s32.totalorder %v7443, 1
    %vm7476 = vcmp.eq.s32.totalorder %v7444, 1
    %vm7477 = vcmp.eq.s32.totalorder %v7445, 1
    %vm7478 = vcmp.eq.s32.totalorder %v7446, 1
    %vm7479 = vcmp.eq.s32.totalorder %v7447, 1
    %vm7480 = vcmp.eq.s32.totalorder %v7448, 1
    %vm7481 = vcmp.eq.s32.totalorder %v7449, 1
    %vm7482 = vcmp.eq.s32.totalorder %v7450, 1
    %vm7483 = vcmp.eq.s32.totalorder %v7451, 1
    %vm7484 = vcmp.eq.s32.totalorder %v7452, 1
    %vm7485 = vcmp.eq.s32.totalorder %v7453, 1
    %vm7486 = vcmp.eq.s32.totalorder %v7454, 1
    %vm7487 = vcmp.eq.s32.totalorder %v7455, 1
    %vm7488 = vcmp.eq.s32.totalorder %v7456, 1
    %vm7489 = vcmp.eq.s32.totalorder %v7457, 1
    %vm7490 = vcmp.eq.s32.totalorder %v7458, 1
    %v7491 = vsel %vm7459, %v78, -3e+38
    %v7492 = vsel %vm7460, %v79, -3e+38
    %v7493 = vsel %vm7461, %v80, -3e+38
    %v7494 = vsel %vm7462, %v81, -3e+38
    %v7495 = vsel %vm7463, %v82, -3e+38
    %v7496 = vsel %vm7464, %v83, -3e+38
    %v7497 = vsel %vm7465, %v84, -3e+38
    %v7498 = vsel %vm7466, %v85, -3e+38
    %v7499 = vsel %vm7467, %v86, -3e+38
    %v7500 = vsel %vm7468, %v87, -3e+38
    %v7501 = vsel %vm7469, %v88, -3e+38
    %v7502 = vsel %vm7470, %v89, -3e+38
    %v7503 = vsel %vm7471, %v90, -3e+38
    %v7504 = vsel %vm7472, %v91, -3e+38
    %v7505 = vsel %vm7473, %v92, -3e+38
    %v7506 = vsel %vm7474, %v93, -3e+38
    %v7507 = vsel %vm7475, %v94, -3e+38
    %v7508 = vsel %vm7476, %v95, -3e+38
    %v7509 = vsel %vm7477, %v96, -3e+38
    %v7510 = vsel %vm7478, %v97, -3e+38
    %v7511 = vsel %vm7479, %v98, -3e+38
    %v7512 = vsel %vm7480, %v99, -3e+38
    %v7513 = vsel %vm7481, %v100, -3e+38
    %v7514 = vsel %vm7482, %v101, -3e+38
    %v7515 = vsel %vm7483, %v102, -3e+38
    %v7516 = vsel %vm7484, %v103, -3e+38
    %v7517 = vsel %vm7485, %v104, -3e+38
    %v7518 = vsel %vm7486, %v105, -3e+38
    %v7519 = vsel %vm7487, %v106, -3e+38
    %v7520 = vsel %vm7488, %v107, -3e+38
    %v7521 = vsel %vm7489, %v108, -3e+38
    %v7522 = vsel %vm7490, %v109, -3e+38
    %v7523 = vsel %vm333, %v7491, -inf
    %v7524 = vsel %vm333, %v7493, -inf
    %v7525 = vsel %vm333, %v7495, -inf
    %v7526 = vmax.f32 %v7523, %v7525
    %v7527 = vsel %vm333, %v7497, -inf
    %v7528 = vmax.f32 %v7524, %v7527
    %v7529 = vsel %vm333, %v7499, -inf
    %v7530 = vmax.f32 %v7526, %v7529
    %v7531 = vsel %vm333, %v7501, -inf
    %v7532 = vmax.f32 %v7528, %v7531
    %v7533 = vsel %vm333, %v7503, -inf
    %v7534 = vmax.f32 %v7530, %v7533
    %v7535 = vsel %vm333, %v7505, -inf
    %v7536 = vmax.f32 %v7532, %v7535
    %v7537 = vsel %vm333, %v7507, -inf
    %v7538 = vmax.f32 %v7534, %v7537
    %v7539 = vsel %vm333, %v7509, -inf
    %v7540 = vmax.f32 %v7536, %v7539
    %v7541 = vsel %vm333, %v7511, -inf
    %v7542 = vmax.f32 %v7538, %v7541
    %v7543 = vsel %vm333, %v7513, -inf
    %v7544 = vmax.f32 %v7540, %v7543
    %v7545 = vsel %vm333, %v7515, -inf
    %v7546 = vmax.f32 %v7542, %v7545
    %v7547 = vsel %vm333, %v7517, -inf
    %v7548 = vmax.f32 %v7544, %v7547
    %v7549 = vsel %vm333, %v7519, -inf
    %v7550 = vmax.f32 %v7546, %v7549
    %v7551 = vsel %vm333, %v7521, -inf
    %v7552 = vmax.f32 %v7548, %v7551
    %v7553 = vmax.f32 %v7550, %v7552
    %v7554 = vsel %vm333, %v7492, -inf
    %v7555 = vsel %vm333, %v7494, -inf
    %v7556 = vsel %vm333, %v7496, -inf
    %v7557 = vmax.f32 %v7554, %v7556
    %v7558 = vsel %vm333, %v7498, -inf
    %v7559 = vmax.f32 %v7555, %v7558
    %v7560 = vsel %vm333, %v7500, -inf
    %v7561 = vmax.f32 %v7557, %v7560
    %v7562 = vsel %vm333, %v7502, -inf
    %v7563 = vmax.f32 %v7559, %v7562
    %v7564 = vsel %vm333, %v7504, -inf
    %v7565 = vmax.f32 %v7561, %v7564
    %v7566 = vsel %vm333, %v7506, -inf
    %v7567 = vmax.f32 %v7563, %v7566
    %v7568 = vsel %vm333, %v7508, -inf
    %v7569 = vmax.f32 %v7565, %v7568
    %v7570 = vsel %vm333, %v7510, -inf
    %v7571 = vmax.f32 %v7567, %v7570
    %v7572 = vsel %vm333, %v7512, -inf
    %v7573 = vmax.f32 %v7569, %v7572
    %v7574 = vsel %vm333, %v7514, -inf
    %v7575 = vmax.f32 %v7571, %v7574
    %v7576 = vsel %vm333, %v7516, -inf
    %v7577 = vmax.f32 %v7573, %v7576
    %v7578 = vsel %vm333, %v7518, -inf
    %v7579 = vmax.f32 %v7575, %v7578
    %v7580 = vsel %vm333, %v7520, -inf
    %v7581 = vmax.f32 %v7577, %v7580
    %v7582 = vsel %vm333, %v7522, -inf
    %v7583 = vmax.f32 %v7579, %v7582
    %v7584 = vmax.f32 %v7581, %v7583
    %v7585 = vsel %vm333, %v7553, -inf
    %v7586 = vsel %vm333, %v7584, -inf
    %v7587 = vmax.f32 %v7585, %v7586
    %v7588 = vrot.slane %v7587, 4
    %v7589 = vmax.f32 %v7587, %v7588
    %v7590 = vrot.slane %v7589, 2
    %v7591 = vmax.f32 %v7589, %v7590
    %v7592 = vrot.slane %v7591, 1
    %v7593 = vmax.f32 %v7591, %v7592
    %p7594 = scmp.le.s32.totalorder %s7304, %s7303
    %p7595 = scmp.le.s32.totalorder %s7306, %s7305
    %p7596 = por %p7594, %p7595
    %s7597 = scalar_select %p7596, 1, 0
    %v7598 = vstv %s7597
    %vm7599 = vcmp.eq.s32.totalorder %v7598, 1
    %v7600 = vsel %vm7599, 0.0, %v7593
    %v7601 = vadd.f32 %v7600, 0.0
    %s7602 = sld [smem:[#allocation3 + $0x64]]
    %s7603 = sld [smem:[#allocation3 + $0x65]]
    %s7604 = sld [smem:[#allocation3 + $0x66]]
    %s7605 = sld [smem:[#allocation3 + $0x67]]
    %v7606 = vstv %s7602
    %vm7607 = vcmp.le.s32.totalorder %v7606, 0
    %vm7608 = vcmp.le.s32.totalorder %v7606, 1
    %vm7609 = vcmp.le.s32.totalorder %v7606, 2
    %vm7610 = vcmp.le.s32.totalorder %v7606, 3
    %vm7611 = vcmp.le.s32.totalorder %v7606, 4
    %vm7612 = vcmp.le.s32.totalorder %v7606, 5
    %vm7613 = vcmp.le.s32.totalorder %v7606, 6
    %vm7614 = vcmp.le.s32.totalorder %v7606, 7
    %vm7615 = vcmp.le.s32.totalorder %v7606, 8
    %vm7616 = vcmp.le.s32.totalorder %v7606, 9
    %vm7617 = vcmp.le.s32.totalorder %v7606, 10
    %vm7618 = vcmp.le.s32.totalorder %v7606, 11
    %vm7619 = vcmp.le.s32.totalorder %v7606, 12
    %vm7620 = vcmp.le.s32.totalorder %v7606, 13
    %vm7621 = vcmp.le.s32.totalorder %v7606, 14
    %vm7622 = vcmp.le.s32.totalorder %v7606, 15
    %v7623 = vstv %s7603
    %vm7624 = vcmp.gt.s32.totalorder %v7623, 0
    %vm7625 = vcmp.gt.s32.totalorder %v7623, 1
    %vm7626 = vcmp.gt.s32.totalorder %v7623, 2
    %vm7627 = vcmp.gt.s32.totalorder %v7623, 3
    %vm7628 = vcmp.gt.s32.totalorder %v7623, 4
    %vm7629 = vcmp.gt.s32.totalorder %v7623, 5
    %vm7630 = vcmp.gt.s32.totalorder %v7623, 6
    %vm7631 = vcmp.gt.s32.totalorder %v7623, 7
    %vm7632 = vcmp.gt.s32.totalorder %v7623, 8
    %vm7633 = vcmp.gt.s32.totalorder %v7623, 9
    %vm7634 = vcmp.gt.s32.totalorder %v7623, 10
    %vm7635 = vcmp.gt.s32.totalorder %v7623, 11
    %vm7636 = vcmp.gt.s32.totalorder %v7623, 12
    %vm7637 = vcmp.gt.s32.totalorder %v7623, 13
    %vm7638 = vcmp.gt.s32.totalorder %v7623, 14
    %vm7639 = vcmp.gt.s32.totalorder %v7623, 15
    %vm7640 = vmand %vm7607, %vm7624
    %vm7641 = vmand %vm7608, %vm7625
    %vm7642 = vmand %vm7609, %vm7626
    %vm7643 = vmand %vm7610, %vm7627
    %vm7644 = vmand %vm7611, %vm7628
    %vm7645 = vmand %vm7612, %vm7629
    %vm7646 = vmand %vm7613, %vm7630
    %vm7647 = vmand %vm7614, %vm7631
    %vm7648 = vmand %vm7615, %vm7632
    %vm7649 = vmand %vm7616, %vm7633
    %vm7650 = vmand %vm7617, %vm7634
    %vm7651 = vmand %vm7618, %vm7635
    %vm7652 = vmand %vm7619, %vm7636
    %vm7653 = vmand %vm7620, %vm7637
    %vm7654 = vmand %vm7621, %vm7638
    %vm7655 = vmand %vm7622, %vm7639
    %v7656 = vstv %s7604
    %vm7657 = vcmp.ge.s32.totalorder %v111, %v7656
    %vm7658 = vcmp.ge.s32.totalorder %v112, %v7656
    %vm7659 = vmand %vm7640, %vm7657
    %vm7660 = vmand %vm7640, %vm7658
    %vm7661 = vmand %vm7641, %vm7657
    %vm7662 = vmand %vm7641, %vm7658
    %vm7663 = vmand %vm7642, %vm7657
    %vm7664 = vmand %vm7642, %vm7658
    %vm7665 = vmand %vm7643, %vm7657
    %vm7666 = vmand %vm7643, %vm7658
    %vm7667 = vmand %vm7644, %vm7657
    %vm7668 = vmand %vm7644, %vm7658
    %vm7669 = vmand %vm7645, %vm7657
    %vm7670 = vmand %vm7645, %vm7658
    %vm7671 = vmand %vm7646, %vm7657
    %vm7672 = vmand %vm7646, %vm7658
    %vm7673 = vmand %vm7647, %vm7657
    %vm7674 = vmand %vm7647, %vm7658
    %vm7675 = vmand %vm7648, %vm7657
    %vm7676 = vmand %vm7648, %vm7658
    %vm7677 = vmand %vm7649, %vm7657
    %vm7678 = vmand %vm7649, %vm7658
    %vm7679 = vmand %vm7650, %vm7657
    %vm7680 = vmand %vm7650, %vm7658
    %vm7681 = vmand %vm7651, %vm7657
    %vm7682 = vmand %vm7651, %vm7658
    %vm7683 = vmand %vm7652, %vm7657
    %vm7684 = vmand %vm7652, %vm7658
    %vm7685 = vmand %vm7653, %vm7657
    %vm7686 = vmand %vm7653, %vm7658
    %vm7687 = vmand %vm7654, %vm7657
    %vm7688 = vmand %vm7654, %vm7658
    %vm7689 = vmand %vm7655, %vm7657
    %vm7690 = vmand %vm7655, %vm7658
    %v7691 = vstv %s7605
    %vm7692 = vcmp.lt.s32.totalorder %v111, %v7691
    %vm7693 = vcmp.lt.s32.totalorder %v112, %v7691
    %vm7694 = vmand %vm7659, %vm7692
    %vm7695 = vmand %vm7660, %vm7693
    %vm7696 = vmand %vm7661, %vm7692
    %vm7697 = vmand %vm7662, %vm7693
    %vm7698 = vmand %vm7663, %vm7692
    %vm7699 = vmand %vm7664, %vm7693
    %vm7700 = vmand %vm7665, %vm7692
    %vm7701 = vmand %vm7666, %vm7693
    %vm7702 = vmand %vm7667, %vm7692
    %vm7703 = vmand %vm7668, %vm7693
    %vm7704 = vmand %vm7669, %vm7692
    %vm7705 = vmand %vm7670, %vm7693
    %vm7706 = vmand %vm7671, %vm7692
    %vm7707 = vmand %vm7672, %vm7693
    %vm7708 = vmand %vm7673, %vm7692
    %vm7709 = vmand %vm7674, %vm7693
    %vm7710 = vmand %vm7675, %vm7692
    %vm7711 = vmand %vm7676, %vm7693
    %vm7712 = vmand %vm7677, %vm7692
    %vm7713 = vmand %vm7678, %vm7693
    %vm7714 = vmand %vm7679, %vm7692
    %vm7715 = vmand %vm7680, %vm7693
    %vm7716 = vmand %vm7681, %vm7692
    %vm7717 = vmand %vm7682, %vm7693
    %vm7718 = vmand %vm7683, %vm7692
    %vm7719 = vmand %vm7684, %vm7693
    %vm7720 = vmand %vm7685, %vm7692
    %vm7721 = vmand %vm7686, %vm7693
    %vm7722 = vmand %vm7687, %vm7692
    %vm7723 = vmand %vm7688, %vm7693
    %vm7724 = vmand %vm7689, %vm7692
    %vm7725 = vmand %vm7690, %vm7693
    %v7726 = vsel %vm7694, 1, 0
    %v7727 = vsel %vm7695, 1, 0
    %v7728 = vsel %vm7696, 1, 0
    %v7729 = vsel %vm7697, 1, 0
    %v7730 = vsel %vm7698, 1, 0
    %v7731 = vsel %vm7699, 1, 0
    %v7732 = vsel %vm7700, 1, 0
    %v7733 = vsel %vm7701, 1, 0
    %v7734 = vsel %vm7702, 1, 0
    %v7735 = vsel %vm7703, 1, 0
    %v7736 = vsel %vm7704, 1, 0
    %v7737 = vsel %vm7705, 1, 0
    %v7738 = vsel %vm7706, 1, 0
    %v7739 = vsel %vm7707, 1, 0
    %v7740 = vsel %vm7708, 1, 0
    %v7741 = vsel %vm7709, 1, 0
    %v7742 = vsel %vm7710, 1, 0
    %v7743 = vsel %vm7711, 1, 0
    %v7744 = vsel %vm7712, 1, 0
    %v7745 = vsel %vm7713, 1, 0
    %v7746 = vsel %vm7714, 1, 0
    %v7747 = vsel %vm7715, 1, 0
    %v7748 = vsel %vm7716, 1, 0
    %v7749 = vsel %vm7717, 1, 0
    %v7750 = vsel %vm7718, 1, 0
    %v7751 = vsel %vm7719, 1, 0
    %v7752 = vsel %vm7720, 1, 0
    %v7753 = vsel %vm7721, 1, 0
    %v7754 = vsel %vm7722, 1, 0
    %v7755 = vsel %vm7723, 1, 0
    %v7756 = vsel %vm7724, 1, 0
    %v7757 = vsel %vm7725, 1, 0
    %vm7758 = vcmp.eq.s32.totalorder %v7726, 1
    %vm7759 = vcmp.eq.s32.totalorder %v7727, 1
    %vm7760 = vcmp.eq.s32.totalorder %v7728, 1
    %vm7761 = vcmp.eq.s32.totalorder %v7729, 1
    %vm7762 = vcmp.eq.s32.totalorder %v7730, 1
    %vm7763 = vcmp.eq.s32.totalorder %v7731, 1
    %vm7764 = vcmp.eq.s32.totalorder %v7732, 1
    %vm7765 = vcmp.eq.s32.totalorder %v7733, 1
    %vm7766 = vcmp.eq.s32.totalorder %v7734, 1
    %vm7767 = vcmp.eq.s32.totalorder %v7735, 1
    %vm7768 = vcmp.eq.s32.totalorder %v7736, 1
    %vm7769 = vcmp.eq.s32.totalorder %v7737, 1
    %vm7770 = vcmp.eq.s32.totalorder %v7738, 1
    %vm7771 = vcmp.eq.s32.totalorder %v7739, 1
    %vm7772 = vcmp.eq.s32.totalorder %v7740, 1
    %vm7773 = vcmp.eq.s32.totalorder %v7741, 1
    %vm7774 = vcmp.eq.s32.totalorder %v7742, 1
    %vm7775 = vcmp.eq.s32.totalorder %v7743, 1
    %vm7776 = vcmp.eq.s32.totalorder %v7744, 1
    %vm7777 = vcmp.eq.s32.totalorder %v7745, 1
    %vm7778 = vcmp.eq.s32.totalorder %v7746, 1
    %vm7779 = vcmp.eq.s32.totalorder %v7747, 1
    %vm7780 = vcmp.eq.s32.totalorder %v7748, 1
    %vm7781 = vcmp.eq.s32.totalorder %v7749, 1
    %vm7782 = vcmp.eq.s32.totalorder %v7750, 1
    %vm7783 = vcmp.eq.s32.totalorder %v7751, 1
    %vm7784 = vcmp.eq.s32.totalorder %v7752, 1
    %vm7785 = vcmp.eq.s32.totalorder %v7753, 1
    %vm7786 = vcmp.eq.s32.totalorder %v7754, 1
    %vm7787 = vcmp.eq.s32.totalorder %v7755, 1
    %vm7788 = vcmp.eq.s32.totalorder %v7756, 1
    %vm7789 = vcmp.eq.s32.totalorder %v7757, 1
    %v7790 = vsel %vm7758, %v78, -3e+38
    %v7791 = vsel %vm7759, %v79, -3e+38
    %v7792 = vsel %vm7760, %v80, -3e+38
    %v7793 = vsel %vm7761, %v81, -3e+38
    %v7794 = vsel %vm7762, %v82, -3e+38
    %v7795 = vsel %vm7763, %v83, -3e+38
    %v7796 = vsel %vm7764, %v84, -3e+38
    %v7797 = vsel %vm7765, %v85, -3e+38
    %v7798 = vsel %vm7766, %v86, -3e+38
    %v7799 = vsel %vm7767, %v87, -3e+38
    %v7800 = vsel %vm7768, %v88, -3e+38
    %v7801 = vsel %vm7769, %v89, -3e+38
    %v7802 = vsel %vm7770, %v90, -3e+38
    %v7803 = vsel %vm7771, %v91, -3e+38
    %v7804 = vsel %vm7772, %v92, -3e+38
    %v7805 = vsel %vm7773, %v93, -3e+38
    %v7806 = vsel %vm7774, %v94, -3e+38
    %v7807 = vsel %vm7775, %v95, -3e+38
    %v7808 = vsel %vm7776, %v96, -3e+38
    %v7809 = vsel %vm7777, %v97, -3e+38
    %v7810 = vsel %vm7778, %v98, -3e+38
    %v7811 = vsel %vm7779, %v99, -3e+38
    %v7812 = vsel %vm7780, %v100, -3e+38
    %v7813 = vsel %vm7781, %v101, -3e+38
    %v7814 = vsel %vm7782, %v102, -3e+38
    %v7815 = vsel %vm7783, %v103, -3e+38
    %v7816 = vsel %vm7784, %v104, -3e+38
    %v7817 = vsel %vm7785, %v105, -3e+38
    %v7818 = vsel %vm7786, %v106, -3e+38
    %v7819 = vsel %vm7787, %v107, -3e+38
    %v7820 = vsel %vm7788, %v108, -3e+38
    %v7821 = vsel %vm7789, %v109, -3e+38
    %v7822 = vsel %vm333, %v7790, -inf
    %v7823 = vsel %vm333, %v7792, -inf
    %v7824 = vsel %vm333, %v7794, -inf
    %v7825 = vmax.f32 %v7822, %v7824
    %v7826 = vsel %vm333, %v7796, -inf
    %v7827 = vmax.f32 %v7823, %v7826
    %v7828 = vsel %vm333, %v7798, -inf
    %v7829 = vmax.f32 %v7825, %v7828
    %v7830 = vsel %vm333, %v7800, -inf
    %v7831 = vmax.f32 %v7827, %v7830
    %v7832 = vsel %vm333, %v7802, -inf
    %v7833 = vmax.f32 %v7829, %v7832
    %v7834 = vsel %vm333, %v7804, -inf
    %v7835 = vmax.f32 %v7831, %v7834
    %v7836 = vsel %vm333, %v7806, -inf
    %v7837 = vmax.f32 %v7833, %v7836
    %v7838 = vsel %vm333, %v7808, -inf
    %v7839 = vmax.f32 %v7835, %v7838
    %v7840 = vsel %vm333, %v7810, -inf
    %v7841 = vmax.f32 %v7837, %v7840
    %v7842 = vsel %vm333, %v7812, -inf
    %v7843 = vmax.f32 %v7839, %v7842
    %v7844 = vsel %vm333, %v7814, -inf
    %v7845 = vmax.f32 %v7841, %v7844
    %v7846 = vsel %vm333, %v7816, -inf
    %v7847 = vmax.f32 %v7843, %v7846
    %v7848 = vsel %vm333, %v7818, -inf
    %v7849 = vmax.f32 %v7845, %v7848
    %v7850 = vsel %vm333, %v7820, -inf
    %v7851 = vmax.f32 %v7847, %v7850
    %v7852 = vmax.f32 %v7849, %v7851
    %v7853 = vsel %vm333, %v7791, -inf
    %v7854 = vsel %vm333, %v7793, -inf
    %v7855 = vsel %vm333, %v7795, -inf
    %v7856 = vmax.f32 %v7853, %v7855
    %v7857 = vsel %vm333, %v7797, -inf
    %v7858 = vmax.f32 %v7854, %v7857
    %v7859 = vsel %vm333, %v7799, -inf
    %v7860 = vmax.f32 %v7856, %v7859
    %v7861 = vsel %vm333, %v7801, -inf
    %v7862 = vmax.f32 %v7858, %v7861
    %v7863 = vsel %vm333, %v7803, -inf
    %v7864 = vmax.f32 %v7860, %v7863
    %v7865 = vsel %vm333, %v7805, -inf
    %v7866 = vmax.f32 %v7862, %v7865
    %v7867 = vsel %vm333, %v7807, -inf
    %v7868 = vmax.f32 %v7864, %v7867
    %v7869 = vsel %vm333, %v7809, -inf
    %v7870 = vmax.f32 %v7866, %v7869
    %v7871 = vsel %vm333, %v7811, -inf
    %v7872 = vmax.f32 %v7868, %v7871
    %v7873 = vsel %vm333, %v7813, -inf
    %v7874 = vmax.f32 %v7870, %v7873
    %v7875 = vsel %vm333, %v7815, -inf
    %v7876 = vmax.f32 %v7872, %v7875
    %v7877 = vsel %vm333, %v7817, -inf
    %v7878 = vmax.f32 %v7874, %v7877
    %v7879 = vsel %vm333, %v7819, -inf
    %v7880 = vmax.f32 %v7876, %v7879
    %v7881 = vsel %vm333, %v7821, -inf
    %v7882 = vmax.f32 %v7878, %v7881
    %v7883 = vmax.f32 %v7880, %v7882
    %v7884 = vsel %vm333, %v7852, -inf
    %v7885 = vsel %vm333, %v7883, -inf
    %v7886 = vmax.f32 %v7884, %v7885
    %v7887 = vrot.slane %v7886, 4
    %v7888 = vmax.f32 %v7886, %v7887
    %v7889 = vrot.slane %v7888, 2
    %v7890 = vmax.f32 %v7888, %v7889
    %v7891 = vrot.slane %v7890, 1
    %v7892 = vmax.f32 %v7890, %v7891
    %p7893 = scmp.le.s32.totalorder %s7603, %s7602
    %p7894 = scmp.le.s32.totalorder %s7605, %s7604
    %p7895 = por %p7893, %p7894
    %s7896 = scalar_select %p7895, 1, 0
    %v7897 = vstv %s7896
    %vm7898 = vcmp.eq.s32.totalorder %v7897, 1
    %v7899 = vsel %vm7898, 0.0, %v7892
    %v7900 = vadd.f32 %v7601, %v7899
    %s7901 = sld [smem:[#allocation3 + $0x68]]
    %s7902 = sld [smem:[#allocation3 + $0x69]]
    %s7903 = sld [smem:[#allocation3 + $0x6a]]
    %s7904 = sld [smem:[#allocation3 + $0x6b]]
    %v7905 = vstv %s7901
    %vm7906 = vcmp.le.s32.totalorder %v7905, 0
    %vm7907 = vcmp.le.s32.totalorder %v7905, 1
    %vm7908 = vcmp.le.s32.totalorder %v7905, 2
    %vm7909 = vcmp.le.s32.totalorder %v7905, 3
    %vm7910 = vcmp.le.s32.totalorder %v7905, 4
    %vm7911 = vcmp.le.s32.totalorder %v7905, 5
    %vm7912 = vcmp.le.s32.totalorder %v7905, 6
    %vm7913 = vcmp.le.s32.totalorder %v7905, 7
    %vm7914 = vcmp.le.s32.totalorder %v7905, 8
    %vm7915 = vcmp.le.s32.totalorder %v7905, 9
    %vm7916 = vcmp.le.s32.totalorder %v7905, 10
    %vm7917 = vcmp.le.s32.totalorder %v7905, 11
    %vm7918 = vcmp.le.s32.totalorder %v7905, 12
    %vm7919 = vcmp.le.s32.totalorder %v7905, 13
    %vm7920 = vcmp.le.s32.totalorder %v7905, 14
    %vm7921 = vcmp.le.s32.totalorder %v7905, 15
    %v7922 = vstv %s7902
    %vm7923 = vcmp.gt.s32.totalorder %v7922, 0
    %vm7924 = vcmp.gt.s32.totalorder %v7922, 1
    %vm7925 = vcmp.gt.s32.totalorder %v7922, 2
    %vm7926 = vcmp.gt.s32.totalorder %v7922, 3
    %vm7927 = vcmp.gt.s32.totalorder %v7922, 4
    %vm7928 = vcmp.gt.s32.totalorder %v7922, 5
    %vm7929 = vcmp.gt.s32.totalorder %v7922, 6
    %vm7930 = vcmp.gt.s32.totalorder %v7922, 7
    %vm7931 = vcmp.gt.s32.totalorder %v7922, 8
    %vm7932 = vcmp.gt.s32.totalorder %v7922, 9
    %vm7933 = vcmp.gt.s32.totalorder %v7922, 10
    %vm7934 = vcmp.gt.s32.totalorder %v7922, 11
    %vm7935 = vcmp.gt.s32.totalorder %v7922, 12
    %vm7936 = vcmp.gt.s32.totalorder %v7922, 13
    %vm7937 = vcmp.gt.s32.totalorder %v7922, 14
    %vm7938 = vcmp.gt.s32.totalorder %v7922, 15
    %vm7939 = vmand %vm7906, %vm7923
    %vm7940 = vmand %vm7907, %vm7924
    %vm7941 = vmand %vm7908, %vm7925
    %vm7942 = vmand %vm7909, %vm7926
    %vm7943 = vmand %vm7910, %vm7927
    %vm7944 = vmand %vm7911, %vm7928
    %vm7945 = vmand %vm7912, %vm7929
    %vm7946 = vmand %vm7913, %vm7930
    %vm7947 = vmand %vm7914, %vm7931
    %vm7948 = vmand %vm7915, %vm7932
    %vm7949 = vmand %vm7916, %vm7933
    %vm7950 = vmand %vm7917, %vm7934
    %vm7951 = vmand %vm7918, %vm7935
    %vm7952 = vmand %vm7919, %vm7936
    %vm7953 = vmand %vm7920, %vm7937
    %vm7954 = vmand %vm7921, %vm7938
    %v7955 = vstv %s7903
    %vm7956 = vcmp.ge.s32.totalorder %v111, %v7955
    %vm7957 = vcmp.ge.s32.totalorder %v112, %v7955
    %vm7958 = vmand %vm7939, %vm7956
    %vm7959 = vmand %vm7939, %vm7957
    %vm7960 = vmand %vm7940, %vm7956
    %vm7961 = vmand %vm7940, %vm7957
    %vm7962 = vmand %vm7941, %vm7956
    %vm7963 = vmand %vm7941, %vm7957
    %vm7964 = vmand %vm7942, %vm7956
    %vm7965 = vmand %vm7942, %vm7957
    %vm7966 = vmand %vm7943, %vm7956
    %vm7967 = vmand %vm7943, %vm7957
    %vm7968 = vmand %vm7944, %vm7956
    %vm7969 = vmand %vm7944, %vm7957
    %vm7970 = vmand %vm7945, %vm7956
    %vm7971 = vmand %vm7945, %vm7957
    %vm7972 = vmand %vm7946, %vm7956
    %vm7973 = vmand %vm7946, %vm7957
    %vm7974 = vmand %vm7947, %vm7956
    %vm7975 = vmand %vm7947, %vm7957
    %vm7976 = vmand %vm7948, %vm7956
    %vm7977 = vmand %vm7948, %vm7957
    %vm7978 = vmand %vm7949, %vm7956
    %vm7979 = vmand %vm7949, %vm7957
    %vm7980 = vmand %vm7950, %vm7956
    %vm7981 = vmand %vm7950, %vm7957
    %vm7982 = vmand %vm7951, %vm7956
    %vm7983 = vmand %vm7951, %vm7957
    %vm7984 = vmand %vm7952, %vm7956
    %vm7985 = vmand %vm7952, %vm7957
    %vm7986 = vmand %vm7953, %vm7956
    %vm7987 = vmand %vm7953, %vm7957
    %vm7988 = vmand %vm7954, %vm7956
    %vm7989 = vmand %vm7954, %vm7957
    %v7990 = vstv %s7904
    %vm7991 = vcmp.lt.s32.totalorder %v111, %v7990
    %vm7992 = vcmp.lt.s32.totalorder %v112, %v7990
    %vm7993 = vmand %vm7958, %vm7991
    %vm7994 = vmand %vm7959, %vm7992
    %vm7995 = vmand %vm7960, %vm7991
    %vm7996 = vmand %vm7961, %vm7992
    %vm7997 = vmand %vm7962, %vm7991
    %vm7998 = vmand %vm7963, %vm7992
    %vm7999 = vmand %vm7964, %vm7991
    %vm8000 = vmand %vm7965, %vm7992
    %vm8001 = vmand %vm7966, %vm7991
    %vm8002 = vmand %vm7967, %vm7992
    %vm8003 = vmand %vm7968, %vm7991
    %vm8004 = vmand %vm7969, %vm7992
    %vm8005 = vmand %vm7970, %vm7991
    %vm8006 = vmand %vm7971, %vm7992
    %vm8007 = vmand %vm7972, %vm7991
    %vm8008 = vmand %vm7973, %vm7992
    %vm8009 = vmand %vm7974, %vm7991
    %vm8010 = vmand %vm7975, %vm7992
    %vm8011 = vmand %vm7976, %vm7991
    %vm8012 = vmand %vm7977, %vm7992
    %vm8013 = vmand %vm7978, %vm7991
    %vm8014 = vmand %vm7979, %vm7992
    %vm8015 = vmand %vm7980, %vm7991
    %vm8016 = vmand %vm7981, %vm7992
    %vm8017 = vmand %vm7982, %vm7991
    %vm8018 = vmand %vm7983, %vm7992
    %vm8019 = vmand %vm7984, %vm7991
    %vm8020 = vmand %vm7985, %vm7992
    %vm8021 = vmand %vm7986, %vm7991
    %vm8022 = vmand %vm7987, %vm7992
    %vm8023 = vmand %vm7988, %vm7991
    %vm8024 = vmand %vm7989, %vm7992
    %v8025 = vsel %vm7993, 1, 0
    %v8026 = vsel %vm7994, 1, 0
    %v8027 = vsel %vm7995, 1, 0
    %v8028 = vsel %vm7996, 1, 0
    %v8029 = vsel %vm7997, 1, 0
    %v8030 = vsel %vm7998, 1, 0
    %v8031 = vsel %vm7999, 1, 0
    %v8032 = vsel %vm8000, 1, 0
    %v8033 = vsel %vm8001, 1, 0
    %v8034 = vsel %vm8002, 1, 0
    %v8035 = vsel %vm8003, 1, 0
    %v8036 = vsel %vm8004, 1, 0
    %v8037 = vsel %vm8005, 1, 0
    %v8038 = vsel %vm8006, 1, 0
    %v8039 = vsel %vm8007, 1, 0
    %v8040 = vsel %vm8008, 1, 0
    %v8041 = vsel %vm8009, 1, 0
    %v8042 = vsel %vm8010, 1, 0
    %v8043 = vsel %vm8011, 1, 0
    %v8044 = vsel %vm8012, 1, 0
    %v8045 = vsel %vm8013, 1, 0
    %v8046 = vsel %vm8014, 1, 0
    %v8047 = vsel %vm8015, 1, 0
    %v8048 = vsel %vm8016, 1, 0
    %v8049 = vsel %vm8017, 1, 0
    %v8050 = vsel %vm8018, 1, 0
    %v8051 = vsel %vm8019, 1, 0
    %v8052 = vsel %vm8020, 1, 0
    %v8053 = vsel %vm8021, 1, 0
    %v8054 = vsel %vm8022, 1, 0
    %v8055 = vsel %vm8023, 1, 0
    %v8056 = vsel %vm8024, 1, 0
    %vm8057 = vcmp.eq.s32.totalorder %v8025, 1
    %vm8058 = vcmp.eq.s32.totalorder %v8026, 1
    %vm8059 = vcmp.eq.s32.totalorder %v8027, 1
    %vm8060 = vcmp.eq.s32.totalorder %v8028, 1
    %vm8061 = vcmp.eq.s32.totalorder %v8029, 1
    %vm8062 = vcmp.eq.s32.totalorder %v8030, 1
    %vm8063 = vcmp.eq.s32.totalorder %v8031, 1
    %vm8064 = vcmp.eq.s32.totalorder %v8032, 1
    %vm8065 = vcmp.eq.s32.totalorder %v8033, 1
    %vm8066 = vcmp.eq.s32.totalorder %v8034, 1
    %vm8067 = vcmp.eq.s32.totalorder %v8035, 1
    %vm8068 = vcmp.eq.s32.totalorder %v8036, 1
    %vm8069 = vcmp.eq.s32.totalorder %v8037, 1
    %vm8070 = vcmp.eq.s32.totalorder %v8038, 1
    %vm8071 = vcmp.eq.s32.totalorder %v8039, 1
    %vm8072 = vcmp.eq.s32.totalorder %v8040, 1
    %vm8073 = vcmp.eq.s32.totalorder %v8041, 1
    %vm8074 = vcmp.eq.s32.totalorder %v8042, 1
    %vm8075 = vcmp.eq.s32.totalorder %v8043, 1
    %vm8076 = vcmp.eq.s32.totalorder %v8044, 1
    %vm8077 = vcmp.eq.s32.totalorder %v8045, 1
    %vm8078 = vcmp.eq.s32.totalorder %v8046, 1
    %vm8079 = vcmp.eq.s32.totalorder %v8047, 1
    %vm8080 = vcmp.eq.s32.totalorder %v8048, 1
    %vm8081 = vcmp.eq.s32.totalorder %v8049, 1
    %vm8082 = vcmp.eq.s32.totalorder %v8050, 1
    %vm8083 = vcmp.eq.s32.totalorder %v8051, 1
    %vm8084 = vcmp.eq.s32.totalorder %v8052, 1
    %vm8085 = vcmp.eq.s32.totalorder %v8053, 1
    %vm8086 = vcmp.eq.s32.totalorder %v8054, 1
    %vm8087 = vcmp.eq.s32.totalorder %v8055, 1
    %vm8088 = vcmp.eq.s32.totalorder %v8056, 1
    %v8089 = vsel %vm8057, %v78, -3e+38
    %v8090 = vsel %vm8058, %v79, -3e+38
    %v8091 = vsel %vm8059, %v80, -3e+38
    %v8092 = vsel %vm8060, %v81, -3e+38
    %v8093 = vsel %vm8061, %v82, -3e+38
    %v8094 = vsel %vm8062, %v83, -3e+38
    %v8095 = vsel %vm8063, %v84, -3e+38
    %v8096 = vsel %vm8064, %v85, -3e+38
    %v8097 = vsel %vm8065, %v86, -3e+38
    %v8098 = vsel %vm8066, %v87, -3e+38
    %v8099 = vsel %vm8067, %v88, -3e+38
    %v8100 = vsel %vm8068, %v89, -3e+38
    %v8101 = vsel %vm8069, %v90, -3e+38
    %v8102 = vsel %vm8070, %v91, -3e+38
    %v8103 = vsel %vm8071, %v92, -3e+38
    %v8104 = vsel %vm8072, %v93, -3e+38
    %v8105 = vsel %vm8073, %v94, -3e+38
    %v8106 = vsel %vm8074, %v95, -3e+38
    %v8107 = vsel %vm8075, %v96, -3e+38
    %v8108 = vsel %vm8076, %v97, -3e+38
    %v8109 = vsel %vm8077, %v98, -3e+38
    %v8110 = vsel %vm8078, %v99, -3e+38
    %v8111 = vsel %vm8079, %v100, -3e+38
    %v8112 = vsel %vm8080, %v101, -3e+38
    %v8113 = vsel %vm8081, %v102, -3e+38
    %v8114 = vsel %vm8082, %v103, -3e+38
    %v8115 = vsel %vm8083, %v104, -3e+38
    %v8116 = vsel %vm8084, %v105, -3e+38
    %v8117 = vsel %vm8085, %v106, -3e+38
    %v8118 = vsel %vm8086, %v107, -3e+38
    %v8119 = vsel %vm8087, %v108, -3e+38
    %v8120 = vsel %vm8088, %v109, -3e+38
    %v8121 = vsel %vm333, %v8089, -inf
    %v8122 = vsel %vm333, %v8091, -inf
    %v8123 = vsel %vm333, %v8093, -inf
    %v8124 = vmax.f32 %v8121, %v8123
    %v8125 = vsel %vm333, %v8095, -inf
    %v8126 = vmax.f32 %v8122, %v8125
    %v8127 = vsel %vm333, %v8097, -inf
    %v8128 = vmax.f32 %v8124, %v8127
    %v8129 = vsel %vm333, %v8099, -inf
    %v8130 = vmax.f32 %v8126, %v8129
    %v8131 = vsel %vm333, %v8101, -inf
    %v8132 = vmax.f32 %v8128, %v8131
    %v8133 = vsel %vm333, %v8103, -inf
    %v8134 = vmax.f32 %v8130, %v8133
    %v8135 = vsel %vm333, %v8105, -inf
    %v8136 = vmax.f32 %v8132, %v8135
    %v8137 = vsel %vm333, %v8107, -inf
    %v8138 = vmax.f32 %v8134, %v8137
    %v8139 = vsel %vm333, %v8109, -inf
    %v8140 = vmax.f32 %v8136, %v8139
    %v8141 = vsel %vm333, %v8111, -inf
    %v8142 = vmax.f32 %v8138, %v8141
    %v8143 = vsel %vm333, %v8113, -inf
    %v8144 = vmax.f32 %v8140, %v8143
    %v8145 = vsel %vm333, %v8115, -inf
    %v8146 = vmax.f32 %v8142, %v8145
    %v8147 = vsel %vm333, %v8117, -inf
    %v8148 = vmax.f32 %v8144, %v8147
    %v8149 = vsel %vm333, %v8119, -inf
    %v8150 = vmax.f32 %v8146, %v8149
    %v8151 = vmax.f32 %v8148, %v8150
    %v8152 = vsel %vm333, %v8090, -inf
    %v8153 = vsel %vm333, %v8092, -inf
    %v8154 = vsel %vm333, %v8094, -inf
    %v8155 = vmax.f32 %v8152, %v8154
    %v8156 = vsel %vm333, %v8096, -inf
    %v8157 = vmax.f32 %v8153, %v8156
    %v8158 = vsel %vm333, %v8098, -inf
    %v8159 = vmax.f32 %v8155, %v8158
    %v8160 = vsel %vm333, %v8100, -inf
    %v8161 = vmax.f32 %v8157, %v8160
    %v8162 = vsel %vm333, %v8102, -inf
    %v8163 = vmax.f32 %v8159, %v8162
    %v8164 = vsel %vm333, %v8104, -inf
    %v8165 = vmax.f32 %v8161, %v8164
    %v8166 = vsel %vm333, %v8106, -inf
    %v8167 = vmax.f32 %v8163, %v8166
    %v8168 = vsel %vm333, %v8108, -inf
    %v8169 = vmax.f32 %v8165, %v8168
    %v8170 = vsel %vm333, %v8110, -inf
    %v8171 = vmax.f32 %v8167, %v8170
    %v8172 = vsel %vm333, %v8112, -inf
    %v8173 = vmax.f32 %v8169, %v8172
    %v8174 = vsel %vm333, %v8114, -inf
    %v8175 = vmax.f32 %v8171, %v8174
    %v8176 = vsel %vm333, %v8116, -inf
    %v8177 = vmax.f32 %v8173, %v8176
    %v8178 = vsel %vm333, %v8118, -inf
    %v8179 = vmax.f32 %v8175, %v8178
    %v8180 = vsel %vm333, %v8120, -inf
    %v8181 = vmax.f32 %v8177, %v8180
    %v8182 = vmax.f32 %v8179, %v8181
    %v8183 = vsel %vm333, %v8151, -inf
    %v8184 = vsel %vm333, %v8182, -inf
    %v8185 = vmax.f32 %v8183, %v8184
    %v8186 = vrot.slane %v8185, 4
    %v8187 = vmax.f32 %v8185, %v8186
    %v8188 = vrot.slane %v8187, 2
    %v8189 = vmax.f32 %v8187, %v8188
    %v8190 = vrot.slane %v8189, 1
    %v8191 = vmax.f32 %v8189, %v8190
    %p8192 = scmp.le.s32.totalorder %s7902, %s7901
    %p8193 = scmp.le.s32.totalorder %s7904, %s7903
    %p8194 = por %p8192, %p8193
    %s8195 = scalar_select %p8194, 1, 0
    %v8196 = vstv %s8195
    %vm8197 = vcmp.eq.s32.totalorder %v8196, 1
    %v8198 = vsel %vm8197, 0.0, %v8191
    %v8199 = vadd.f32 %v7900, %v8198
    %s8200 = sld [smem:[#allocation3 + $0x6c]]
    %s8201 = sld [smem:[#allocation3 + $0x6d]]
    %s8202 = sld [smem:[#allocation3 + $0x6e]]
    %s8203 = sld [smem:[#allocation3 + $0x6f]]
    %v8204 = vstv %s8200
    %vm8205 = vcmp.le.s32.totalorder %v8204, 0
    %vm8206 = vcmp.le.s32.totalorder %v8204, 1
    %vm8207 = vcmp.le.s32.totalorder %v8204, 2
    %vm8208 = vcmp.le.s32.totalorder %v8204, 3
    %vm8209 = vcmp.le.s32.totalorder %v8204, 4
    %vm8210 = vcmp.le.s32.totalorder %v8204, 5
    %vm8211 = vcmp.le.s32.totalorder %v8204, 6
    %vm8212 = vcmp.le.s32.totalorder %v8204, 7
    %vm8213 = vcmp.le.s32.totalorder %v8204, 8
    %vm8214 = vcmp.le.s32.totalorder %v8204, 9
    %vm8215 = vcmp.le.s32.totalorder %v8204, 10
    %vm8216 = vcmp.le.s32.totalorder %v8204, 11
    %vm8217 = vcmp.le.s32.totalorder %v8204, 12
    %vm8218 = vcmp.le.s32.totalorder %v8204, 13
    %vm8219 = vcmp.le.s32.totalorder %v8204, 14
    %vm8220 = vcmp.le.s32.totalorder %v8204, 15
    %v8221 = vstv %s8201
    %vm8222 = vcmp.gt.s32.totalorder %v8221, 0
    %vm8223 = vcmp.gt.s32.totalorder %v8221, 1
    %vm8224 = vcmp.gt.s32.totalorder %v8221, 2
    %vm8225 = vcmp.gt.s32.totalorder %v8221, 3
    %vm8226 = vcmp.gt.s32.totalorder %v8221, 4
    %vm8227 = vcmp.gt.s32.totalorder %v8221, 5
    %vm8228 = vcmp.gt.s32.totalorder %v8221, 6
    %vm8229 = vcmp.gt.s32.totalorder %v8221, 7
    %vm8230 = vcmp.gt.s32.totalorder %v8221, 8
    %vm8231 = vcmp.gt.s32.totalorder %v8221, 9
    %vm8232 = vcmp.gt.s32.totalorder %v8221, 10
    %vm8233 = vcmp.gt.s32.totalorder %v8221, 11
    %vm8234 = vcmp.gt.s32.totalorder %v8221, 12
    %vm8235 = vcmp.gt.s32.totalorder %v8221, 13
    %vm8236 = vcmp.gt.s32.totalorder %v8221, 14
    %vm8237 = vcmp.gt.s32.totalorder %v8221, 15
    %vm8238 = vmand %vm8205, %vm8222
    %vm8239 = vmand %vm8206, %vm8223
    %vm8240 = vmand %vm8207, %vm8224
    %vm8241 = vmand %vm8208, %vm8225
    %vm8242 = vmand %vm8209, %vm8226
    %vm8243 = vmand %vm8210, %vm8227
    %vm8244 = vmand %vm8211, %vm8228
    %vm8245 = vmand %vm8212, %vm8229
    %vm8246 = vmand %vm8213, %vm8230
    %vm8247 = vmand %vm8214, %vm8231
    %vm8248 = vmand %vm8215, %vm8232
    %vm8249 = vmand %vm8216, %vm8233
    %vm8250 = vmand %vm8217, %vm8234
    %vm8251 = vmand %vm8218, %vm8235
    %vm8252 = vmand %vm8219, %vm8236
    %vm8253 = vmand %vm8220, %vm8237
    %v8254 = vstv %s8202
    %vm8255 = vcmp.ge.s32.totalorder %v111, %v8254
    %vm8256 = vcmp.ge.s32.totalorder %v112, %v8254
    %vm8257 = vmand %vm8238, %vm8255
    %vm8258 = vmand %vm8238, %vm8256
    %vm8259 = vmand %vm8239, %vm8255
    %vm8260 = vmand %vm8239, %vm8256
    %vm8261 = vmand %vm8240, %vm8255
    %vm8262 = vmand %vm8240, %vm8256
    %vm8263 = vmand %vm8241, %vm8255
    %vm8264 = vmand %vm8241, %vm8256
    %vm8265 = vmand %vm8242, %vm8255
    %vm8266 = vmand %vm8242, %vm8256
    %vm8267 = vmand %vm8243, %vm8255
    %vm8268 = vmand %vm8243, %vm8256
    %vm8269 = vmand %vm8244, %vm8255
    %vm8270 = vmand %vm8244, %vm8256
    %vm8271 = vmand %vm8245, %vm8255
    %vm8272 = vmand %vm8245, %vm8256
    %vm8273 = vmand %vm8246, %vm8255
    %vm8274 = vmand %vm8246, %vm8256
    %vm8275 = vmand %vm8247, %vm8255
    %vm8276 = vmand %vm8247, %vm8256
    %vm8277 = vmand %vm8248, %vm8255
    %vm8278 = vmand %vm8248, %vm8256
    %vm8279 = vmand %vm8249, %vm8255
    %vm8280 = vmand %vm8249, %vm8256
    %vm8281 = vmand %vm8250, %vm8255
    %vm8282 = vmand %vm8250, %vm8256
    %vm8283 = vmand %vm8251, %vm8255
    %vm8284 = vmand %vm8251, %vm8256
    %vm8285 = vmand %vm8252, %vm8255
    %vm8286 = vmand %vm8252, %vm8256
    %vm8287 = vmand %vm8253, %vm8255
    %vm8288 = vmand %vm8253, %vm8256
    %v8289 = vstv %s8203
    %vm8290 = vcmp.lt.s32.totalorder %v111, %v8289
    %vm8291 = vcmp.lt.s32.totalorder %v112, %v8289
    %vm8292 = vmand %vm8257, %vm8290
    %vm8293 = vmand %vm8258, %vm8291
    %vm8294 = vmand %vm8259, %vm8290
    %vm8295 = vmand %vm8260, %vm8291
    %vm8296 = vmand %vm8261, %vm8290
    %vm8297 = vmand %vm8262, %vm8291
    %vm8298 = vmand %vm8263, %vm8290
    %vm8299 = vmand %vm8264, %vm8291
    %vm8300 = vmand %vm8265, %vm8290
    %vm8301 = vmand %vm8266, %vm8291
    %vm8302 = vmand %vm8267, %vm8290
    %vm8303 = vmand %vm8268, %vm8291
    %vm8304 = vmand %vm8269, %vm8290
    %vm8305 = vmand %vm8270, %vm8291
    %vm8306 = vmand %vm8271, %vm8290
    %vm8307 = vmand %vm8272, %vm8291
    %vm8308 = vmand %vm8273, %vm8290
    %vm8309 = vmand %vm8274, %vm8291
    %vm8310 = vmand %vm8275, %vm8290
    %vm8311 = vmand %vm8276, %vm8291
    %vm8312 = vmand %vm8277, %vm8290
    %vm8313 = vmand %vm8278, %vm8291
    %vm8314 = vmand %vm8279, %vm8290
    %vm8315 = vmand %vm8280, %vm8291
    %vm8316 = vmand %vm8281, %vm8290
    %vm8317 = vmand %vm8282, %vm8291
    %vm8318 = vmand %vm8283, %vm8290
    %vm8319 = vmand %vm8284, %vm8291
    %vm8320 = vmand %vm8285, %vm8290
    %vm8321 = vmand %vm8286, %vm8291
    %vm8322 = vmand %vm8287, %vm8290
    %vm8323 = vmand %vm8288, %vm8291
    %v8324 = vsel %vm8292, 1, 0
    %v8325 = vsel %vm8293, 1, 0
    %v8326 = vsel %vm8294, 1, 0
    %v8327 = vsel %vm8295, 1, 0
    %v8328 = vsel %vm8296, 1, 0
    %v8329 = vsel %vm8297, 1, 0
    %v8330 = vsel %vm8298, 1, 0
    %v8331 = vsel %vm8299, 1, 0
    %v8332 = vsel %vm8300, 1, 0
    %v8333 = vsel %vm8301, 1, 0
    %v8334 = vsel %vm8302, 1, 0
    %v8335 = vsel %vm8303, 1, 0
    %v8336 = vsel %vm8304, 1, 0
    %v8337 = vsel %vm8305, 1, 0
    %v8338 = vsel %vm8306, 1, 0
    %v8339 = vsel %vm8307, 1, 0
    %v8340 = vsel %vm8308, 1, 0
    %v8341 = vsel %vm8309, 1, 0
    %v8342 = vsel %vm8310, 1, 0
    %v8343 = vsel %vm8311, 1, 0
    %v8344 = vsel %vm8312, 1, 0
    %v8345 = vsel %vm8313, 1, 0
    %v8346 = vsel %vm8314, 1, 0
    %v8347 = vsel %vm8315, 1, 0
    %v8348 = vsel %vm8316, 1, 0
    %v8349 = vsel %vm8317, 1, 0
    %v8350 = vsel %vm8318, 1, 0
    %v8351 = vsel %vm8319, 1, 0
    %v8352 = vsel %vm8320, 1, 0
    %v8353 = vsel %vm8321, 1, 0
    %v8354 = vsel %vm8322, 1, 0
    %v8355 = vsel %vm8323, 1, 0
    %vm8356 = vcmp.eq.s32.totalorder %v8324, 1
    %vm8357 = vcmp.eq.s32.totalorder %v8325, 1
    %vm8358 = vcmp.eq.s32.totalorder %v8326, 1
    %vm8359 = vcmp.eq.s32.totalorder %v8327, 1
    %vm8360 = vcmp.eq.s32.totalorder %v8328, 1
    %vm8361 = vcmp.eq.s32.totalorder %v8329, 1
    %vm8362 = vcmp.eq.s32.totalorder %v8330, 1
    %vm8363 = vcmp.eq.s32.totalorder %v8331, 1
    %vm8364 = vcmp.eq.s32.totalorder %v8332, 1
    %vm8365 = vcmp.eq.s32.totalorder %v8333, 1
    %vm8366 = vcmp.eq.s32.totalorder %v8334, 1
    %vm8367 = vcmp.eq.s32.totalorder %v8335, 1
    %vm8368 = vcmp.eq.s32.totalorder %v8336, 1
    %vm8369 = vcmp.eq.s32.totalorder %v8337, 1
    %vm8370 = vcmp.eq.s32.totalorder %v8338, 1
    %vm8371 = vcmp.eq.s32.totalorder %v8339, 1
    %vm8372 = vcmp.eq.s32.totalorder %v8340, 1
    %vm8373 = vcmp.eq.s32.totalorder %v8341, 1
    %vm8374 = vcmp.eq.s32.totalorder %v8342, 1
    %vm8375 = vcmp.eq.s32.totalorder %v8343, 1
    %vm8376 = vcmp.eq.s32.totalorder %v8344, 1
    %vm8377 = vcmp.eq.s32.totalorder %v8345, 1
    %vm8378 = vcmp.eq.s32.totalorder %v8346, 1
    %vm8379 = vcmp.eq.s32.totalorder %v8347, 1
    %vm8380 = vcmp.eq.s32.totalorder %v8348, 1
    %vm8381 = vcmp.eq.s32.totalorder %v8349, 1
    %vm8382 = vcmp.eq.s32.totalorder %v8350, 1
    %vm8383 = vcmp.eq.s32.totalorder %v8351, 1
    %vm8384 = vcmp.eq.s32.totalorder %v8352, 1
    %vm8385 = vcmp.eq.s32.totalorder %v8353, 1
    %vm8386 = vcmp.eq.s32.totalorder %v8354, 1
    %vm8387 = vcmp.eq.s32.totalorder %v8355, 1
    %v8388 = vsel %vm8356, %v78, -3e+38
    %v8389 = vsel %vm8357, %v79, -3e+38
    %v8390 = vsel %vm8358, %v80, -3e+38
    %v8391 = vsel %vm8359, %v81, -3e+38
    %v8392 = vsel %vm8360, %v82, -3e+38
    %v8393 = vsel %vm8361, %v83, -3e+38
    %v8394 = vsel %vm8362, %v84, -3e+38
    %v8395 = vsel %vm8363, %v85, -3e+38
    %v8396 = vsel %vm8364, %v86, -3e+38
    %v8397 = vsel %vm8365, %v87, -3e+38
    %v8398 = vsel %vm8366, %v88, -3e+38
    %v8399 = vsel %vm8367, %v89, -3e+38
    %v8400 = vsel %vm8368, %v90, -3e+38
    %v8401 = vsel %vm8369, %v91, -3e+38
    %v8402 = vsel %vm8370, %v92, -3e+38
    %v8403 = vsel %vm8371, %v93, -3e+38
    %v8404 = vsel %vm8372, %v94, -3e+38
    %v8405 = vsel %vm8373, %v95, -3e+38
    %v8406 = vsel %vm8374, %v96, -3e+38
    %v8407 = vsel %vm8375, %v97, -3e+38
    %v8408 = vsel %vm8376, %v98, -3e+38
    %v8409 = vsel %vm8377, %v99, -3e+38
    %v8410 = vsel %vm8378, %v100, -3e+38
    %v8411 = vsel %vm8379, %v101, -3e+38
    %v8412 = vsel %vm8380, %v102, -3e+38
    %v8413 = vsel %vm8381, %v103, -3e+38
    %v8414 = vsel %vm8382, %v104, -3e+38
    %v8415 = vsel %vm8383, %v105, -3e+38
    %v8416 = vsel %vm8384, %v106, -3e+38
    %v8417 = vsel %vm8385, %v107, -3e+38
    %v8418 = vsel %vm8386, %v108, -3e+38
    %v8419 = vsel %vm8387, %v109, -3e+38
    %v8420 = vsel %vm333, %v8388, -inf
    %v8421 = vsel %vm333, %v8390, -inf
    %v8422 = vsel %vm333, %v8392, -inf
    %v8423 = vmax.f32 %v8420, %v8422
    %v8424 = vsel %vm333, %v8394, -inf
    %v8425 = vmax.f32 %v8421, %v8424
    %v8426 = vsel %vm333, %v8396, -inf
    %v8427 = vmax.f32 %v8423, %v8426
    %v8428 = vsel %vm333, %v8398, -inf
    %v8429 = vmax.f32 %v8425, %v8428
    %v8430 = vsel %vm333, %v8400, -inf
    %v8431 = vmax.f32 %v8427, %v8430
    %v8432 = vsel %vm333, %v8402, -inf
    %v8433 = vmax.f32 %v8429, %v8432
    %v8434 = vsel %vm333, %v8404, -inf
    %v8435 = vmax.f32 %v8431, %v8434
    %v8436 = vsel %vm333, %v8406, -inf
    %v8437 = vmax.f32 %v8433, %v8436
    %v8438 = vsel %vm333, %v8408, -inf
    %v8439 = vmax.f32 %v8435, %v8438
    %v8440 = vsel %vm333, %v8410, -inf
    %v8441 = vmax.f32 %v8437, %v8440
    %v8442 = vsel %vm333, %v8412, -inf
    %v8443 = vmax.f32 %v8439, %v8442
    %v8444 = vsel %vm333, %v8414, -inf
    %v8445 = vmax.f32 %v8441, %v8444
    %v8446 = vsel %vm333, %v8416, -inf
    %v8447 = vmax.f32 %v8443, %v8446
    %v8448 = vsel %vm333, %v8418, -inf
    %v8449 = vmax.f32 %v8445, %v8448
    %v8450 = vmax.f32 %v8447, %v8449
    %v8451 = vsel %vm333, %v8389, -inf
    %v8452 = vsel %vm333, %v8391, -inf
    %v8453 = vsel %vm333, %v8393, -inf
    %v8454 = vmax.f32 %v8451, %v8453
    %v8455 = vsel %vm333, %v8395, -inf
    %v8456 = vmax.f32 %v8452, %v8455
    %v8457 = vsel %vm333, %v8397, -inf
    %v8458 = vmax.f32 %v8454, %v8457
    %v8459 = vsel %vm333, %v8399, -inf
    %v8460 = vmax.f32 %v8456, %v8459
    %v8461 = vsel %vm333, %v8401, -inf
    %v8462 = vmax.f32 %v8458, %v8461
    %v8463 = vsel %vm333, %v8403, -inf
    %v8464 = vmax.f32 %v8460, %v8463
    %v8465 = vsel %vm333, %v8405, -inf
    %v8466 = vmax.f32 %v8462, %v8465
    %v8467 = vsel %vm333, %v8407, -inf
    %v8468 = vmax.f32 %v8464, %v8467
    %v8469 = vsel %vm333, %v8409, -inf
    %v8470 = vmax.f32 %v8466, %v8469
    %v8471 = vsel %vm333, %v8411, -inf
    %v8472 = vmax.f32 %v8468, %v8471
    %v8473 = vsel %vm333, %v8413, -inf
    %v8474 = vmax.f32 %v8470, %v8473
    %v8475 = vsel %vm333, %v8415, -inf
    %v8476 = vmax.f32 %v8472, %v8475
    %v8477 = vsel %vm333, %v8417, -inf
    %v8478 = vmax.f32 %v8474, %v8477
    %v8479 = vsel %vm333, %v8419, -inf
    %v8480 = vmax.f32 %v8476, %v8479
    %v8481 = vmax.f32 %v8478, %v8480
    %v8482 = vsel %vm333, %v8450, -inf
    %v8483 = vsel %vm333, %v8481, -inf
    %v8484 = vmax.f32 %v8482, %v8483
    %v8485 = vrot.slane %v8484, 4
    %v8486 = vmax.f32 %v8484, %v8485
    %v8487 = vrot.slane %v8486, 2
    %v8488 = vmax.f32 %v8486, %v8487
    %v8489 = vrot.slane %v8488, 1
    %v8490 = vmax.f32 %v8488, %v8489
    %p8491 = scmp.le.s32.totalorder %s8201, %s8200
    %p8492 = scmp.le.s32.totalorder %s8203, %s8202
    %p8493 = por %p8491, %p8492
    %s8494 = scalar_select %p8493, 1, 0
    %v8495 = vstv %s8494
    %vm8496 = vcmp.eq.s32.totalorder %v8495, 1
    %v8497 = vsel %vm8496, 0.0, %v8490
    %v8498 = vadd.f32 %v8199, %v8497
    %v8499 = vmul.f32 %v8498, 0.25
    %8500 = vst.msk [vmem:[#allocation2 + $0x6] sm:$0x1] %vm1311, %v8499
    %s8501 = sld [smem:[#allocation3 + $0x70]]
    %s8502 = sld [smem:[#allocation3 + $0x71]]
    %s8503 = sld [smem:[#allocation3 + $0x72]]
    %s8504 = sld [smem:[#allocation3 + $0x73]]
    %v8505 = vstv %s8501
    %vm8506 = vcmp.le.s32.totalorder %v8505, 0
    %vm8507 = vcmp.le.s32.totalorder %v8505, 1
    %vm8508 = vcmp.le.s32.totalorder %v8505, 2
    %vm8509 = vcmp.le.s32.totalorder %v8505, 3
    %vm8510 = vcmp.le.s32.totalorder %v8505, 4
    %vm8511 = vcmp.le.s32.totalorder %v8505, 5
    %vm8512 = vcmp.le.s32.totalorder %v8505, 6
    %vm8513 = vcmp.le.s32.totalorder %v8505, 7
    %vm8514 = vcmp.le.s32.totalorder %v8505, 8
    %vm8515 = vcmp.le.s32.totalorder %v8505, 9
    %vm8516 = vcmp.le.s32.totalorder %v8505, 10
    %vm8517 = vcmp.le.s32.totalorder %v8505, 11
    %vm8518 = vcmp.le.s32.totalorder %v8505, 12
    %vm8519 = vcmp.le.s32.totalorder %v8505, 13
    %vm8520 = vcmp.le.s32.totalorder %v8505, 14
    %vm8521 = vcmp.le.s32.totalorder %v8505, 15
    %v8522 = vstv %s8502
    %vm8523 = vcmp.gt.s32.totalorder %v8522, 0
    %vm8524 = vcmp.gt.s32.totalorder %v8522, 1
    %vm8525 = vcmp.gt.s32.totalorder %v8522, 2
    %vm8526 = vcmp.gt.s32.totalorder %v8522, 3
    %vm8527 = vcmp.gt.s32.totalorder %v8522, 4
    %vm8528 = vcmp.gt.s32.totalorder %v8522, 5
    %vm8529 = vcmp.gt.s32.totalorder %v8522, 6
    %vm8530 = vcmp.gt.s32.totalorder %v8522, 7
    %vm8531 = vcmp.gt.s32.totalorder %v8522, 8
    %vm8532 = vcmp.gt.s32.totalorder %v8522, 9
    %vm8533 = vcmp.gt.s32.totalorder %v8522, 10
    %vm8534 = vcmp.gt.s32.totalorder %v8522, 11
    %vm8535 = vcmp.gt.s32.totalorder %v8522, 12
    %vm8536 = vcmp.gt.s32.totalorder %v8522, 13
    %vm8537 = vcmp.gt.s32.totalorder %v8522, 14
    %vm8538 = vcmp.gt.s32.totalorder %v8522, 15
    %vm8539 = vmand %vm8506, %vm8523
    %vm8540 = vmand %vm8507, %vm8524
    %vm8541 = vmand %vm8508, %vm8525
    %vm8542 = vmand %vm8509, %vm8526
    %vm8543 = vmand %vm8510, %vm8527
    %vm8544 = vmand %vm8511, %vm8528
    %vm8545 = vmand %vm8512, %vm8529
    %vm8546 = vmand %vm8513, %vm8530
    %vm8547 = vmand %vm8514, %vm8531
    %vm8548 = vmand %vm8515, %vm8532
    %vm8549 = vmand %vm8516, %vm8533
    %vm8550 = vmand %vm8517, %vm8534
    %vm8551 = vmand %vm8518, %vm8535
    %vm8552 = vmand %vm8519, %vm8536
    %vm8553 = vmand %vm8520, %vm8537
    %vm8554 = vmand %vm8521, %vm8538
    %v8555 = vstv %s8503
    %vm8556 = vcmp.ge.s32.totalorder %v111, %v8555
    %vm8557 = vcmp.ge.s32.totalorder %v112, %v8555
    %vm8558 = vmand %vm8539, %vm8556
    %vm8559 = vmand %vm8539, %vm8557
    %vm8560 = vmand %vm8540, %vm8556
    %vm8561 = vmand %vm8540, %vm8557
    %vm8562 = vmand %vm8541, %vm8556
    %vm8563 = vmand %vm8541, %vm8557
    %vm8564 = vmand %vm8542, %vm8556
    %vm8565 = vmand %vm8542, %vm8557
    %vm8566 = vmand %vm8543, %vm8556
    %vm8567 = vmand %vm8543, %vm8557
    %vm8568 = vmand %vm8544, %vm8556
    %vm8569 = vmand %vm8544, %vm8557
    %vm8570 = vmand %vm8545, %vm8556
    %vm8571 = vmand %vm8545, %vm8557
    %vm8572 = vmand %vm8546, %vm8556
    %vm8573 = vmand %vm8546, %vm8557
    %vm8574 = vmand %vm8547, %vm8556
    %vm8575 = vmand %vm8547, %vm8557
    %vm8576 = vmand %vm8548, %vm8556
    %vm8577 = vmand %vm8548, %vm8557
    %vm8578 = vmand %vm8549, %vm8556
    %vm8579 = vmand %vm8549, %vm8557
    %vm8580 = vmand %vm8550, %vm8556
    %vm8581 = vmand %vm8550, %vm8557
    %vm8582 = vmand %vm8551, %vm8556
    %vm8583 = vmand %vm8551, %vm8557
    %vm8584 = vmand %vm8552, %vm8556
    %vm8585 = vmand %vm8552, %vm8557
    %vm8586 = vmand %vm8553, %vm8556
    %vm8587 = vmand %vm8553, %vm8557
    %vm8588 = vmand %vm8554, %vm8556
    %vm8589 = vmand %vm8554, %vm8557
    %v8590 = vstv %s8504
    %vm8591 = vcmp.lt.s32.totalorder %v111, %v8590
    %vm8592 = vcmp.lt.s32.totalorder %v112, %v8590
    %vm8593 = vmand %vm8558, %vm8591
    %vm8594 = vmand %vm8559, %vm8592
    %vm8595 = vmand %vm8560, %vm8591
    %vm8596 = vmand %vm8561, %vm8592
    %vm8597 = vmand %vm8562, %vm8591
    %vm8598 = vmand %vm8563, %vm8592
    %vm8599 = vmand %vm8564, %vm8591
    %vm8600 = vmand %vm8565, %vm8592
    %vm8601 = vmand %vm8566, %vm8591
    %vm8602 = vmand %vm8567, %vm8592
    %vm8603 = vmand %vm8568, %vm8591
    %vm8604 = vmand %vm8569, %vm8592
    %vm8605 = vmand %vm8570, %vm8591
    %vm8606 = vmand %vm8571, %vm8592
    %vm8607 = vmand %vm8572, %vm8591
    %vm8608 = vmand %vm8573, %vm8592
    %vm8609 = vmand %vm8574, %vm8591
    %vm8610 = vmand %vm8575, %vm8592
    %vm8611 = vmand %vm8576, %vm8591
    %vm8612 = vmand %vm8577, %vm8592
    %vm8613 = vmand %vm8578, %vm8591
    %vm8614 = vmand %vm8579, %vm8592
    %vm8615 = vmand %vm8580, %vm8591
    %vm8616 = vmand %vm8581, %vm8592
    %vm8617 = vmand %vm8582, %vm8591
    %vm8618 = vmand %vm8583, %vm8592
    %vm8619 = vmand %vm8584, %vm8591
    %vm8620 = vmand %vm8585, %vm8592
    %vm8621 = vmand %vm8586, %vm8591
    %vm8622 = vmand %vm8587, %vm8592
    %vm8623 = vmand %vm8588, %vm8591
    %vm8624 = vmand %vm8589, %vm8592
    %v8625 = vsel %vm8593, 1, 0
    %v8626 = vsel %vm8594, 1, 0
    %v8627 = vsel %vm8595, 1, 0
    %v8628 = vsel %vm8596, 1, 0
    %v8629 = vsel %vm8597, 1, 0
    %v8630 = vsel %vm8598, 1, 0
    %v8631 = vsel %vm8599, 1, 0
    %v8632 = vsel %vm8600, 1, 0
    %v8633 = vsel %vm8601, 1, 0
    %v8634 = vsel %vm8602, 1, 0
    %v8635 = vsel %vm8603, 1, 0
    %v8636 = vsel %vm8604, 1, 0
    %v8637 = vsel %vm8605, 1, 0
    %v8638 = vsel %vm8606, 1, 0
    %v8639 = vsel %vm8607, 1, 0
    %v8640 = vsel %vm8608, 1, 0
    %v8641 = vsel %vm8609, 1, 0
    %v8642 = vsel %vm8610, 1, 0
    %v8643 = vsel %vm8611, 1, 0
    %v8644 = vsel %vm8612, 1, 0
    %v8645 = vsel %vm8613, 1, 0
    %v8646 = vsel %vm8614, 1, 0
    %v8647 = vsel %vm8615, 1, 0
    %v8648 = vsel %vm8616, 1, 0
    %v8649 = vsel %vm8617, 1, 0
    %v8650 = vsel %vm8618, 1, 0
    %v8651 = vsel %vm8619, 1, 0
    %v8652 = vsel %vm8620, 1, 0
    %v8653 = vsel %vm8621, 1, 0
    %v8654 = vsel %vm8622, 1, 0
    %v8655 = vsel %vm8623, 1, 0
    %v8656 = vsel %vm8624, 1, 0
    %vm8657 = vcmp.eq.s32.totalorder %v8625, 1
    %vm8658 = vcmp.eq.s32.totalorder %v8626, 1
    %vm8659 = vcmp.eq.s32.totalorder %v8627, 1
    %vm8660 = vcmp.eq.s32.totalorder %v8628, 1
    %vm8661 = vcmp.eq.s32.totalorder %v8629, 1
    %vm8662 = vcmp.eq.s32.totalorder %v8630, 1
    %vm8663 = vcmp.eq.s32.totalorder %v8631, 1
    %vm8664 = vcmp.eq.s32.totalorder %v8632, 1
    %vm8665 = vcmp.eq.s32.totalorder %v8633, 1
    %vm8666 = vcmp.eq.s32.totalorder %v8634, 1
    %vm8667 = vcmp.eq.s32.totalorder %v8635, 1
    %vm8668 = vcmp.eq.s32.totalorder %v8636, 1
    %vm8669 = vcmp.eq.s32.totalorder %v8637, 1
    %vm8670 = vcmp.eq.s32.totalorder %v8638, 1
    %vm8671 = vcmp.eq.s32.totalorder %v8639, 1
    %vm8672 = vcmp.eq.s32.totalorder %v8640, 1
    %vm8673 = vcmp.eq.s32.totalorder %v8641, 1
    %vm8674 = vcmp.eq.s32.totalorder %v8642, 1
    %vm8675 = vcmp.eq.s32.totalorder %v8643, 1
    %vm8676 = vcmp.eq.s32.totalorder %v8644, 1
    %vm8677 = vcmp.eq.s32.totalorder %v8645, 1
    %vm8678 = vcmp.eq.s32.totalorder %v8646, 1
    %vm8679 = vcmp.eq.s32.totalorder %v8647, 1
    %vm8680 = vcmp.eq.s32.totalorder %v8648, 1
    %vm8681 = vcmp.eq.s32.totalorder %v8649, 1
    %vm8682 = vcmp.eq.s32.totalorder %v8650, 1
    %vm8683 = vcmp.eq.s32.totalorder %v8651, 1
    %vm8684 = vcmp.eq.s32.totalorder %v8652, 1
    %vm8685 = vcmp.eq.s32.totalorder %v8653, 1
    %vm8686 = vcmp.eq.s32.totalorder %v8654, 1
    %vm8687 = vcmp.eq.s32.totalorder %v8655, 1
    %vm8688 = vcmp.eq.s32.totalorder %v8656, 1
    %v8689 = vsel %vm8657, %v78, -3e+38
    %v8690 = vsel %vm8658, %v79, -3e+38
    %v8691 = vsel %vm8659, %v80, -3e+38
    %v8692 = vsel %vm8660, %v81, -3e+38
    %v8693 = vsel %vm8661, %v82, -3e+38
    %v8694 = vsel %vm8662, %v83, -3e+38
    %v8695 = vsel %vm8663, %v84, -3e+38
    %v8696 = vsel %vm8664, %v85, -3e+38
    %v8697 = vsel %vm8665, %v86, -3e+38
    %v8698 = vsel %vm8666, %v87, -3e+38
    %v8699 = vsel %vm8667, %v88, -3e+38
    %v8700 = vsel %vm8668, %v89, -3e+38
    %v8701 = vsel %vm8669, %v90, -3e+38
    %v8702 = vsel %vm8670, %v91, -3e+38
    %v8703 = vsel %vm8671, %v92, -3e+38
    %v8704 = vsel %vm8672, %v93, -3e+38
    %v8705 = vsel %vm8673, %v94, -3e+38
    %v8706 = vsel %vm8674, %v95, -3e+38
    %v8707 = vsel %vm8675, %v96, -3e+38
    %v8708 = vsel %vm8676, %v97, -3e+38
    %v8709 = vsel %vm8677, %v98, -3e+38
    %v8710 = vsel %vm8678, %v99, -3e+38
    %v8711 = vsel %vm8679, %v100, -3e+38
    %v8712 = vsel %vm8680, %v101, -3e+38
    %v8713 = vsel %vm8681, %v102, -3e+38
    %v8714 = vsel %vm8682, %v103, -3e+38
    %v8715 = vsel %vm8683, %v104, -3e+38
    %v8716 = vsel %vm8684, %v105, -3e+38
    %v8717 = vsel %vm8685, %v106, -3e+38
    %v8718 = vsel %vm8686, %v107, -3e+38
    %v8719 = vsel %vm8687, %v108, -3e+38
    %v8720 = vsel %vm8688, %v109, -3e+38
    %v8721 = vsel %vm333, %v8689, -inf
    %v8722 = vsel %vm333, %v8691, -inf
    %v8723 = vsel %vm333, %v8693, -inf
    %v8724 = vmax.f32 %v8721, %v8723
    %v8725 = vsel %vm333, %v8695, -inf
    %v8726 = vmax.f32 %v8722, %v8725
    %v8727 = vsel %vm333, %v8697, -inf
    %v8728 = vmax.f32 %v8724, %v8727
    %v8729 = vsel %vm333, %v8699, -inf
    %v8730 = vmax.f32 %v8726, %v8729
    %v8731 = vsel %vm333, %v8701, -inf
    %v8732 = vmax.f32 %v8728, %v8731
    %v8733 = vsel %vm333, %v8703, -inf
    %v8734 = vmax.f32 %v8730, %v8733
    %v8735 = vsel %vm333, %v8705, -inf
    %v8736 = vmax.f32 %v8732, %v8735
    %v8737 = vsel %vm333, %v8707, -inf
    %v8738 = vmax.f32 %v8734, %v8737
    %v8739 = vsel %vm333, %v8709, -inf
    %v8740 = vmax.f32 %v8736, %v8739
    %v8741 = vsel %vm333, %v8711, -inf
    %v8742 = vmax.f32 %v8738, %v8741
    %v8743 = vsel %vm333, %v8713, -inf
    %v8744 = vmax.f32 %v8740, %v8743
    %v8745 = vsel %vm333, %v8715, -inf
    %v8746 = vmax.f32 %v8742, %v8745
    %v8747 = vsel %vm333, %v8717, -inf
    %v8748 = vmax.f32 %v8744, %v8747
    %v8749 = vsel %vm333, %v8719, -inf
    %v8750 = vmax.f32 %v8746, %v8749
    %v8751 = vmax.f32 %v8748, %v8750
    %v8752 = vsel %vm333, %v8690, -inf
    %v8753 = vsel %vm333, %v8692, -inf
    %v8754 = vsel %vm333, %v8694, -inf
    %v8755 = vmax.f32 %v8752, %v8754
    %v8756 = vsel %vm333, %v8696, -inf
    %v8757 = vmax.f32 %v8753, %v8756
    %v8758 = vsel %vm333, %v8698, -inf
    %v8759 = vmax.f32 %v8755, %v8758
    %v8760 = vsel %vm333, %v8700, -inf
    %v8761 = vmax.f32 %v8757, %v8760
    %v8762 = vsel %vm333, %v8702, -inf
    %v8763 = vmax.f32 %v8759, %v8762
    %v8764 = vsel %vm333, %v8704, -inf
    %v8765 = vmax.f32 %v8761, %v8764
    %v8766 = vsel %vm333, %v8706, -inf
    %v8767 = vmax.f32 %v8763, %v8766
    %v8768 = vsel %vm333, %v8708, -inf
    %v8769 = vmax.f32 %v8765, %v8768
    %v8770 = vsel %vm333, %v8710, -inf
    %v8771 = vmax.f32 %v8767, %v8770
    %v8772 = vsel %vm333, %v8712, -inf
    %v8773 = vmax.f32 %v8769, %v8772
    %v8774 = vsel %vm333, %v8714, -inf
    %v8775 = vmax.f32 %v8771, %v8774
    %v8776 = vsel %vm333, %v8716, -inf
    %v8777 = vmax.f32 %v8773, %v8776
    %v8778 = vsel %vm333, %v8718, -inf
    %v8779 = vmax.f32 %v8775, %v8778
    %v8780 = vsel %vm333, %v8720, -inf
    %v8781 = vmax.f32 %v8777, %v8780
    %v8782 = vmax.f32 %v8779, %v8781
    %v8783 = vsel %vm333, %v8751, -inf
    %v8784 = vsel %vm333, %v8782, -inf
    %v8785 = vmax.f32 %v8783, %v8784
    %v8786 = vrot.slane %v8785, 4
    %v8787 = vmax.f32 %v8785, %v8786
    %v8788 = vrot.slane %v8787, 2
    %v8789 = vmax.f32 %v8787, %v8788
    %v8790 = vrot.slane %v8789, 1
    %v8791 = vmax.f32 %v8789, %v8790
    %p8792 = scmp.le.s32.totalorder %s8502, %s8501
    %p8793 = scmp.le.s32.totalorder %s8504, %s8503
    %p8794 = por %p8792, %p8793
    %s8795 = scalar_select %p8794, 1, 0
    %v8796 = vstv %s8795
    %vm8797 = vcmp.eq.s32.totalorder %v8796, 1
    %v8798 = vsel %vm8797, 0.0, %v8791
    %v8799 = vadd.f32 %v8798, 0.0
    %s8800 = sld [smem:[#allocation3 + $0x74]]
    %s8801 = sld [smem:[#allocation3 + $0x75]]
    %s8802 = sld [smem:[#allocation3 + $0x76]]
    %s8803 = sld [smem:[#allocation3 + $0x77]]
    %v8804 = vstv %s8800
    %vm8805 = vcmp.le.s32.totalorder %v8804, 0
    %vm8806 = vcmp.le.s32.totalorder %v8804, 1
    %vm8807 = vcmp.le.s32.totalorder %v8804, 2
    %vm8808 = vcmp.le.s32.totalorder %v8804, 3
    %vm8809 = vcmp.le.s32.totalorder %v8804, 4
    %vm8810 = vcmp.le.s32.totalorder %v8804, 5
    %vm8811 = vcmp.le.s32.totalorder %v8804, 6
    %vm8812 = vcmp.le.s32.totalorder %v8804, 7
    %vm8813 = vcmp.le.s32.totalorder %v8804, 8
    %vm8814 = vcmp.le.s32.totalorder %v8804, 9
    %vm8815 = vcmp.le.s32.totalorder %v8804, 10
    %vm8816 = vcmp.le.s32.totalorder %v8804, 11
    %vm8817 = vcmp.le.s32.totalorder %v8804, 12
    %vm8818 = vcmp.le.s32.totalorder %v8804, 13
    %vm8819 = vcmp.le.s32.totalorder %v8804, 14
    %vm8820 = vcmp.le.s32.totalorder %v8804, 15
    %v8821 = vstv %s8801
    %vm8822 = vcmp.gt.s32.totalorder %v8821, 0
    %vm8823 = vcmp.gt.s32.totalorder %v8821, 1
    %vm8824 = vcmp.gt.s32.totalorder %v8821, 2
    %vm8825 = vcmp.gt.s32.totalorder %v8821, 3
    %vm8826 = vcmp.gt.s32.totalorder %v8821, 4
    %vm8827 = vcmp.gt.s32.totalorder %v8821, 5
    %vm8828 = vcmp.gt.s32.totalorder %v8821, 6
    %vm8829 = vcmp.gt.s32.totalorder %v8821, 7
    %vm8830 = vcmp.gt.s32.totalorder %v8821, 8
    %vm8831 = vcmp.gt.s32.totalorder %v8821, 9
    %vm8832 = vcmp.gt.s32.totalorder %v8821, 10
    %vm8833 = vcmp.gt.s32.totalorder %v8821, 11
    %vm8834 = vcmp.gt.s32.totalorder %v8821, 12
    %vm8835 = vcmp.gt.s32.totalorder %v8821, 13
    %vm8836 = vcmp.gt.s32.totalorder %v8821, 14
    %vm8837 = vcmp.gt.s32.totalorder %v8821, 15
    %vm8838 = vmand %vm8805, %vm8822
    %vm8839 = vmand %vm8806, %vm8823
    %vm8840 = vmand %vm8807, %vm8824
    %vm8841 = vmand %vm8808, %vm8825
    %vm8842 = vmand %vm8809, %vm8826
    %vm8843 = vmand %vm8810, %vm8827
    %vm8844 = vmand %vm8811, %vm8828
    %vm8845 = vmand %vm8812, %vm8829
    %vm8846 = vmand %vm8813, %vm8830
    %vm8847 = vmand %vm8814, %vm8831
    %vm8848 = vmand %vm8815, %vm8832
    %vm8849 = vmand %vm8816, %vm8833
    %vm8850 = vmand %vm8817, %vm8834
    %vm8851 = vmand %vm8818, %vm8835
    %vm8852 = vmand %vm8819, %vm8836
    %vm8853 = vmand %vm8820, %vm8837
    %v8854 = vstv %s8802
    %vm8855 = vcmp.ge.s32.totalorder %v111, %v8854
    %vm8856 = vcmp.ge.s32.totalorder %v112, %v8854
    %vm8857 = vmand %vm8838, %vm8855
    %vm8858 = vmand %vm8838, %vm8856
    %vm8859 = vmand %vm8839, %vm8855
    %vm8860 = vmand %vm8839, %vm8856
    %vm8861 = vmand %vm8840, %vm8855
    %vm8862 = vmand %vm8840, %vm8856
    %vm8863 = vmand %vm8841, %vm8855
    %vm8864 = vmand %vm8841, %vm8856
    %vm8865 = vmand %vm8842, %vm8855
    %vm8866 = vmand %vm8842, %vm8856
    %vm8867 = vmand %vm8843, %vm8855
    %vm8868 = vmand %vm8843, %vm8856
    %vm8869 = vmand %vm8844, %vm8855
    %vm8870 = vmand %vm8844, %vm8856
    %vm8871 = vmand %vm8845, %vm8855
    %vm8872 = vmand %vm8845, %vm8856
    %vm8873 = vmand %vm8846, %vm8855
    %vm8874 = vmand %vm8846, %vm8856
    %vm8875 = vmand %vm8847, %vm8855
    %vm8876 = vmand %vm8847, %vm8856
    %vm8877 = vmand %vm8848, %vm8855
    %vm8878 = vmand %vm8848, %vm8856
    %vm8879 = vmand %vm8849, %vm8855
    %vm8880 = vmand %vm8849, %vm8856
    %vm8881 = vmand %vm8850, %vm8855
    %vm8882 = vmand %vm8850, %vm8856
    %vm8883 = vmand %vm8851, %vm8855
    %vm8884 = vmand %vm8851, %vm8856
    %vm8885 = vmand %vm8852, %vm8855
    %vm8886 = vmand %vm8852, %vm8856
    %vm8887 = vmand %vm8853, %vm8855
    %vm8888 = vmand %vm8853, %vm8856
    %v8889 = vstv %s8803
    %vm8890 = vcmp.lt.s32.totalorder %v111, %v8889
    %vm8891 = vcmp.lt.s32.totalorder %v112, %v8889
    %vm8892 = vmand %vm8857, %vm8890
    %vm8893 = vmand %vm8858, %vm8891
    %vm8894 = vmand %vm8859, %vm8890
    %vm8895 = vmand %vm8860, %vm8891
    %vm8896 = vmand %vm8861, %vm8890
    %vm8897 = vmand %vm8862, %vm8891
    %vm8898 = vmand %vm8863, %vm8890
    %vm8899 = vmand %vm8864, %vm8891
    %vm8900 = vmand %vm8865, %vm8890
    %vm8901 = vmand %vm8866, %vm8891
    %vm8902 = vmand %vm8867, %vm8890
    %vm8903 = vmand %vm8868, %vm8891
    %vm8904 = vmand %vm8869, %vm8890
    %vm8905 = vmand %vm8870, %vm8891
    %vm8906 = vmand %vm8871, %vm8890
    %vm8907 = vmand %vm8872, %vm8891
    %vm8908 = vmand %vm8873, %vm8890
    %vm8909 = vmand %vm8874, %vm8891
    %vm8910 = vmand %vm8875, %vm8890
    %vm8911 = vmand %vm8876, %vm8891
    %vm8912 = vmand %vm8877, %vm8890
    %vm8913 = vmand %vm8878, %vm8891
    %vm8914 = vmand %vm8879, %vm8890
    %vm8915 = vmand %vm8880, %vm8891
    %vm8916 = vmand %vm8881, %vm8890
    %vm8917 = vmand %vm8882, %vm8891
    %vm8918 = vmand %vm8883, %vm8890
    %vm8919 = vmand %vm8884, %vm8891
    %vm8920 = vmand %vm8885, %vm8890
    %vm8921 = vmand %vm8886, %vm8891
    %vm8922 = vmand %vm8887, %vm8890
    %vm8923 = vmand %vm8888, %vm8891
    %v8924 = vsel %vm8892, 1, 0
    %v8925 = vsel %vm8893, 1, 0
    %v8926 = vsel %vm8894, 1, 0
    %v8927 = vsel %vm8895, 1, 0
    %v8928 = vsel %vm8896, 1, 0
    %v8929 = vsel %vm8897, 1, 0
    %v8930 = vsel %vm8898, 1, 0
    %v8931 = vsel %vm8899, 1, 0
    %v8932 = vsel %vm8900, 1, 0
    %v8933 = vsel %vm8901, 1, 0
    %v8934 = vsel %vm8902, 1, 0
    %v8935 = vsel %vm8903, 1, 0
    %v8936 = vsel %vm8904, 1, 0
    %v8937 = vsel %vm8905, 1, 0
    %v8938 = vsel %vm8906, 1, 0
    %v8939 = vsel %vm8907, 1, 0
    %v8940 = vsel %vm8908, 1, 0
    %v8941 = vsel %vm8909, 1, 0
    %v8942 = vsel %vm8910, 1, 0
    %v8943 = vsel %vm8911, 1, 0
    %v8944 = vsel %vm8912, 1, 0
    %v8945 = vsel %vm8913, 1, 0
    %v8946 = vsel %vm8914, 1, 0
    %v8947 = vsel %vm8915, 1, 0
    %v8948 = vsel %vm8916, 1, 0
    %v8949 = vsel %vm8917, 1, 0
    %v8950 = vsel %vm8918, 1, 0
    %v8951 = vsel %vm8919, 1, 0
    %v8952 = vsel %vm8920, 1, 0
    %v8953 = vsel %vm8921, 1, 0
    %v8954 = vsel %vm8922, 1, 0
    %v8955 = vsel %vm8923, 1, 0
    %vm8956 = vcmp.eq.s32.totalorder %v8924, 1
    %vm8957 = vcmp.eq.s32.totalorder %v8925, 1
    %vm8958 = vcmp.eq.s32.totalorder %v8926, 1
    %vm8959 = vcmp.eq.s32.totalorder %v8927, 1
    %vm8960 = vcmp.eq.s32.totalorder %v8928, 1
    %vm8961 = vcmp.eq.s32.totalorder %v8929, 1
    %vm8962 = vcmp.eq.s32.totalorder %v8930, 1
    %vm8963 = vcmp.eq.s32.totalorder %v8931, 1
    %vm8964 = vcmp.eq.s32.totalorder %v8932, 1
    %vm8965 = vcmp.eq.s32.totalorder %v8933, 1
    %vm8966 = vcmp.eq.s32.totalorder %v8934, 1
    %vm8967 = vcmp.eq.s32.totalorder %v8935, 1
    %vm8968 = vcmp.eq.s32.totalorder %v8936, 1
    %vm8969 = vcmp.eq.s32.totalorder %v8937, 1
    %vm8970 = vcmp.eq.s32.totalorder %v8938, 1
    %vm8971 = vcmp.eq.s32.totalorder %v8939, 1
    %vm8972 = vcmp.eq.s32.totalorder %v8940, 1
    %vm8973 = vcmp.eq.s32.totalorder %v8941, 1
    %vm8974 = vcmp.eq.s32.totalorder %v8942, 1
    %vm8975 = vcmp.eq.s32.totalorder %v8943, 1
    %vm8976 = vcmp.eq.s32.totalorder %v8944, 1
    %vm8977 = vcmp.eq.s32.totalorder %v8945, 1
    %vm8978 = vcmp.eq.s32.totalorder %v8946, 1
    %vm8979 = vcmp.eq.s32.totalorder %v8947, 1
    %vm8980 = vcmp.eq.s32.totalorder %v8948, 1
    %vm8981 = vcmp.eq.s32.totalorder %v8949, 1
    %vm8982 = vcmp.eq.s32.totalorder %v8950, 1
    %vm8983 = vcmp.eq.s32.totalorder %v8951, 1
    %vm8984 = vcmp.eq.s32.totalorder %v8952, 1
    %vm8985 = vcmp.eq.s32.totalorder %v8953, 1
    %vm8986 = vcmp.eq.s32.totalorder %v8954, 1
    %vm8987 = vcmp.eq.s32.totalorder %v8955, 1
    %v8988 = vsel %vm8956, %v78, -3e+38
    %v8989 = vsel %vm8957, %v79, -3e+38
    %v8990 = vsel %vm8958, %v80, -3e+38
    %v8991 = vsel %vm8959, %v81, -3e+38
    %v8992 = vsel %vm8960, %v82, -3e+38
    %v8993 = vsel %vm8961, %v83, -3e+38
    %v8994 = vsel %vm8962, %v84, -3e+38
    %v8995 = vsel %vm8963, %v85, -3e+38
    %v8996 = vsel %vm8964, %v86, -3e+38
    %v8997 = vsel %vm8965, %v87, -3e+38
    %v8998 = vsel %vm8966, %v88, -3e+38
    %v8999 = vsel %vm8967, %v89, -3e+38
    %v9000 = vsel %vm8968, %v90, -3e+38
    %v9001 = vsel %vm8969, %v91, -3e+38
    %v9002 = vsel %vm8970, %v92, -3e+38
    %v9003 = vsel %vm8971, %v93, -3e+38
    %v9004 = vsel %vm8972, %v94, -3e+38
    %v9005 = vsel %vm8973, %v95, -3e+38
    %v9006 = vsel %vm8974, %v96, -3e+38
    %v9007 = vsel %vm8975, %v97, -3e+38
    %v9008 = vsel %vm8976, %v98, -3e+38
    %v9009 = vsel %vm8977, %v99, -3e+38
    %v9010 = vsel %vm8978, %v100, -3e+38
    %v9011 = vsel %vm8979, %v101, -3e+38
    %v9012 = vsel %vm8980, %v102, -3e+38
    %v9013 = vsel %vm8981, %v103, -3e+38
    %v9014 = vsel %vm8982, %v104, -3e+38
    %v9015 = vsel %vm8983, %v105, -3e+38
    %v9016 = vsel %vm8984, %v106, -3e+38
    %v9017 = vsel %vm8985, %v107, -3e+38
    %v9018 = vsel %vm8986, %v108, -3e+38
    %v9019 = vsel %vm8987, %v109, -3e+38
    %v9020 = vsel %vm333, %v8988, -inf
    %v9021 = vsel %vm333, %v8990, -inf
    %v9022 = vsel %vm333, %v8992, -inf
    %v9023 = vmax.f32 %v9020, %v9022
    %v9024 = vsel %vm333, %v8994, -inf
    %v9025 = vmax.f32 %v9021, %v9024
    %v9026 = vsel %vm333, %v8996, -inf
    %v9027 = vmax.f32 %v9023, %v9026
    %v9028 = vsel %vm333, %v8998, -inf
    %v9029 = vmax.f32 %v9025, %v9028
    %v9030 = vsel %vm333, %v9000, -inf
    %v9031 = vmax.f32 %v9027, %v9030
    %v9032 = vsel %vm333, %v9002, -inf
    %v9033 = vmax.f32 %v9029, %v9032
    %v9034 = vsel %vm333, %v9004, -inf
    %v9035 = vmax.f32 %v9031, %v9034
    %v9036 = vsel %vm333, %v9006, -inf
    %v9037 = vmax.f32 %v9033, %v9036
    %v9038 = vsel %vm333, %v9008, -inf
    %v9039 = vmax.f32 %v9035, %v9038
    %v9040 = vsel %vm333, %v9010, -inf
    %v9041 = vmax.f32 %v9037, %v9040
    %v9042 = vsel %vm333, %v9012, -inf
    %v9043 = vmax.f32 %v9039, %v9042
    %v9044 = vsel %vm333, %v9014, -inf
    %v9045 = vmax.f32 %v9041, %v9044
    %v9046 = vsel %vm333, %v9016, -inf
    %v9047 = vmax.f32 %v9043, %v9046
    %v9048 = vsel %vm333, %v9018, -inf
    %v9049 = vmax.f32 %v9045, %v9048
    %v9050 = vmax.f32 %v9047, %v9049
    %v9051 = vsel %vm333, %v8989, -inf
    %v9052 = vsel %vm333, %v8991, -inf
    %v9053 = vsel %vm333, %v8993, -inf
    %v9054 = vmax.f32 %v9051, %v9053
    %v9055 = vsel %vm333, %v8995, -inf
    %v9056 = vmax.f32 %v9052, %v9055
    %v9057 = vsel %vm333, %v8997, -inf
    %v9058 = vmax.f32 %v9054, %v9057
    %v9059 = vsel %vm333, %v8999, -inf
    %v9060 = vmax.f32 %v9056, %v9059
    %v9061 = vsel %vm333, %v9001, -inf
    %v9062 = vmax.f32 %v9058, %v9061
    %v9063 = vsel %vm333, %v9003, -inf
    %v9064 = vmax.f32 %v9060, %v9063
    %v9065 = vsel %vm333, %v9005, -inf
    %v9066 = vmax.f32 %v9062, %v9065
    %v9067 = vsel %vm333, %v9007, -inf
    %v9068 = vmax.f32 %v9064, %v9067
    %v9069 = vsel %vm333, %v9009, -inf
    %v9070 = vmax.f32 %v9066, %v9069
    %v9071 = vsel %vm333, %v9011, -inf
    %v9072 = vmax.f32 %v9068, %v9071
    %v9073 = vsel %vm333, %v9013, -inf
    %v9074 = vmax.f32 %v9070, %v9073
    %v9075 = vsel %vm333, %v9015, -inf
    %v9076 = vmax.f32 %v9072, %v9075
    %v9077 = vsel %vm333, %v9017, -inf
    %v9078 = vmax.f32 %v9074, %v9077
    %v9079 = vsel %vm333, %v9019, -inf
    %v9080 = vmax.f32 %v9076, %v9079
    %v9081 = vmax.f32 %v9078, %v9080
    %v9082 = vsel %vm333, %v9050, -inf
    %v9083 = vsel %vm333, %v9081, -inf
    %v9084 = vmax.f32 %v9082, %v9083
    %v9085 = vrot.slane %v9084, 4
    %v9086 = vmax.f32 %v9084, %v9085
    %v9087 = vrot.slane %v9086, 2
    %v9088 = vmax.f32 %v9086, %v9087
    %v9089 = vrot.slane %v9088, 1
    %v9090 = vmax.f32 %v9088, %v9089
    %p9091 = scmp.le.s32.totalorder %s8801, %s8800
    %p9092 = scmp.le.s32.totalorder %s8803, %s8802
    %p9093 = por %p9091, %p9092
    %s9094 = scalar_select %p9093, 1, 0
    %v9095 = vstv %s9094
    %vm9096 = vcmp.eq.s32.totalorder %v9095, 1
    %v9097 = vsel %vm9096, 0.0, %v9090
    %v9098 = vadd.f32 %v8799, %v9097
    %s9099 = sld [smem:[#allocation3 + $0x78]]
    %s9100 = sld [smem:[#allocation3 + $0x79]]
    %s9101 = sld [smem:[#allocation3 + $0x7a]]
    %s9102 = sld [smem:[#allocation3 + $0x7b]]
    %v9103 = vstv %s9099
    %vm9104 = vcmp.le.s32.totalorder %v9103, 0
    %vm9105 = vcmp.le.s32.totalorder %v9103, 1
    %vm9106 = vcmp.le.s32.totalorder %v9103, 2
    %vm9107 = vcmp.le.s32.totalorder %v9103, 3
    %vm9108 = vcmp.le.s32.totalorder %v9103, 4
    %vm9109 = vcmp.le.s32.totalorder %v9103, 5
    %vm9110 = vcmp.le.s32.totalorder %v9103, 6
    %vm9111 = vcmp.le.s32.totalorder %v9103, 7
    %vm9112 = vcmp.le.s32.totalorder %v9103, 8
    %vm9113 = vcmp.le.s32.totalorder %v9103, 9
    %vm9114 = vcmp.le.s32.totalorder %v9103, 10
    %vm9115 = vcmp.le.s32.totalorder %v9103, 11
    %vm9116 = vcmp.le.s32.totalorder %v9103, 12
    %vm9117 = vcmp.le.s32.totalorder %v9103, 13
    %vm9118 = vcmp.le.s32.totalorder %v9103, 14
    %vm9119 = vcmp.le.s32.totalorder %v9103, 15
    %v9120 = vstv %s9100
    %vm9121 = vcmp.gt.s32.totalorder %v9120, 0
    %vm9122 = vcmp.gt.s32.totalorder %v9120, 1
    %vm9123 = vcmp.gt.s32.totalorder %v9120, 2
    %vm9124 = vcmp.gt.s32.totalorder %v9120, 3
    %vm9125 = vcmp.gt.s32.totalorder %v9120, 4
    %vm9126 = vcmp.gt.s32.totalorder %v9120, 5
    %vm9127 = vcmp.gt.s32.totalorder %v9120, 6
    %vm9128 = vcmp.gt.s32.totalorder %v9120, 7
    %vm9129 = vcmp.gt.s32.totalorder %v9120, 8
    %vm9130 = vcmp.gt.s32.totalorder %v9120, 9
    %vm9131 = vcmp.gt.s32.totalorder %v9120, 10
    %vm9132 = vcmp.gt.s32.totalorder %v9120, 11
    %vm9133 = vcmp.gt.s32.totalorder %v9120, 12
    %vm9134 = vcmp.gt.s32.totalorder %v9120, 13
    %vm9135 = vcmp.gt.s32.totalorder %v9120, 14
    %vm9136 = vcmp.gt.s32.totalorder %v9120, 15
    %vm9137 = vmand %vm9104, %vm9121
    %vm9138 = vmand %vm9105, %vm9122
    %vm9139 = vmand %vm9106, %vm9123
    %vm9140 = vmand %vm9107, %vm9124
    %vm9141 = vmand %vm9108, %vm9125
    %vm9142 = vmand %vm9109, %vm9126
    %vm9143 = vmand %vm9110, %vm9127
    %vm9144 = vmand %vm9111, %vm9128
    %vm9145 = vmand %vm9112, %vm9129
    %vm9146 = vmand %vm9113, %vm9130
    %vm9147 = vmand %vm9114, %vm9131
    %vm9148 = vmand %vm9115, %vm9132
    %vm9149 = vmand %vm9116, %vm9133
    %vm9150 = vmand %vm9117, %vm9134
    %vm9151 = vmand %vm9118, %vm9135
    %vm9152 = vmand %vm9119, %vm9136
    %v9153 = vstv %s9101
    %vm9154 = vcmp.ge.s32.totalorder %v111, %v9153
    %vm9155 = vcmp.ge.s32.totalorder %v112, %v9153
    %vm9156 = vmand %vm9137, %vm9154
    %vm9157 = vmand %vm9137, %vm9155
    %vm9158 = vmand %vm9138, %vm9154
    %vm9159 = vmand %vm9138, %vm9155
    %vm9160 = vmand %vm9139, %vm9154
    %vm9161 = vmand %vm9139, %vm9155
    %vm9162 = vmand %vm9140, %vm9154
    %vm9163 = vmand %vm9140, %vm9155
    %vm9164 = vmand %vm9141, %vm9154
    %vm9165 = vmand %vm9141, %vm9155
    %vm9166 = vmand %vm9142, %vm9154
    %vm9167 = vmand %vm9142, %vm9155
    %vm9168 = vmand %vm9143, %vm9154
    %vm9169 = vmand %vm9143, %vm9155
    %vm9170 = vmand %vm9144, %vm9154
    %vm9171 = vmand %vm9144, %vm9155
    %vm9172 = vmand %vm9145, %vm9154
    %vm9173 = vmand %vm9145, %vm9155
    %vm9174 = vmand %vm9146, %vm9154
    %vm9175 = vmand %vm9146, %vm9155
    %vm9176 = vmand %vm9147, %vm9154
    %vm9177 = vmand %vm9147, %vm9155
    %vm9178 = vmand %vm9148, %vm9154
    %vm9179 = vmand %vm9148, %vm9155
    %vm9180 = vmand %vm9149, %vm9154
    %vm9181 = vmand %vm9149, %vm9155
    %vm9182 = vmand %vm9150, %vm9154
    %vm9183 = vmand %vm9150, %vm9155
    %vm9184 = vmand %vm9151, %vm9154
    %vm9185 = vmand %vm9151, %vm9155
    %vm9186 = vmand %vm9152, %vm9154
    %vm9187 = vmand %vm9152, %vm9155
    %v9188 = vstv %s9102
    %vm9189 = vcmp.lt.s32.totalorder %v111, %v9188
    %vm9190 = vcmp.lt.s32.totalorder %v112, %v9188
    %vm9191 = vmand %vm9156, %vm9189
    %vm9192 = vmand %vm9157, %vm9190
    %vm9193 = vmand %vm9158, %vm9189
    %vm9194 = vmand %vm9159, %vm9190
    %vm9195 = vmand %vm9160, %vm9189
    %vm9196 = vmand %vm9161, %vm9190
    %vm9197 = vmand %vm9162, %vm9189
    %vm9198 = vmand %vm9163, %vm9190
    %vm9199 = vmand %vm9164, %vm9189
    %vm9200 = vmand %vm9165, %vm9190
    %vm9201 = vmand %vm9166, %vm9189
    %vm9202 = vmand %vm9167, %vm9190
    %vm9203 = vmand %vm9168, %vm9189
    %vm9204 = vmand %vm9169, %vm9190
    %vm9205 = vmand %vm9170, %vm9189
    %vm9206 = vmand %vm9171, %vm9190
    %vm9207 = vmand %vm9172, %vm9189
    %vm9208 = vmand %vm9173, %vm9190
    %vm9209 = vmand %vm9174, %vm9189
    %vm9210 = vmand %vm9175, %vm9190
    %vm9211 = vmand %vm9176, %vm9189
    %vm9212 = vmand %vm9177, %vm9190
    %vm9213 = vmand %vm9178, %vm9189
    %vm9214 = vmand %vm9179, %vm9190
    %vm9215 = vmand %vm9180, %vm9189
    %vm9216 = vmand %vm9181, %vm9190
    %vm9217 = vmand %vm9182, %vm9189
    %vm9218 = vmand %vm9183, %vm9190
    %vm9219 = vmand %vm9184, %vm9189
    %vm9220 = vmand %vm9185, %vm9190
    %vm9221 = vmand %vm9186, %vm9189
    %vm9222 = vmand %vm9187, %vm9190
    %v9223 = vsel %vm9191, 1, 0
    %v9224 = vsel %vm9192, 1, 0
    %v9225 = vsel %vm9193, 1, 0
    %v9226 = vsel %vm9194, 1, 0
    %v9227 = vsel %vm9195, 1, 0
    %v9228 = vsel %vm9196, 1, 0
    %v9229 = vsel %vm9197, 1, 0
    %v9230 = vsel %vm9198, 1, 0
    %v9231 = vsel %vm9199, 1, 0
    %v9232 = vsel %vm9200, 1, 0
    %v9233 = vsel %vm9201, 1, 0
    %v9234 = vsel %vm9202, 1, 0
    %v9235 = vsel %vm9203, 1, 0
    %v9236 = vsel %vm9204, 1, 0
    %v9237 = vsel %vm9205, 1, 0
    %v9238 = vsel %vm9206, 1, 0
    %v9239 = vsel %vm9207, 1, 0
    %v9240 = vsel %vm9208, 1, 0
    %v9241 = vsel %vm9209, 1, 0
    %v9242 = vsel %vm9210, 1, 0
    %v9243 = vsel %vm9211, 1, 0
    %v9244 = vsel %vm9212, 1, 0
    %v9245 = vsel %vm9213, 1, 0
    %v9246 = vsel %vm9214, 1, 0
    %v9247 = vsel %vm9215, 1, 0
    %v9248 = vsel %vm9216, 1, 0
    %v9249 = vsel %vm9217, 1, 0
    %v9250 = vsel %vm9218, 1, 0
    %v9251 = vsel %vm9219, 1, 0
    %v9252 = vsel %vm9220, 1, 0
    %v9253 = vsel %vm9221, 1, 0
    %v9254 = vsel %vm9222, 1, 0
    %vm9255 = vcmp.eq.s32.totalorder %v9223, 1
    %vm9256 = vcmp.eq.s32.totalorder %v9224, 1
    %vm9257 = vcmp.eq.s32.totalorder %v9225, 1
    %vm9258 = vcmp.eq.s32.totalorder %v9226, 1
    %vm9259 = vcmp.eq.s32.totalorder %v9227, 1
    %vm9260 = vcmp.eq.s32.totalorder %v9228, 1
    %vm9261 = vcmp.eq.s32.totalorder %v9229, 1
    %vm9262 = vcmp.eq.s32.totalorder %v9230, 1
    %vm9263 = vcmp.eq.s32.totalorder %v9231, 1
    %vm9264 = vcmp.eq.s32.totalorder %v9232, 1
    %vm9265 = vcmp.eq.s32.totalorder %v9233, 1
    %vm9266 = vcmp.eq.s32.totalorder %v9234, 1
    %vm9267 = vcmp.eq.s32.totalorder %v9235, 1
    %vm9268 = vcmp.eq.s32.totalorder %v9236, 1
    %vm9269 = vcmp.eq.s32.totalorder %v9237, 1
    %vm9270 = vcmp.eq.s32.totalorder %v9238, 1
    %vm9271 = vcmp.eq.s32.totalorder %v9239, 1
    %vm9272 = vcmp.eq.s32.totalorder %v9240, 1
    %vm9273 = vcmp.eq.s32.totalorder %v9241, 1
    %vm9274 = vcmp.eq.s32.totalorder %v9242, 1
    %vm9275 = vcmp.eq.s32.totalorder %v9243, 1
    %vm9276 = vcmp.eq.s32.totalorder %v9244, 1
    %vm9277 = vcmp.eq.s32.totalorder %v9245, 1
    %vm9278 = vcmp.eq.s32.totalorder %v9246, 1
    %vm9279 = vcmp.eq.s32.totalorder %v9247, 1
    %vm9280 = vcmp.eq.s32.totalorder %v9248, 1
    %vm9281 = vcmp.eq.s32.totalorder %v9249, 1
    %vm9282 = vcmp.eq.s32.totalorder %v9250, 1
    %vm9283 = vcmp.eq.s32.totalorder %v9251, 1
    %vm9284 = vcmp.eq.s32.totalorder %v9252, 1
    %vm9285 = vcmp.eq.s32.totalorder %v9253, 1
    %vm9286 = vcmp.eq.s32.totalorder %v9254, 1
    %v9287 = vsel %vm9255, %v78, -3e+38
    %v9288 = vsel %vm9256, %v79, -3e+38
    %v9289 = vsel %vm9257, %v80, -3e+38
    %v9290 = vsel %vm9258, %v81, -3e+38
    %v9291 = vsel %vm9259, %v82, -3e+38
    %v9292 = vsel %vm9260, %v83, -3e+38
    %v9293 = vsel %vm9261, %v84, -3e+38
    %v9294 = vsel %vm9262, %v85, -3e+38
    %v9295 = vsel %vm9263, %v86, -3e+38
    %v9296 = vsel %vm9264, %v87, -3e+38
    %v9297 = vsel %vm9265, %v88, -3e+38
    %v9298 = vsel %vm9266, %v89, -3e+38
    %v9299 = vsel %vm9267, %v90, -3e+38
    %v9300 = vsel %vm9268, %v91, -3e+38
    %v9301 = vsel %vm9269, %v92, -3e+38
    %v9302 = vsel %vm9270, %v93, -3e+38
    %v9303 = vsel %vm9271, %v94, -3e+38
    %v9304 = vsel %vm9272, %v95, -3e+38
    %v9305 = vsel %vm9273, %v96, -3e+38
    %v9306 = vsel %vm9274, %v97, -3e+38
    %v9307 = vsel %vm9275, %v98, -3e+38
    %v9308 = vsel %vm9276, %v99, -3e+38
    %v9309 = vsel %vm9277, %v100, -3e+38
    %v9310 = vsel %vm9278, %v101, -3e+38
    %v9311 = vsel %vm9279, %v102, -3e+38
    %v9312 = vsel %vm9280, %v103, -3e+38
    %v9313 = vsel %vm9281, %v104, -3e+38
    %v9314 = vsel %vm9282, %v105, -3e+38
    %v9315 = vsel %vm9283, %v106, -3e+38
    %v9316 = vsel %vm9284, %v107, -3e+38
    %v9317 = vsel %vm9285, %v108, -3e+38
    %v9318 = vsel %vm9286, %v109, -3e+38
    %v9319 = vsel %vm333, %v9287, -inf
    %v9320 = vsel %vm333, %v9289, -inf
    %v9321 = vsel %vm333, %v9291, -inf
    %v9322 = vmax.f32 %v9319, %v9321
    %v9323 = vsel %vm333, %v9293, -inf
    %v9324 = vmax.f32 %v9320, %v9323
    %v9325 = vsel %vm333, %v9295, -inf
    %v9326 = vmax.f32 %v9322, %v9325
    %v9327 = vsel %vm333, %v9297, -inf
    %v9328 = vmax.f32 %v9324, %v9327
    %v9329 = vsel %vm333, %v9299, -inf
    %v9330 = vmax.f32 %v9326, %v9329
    %v9331 = vsel %vm333, %v9301, -inf
    %v9332 = vmax.f32 %v9328, %v9331
    %v9333 = vsel %vm333, %v9303, -inf
    %v9334 = vmax.f32 %v9330, %v9333
    %v9335 = vsel %vm333, %v9305, -inf
    %v9336 = vmax.f32 %v9332, %v9335
    %v9337 = vsel %vm333, %v9307, -inf
    %v9338 = vmax.f32 %v9334, %v9337
    %v9339 = vsel %vm333, %v9309, -inf
    %v9340 = vmax.f32 %v9336, %v9339
    %v9341 = vsel %vm333, %v9311, -inf
    %v9342 = vmax.f32 %v9338, %v9341
    %v9343 = vsel %vm333, %v9313, -inf
    %v9344 = vmax.f32 %v9340, %v9343
    %v9345 = vsel %vm333, %v9315, -inf
    %v9346 = vmax.f32 %v9342, %v9345
    %v9347 = vsel %vm333, %v9317, -inf
    %v9348 = vmax.f32 %v9344, %v9347
    %v9349 = vmax.f32 %v9346, %v9348
    %v9350 = vsel %vm333, %v9288, -inf
    %v9351 = vsel %vm333, %v9290, -inf
    %v9352 = vsel %vm333, %v9292, -inf
    %v9353 = vmax.f32 %v9350, %v9352
    %v9354 = vsel %vm333, %v9294, -inf
    %v9355 = vmax.f32 %v9351, %v9354
    %v9356 = vsel %vm333, %v9296, -inf
    %v9357 = vmax.f32 %v9353, %v9356
    %v9358 = vsel %vm333, %v9298, -inf
    %v9359 = vmax.f32 %v9355, %v9358
    %v9360 = vsel %vm333, %v9300, -inf
    %v9361 = vmax.f32 %v9357, %v9360
    %v9362 = vsel %vm333, %v9302, -inf
    %v9363 = vmax.f32 %v9359, %v9362
    %v9364 = vsel %vm333, %v9304, -inf
    %v9365 = vmax.f32 %v9361, %v9364
    %v9366 = vsel %vm333, %v9306, -inf
    %v9367 = vmax.f32 %v9363, %v9366
    %v9368 = vsel %vm333, %v9308, -inf
    %v9369 = vmax.f32 %v9365, %v9368
    %v9370 = vsel %vm333, %v9310, -inf
    %v9371 = vmax.f32 %v9367, %v9370
    %v9372 = vsel %vm333, %v9312, -inf
    %v9373 = vmax.f32 %v9369, %v9372
    %v9374 = vsel %vm333, %v9314, -inf
    %v9375 = vmax.f32 %v9371, %v9374
    %v9376 = vsel %vm333, %v9316, -inf
    %v9377 = vmax.f32 %v9373, %v9376
    %v9378 = vsel %vm333, %v9318, -inf
    %v9379 = vmax.f32 %v9375, %v9378
    %v9380 = vmax.f32 %v9377, %v9379
    %v9381 = vsel %vm333, %v9349, -inf
    %v9382 = vsel %vm333, %v9380, -inf
    %v9383 = vmax.f32 %v9381, %v9382
    %v9384 = vrot.slane %v9383, 4
    %v9385 = vmax.f32 %v9383, %v9384
    %v9386 = vrot.slane %v9385, 2
    %v9387 = vmax.f32 %v9385, %v9386
    %v9388 = vrot.slane %v9387, 1
    %v9389 = vmax.f32 %v9387, %v9388
    %p9390 = scmp.le.s32.totalorder %s9100, %s9099
    %p9391 = scmp.le.s32.totalorder %s9102, %s9101
    %p9392 = por %p9390, %p9391
    %s9393 = scalar_select %p9392, 1, 0
    %v9394 = vstv %s9393
    %vm9395 = vcmp.eq.s32.totalorder %v9394, 1
    %v9396 = vsel %vm9395, 0.0, %v9389
    %v9397 = vadd.f32 %v9098, %v9396
    %s9398 = sld [smem:[#allocation3 + $0x7c]]
    %s9399 = sld [smem:[#allocation3 + $0x7d]]
    %s9400 = sld [smem:[#allocation3 + $0x7e]]
    %s9401 = sld [smem:[#allocation3 + $0x7f]]
    %v9402 = vstv %s9398
    %vm9403 = vcmp.le.s32.totalorder %v9402, 0
    %vm9404 = vcmp.le.s32.totalorder %v9402, 1
    %vm9405 = vcmp.le.s32.totalorder %v9402, 2
    %vm9406 = vcmp.le.s32.totalorder %v9402, 3
    %vm9407 = vcmp.le.s32.totalorder %v9402, 4
    %vm9408 = vcmp.le.s32.totalorder %v9402, 5
    %vm9409 = vcmp.le.s32.totalorder %v9402, 6
    %vm9410 = vcmp.le.s32.totalorder %v9402, 7
    %vm9411 = vcmp.le.s32.totalorder %v9402, 8
    %vm9412 = vcmp.le.s32.totalorder %v9402, 9
    %vm9413 = vcmp.le.s32.totalorder %v9402, 10
    %vm9414 = vcmp.le.s32.totalorder %v9402, 11
    %vm9415 = vcmp.le.s32.totalorder %v9402, 12
    %vm9416 = vcmp.le.s32.totalorder %v9402, 13
    %vm9417 = vcmp.le.s32.totalorder %v9402, 14
    %vm9418 = vcmp.le.s32.totalorder %v9402, 15
    %v9419 = vstv %s9399
    %vm9420 = vcmp.gt.s32.totalorder %v9419, 0
    %vm9421 = vcmp.gt.s32.totalorder %v9419, 1
    %vm9422 = vcmp.gt.s32.totalorder %v9419, 2
    %vm9423 = vcmp.gt.s32.totalorder %v9419, 3
    %vm9424 = vcmp.gt.s32.totalorder %v9419, 4
    %vm9425 = vcmp.gt.s32.totalorder %v9419, 5
    %vm9426 = vcmp.gt.s32.totalorder %v9419, 6
    %vm9427 = vcmp.gt.s32.totalorder %v9419, 7
    %vm9428 = vcmp.gt.s32.totalorder %v9419, 8
    %vm9429 = vcmp.gt.s32.totalorder %v9419, 9
    %vm9430 = vcmp.gt.s32.totalorder %v9419, 10
    %vm9431 = vcmp.gt.s32.totalorder %v9419, 11
    %vm9432 = vcmp.gt.s32.totalorder %v9419, 12
    %vm9433 = vcmp.gt.s32.totalorder %v9419, 13
    %vm9434 = vcmp.gt.s32.totalorder %v9419, 14
    %vm9435 = vcmp.gt.s32.totalorder %v9419, 15
    %vm9436 = vmand %vm9403, %vm9420
    %vm9437 = vmand %vm9404, %vm9421
    %vm9438 = vmand %vm9405, %vm9422
    %vm9439 = vmand %vm9406, %vm9423
    %vm9440 = vmand %vm9407, %vm9424
    %vm9441 = vmand %vm9408, %vm9425
    %vm9442 = vmand %vm9409, %vm9426
    %vm9443 = vmand %vm9410, %vm9427
    %vm9444 = vmand %vm9411, %vm9428
    %vm9445 = vmand %vm9412, %vm9429
    %vm9446 = vmand %vm9413, %vm9430
    %vm9447 = vmand %vm9414, %vm9431
    %vm9448 = vmand %vm9415, %vm9432
    %vm9449 = vmand %vm9416, %vm9433
    %vm9450 = vmand %vm9417, %vm9434
    %vm9451 = vmand %vm9418, %vm9435
    %v9452 = vstv %s9400
    %vm9453 = vcmp.ge.s32.totalorder %v111, %v9452
    %vm9454 = vcmp.ge.s32.totalorder %v112, %v9452
    %vm9455 = vmand %vm9436, %vm9453
    %vm9456 = vmand %vm9436, %vm9454
    %vm9457 = vmand %vm9437, %vm9453
    %vm9458 = vmand %vm9437, %vm9454
    %vm9459 = vmand %vm9438, %vm9453
    %vm9460 = vmand %vm9438, %vm9454
    %vm9461 = vmand %vm9439, %vm9453
    %vm9462 = vmand %vm9439, %vm9454
    %vm9463 = vmand %vm9440, %vm9453
    %vm9464 = vmand %vm9440, %vm9454
    %vm9465 = vmand %vm9441, %vm9453
    %vm9466 = vmand %vm9441, %vm9454
    %vm9467 = vmand %vm9442, %vm9453
    %vm9468 = vmand %vm9442, %vm9454
    %vm9469 = vmand %vm9443, %vm9453
    %vm9470 = vmand %vm9443, %vm9454
    %vm9471 = vmand %vm9444, %vm9453
    %vm9472 = vmand %vm9444, %vm9454
    %vm9473 = vmand %vm9445, %vm9453
    %vm9474 = vmand %vm9445, %vm9454
    %vm9475 = vmand %vm9446, %vm9453
    %vm9476 = vmand %vm9446, %vm9454
    %vm9477 = vmand %vm9447, %vm9453
    %vm9478 = vmand %vm9447, %vm9454
    %vm9479 = vmand %vm9448, %vm9453
    %vm9480 = vmand %vm9448, %vm9454
    %vm9481 = vmand %vm9449, %vm9453
    %vm9482 = vmand %vm9449, %vm9454
    %vm9483 = vmand %vm9450, %vm9453
    %vm9484 = vmand %vm9450, %vm9454
    %vm9485 = vmand %vm9451, %vm9453
    %vm9486 = vmand %vm9451, %vm9454
    %v9487 = vstv %s9401
    %vm9488 = vcmp.lt.s32.totalorder %v111, %v9487
    %vm9489 = vcmp.lt.s32.totalorder %v112, %v9487
    %vm9490 = vmand %vm9455, %vm9488
    %vm9491 = vmand %vm9456, %vm9489
    %vm9492 = vmand %vm9457, %vm9488
    %vm9493 = vmand %vm9458, %vm9489
    %vm9494 = vmand %vm9459, %vm9488
    %vm9495 = vmand %vm9460, %vm9489
    %vm9496 = vmand %vm9461, %vm9488
    %vm9497 = vmand %vm9462, %vm9489
    %vm9498 = vmand %vm9463, %vm9488
    %vm9499 = vmand %vm9464, %vm9489
    %vm9500 = vmand %vm9465, %vm9488
    %vm9501 = vmand %vm9466, %vm9489
    %vm9502 = vmand %vm9467, %vm9488
    %vm9503 = vmand %vm9468, %vm9489
    %vm9504 = vmand %vm9469, %vm9488
    %vm9505 = vmand %vm9470, %vm9489
    %vm9506 = vmand %vm9471, %vm9488
    %vm9507 = vmand %vm9472, %vm9489
    %vm9508 = vmand %vm9473, %vm9488
    %vm9509 = vmand %vm9474, %vm9489
    %vm9510 = vmand %vm9475, %vm9488
    %vm9511 = vmand %vm9476, %vm9489
    %vm9512 = vmand %vm9477, %vm9488
    %vm9513 = vmand %vm9478, %vm9489
    %vm9514 = vmand %vm9479, %vm9488
    %vm9515 = vmand %vm9480, %vm9489
    %vm9516 = vmand %vm9481, %vm9488
    %vm9517 = vmand %vm9482, %vm9489
    %vm9518 = vmand %vm9483, %vm9488
    %vm9519 = vmand %vm9484, %vm9489
    %vm9520 = vmand %vm9485, %vm9488
    %vm9521 = vmand %vm9486, %vm9489
    %v9522 = vsel %vm9490, 1, 0
    %v9523 = vsel %vm9491, 1, 0
    %v9524 = vsel %vm9492, 1, 0
    %v9525 = vsel %vm9493, 1, 0
    %v9526 = vsel %vm9494, 1, 0
    %v9527 = vsel %vm9495, 1, 0
    %v9528 = vsel %vm9496, 1, 0
    %v9529 = vsel %vm9497, 1, 0
    %v9530 = vsel %vm9498, 1, 0
    %v9531 = vsel %vm9499, 1, 0
    %v9532 = vsel %vm9500, 1, 0
    %v9533 = vsel %vm9501, 1, 0
    %v9534 = vsel %vm9502, 1, 0
    %v9535 = vsel %vm9503, 1, 0
    %v9536 = vsel %vm9504, 1, 0
    %v9537 = vsel %vm9505, 1, 0
    %v9538 = vsel %vm9506, 1, 0
    %v9539 = vsel %vm9507, 1, 0
    %v9540 = vsel %vm9508, 1, 0
    %v9541 = vsel %vm9509, 1, 0
    %v9542 = vsel %vm9510, 1, 0
    %v9543 = vsel %vm9511, 1, 0
    %v9544 = vsel %vm9512, 1, 0
    %v9545 = vsel %vm9513, 1, 0
    %v9546 = vsel %vm9514, 1, 0
    %v9547 = vsel %vm9515, 1, 0
    %v9548 = vsel %vm9516, 1, 0
    %v9549 = vsel %vm9517, 1, 0
    %v9550 = vsel %vm9518, 1, 0
    %v9551 = vsel %vm9519, 1, 0
    %v9552 = vsel %vm9520, 1, 0
    %v9553 = vsel %vm9521, 1, 0
    %vm9554 = vcmp.eq.s32.totalorder %v9522, 1
    %vm9555 = vcmp.eq.s32.totalorder %v9523, 1
    %vm9556 = vcmp.eq.s32.totalorder %v9524, 1
    %vm9557 = vcmp.eq.s32.totalorder %v9525, 1
    %vm9558 = vcmp.eq.s32.totalorder %v9526, 1
    %vm9559 = vcmp.eq.s32.totalorder %v9527, 1
    %vm9560 = vcmp.eq.s32.totalorder %v9528, 1
    %vm9561 = vcmp.eq.s32.totalorder %v9529, 1
    %vm9562 = vcmp.eq.s32.totalorder %v9530, 1
    %vm9563 = vcmp.eq.s32.totalorder %v9531, 1
    %vm9564 = vcmp.eq.s32.totalorder %v9532, 1
    %vm9565 = vcmp.eq.s32.totalorder %v9533, 1
    %vm9566 = vcmp.eq.s32.totalorder %v9534, 1
    %vm9567 = vcmp.eq.s32.totalorder %v9535, 1
    %vm9568 = vcmp.eq.s32.totalorder %v9536, 1
    %vm9569 = vcmp.eq.s32.totalorder %v9537, 1
    %vm9570 = vcmp.eq.s32.totalorder %v9538, 1
    %vm9571 = vcmp.eq.s32.totalorder %v9539, 1
    %vm9572 = vcmp.eq.s32.totalorder %v9540, 1
    %vm9573 = vcmp.eq.s32.totalorder %v9541, 1
    %vm9574 = vcmp.eq.s32.totalorder %v9542, 1
    %vm9575 = vcmp.eq.s32.totalorder %v9543, 1
    %vm9576 = vcmp.eq.s32.totalorder %v9544, 1
    %vm9577 = vcmp.eq.s32.totalorder %v9545, 1
    %vm9578 = vcmp.eq.s32.totalorder %v9546, 1
    %vm9579 = vcmp.eq.s32.totalorder %v9547, 1
    %vm9580 = vcmp.eq.s32.totalorder %v9548, 1
    %vm9581 = vcmp.eq.s32.totalorder %v9549, 1
    %vm9582 = vcmp.eq.s32.totalorder %v9550, 1
    %vm9583 = vcmp.eq.s32.totalorder %v9551, 1
    %vm9584 = vcmp.eq.s32.totalorder %v9552, 1
    %vm9585 = vcmp.eq.s32.totalorder %v9553, 1
    %v9586 = vsel %vm9554, %v78, -3e+38
    %v9587 = vsel %vm9555, %v79, -3e+38
    %v9588 = vsel %vm9556, %v80, -3e+38
    %v9589 = vsel %vm9557, %v81, -3e+38
    %v9590 = vsel %vm9558, %v82, -3e+38
    %v9591 = vsel %vm9559, %v83, -3e+38
    %v9592 = vsel %vm9560, %v84, -3e+38
    %v9593 = vsel %vm9561, %v85, -3e+38
    %v9594 = vsel %vm9562, %v86, -3e+38
    %v9595 = vsel %vm9563, %v87, -3e+38
    %v9596 = vsel %vm9564, %v88, -3e+38
    %v9597 = vsel %vm9565, %v89, -3e+38
    %v9598 = vsel %vm9566, %v90, -3e+38
    %v9599 = vsel %vm9567, %v91, -3e+38
    %v9600 = vsel %vm9568, %v92, -3e+38
    %v9601 = vsel %vm9569, %v93, -3e+38
    %v9602 = vsel %vm9570, %v94, -3e+38
    %v9603 = vsel %vm9571, %v95, -3e+38
    %v9604 = vsel %vm9572, %v96, -3e+38
    %v9605 = vsel %vm9573, %v97, -3e+38
    %v9606 = vsel %vm9574, %v98, -3e+38
    %v9607 = vsel %vm9575, %v99, -3e+38
    %v9608 = vsel %vm9576, %v100, -3e+38
    %v9609 = vsel %vm9577, %v101, -3e+38
    %v9610 = vsel %vm9578, %v102, -3e+38
    %v9611 = vsel %vm9579, %v103, -3e+38
    %v9612 = vsel %vm9580, %v104, -3e+38
    %v9613 = vsel %vm9581, %v105, -3e+38
    %v9614 = vsel %vm9582, %v106, -3e+38
    %v9615 = vsel %vm9583, %v107, -3e+38
    %v9616 = vsel %vm9584, %v108, -3e+38
    %v9617 = vsel %vm9585, %v109, -3e+38
    %v9618 = vsel %vm333, %v9586, -inf
    %v9619 = vsel %vm333, %v9588, -inf
    %v9620 = vsel %vm333, %v9590, -inf
    %v9621 = vmax.f32 %v9618, %v9620
    %v9622 = vsel %vm333, %v9592, -inf
    %v9623 = vmax.f32 %v9619, %v9622
    %v9624 = vsel %vm333, %v9594, -inf
    %v9625 = vmax.f32 %v9621, %v9624
    %v9626 = vsel %vm333, %v9596, -inf
    %v9627 = vmax.f32 %v9623, %v9626
    %v9628 = vsel %vm333, %v9598, -inf
    %v9629 = vmax.f32 %v9625, %v9628
    %v9630 = vsel %vm333, %v9600, -inf
    %v9631 = vmax.f32 %v9627, %v9630
    %v9632 = vsel %vm333, %v9602, -inf
    %v9633 = vmax.f32 %v9629, %v9632
    %v9634 = vsel %vm333, %v9604, -inf
    %v9635 = vmax.f32 %v9631, %v9634
    %v9636 = vsel %vm333, %v9606, -inf
    %v9637 = vmax.f32 %v9633, %v9636
    %v9638 = vsel %vm333, %v9608, -inf
    %v9639 = vmax.f32 %v9635, %v9638
    %v9640 = vsel %vm333, %v9610, -inf
    %v9641 = vmax.f32 %v9637, %v9640
    %v9642 = vsel %vm333, %v9612, -inf
    %v9643 = vmax.f32 %v9639, %v9642
    %v9644 = vsel %vm333, %v9614, -inf
    %v9645 = vmax.f32 %v9641, %v9644
    %v9646 = vsel %vm333, %v9616, -inf
    %v9647 = vmax.f32 %v9643, %v9646
    %v9648 = vmax.f32 %v9645, %v9647
    %v9649 = vsel %vm333, %v9587, -inf
    %v9650 = vsel %vm333, %v9589, -inf
    %v9651 = vsel %vm333, %v9591, -inf
    %v9652 = vmax.f32 %v9649, %v9651
    %v9653 = vsel %vm333, %v9593, -inf
    %v9654 = vmax.f32 %v9650, %v9653
    %v9655 = vsel %vm333, %v9595, -inf
    %v9656 = vmax.f32 %v9652, %v9655
    %v9657 = vsel %vm333, %v9597, -inf
    %v9658 = vmax.f32 %v9654, %v9657
    %v9659 = vsel %vm333, %v9599, -inf
    %v9660 = vmax.f32 %v9656, %v9659
    %v9661 = vsel %vm333, %v9601, -inf
    %v9662 = vmax.f32 %v9658, %v9661
    %v9663 = vsel %vm333, %v9603, -inf
    %v9664 = vmax.f32 %v9660, %v9663
    %v9665 = vsel %vm333, %v9605, -inf
    %v9666 = vmax.f32 %v9662, %v9665
    %v9667 = vsel %vm333, %v9607, -inf
    %v9668 = vmax.f32 %v9664, %v9667
    %v9669 = vsel %vm333, %v9609, -inf
    %v9670 = vmax.f32 %v9666, %v9669
    %v9671 = vsel %vm333, %v9611, -inf
    %v9672 = vmax.f32 %v9668, %v9671
    %v9673 = vsel %vm333, %v9613, -inf
    %v9674 = vmax.f32 %v9670, %v9673
    %v9675 = vsel %vm333, %v9615, -inf
    %v9676 = vmax.f32 %v9672, %v9675
    %v9677 = vsel %vm333, %v9617, -inf
    %v9678 = vmax.f32 %v9674, %v9677
    %v9679 = vmax.f32 %v9676, %v9678
    %v9680 = vsel %vm333, %v9648, -inf
    %v9681 = vsel %vm333, %v9679, -inf
    %v9682 = vmax.f32 %v9680, %v9681
    %v9683 = vrot.slane %v9682, 4
    %v9684 = vmax.f32 %v9682, %v9683
    %v9685 = vrot.slane %v9684, 2
    %v9686 = vmax.f32 %v9684, %v9685
    %v9687 = vrot.slane %v9686, 1
    %v9688 = vmax.f32 %v9686, %v9687
    %p9689 = scmp.le.s32.totalorder %s9399, %s9398
    %p9690 = scmp.le.s32.totalorder %s9401, %s9400
    %p9691 = por %p9689, %p9690
    %s9692 = scalar_select %p9691, 1, 0
    %v9693 = vstv %s9692
    %vm9694 = vcmp.eq.s32.totalorder %v9693, 1
    %v9695 = vsel %vm9694, 0.0, %v9688
    %v9696 = vadd.f32 %v9397, %v9695
    %v9697 = vmul.f32 %v9696, 0.25
    %9698 = vst.msk [vmem:[#allocation2 + $0x7] sm:$0x1] %vm1311, %v9697
    %v9699 = vld [vmem:[#allocation2] sm:$0xff]
    %v9700 = vpack.c.bf16 %v9699, %v9699
    %v9701 = vld [vmem:[%s3] sm:$0xf]
    %v9702 = vld [vmem:[%s3 + $0x4] sm:$0xf]
    %v9703 = vld [vmem:[%s3 + $0x8] sm:$0xf]
    %v9704 = vld [vmem:[%s3 + $0xc] sm:$0xf]
    %v9705 = vld [vmem:[%s4] sm:$0x1]
    %v9707 = vlaneseq
    %v9708 = vshrl.u32 %v9707, 7
    %v9709 = vsub.s32 0, %v9708
    %v9710 = vrot.slane %v9705, %v9709
    %v9716 = vunpack.c.l.b16 %v9701
    %v9717 = vunpack.c.l.b16 %v9702
    %v9718 = vunpack.c.l.b16 %v9703
    %v9719 = vunpack.c.l.b16 %v9704
    %v9720 = vpack.c.b16 %v9717, %v9716
    %v9721 = vpack.c.b16 %v9719, %v9718
    %v9725 = vsel %vm333, %v9700, 0
    %9727 = vmatprep.subr.bf16.mxu0 0
    %9728 = vmatpush1.bf16.msra.mxu0 %v9720
    %9729 = vmatprep.subr.bf16.mxu0 0
    %9730 = vmatpush1.bf16.msra.mxu0 %v9721
    %9731 = vmatprep.subr.bf16.mxu0 0
    %9732 = vmatpush1.bf16.msra.mxu0 0
    %9733 = vmatprep.subr.bf16.mxu0 0
    %9734 = vmatpush1.bf16.msra.mxu0 0
    %9735 = vmatprep.subr.bf16.mxu0 0
    %9736 = vmatpush1.bf16.msra.mxu0 0
    %9737 = vmatprep.subr.bf16.mxu0 0
    %9738 = vmatpush1.bf16.msra.mxu0 0
    %9739 = vmatprep.subr.bf16.mxu0 0
    %9740 = vmatpush1.bf16.msra.mxu0 0
    %9741 = vmatprep.subr.bf16.mxu0 0
    %9742 = vmatpush1.bf16.msra.mxu0 0
    %9743 = vmatprep.subr.bf16.mxu0 0
    %9744 = vmatpush1.bf16.msra.mxu0 0
    %9745 = vmatprep.subr.bf16.mxu0 0
    %9746 = vmatpush1.bf16.msra.mxu0 0
    %9747 = vmatprep.subr.bf16.mxu0 0
    %9748 = vmatpush1.bf16.msra.mxu0 0
    %9749 = vmatprep.subr.bf16.mxu0 0
    %9750 = vmatpush1.bf16.msra.mxu0 0
    %9751 = vmatprep.subr.bf16.mxu0 0
    %9752 = vmatpush1.bf16.msra.mxu0 0
    %9753 = vmatprep.subr.bf16.mxu0 0
    %9754 = vmatpush1.bf16.msra.mxu0 0
    %9755 = vmatprep.subr.bf16.mxu0 0
    %9756 = vmatpush1.bf16.msra.mxu0 0
    %9757 = vmatprep.subr.bf16.mxu0 0
    %9758 = vmatpush1.bf16.msra.mxu0 0
    %9759 = vmatprep.mubr.bf16.mxu0 0
    %9760 = vmatmul.mubr.bf16.gmra.mrb[0].mxu0 %v9725
    %v9761 = vpop.f32.mrb[0].mxu0
    %v9762 = vadd.f32 %v9710, %v9761
    %v9763 = vpop.f32.mrb[0].mxu0
    %v9764 = vpop.f32.mrb[0].mxu0
    %v9765 = vpop.f32.mrb[0].mxu0
    %9766 = vdwg.mxu0
    %v9767 = vmax.f32 %v9762, 0.0
    %v9768 = vpack.c.bf16 %v9767, %v9767
    %v9769 = vld [vmem:[%s5] sm:$0xf]
    %v9770 = vld [vmem:[%s5 + $0x4] sm:$0xf]
    %v9771 = vld [vmem:[%s5 + $0x8] sm:$0xf]
    %v9772 = vld [vmem:[%s5 + $0xc] sm:$0xf]
    %v9773 = vld [vmem:[%s6] sm:$0x1]
    %v9775 = vlaneseq
    %v9776 = vshrl.u32 %v9775, 7
    %v9777 = vsub.s32 0, %v9776
    %v9778 = vrot.slane %v9773, %v9777
    %v9784 = vunpack.c.l.b16 %v9769
    %v9785 = vunpack.c.l.b16 %v9770
    %v9786 = vunpack.c.l.b16 %v9771
    %v9787 = vunpack.c.l.b16 %v9772
    %v9788 = vpack.c.b16 %v9785, %v9784
    %v9789 = vpack.c.b16 %v9787, %v9786
    %v9793 = vsel %vm333, %v9768, 0
    %9795 = vmatprep.subr.bf16.mxu0 0
    %9796 = vmatpush1.bf16.msra.mxu0 %v9788
    %9797 = vmatprep.subr.bf16.mxu0 0
    %9798 = vmatpush1.bf16.msra.mxu0 %v9789
    %9799 = vmatprep.subr.bf16.mxu0 0
    %9800 = vmatpush1.bf16.msra.mxu0 0
    %9801 = vmatprep.subr.bf16.mxu0 0
    %9802 = vmatpush1.bf16.msra.mxu0 0
    %9803 = vmatprep.subr.bf16.mxu0 0
    %9804 = vmatpush1.bf16.msra.mxu0 0
    %9805 = vmatprep.subr.bf16.mxu0 0
    %9806 = vmatpush1.bf16.msra.mxu0 0
    %9807 = vmatprep.subr.bf16.mxu0 0
    %9808 = vmatpush1.bf16.msra.mxu0 0
    %9809 = vmatprep.subr.bf16.mxu0 0
    %9810 = vmatpush1.bf16.msra.mxu0 0
    %9811 = vmatprep.subr.bf16.mxu0 0
    %9812 = vmatpush1.bf16.msra.mxu0 0
    %9813 = vmatprep.subr.bf16.mxu0 0
    %9814 = vmatpush1.bf16.msra.mxu0 0
    %9815 = vmatprep.subr.bf16.mxu0 0
    %9816 = vmatpush1.bf16.msra.mxu0 0
    %9817 = vmatprep.subr.bf16.mxu0 0
    %9818 = vmatpush1.bf16.msra.mxu0 0
    %9819 = vmatprep.subr.bf16.mxu0 0
    %9820 = vmatpush1.bf16.msra.mxu0 0
    %9821 = vmatprep.subr.bf16.mxu0 0
    %9822 = vmatpush1.bf16.msra.mxu0 0
    %9823 = vmatprep.subr.bf16.mxu0 0
    %9824 = vmatpush1.bf16.msra.mxu0 0
    %9825 = vmatprep.subr.bf16.mxu0 0
    %9826 = vmatpush1.bf16.msra.mxu0 0
    %9827 = vmatprep.mubr.bf16.mxu0 0
    %9828 = vmatmul.mubr.bf16.gmra.mrb[0].mxu0 %v9793
    %v9829 = vpop.f32.mrb[0].mxu0
    %v9830 = vadd.f32 %v9778, %v9829
    %v9831 = vpop.f32.mrb[0].mxu0
    %v9832 = vpop.f32.mrb[0].mxu0
    %v9833 = vpop.f32.mrb[0].mxu0
    %9834 = vdwg.mxu0
    %9835 = vst [vmem:[#allocation7] sm:$0xff] %v9830
    %v9836 = vlaneseq
    %v9837 = vand.u32 %v9836, 127
    %9838 = vmax.xlane.f32.xlu0 %v9830
    %v9839 = vpop.xlane.xlu0 %9838
    %vm9840 = vcmp.eq.f32.partialorder %v9830, %v9839
    %v9841 = vsel %vm9840, %v9837, 128
    %v9842 = vand.u32 %v9841, 65535
    %v9843 = vshra.s32 %v9841, 16
    %v9844 = vcvt.s32.f32 %v9842
    %v9845 = vcvt.s32.f32 %v9843
    %9846 = vmin.xlane.f32.xlu0 %v9845
    %v9847 = vpop.xlane.xlu0 %9846
    %vm9848 = vcmp.eq.f32.partialorder %v9845, %v9847
    %v9849 = vsel %vm9848, %v9844, inf
    %9850 = vmin.xlane.f32.xlu0 %v9849
    %v9851 = vpop.xlane.xlu0 %9850
    %v9852 = vcvt.f32.s32 %v9851
    %v9853 = vcvt.f32.s32 %v9847
    %v9854 = vshll.u32 %v9853, 16
    %v9855 = vadd.s32 %v9854, %v9852
    %vm9856 = vcmask 7168
    %9857 = vst.msk [vmem:[%s8] sm:$0xff] %vm9856, %v9855
    %v9858 = vld [vmem:[%s1] sm:$0xff]
    %9859 = vset.pattern.permute.xlu0 0
    %9860 = vperm.xlu0 %9859, %v9858
    %v9861 = vpop.permute.xlu0 %9860
    %vm9862 = vcmp.eq.s32.totalorder %v9837, %v9861
    %v9863 = vsel %vm9862, %v9830, 0.0
    %9864 = vadd.xlane.f32.xlu0 %v9863
    %v9865 = vpop.xlane.xlu0 %9864
    %v9866 = vsub.f32 %v9830, %v9839
    %v9867 = vmul.f32 %v9866, 1.442695
    %v9868 = vpow.pop %v9867
    %9869 = vadd.xlane.f32.xlu0 %v9868
    %v9870 = vpop.xlane.xlu0 %9869
    %v9871 = vlog2.pop %v9870
    %v9872 = vmul.f32 %v9871, 0.6931472
    %v9873 = vadd.f32 %v9839, %v9872
    %v9874 = vsub.f32 %v9873, %v9865
    %v9875 = vsel %vm9856, %v9874, 0.0
    %9876 = vadd.xlane.f32.xlu0 %v9875
    %v9877 = vpop.xlane.xlu0 %9876
    %v9878 = vrot.slane %v9877, 4
    %v9879 = vadd.f32 %v9877, %v9878
    %v9880 = vrot.slane %v9879, 2
    %v9881 = vadd.f32 %v9879, %v9880
    %v9882 = vrot.slane %v9881, 1
    %v9883 = vadd.f32 %v9881, %v9882
    %s9884 = vtos %v9883
    %s9885 = smul.f32 %s9884, 0.125
    %s9886 = scalar_lea.smem [#allocation8], 0
    %9887 = sst [smem:[%s9886]] %s9885
    // Predicated region
    $region34: #{classification_forward.1} parent=1 // pred_check
      _
    $region35: #{classification_forward.1} parent=1 // pred_check_branch
      %9889 = sbr.rel (0) target = $region37
    $region36: #{classification_forward.1} parent=1 // pred_region
      %s9891 = ssub.s32 128, 128
      %9892 = vsyncadd [#allocation4], %s9891
      %s9894 = sshll.u32 [#allocation7], 4
      %s9895 = int_to_ptr.vmem [resolvable:$true] %s9894
      %9897 = dma.vmem_to_hbm [thread:$0]  %s9895, 128, %s7, [#allocation4]
    $region37: #{classification_forward.1} parent=1 // pred_fallthru
      _
    // Predicated region
    $region38: #{classification_forward.1} parent=1 // pred_check
      _
    $region39: #{classification_forward.1} parent=1 // pred_check_branch
      %9899 = sbr.rel (0) target = $region41
    $region40: #{classification_forward.1} parent=1 // pred_region
      _
    $region41: #{classification_forward.1} parent=1 // pred_fallthru
      _
    // Predicated region
    $region42: #{classification_forward.1} parent=1 // pred_check
      _
    $region43: #{classification_forward.1} parent=1 // pred_check_branch
      %9901 = sbr.rel (0) target = $region45
    $region44: #{classification_forward.1} parent=1 // pred_region
      %s9903 = ssub.s32 16, 16
      %9904 = vsyncadd [#allocation5], %s9903
      %9907 = dma.smem_to_hbm [#allocation8], 16, %s9, [#allocation5]
    $region45: #{classification_forward.1} parent=1 // pred_fallthru
      _
    // Predicated region
    $region46: #{classification_forward.1} parent=1 // pred_check
      _
    $region47: #{classification_forward.1} parent=1 // pred_check_branch
      %9909 = sbr.rel (0) target = $region49
    $region48: #{classification_forward.1} parent=1 // pred_region
      %9910 = dma.done [#allocation4], 128
    $region49: #{classification_forward.1} parent=1 // pred_fallthru
      _
    // Predicated region
    $region50: #{classification_forward.1} parent=1 // pred_check
      _
    $region51: #{classification_forward.1} parent=1 // pred_check_branch
      %9912 = sbr.rel (0) target = $region53
    $region52: #{classification_forward.1} parent=1 // pred_region
      _
    $region53: #{classification_forward.1} parent=1 // pred_fallthru
      _
    // Predicated region
    $region54: #{classification_forward.1} parent=1 // pred_check
      _
    $region55: #{classification_forward.1} parent=1 // pred_check_branch
      %9914 = sbr.rel (0) target = $region57
    $region56: #{classification_forward.1} parent=1 // pred_region
      %9915 = dma.done [#allocation5], 16
    $region57: #{classification_forward.1} parent=1 // pred_fallthru
      _
    %9916 = sfence
    %9917 = vsyncpa [#allocation4], 1
    %9918 = vsyncpa [#allocation5], 1
    %9919 = vsyncpa [#allocation6], 1

</llo_original>
